<compile_context>
chip_gen: v6e
topology: v6e:2x2x1
jax: 0.10.0
libtpu: 0.0.40
codegen_flags: <defaults>
</compile_context>

<pallas_src>
import functools

import jax
import jax.numpy as jnp
from jax.experimental import pallas as pl
from jax.experimental.pallas import tpu as pltpu


# ----------------------------------------------------------------------------
# Small helpers for pallas_call plumbing
# ----------------------------------------------------------------------------
def _vmem():
    return pl.BlockSpec(memory_space=pltpu.MemorySpace.VMEM)


def _compiler_params():
    return pltpu.CompilerParams(vmem_limit_bytes=32 * 1024 * 1024)


def _bytes(*arrays):
    return int(sum(int(a.size) * a.dtype.itemsize for a in arrays))


# ----------------------------------------------------------------------------
# Pallas kernels
# ----------------------------------------------------------------------------
def _matmul_bias_act_kernel(a_ref, w_ref, b_ref, o_ref, *, act):
    """o = act(a @ w + b).  MXU sees the weight dtype (bf16), accumulates f32."""
    acc = jnp.dot(a_ref[...].astype(w_ref.dtype), w_ref[...],
                  preferred_element_type=jnp.float32)
    acc = acc + b_ref[...]
    if act == "relu":
        acc = jnp.maximum(acc, 0.0)
    elif act == "sigmoid":
        acc = jax.nn.sigmoid(acc)
    o_ref[...] = acc


def _matmul_t_bias_act_kernel(wt_ref, at_ref, b_ref, o_ref, *, act):
    """o (N, M) = act(wT @ aT + b).  Transposed orientation keeps the large M
    dimension on the lane axis -> lane-dense output stores (N may be tiny)."""
    acc = jnp.dot(wt_ref[...], at_ref[...].astype(wt_ref.dtype),
                  preferred_element_type=jnp.float32)
    acc = acc + b_ref[...]                      # b: (N, 1), lane-broadcast
    if act == "relu":
        acc = jnp.maximum(acc, 0.0)
    elif act == "sigmoid":
        acc = jax.nn.sigmoid(acc)
    o_ref[...] = acc


def _fused_fc_kernel(h_ref, eps_ref, w1_ref, b1_ref, wml_ref, bml_ref,
                     wd1_ref, bd1_ref, wd2_ref, bd2_ref,
                     mu_ref, logvar_ref, d2_ref, *, latent_dim):
    """enc_fc1 -> [fc_mu|fc_logvar] -> reparameterize -> dec_fc1 -> dec_fc2,
    all intermediates resident in VMEM; only mu, logvar, dec_fc2 output leave."""
    # enc_fc1 (bf16 MXU inputs, f32 accumulation) + ReLU
    h1 = jnp.dot(h_ref[...].astype(w1_ref.dtype), w1_ref[...],
                 preferred_element_type=jnp.float32) + b1_ref[...]
    h1 = jnp.maximum(h1, 0.0)
    # fused fc_mu | fc_logvar (kept f32: tiny matmul, precise latent path)
    ml = jnp.dot(h1, wml_ref[...], preferred_element_type=jnp.float32) + bml_ref[...]
    mu = ml[:, :latent_dim]
    logvar = ml[:, latent_dim:]
    # reparameterization: z = mu + eps * exp(0.5 * logvar)   (f32 EUP exp)
    z = mu + eps_ref[...] * jnp.exp(0.5 * logvar)
    # dec_fc1 + ReLU (f32, tiny)
    d1 = jnp.dot(z, wd1_ref[...], preferred_element_type=jnp.float32) + bd1_ref[...]
    d1 = jnp.maximum(d1, 0.0)
    # dec_fc2 + ReLU (bf16 MXU inputs, f32 accumulation)
    d2 = jnp.dot(d1.astype(wd2_ref.dtype), wd2_ref[...],
                 preferred_element_type=jnp.float32) + bd2_ref[...]
    d2 = jnp.maximum(d2, 0.0)
    mu_ref[...] = mu
    logvar_ref[...] = logvar
    d2_ref[...] = d2


# ----------------------------------------------------------------------------
# Pallas wrappers (whole-array VMEM blocks, no grid)
# ----------------------------------------------------------------------------
def matmul_bias_act(a, w, b, act="none"):
    M, K = a.shape
    Kw, N = w.shape
    assert K == Kw
    cost = pl.CostEstimate(
        flops=2 * M * K * N,
        transcendentals=M * N if act == "sigmoid" else 0,
        bytes_accessed=_bytes(a, w, b) + 4 * M * N)
    return pl.pallas_call(
        functools.partial(_matmul_bias_act_kernel, act=act),
        out_shape=jax.ShapeDtypeStruct((M, N), jnp.float32),
        in_specs=[_vmem(), _vmem(), _vmem()],
        out_specs=_vmem(),
        compiler_params=_compiler_params(),
        cost_estimate=cost,
    )(a, w, b)


def matmul_t_bias_act(wt, at, b, act="none"):
    N, K = wt.shape
    Ka, M = at.shape
    assert K == Ka
    cost = pl.CostEstimate(
        flops=2 * M * K * N,
        transcendentals=M * N if act == "sigmoid" else 0,
        bytes_accessed=_bytes(wt, at, b) + 4 * M * N)
    return pl.pallas_call(
        functools.partial(_matmul_t_bias_act_kernel, act=act),
        out_shape=jax.ShapeDtypeStruct((N, M), jnp.float32),
        in_specs=[_vmem(), _vmem(), _vmem()],
        out_specs=_vmem(),
        compiler_params=_compiler_params(),
        cost_estimate=cost,
    )(wt, at, b)


def fused_fc_latent(h, eps, q):
    B, din = h.shape
    latent_dim = eps.shape[1]
    dout = q["dfc2_w"].shape[1]
    flops = 2 * B * (din * 256 + 256 * 2 * latent_dim + latent_dim * 256 + 256 * dout)
    cost = pl.CostEstimate(
        flops=flops,
        transcendentals=B * latent_dim,
        bytes_accessed=_bytes(h, eps, q["fc1_w"], q["fc1_b"], q["ml_w"], q["ml_b"],
                              q["dfc1_w"], q["dfc1_b"], q["dfc2_w"], q["dfc2_b"])
        + 4 * B * (2 * latent_dim + dout))
    return pl.pallas_call(
        functools.partial(_fused_fc_kernel, latent_dim=latent_dim),
        out_shape=(jax.ShapeDtypeStruct((B, latent_dim), jnp.float32),
                   jax.ShapeDtypeStruct((B, latent_dim), jnp.float32),
                   jax.ShapeDtypeStruct((B, dout), jnp.float32)),
        in_specs=[_vmem()] * 10,
        out_specs=(_vmem(), _vmem(), _vmem()),
        compiler_params=_compiler_params(),
        cost_estimate=cost,
    )(h, eps, q["fc1_w"], q["fc1_b"], q["ml_w"], q["ml_b"],
      q["dfc1_w"], q["dfc1_b"], q["dfc2_w"], q["dfc2_b"])


# ----------------------------------------------------------------------------
# Glue: patch extraction / weight reshaping (layout plumbing only, jit-fused)
# ----------------------------------------------------------------------------
def im2col(x_nhwc, k, stride, pad):
    """k x k patches -> (B*oh*ow, k*k*C), patch row order (kh, kw, c)."""
    x = jnp.pad(x_nhwc, ((0, 0), (pad, pad), (pad, pad), (0, 0)))
    B, H, W, C = x.shape
    oh = (H - k) // stride + 1
    ow = (W - k) // stride + 1
    patches = []
    for kh in range(k):
        for kw in range(k):
            patches.append(
                x[:, kh:kh + stride * oh:stride, kw:kw + stride * ow:stride, :])
    p = jnp.stack(patches, axis=3)                     # (B, oh, ow, k*k, C)
    return p.reshape(B * oh * ow, k * k * C), oh, ow


def conv_weight_to_mat(w_oikk):
    """PyTorch Conv2d weight (O,I,k,k) -> matmul weight (k*k*I, O)."""
    O, I, k, _ = w_oikk.shape
    return jnp.transpose(w_oikk, (2, 3, 1, 0)).reshape(k * k * I, O)


# --- ConvTranspose2d(k=4, stride=2, padding=1): sub-pixel phase decomposition.
# With xp = 1-padded input and 2x2 windows V_j = (xp[j], xp[j+1]):
#   y[2m]   = W[3]*xp[m]   + W[1]*xp[m+1]   -> phase 0, window j = m
#   y[2m+1] = W[2]*xp[m+1] + W[0]*xp[m+2]   -> phase 1, window j = m+1
# so the kernel tap index per (phase, tap) is KIDX = [[3, 1], [2, 0]] per axis,
# and  y[b, 2m+py, 2n+px, o] = phase_out[b, m+py, n+px, py, px, o].
_KIDX = ((3, 1), (2, 0))


def deconv_phase_weight(w_iokk):
    """PyTorch ConvTranspose2d weight (I,O,4,4) -> (4*I [ty,tx,i], 4*O [py,px,o])."""
    I, O, k, _ = w_iokk.shape
    assert k == 4
    blocks = jnp.zeros((2, 2, I, 2, 2, O), dtype=w_iokk.dtype)
    for py in range(2):
        for px in range(2):
            for ty in range(2):
                for tx in range(2):
                    blocks = blocks.at[ty, tx, :, py, px, :].set(
                        w_iokk[:, :, _KIDX[py][ty], _KIDX[px][tx]])
    return blocks.reshape(4 * I, 4 * O)


def _deconv_window_slices(x_nhwc):
    B, H, W, C = x_nhwc.shape
    xp = jnp.pad(x_nhwc, ((0, 0), (1, 1), (1, 1), (0, 0)))
    cols = []
    for ty in range(2):
        for tx in range(2):
            cols.append(xp[:, ty:ty + H + 1, tx:tx + W + 1, :])   # (B, H+1, W+1, C)
    return cols, B, H, W, C


def deconv_patches(x_nhwc):
    """2x2 windows on pad-1 input -> (B*(H+1)*(W+1), 4*C), row order (ty,tx,c)."""
    cols, B, H, W, C = _deconv_window_slices(x_nhwc)
    p = jnp.stack(cols, axis=3)                         # (B, H+1, W+1, 4, C)
    return p.reshape(B * (H + 1) * (W + 1), 4 * C)


def deconv_patches_t(x_nhwc):
    """Transposed patches: (4*C, B*(H+1)*(W+1)) with K on sublanes, M on lanes."""
    cols, B, H, W, C = _deconv_window_slices(x_nhwc)
    p = jnp.stack(cols, axis=0)                         # (4, B, H+1, W+1, C)
    p = jnp.transpose(p, (0, 4, 1, 2, 3))               # (4, C, B, H+1, W+1)
    return p.reshape(4 * C, B * (H + 1) * (W + 1))


def phase_interleave(P, H, W):
    """P: (B, H+1, W+1, 2, 2, O) phase outputs -> (B, 2H, 2W, O)."""
    B, O = P.shape[0], P.shape[-1]
    s00 = P[:, 0:H, 0:W, 0, 0, :]
    s01 = P[:, 0:H, 1:W + 1, 0, 1, :]
    s10 = P[:, 1:H + 1, 0:W, 1, 0, :]
    s11 = P[:, 1:H + 1, 1:W + 1, 1, 1, :]
    row0 = jnp.stack([s00, s01], axis=3)                # (B, H, W, 2, O)  px
    row1 = jnp.stack([s10, s11], axis=3)
    y = jnp.stack([row0, row1], axis=2)                 # (B, H, 2, W, 2, O)
    return y.reshape(B, 2 * H, 2 * W, O)


# ----------------------------------------------------------------------------
# Parameters: PyTorch-shaped init + one-time preparation into kernel layouts
# ----------------------------------------------------------------------------
def init_params(latent_dim, key):
    ks = jax.random.split(key, 18)

    def lin(kw, kb, fan_in, fan_out):
        s = 1.0 / jnp.sqrt(fan_in)
        return (jax.random.uniform(kw, (fan_in, fan_out), jnp.float32, -s, s),
                jax.random.uniform(kb, (fan_out,), jnp.float32, -s, s))

    def conv(kw, kb, o, i, k):
        s = 1.0 / jnp.sqrt(i * k * k)
        return (jax.random.uniform(kw, (o, i, k, k), jnp.float32, -s, s),
                jax.random.uniform(kb, (o,), jnp.float32, -s, s))

    def deconv(kw, kb, i, o, k):
        s = 1.0 / jnp.sqrt(i * k * k)
        return (jax.random.uniform(kw, (i, o, k, k), jnp.float32, -s, s),
                jax.random.uniform(kb, (o,), jnp.float32, -s, s))

    p = {}
    p["enc_conv1_w"], p["enc_conv1_b"] = conv(ks[0], ks[1], 32, 1, 4)
    p["enc_conv2_w"], p["enc_conv2_b"] = conv(ks[2], ks[3], 64, 32, 4)
    p["enc_fc1_w"], p["enc_fc1_b"] = lin(ks[4], ks[5], 64 * 7 * 7, 256)
    p["enc_fcmu_w"], p["enc_fcmu_b"] = lin(ks[6], ks[7], 256, latent_dim)
    p["enc_fclv_w"], p["enc_fclv_b"] = lin(ks[8], ks[9], 256, latent_dim)
    p["dec_fc1_w"], p["dec_fc1_b"] = lin(ks[10], ks[11], latent_dim, 256)
    p["dec_fc2_w"], p["dec_fc2_b"] = lin(ks[12], ks[13], 256, 64 * 7 * 7)
    p["dec_dc1_w"], p["dec_dc1_b"] = deconv(ks[14], ks[15], 64, 32, 4)
    p["dec_dc2_w"], p["dec_dc2_b"] = deconv(ks[16], ks[17], 32, 1, 4)
    return p


def prepare_params(p):
    """Fold layout permutations / phase decomposition / mu|logvar fusion into
    the weights once; cast MXU operands of the big matmuls to bf16."""
    q = {}
    # Encoder convs (im2col matmul form).
    q["c1_w"] = conv_weight_to_mat(p["enc_conv1_w"]).astype(jnp.bfloat16)
    q["c1_b"] = p["enc_conv1_b"].reshape(1, -1)
    q["c2_w"] = conv_weight_to_mat(p["enc_conv2_w"]).astype(jnp.bfloat16)
    q["c2_b"] = p["enc_conv2_b"].reshape(1, -1)
    # enc_fc1: permute rows from PyTorch NCHW-flatten (c,h,w) to NHWC (h,w,c)
    # so it consumes the conv2 output flatten directly (no transpose on path).
    w1 = p["enc_fc1_w"].reshape(64, 7, 7, 256).transpose(1, 2, 0, 3)
    q["fc1_w"] = w1.reshape(64 * 7 * 7, 256).astype(jnp.bfloat16)
    q["fc1_b"] = p["enc_fc1_b"].reshape(1, -1)
    # Fused fc_mu | fc_logvar (single N = 2*latent matmul), kept f32.
    q["ml_w"] = jnp.concatenate([p["enc_fcmu_w"], p["enc_fclv_w"]], axis=1)
    q["ml_b"] = jnp.concatenate([p["enc_fcmu_b"], p["enc_fclv_b"]]).reshape(1, -1)
    # dec_fc1 (tiny, f32).
    q["dfc1_w"] = p["dec_fc1_w"]
    q["dfc1_b"] = p["dec_fc1_b"].reshape(1, -1)
    # dec_fc2: permute columns (c,h,w) -> (h,w,c) so output is NHWC-flattened.
    w2 = p["dec_fc2_w"].reshape(256, 64, 7, 7).transpose(0, 2, 3, 1)
    q["dfc2_w"] = w2.reshape(256, 64 * 7 * 7).astype(jnp.bfloat16)
    q["dfc2_b"] = p["dec_fc2_b"].reshape(64, 7, 7).transpose(1, 2, 0).reshape(1, -1)
    # Deconvs: sub-pixel phase weight matrices.
    q["dc1_w"] = deconv_phase_weight(p["dec_dc1_w"]).astype(jnp.bfloat16)   # (256,128)
    q["dc1_b"] = jnp.tile(p["dec_dc1_b"], 4).reshape(1, -1)                 # (1,128)
    q["dc2_wT"] = deconv_phase_weight(p["dec_dc2_w"]).T.astype(jnp.bfloat16)  # (4,128)
    q["dc2_bT"] = jnp.tile(p["dec_dc2_b"], 4).reshape(-1, 1)                  # (4,1)
    return q


# ----------------------------------------------------------------------------
# Full VAE forward
# ----------------------------------------------------------------------------
def vae_forward(q, x_nchw, eps):
    """x_nchw: (B, 1, 28, 28) float32.  eps: (B, latent_dim) ~ N(0,1)."""
    B = x_nchw.shape[0]
    x = jnp.transpose(x_nchw, (0, 2, 3, 1))                      # NHWC

    # Encoder convs (im2col + Pallas matmul+bias+ReLU).
    p1, oh1, ow1 = im2col(x, 4, 2, 1)                            # (B*196, 16)
    h = matmul_bias_act(p1, q["c1_w"], q["c1_b"], "relu")
    h = h.reshape(B, oh1, ow1, q["c1_w"].shape[1])               # (B, 14, 14, 32)
    p2, oh2, ow2 = im2col(h, 4, 2, 1)                            # (B*49, 512)
    h = matmul_bias_act(p2, q["c2_w"], q["c2_b"], "relu")        # (B*49, 64)
    # NHWC flatten; fc1 weight rows are pre-permuted to consume this order.
    h = h.reshape(B, oh2 * ow2 * q["c2_w"].shape[1])             # (B, 3136)

    # Fused FC stack + reparameterization + decoder FCs (one Pallas kernel).
    mu, logvar, d = fused_fc_latent(h, eps, q)                   # d: (B, 3136) NHWC

    # Decoder deconv1 (sub-pixel phases), standard orientation (N = 128: dense).
    d = d.reshape(B, 7, 7, 64)                                   # NHWC directly
    dp1 = deconv_patches(d)                                      # (B*64, 256)
    ph = matmul_bias_act(dp1, q["dc1_w"], q["dc1_b"], "relu")    # (B*64, 128)
    ph = ph.reshape(B, 8, 8, 2, 2, 32)
    d = phase_interleave(ph, 7, 7)                               # (B, 14, 14, 32)

    # Decoder deconv2 (single output channel): transposed, lane-dense output.
    dp2t = deconv_patches_t(d)                                   # (128, B*225)
    ph = matmul_t_bias_act(q["dc2_wT"], dp2t, q["dc2_bT"], "sigmoid")  # (4, B*225)
    ph = jnp.transpose(ph.reshape(2, 2, 1, B, 15, 15), (3, 4, 5, 0, 1, 2))
    y = phase_interleave(ph, 14, 14)                             # (B, 28, 28, 1)

    x_recon = jnp.transpose(y, (0, 3, 1, 2))                     # NCHW
    return x_recon, mu, logvar


if __name__ == "__main__":
    latent_dim = 16
    B = 2

    key = jax.random.PRNGKey(0)
    k_x, k_eps, k_params = jax.random.split(key, 3)

    # Spatial size must be 28 (the module hard-codes 64*7*7 after two
    # stride-2 convs), so x is (B, 1, 28, 28) NCHW.
    x = jax.random.normal(k_x, (B, 1, 28, 28), dtype=jnp.float32)
    # torch.randn_like(std) equivalent, drawn host-side and passed in.
    eps = jax.random.normal(k_eps, (B, latent_dim), dtype=jnp.float32)

    params = init_params(latent_dim, k_params)
    q = prepare_params(params)

    fwd = jax.jit(vae_forward)
    x_recon, mu, logvar = fwd(q, x, eps)
    jax.block_until_ready((x_recon, mu, logvar))

    assert x_recon.shape == (B, 1, 28, 28)
    assert mu.shape == (B, latent_dim)
    assert logvar.shape == (B, latent_dim)
    assert bool(jnp.all(jnp.isfinite(x_recon)))
    assert bool(jnp.all(jnp.isfinite(mu))) and bool(jnp.all(jnp.isfinite(logvar)))
    assert bool(jnp.all((x_recon >= 0.0) & (x_recon <= 1.0)))  # sigmoid output

    print("KERNEL_OK")
</pallas_src>

<mosaic_0001>
module attributes {stable_mosaic.version = 11 : i64} {
  func.func @_matmul_bias_act_kernel(%arg0: memref<392x16xf32, #tpu.memory_space<vmem>>, %arg1: memref<16x32xbf16, #tpu.memory_space<vmem>>, %arg2: memref<1x32xf32, #tpu.memory_space<vmem>>, %arg3: memref<392x32xf32, #tpu.memory_space<vmem>>) attributes {dimension_semantics = [], scalar_prefetch = 0 : i64, scratch_operands = 0 : i64, tpu.core_type = #tpu.core_type<tc>} {
    %c0 = arith.constant 0 : index
    %c0_0 = arith.constant 0 : index
    %0 = vector.load %arg0[%c0, %c0_0] : memref<392x16xf32, #tpu.memory_space<vmem>>, vector<392x16xf32>
    %1 = arith.truncf %0 : vector<392x16xf32> to vector<392x16xbf16>
    %c0_1 = arith.constant 0 : index
    %c0_2 = arith.constant 0 : index
    %2 = vector.load %arg1[%c0_1, %c0_2] : memref<16x32xbf16, #tpu.memory_space<vmem>>, vector<16x32xbf16>
    %cst = arith.constant dense<0.000000e+00> : vector<392x32xf32>
    %3 = tpu.matmul %1, %2, %cst {dimension_numbers = #tpu.dot_dimension_numbers<[1], [0], [0], [1], [0, 0, 1, 1], [], []>} : vector<392x16xbf16>, vector<16x32xbf16>, vector<392x32xf32> -> vector<392x32xf32>
    %c0_3 = arith.constant 0 : index
    %c0_4 = arith.constant 0 : index
    %4 = vector.load %arg2[%c0_3, %c0_4] : memref<1x32xf32, #tpu.memory_space<vmem>>, vector<1x32xf32>
    %5 = vector.broadcast %4 : vector<1x32xf32> to vector<392x32xf32>
    %6 = arith.addf %3, %5 : vector<392x32xf32>
    %cst_5 = arith.constant 0.000000e+00 : f32
    %7 = vector.broadcast %cst_5 : f32 to vector<392x32xf32>
    %8 = arith.maximumf %6, %7 : vector<392x32xf32>
    %c0_6 = arith.constant 0 : index
    %c0_7 = arith.constant 0 : index
    %9 = vector.load %arg3[%c0_6, %c0_7] : memref<392x32xf32, #tpu.memory_space<vmem>>, vector<392x32xf32>
    tpu.vector_store %arg3[%c0_6, %c0_7], %8 {strides = array<i32>} : memref<392x32xf32, #tpu.memory_space<vmem>>, vector<392x32xf32>,
    return
  }
}

module attributes {stable_mosaic.version = 11 : i64} {
  func.func @_matmul_bias_act_kernel(%arg0: memref<98x512xf32, #tpu.memory_space<vmem>>, %arg1: memref<512x64xbf16, #tpu.memory_space<vmem>>, %arg2: memref<1x64xf32, #tpu.memory_space<vmem>>, %arg3: memref<98x64xf32, #tpu.memory_space<vmem>>) attributes {dimension_semantics = [], scalar_prefetch = 0 : i64, scratch_operands = 0 : i64, tpu.core_type = #tpu.core_type<tc>} {
    %c0 = arith.constant 0 : index
    %c0_0 = arith.constant 0 : index
    %0 = vector.load %arg0[%c0, %c0_0] : memref<98x512xf32, #tpu.memory_space<vmem>>, vector<98x512xf32>
    %1 = arith.truncf %0 : vector<98x512xf32> to vector<98x512xbf16>
    %c0_1 = arith.constant 0 : index
    %c0_2 = arith.constant 0 : index
    %2 = vector.load %arg1[%c0_1, %c0_2] : memref<512x64xbf16, #tpu.memory_space<vmem>>, vector<512x64xbf16>
    %cst = arith.constant dense<0.000000e+00> : vector<98x64xf32>
    %3 = tpu.matmul %1, %2, %cst {dimension_numbers = #tpu.dot_dimension_numbers<[1], [0], [0], [1], [0, 0, 1, 1], [], []>} : vector<98x512xbf16>, vector<512x64xbf16>, vector<98x64xf32> -> vector<98x64xf32>
    %c0_3 = arith.constant 0 : index
    %c0_4 = arith.constant 0 : index
    %4 = vector.load %arg2[%c0_3, %c0_4] : memref<1x64xf32, #tpu.memory_space<vmem>>, vector<1x64xf32>
    %5 = vector.broadcast %4 : vector<1x64xf32> to vector<98x64xf32>
    %6 = arith.addf %3, %5 : vector<98x64xf32>
    %cst_5 = arith.constant 0.000000e+00 : f32
    %7 = vector.broadcast %cst_5 : f32 to vector<98x64xf32>
    %8 = arith.maximumf %6, %7 : vector<98x64xf32>
    %c0_6 = arith.constant 0 : index
    %c0_7 = arith.constant 0 : index
    %9 = vector.load %arg3[%c0_6, %c0_7] : memref<98x64xf32, #tpu.memory_space<vmem>>, vector<98x64xf32>
    tpu.vector_store %arg3[%c0_6, %c0_7], %8 {strides = array<i32>} : memref<98x64xf32, #tpu.memory_space<vmem>>, vector<98x64xf32>,
    return
  }
}

module attributes {stable_mosaic.version = 11 : i64} {
  func.func @_fused_fc_kernel(%arg0: memref<2x3136xf32, #tpu.memory_space<vmem>>, %arg1: memref<2x16xf32, #tpu.memory_space<vmem>>, %arg2: memref<3136x256xbf16, #tpu.memory_space<vmem>>, %arg3: memref<1x256xf32, #tpu.memory_space<vmem>>, %arg4: memref<256x32xf32, #tpu.memory_space<vmem>>, %arg5: memref<1x32xf32, #tpu.memory_space<vmem>>, %arg6: memref<16x256xf32, #tpu.memory_space<vmem>>, %arg7: memref<1x256xf32, #tpu.memory_space<vmem>>, %arg8: memref<256x3136xbf16, #tpu.memory_space<vmem>>, %arg9: memref<1x3136xf32, #tpu.memory_space<vmem>>, %arg10: memref<2x16xf32, #tpu.memory_space<vmem>>, %arg11: memref<2x16xf32, #tpu.memory_space<vmem>>, %arg12: memref<2x3136xf32, #tpu.memory_space<vmem>>) attributes {dimension_semantics = [], scalar_prefetch = 0 : i64, scratch_operands = 0 : i64, tpu.core_type = #tpu.core_type<tc>} {
    %c0 = arith.constant 0 : index
    %c0_0 = arith.constant 0 : index
    %0 = vector.load %arg0[%c0, %c0_0] : memref<2x3136xf32, #tpu.memory_space<vmem>>, vector<2x3136xf32>
    %1 = arith.truncf %0 : vector<2x3136xf32> to vector<2x3136xbf16>
    %c0_1 = arith.constant 0 : index
    %c0_2 = arith.constant 0 : index
    %2 = vector.load %arg2[%c0_1, %c0_2] : memref<3136x256xbf16, #tpu.memory_space<vmem>>, vector<3136x256xbf16>
    %cst = arith.constant dense<0.000000e+00> : vector<2x256xf32>
    %3 = tpu.matmul %1, %2, %cst {dimension_numbers = #tpu.dot_dimension_numbers<[1], [0], [0], [1], [0, 0, 1, 1], [], []>} : vector<2x3136xbf16>, vector<3136x256xbf16>, vector<2x256xf32> -> vector<2x256xf32>
    %c0_3 = arith.constant 0 : index
    %c0_4 = arith.constant 0 : index
    %4 = vector.load %arg3[%c0_3, %c0_4] : memref<1x256xf32, #tpu.memory_space<vmem>>, vector<1x256xf32>
    %5 = vector.broadcast %4 : vector<1x256xf32> to vector<2x256xf32>
    %6 = arith.addf %3, %5 : vector<2x256xf32>
    %cst_5 = arith.constant 0.000000e+00 : f32
    %7 = vector.broadcast %cst_5 : f32 to vector<2x256xf32>
    %8 = arith.maximumf %6, %7 : vector<2x256xf32>
    %c0_6 = arith.constant 0 : index
    %c0_7 = arith.constant 0 : index
    %9 = vector.load %arg4[%c0_6, %c0_7] : memref<256x32xf32, #tpu.memory_space<vmem>>, vector<256x32xf32>
    %cst_8 = arith.constant dense<0.000000e+00> : vector<2x32xf32>
    %10 = tpu.matmul %8, %9, %cst_8 {dimension_numbers = #tpu.dot_dimension_numbers<[1], [0], [0], [1], [0, 0, 1, 1], [], []>} : vector<2x256xf32>, vector<256x32xf32>, vector<2x32xf32> -> vector<2x32xf32>
    %c0_9 = arith.constant 0 : index
    %c0_10 = arith.constant 0 : index
    %11 = vector.load %arg5[%c0_9, %c0_10] : memref<1x32xf32, #tpu.memory_space<vmem>>, vector<1x32xf32>
    %12 = vector.broadcast %11 : vector<1x32xf32> to vector<2x32xf32>
    %13 = arith.addf %10, %12 : vector<2x32xf32>
    %14 = vector.extract_strided_slice %13 {offsets = [0, 0], sizes = [2, 16], strides = [1, 1]} : vector<2x32xf32> to vector<2x16xf32>
    %15 = vector.extract_strided_slice %13 {offsets = [0, 16], sizes = [2, 16], strides = [1, 1]} : vector<2x32xf32> to vector<2x16xf32>
    %c0_11 = arith.constant 0 : index
    %c0_12 = arith.constant 0 : index
    %16 = vector.load %arg1[%c0_11, %c0_12] : memref<2x16xf32, #tpu.memory_space<vmem>>, vector<2x16xf32>
    %cst_13 = arith.constant 5.000000e-01 : f32
    %17 = vector.broadcast %cst_13 : f32 to vector<2x16xf32>
    %18 = arith.mulf %17, %15 : vector<2x16xf32>
    %19 = math.exp %18 : vector<2x16xf32>
    %20 = arith.mulf %16, %19 : vector<2x16xf32>
    %21 = arith.addf %14, %20 : vector<2x16xf32>
    %c0_14 = arith.constant 0 : index
    %c0_15 = arith.constant 0 : index
    %22 = vector.load %arg6[%c0_14, %c0_15] : memref<16x256xf32, #tpu.memory_space<vmem>>, vector<16x256xf32>
    %cst_16 = arith.constant dense<0.000000e+00> : vector<2x256xf32>
    %23 = tpu.matmul %21, %22, %cst_16 {dimension_numbers = #tpu.dot_dimension_numbers<[1], [0], [0], [1], [0, 0, 1, 1], [], []>} : vector<2x16xf32>, vector<16x256xf32>, vector<2x256xf32> -> vector<2x256xf32>
    %c0_17 = arith.constant 0 : index
    %c0_18 = arith.constant 0 : index
    %24 = vector.load %arg7[%c0_17, %c0_18] : memref<1x256xf32, #tpu.memory_space<vmem>>, vector<1x256xf32>
    %25 = vector.broadcast %24 : vector<1x256xf32> to vector<2x256xf32>
    %26 = arith.addf %23, %25 : vector<2x256xf32>
    %cst_19 = arith.constant 0.000000e+00 : f32
    %27 = vector.broadcast %cst_19 : f32 to vector<2x256xf32>
    %28 = arith.maximumf %26, %27 : vector<2x256xf32>
    %29 = arith.truncf %28 : vector<2x256xf32> to vector<2x256xbf16>
    %c0_20 = arith.constant 0 : index
    %c0_21 = arith.constant 0 : index
    %30 = vector.load %arg8[%c0_20, %c0_21] : memref<256x3136xbf16, #tpu.memory_space<vmem>>, vector<256x3136xbf16>
    %cst_22 = arith.constant dense<0.000000e+00> : vector<2x3136xf32>
    %31 = tpu.matmul %29, %30, %cst_22 {dimension_numbers = #tpu.dot_dimension_numbers<[1], [0], [0], [1], [0, 0, 1, 1], [], []>} : vector<2x256xbf16>, vector<256x3136xbf16>, vector<2x3136xf32> -> vector<2x3136xf32>
    %c0_23 = arith.constant 0 : index
    %c0_24 = arith.constant 0 : index
    %32 = vector.load %arg9[%c0_23, %c0_24] : memref<1x3136xf32, #tpu.memory_space<vmem>>, vector<1x3136xf32>
    %33 = vector.broadcast %32 : vector<1x3136xf32> to vector<2x3136xf32>
    %34 = arith.addf %31, %33 : vector<2x3136xf32>
    %cst_25 = arith.constant 0.000000e+00 : f32
    %35 = vector.broadcast %cst_25 : f32 to vector<2x3136xf32>
    %36 = arith.maximumf %34, %35 : vector<2x3136xf32>
    %c0_26 = arith.constant 0 : index
    %c0_27 = arith.constant 0 : index
    %37 = vector.load %arg10[%c0_26, %c0_27] : memref<2x16xf32, #tpu.memory_space<vmem>>, vector<2x16xf32>
    tpu.vector_store %arg10[%c0_26, %c0_27], %14 {strides = array<i32>} : memref<2x16xf32, #tpu.memory_space<vmem>>, vector<2x16xf32>,
    %c0_28 = arith.constant 0 : index
    %c0_29 = arith.constant 0 : index
    %38 = vector.load %arg11[%c0_28, %c0_29] : memref<2x16xf32, #tpu.memory_space<vmem>>, vector<2x16xf32>
    tpu.vector_store %arg11[%c0_28, %c0_29], %15 {strides = array<i32>} : memref<2x16xf32, #tpu.memory_space<vmem>>, vector<2x16xf32>,
    %c0_30 = arith.constant 0 : index
    %c0_31 = arith.constant 0 : index
    %39 = vector.load %arg12[%c0_30, %c0_31] : memref<2x3136xf32, #tpu.memory_space<vmem>>, vector<2x3136xf32>
    tpu.vector_store %arg12[%c0_30, %c0_31], %36 {strides = array<i32>} : memref<2x3136xf32, #tpu.memory_space<vmem>>, vector<2x3136xf32>,
    return
  }
}

module attributes {stable_mosaic.version = 11 : i64} {
  func.func @_matmul_bias_act_kernel(%arg0: memref<128x256xf32, #tpu.memory_space<vmem>>, %arg1: memref<256x128xbf16, #tpu.memory_space<vmem>>, %arg2: memref<1x128xf32, #tpu.memory_space<vmem>>, %arg3: memref<128x128xf32, #tpu.memory_space<vmem>>) attributes {dimension_semantics = [], scalar_prefetch = 0 : i64, scratch_operands = 0 : i64, tpu.core_type = #tpu.core_type<tc>} {
    %c0 = arith.constant 0 : index
    %c0_0 = arith.constant 0 : index
    %0 = vector.load %arg0[%c0, %c0_0] : memref<128x256xf32, #tpu.memory_space<vmem>>, vector<128x256xf32>
    %1 = arith.truncf %0 : vector<128x256xf32> to vector<128x256xbf16>
    %c0_1 = arith.constant 0 : index
    %c0_2 = arith.constant 0 : index
    %2 = vector.load %arg1[%c0_1, %c0_2] : memref<256x128xbf16, #tpu.memory_space<vmem>>, vector<256x128xbf16>
    %cst = arith.constant dense<0.000000e+00> : vector<128x128xf32>
    %3 = tpu.matmul %1, %2, %cst {dimension_numbers = #tpu.dot_dimension_numbers<[1], [0], [0], [1], [0, 0, 1, 1], [], []>} : vector<128x256xbf16>, vector<256x128xbf16>, vector<128x128xf32> -> vector<128x128xf32>
    %c0_3 = arith.constant 0 : index
    %c0_4 = arith.constant 0 : index
    %4 = vector.load %arg2[%c0_3, %c0_4] : memref<1x128xf32, #tpu.memory_space<vmem>>, vector<1x128xf32>
    %5 = vector.broadcast %4 : vector<1x128xf32> to vector<128x128xf32>
    %6 = arith.addf %3, %5 : vector<128x128xf32>
    %cst_5 = arith.constant 0.000000e+00 : f32
    %7 = vector.broadcast %cst_5 : f32 to vector<128x128xf32>
    %8 = arith.maximumf %6, %7 : vector<128x128xf32>
    %c0_6 = arith.constant 0 : index
    %c0_7 = arith.constant 0 : index
    %9 = vector.load %arg3[%c0_6, %c0_7] : memref<128x128xf32, #tpu.memory_space<vmem>>, vector<128x128xf32>
    tpu.vector_store %arg3[%c0_6, %c0_7], %8 {strides = array<i32>} : memref<128x128xf32, #tpu.memory_space<vmem>>, vector<128x128xf32>,
    return
  }
}

module attributes {stable_mosaic.version = 11 : i64} {
  func.func @_matmul_t_bias_act_kernel(%arg0: memref<4x128xbf16, #tpu.memory_space<vmem>>, %arg1: memref<128x450xf32, #tpu.memory_space<vmem>>, %arg2: memref<4x1xf32, #tpu.memory_space<vmem>>, %arg3: memref<4x450xf32, #tpu.memory_space<vmem>>) attributes {dimension_semantics = [], scalar_prefetch = 0 : i64, scratch_operands = 0 : i64, tpu.core_type = #tpu.core_type<tc>} {
    %c0 = arith.constant 0 : index
    %c0_0 = arith.constant 0 : index
    %0 = vector.load %arg0[%c0, %c0_0] : memref<4x128xbf16, #tpu.memory_space<vmem>>, vector<4x128xbf16>
    %c0_1 = arith.constant 0 : index
    %c0_2 = arith.constant 0 : index
    %1 = vector.load %arg1[%c0_1, %c0_2] : memref<128x450xf32, #tpu.memory_space<vmem>>, vector<128x450xf32>
    %2 = arith.truncf %1 : vector<128x450xf32> to vector<128x450xbf16>
    %cst = arith.constant dense<0.000000e+00> : vector<4x450xf32>
    %3 = tpu.matmul %0, %2, %cst {dimension_numbers = #tpu.dot_dimension_numbers<[1], [0], [0], [1], [0, 0, 1, 1], [], []>} : vector<4x128xbf16>, vector<128x450xbf16>, vector<4x450xf32> -> vector<4x450xf32>
    %c0_3 = arith.constant 0 : index
    %c0_4 = arith.constant 0 : index
    %4 = vector.load %arg2[%c0_3, %c0_4] : memref<4x1xf32, #tpu.memory_space<vmem>>, vector<4x1xf32>
    %5 = vector.broadcast %4 : vector<4x1xf32> to vector<4x450xf32>
    %6 = arith.addf %3, %5 : vector<4x450xf32>
    %7 = arith.negf %6 : vector<4x450xf32>
    %8 = math.exp %7 : vector<4x450xf32>
    %cst_5 = arith.constant 1.000000e+00 : f32
    %9 = vector.broadcast %cst_5 : f32 to vector<4x450xf32>
    %10 = arith.addf %9, %8 : vector<4x450xf32>
    %11 = arith.divf %9, %10 : vector<4x450xf32>
    %c0_6 = arith.constant 0 : index
    %c0_7 = arith.constant 0 : index
    %12 = vector.load %arg3[%c0_6, %c0_7] : memref<4x450xf32, #tpu.memory_space<vmem>>, vector<4x450xf32>
    tpu.vector_store %arg3[%c0_6, %c0_7], %11 {strides = array<i32>} : memref<4x450xf32, #tpu.memory_space<vmem>>, vector<4x450xf32>,
    return
  }
}

</mosaic_0001>

<llo_original>
// kernel: vae_forward.5
$region0: #{vae_forward.5}
  #allocation0 [shape = 'u32[]', space=smem, size = 0x4, offset = 0x4, fixed_abs, tag = 'smem constant byte address 0x4 - core index']
  #allocation1 [shape = 'u32[144,128]{1,0:T(1,128)}', space=vmem, size = 0x12000, scoped, tag = 'internal scratch']
  %s0 = inlined_call_operand.vmem [shape: f32[392,16], index: 0, kind: input, shape index: {}]
  %s1 = inlined_call_operand.vmem [shape: bf16[16,32], index: 1, kind: input, shape index: {}]
  %s2 = inlined_call_operand.vmem [shape: f32[1,32], index: 2, kind: input, shape index: {}]
  %s3 = inlined_call_operand.vmem [shape: f32[392,32], index: 3, kind: output, shape index: {}]
  %s4 = sld [smem:[#allocation0]]
  $region22: #{vae_forward.5} parent=0
    _
  %s6 = ssub.s32 1, %s4
  %s7 = scalar_select 0, %s6, %s4
  // Predicated region
  $region2: #{vae_forward.5} parent=0 // pred_check
    _
  $region3: #{vae_forward.5} parent=0 // pred_check_branch
    %9 = sbr.rel (0) target = $region5
  $region4: #{vae_forward.5} parent=0 // pred_region
    _
  $region5: #{vae_forward.5} parent=0 // pred_fallthru
    _
  // Predicated region
  $region6: #{vae_forward.5} parent=0 // pred_check
    _
  $region7: #{vae_forward.5} parent=0 // pred_check_branch
    %11 = sbr.rel (0) target = $region9
  $region8: #{vae_forward.5} parent=0 // pred_region
    _
  $region9: #{vae_forward.5} parent=0 // pred_fallthru
    _
  // Predicated region
  $region10: #{vae_forward.5} parent=0 // pred_check
    _
  $region11: #{vae_forward.5} parent=0 // pred_check_branch
    %13 = sbr.rel (0) target = $region13
  $region12: #{vae_forward.5} parent=0 // pred_region
    _
  $region13: #{vae_forward.5} parent=0 // pred_fallthru
    _
  %v15 = vld [vmem:[%s0] sm:$0xff]
  %v16 = vld [vmem:[%s0 + $0x8] sm:$0xff]
  %v17 = vld [vmem:[%s0 + $0x10] sm:$0xff]
  %v18 = vld [vmem:[%s0 + $0x18] sm:$0xff]
  %v19 = vld [vmem:[%s0 + $0x20] sm:$0xff]
  %v20 = vld [vmem:[%s0 + $0x28] sm:$0xff]
  %v21 = vld [vmem:[%s0 + $0x30] sm:$0xff]
  %v22 = vld [vmem:[%s0 + $0x38] sm:$0xff]
  %v23 = vld [vmem:[%s0 + $0x40] sm:$0xff]
  %v24 = vld [vmem:[%s0 + $0x48] sm:$0xff]
  %v25 = vld [vmem:[%s0 + $0x50] sm:$0xff]
  %v26 = vld [vmem:[%s0 + $0x58] sm:$0xff]
  %v27 = vld [vmem:[%s0 + $0x60] sm:$0xff]
  %v28 = vld [vmem:[%s0 + $0x68] sm:$0xff]
  %v29 = vld [vmem:[%s0 + $0x70] sm:$0xff]
  %v30 = vld [vmem:[%s0 + $0x78] sm:$0xff]
  %v31 = vld [vmem:[%s0 + $0x80] sm:$0xff]
  %v32 = vld [vmem:[%s0 + $0x88] sm:$0xff]
  %v33 = vld [vmem:[%s0 + $0x90] sm:$0xff]
  %v34 = vld [vmem:[%s0 + $0x98] sm:$0xff]
  %v35 = vld [vmem:[%s0 + $0xa0] sm:$0xff]
  %v36 = vld [vmem:[%s0 + $0xa8] sm:$0xff]
  %v37 = vld [vmem:[%s0 + $0xb0] sm:$0xff]
  %v38 = vld [vmem:[%s0 + $0xb8] sm:$0xff]
  %v39 = vld [vmem:[%s0 + $0xc0] sm:$0xff]
  %v40 = vld [vmem:[%s0 + $0xc8] sm:$0xff]
  %v41 = vld [vmem:[%s0 + $0xd0] sm:$0xff]
  %v42 = vld [vmem:[%s0 + $0xd8] sm:$0xff]
  %v43 = vld [vmem:[%s0 + $0xe0] sm:$0xff]
  %v44 = vld [vmem:[%s0 + $0xe8] sm:$0xff]
  %v45 = vld [vmem:[%s0 + $0xf0] sm:$0xff]
  %v46 = vld [vmem:[%s0 + $0xf8] sm:$0xff]
  %v47 = vld [vmem:[%s0 + $0x100] sm:$0xff]
  %v48 = vld [vmem:[%s0 + $0x108] sm:$0xff]
  %v49 = vld [vmem:[%s0 + $0x110] sm:$0xff]
  %v50 = vld [vmem:[%s0 + $0x118] sm:$0xff]
  %v51 = vld [vmem:[%s0 + $0x120] sm:$0xff]
  %v52 = vld [vmem:[%s0 + $0x128] sm:$0xff]
  %v53 = vld [vmem:[%s0 + $0x130] sm:$0xff]
  %v54 = vld [vmem:[%s0 + $0x138] sm:$0xff]
  %v55 = vld [vmem:[%s0 + $0x140] sm:$0xff]
  %v56 = vld [vmem:[%s0 + $0x148] sm:$0xff]
  %v57 = vld [vmem:[%s0 + $0x150] sm:$0xff]
  %v58 = vld [vmem:[%s0 + $0x158] sm:$0xff]
  %v59 = vld [vmem:[%s0 + $0x160] sm:$0xff]
  %v60 = vld [vmem:[%s0 + $0x168] sm:$0xff]
  %v61 = vld [vmem:[%s0 + $0x170] sm:$0xff]
  %v62 = vld [vmem:[%s0 + $0x178] sm:$0xff]
  %v63 = vld [vmem:[%s0 + $0x180] sm:$0xff]
  %v64 = vpack.c.bf16 %v16, %v15
  %v65 = vpack.c.bf16 %v18, %v17
  %v66 = vpack.c.bf16 %v20, %v19
  %v67 = vpack.c.bf16 %v22, %v21
  %v68 = vpack.c.bf16 %v24, %v23
  %v69 = vpack.c.bf16 %v26, %v25
  %v70 = vpack.c.bf16 %v28, %v27
  %v71 = vpack.c.bf16 %v30, %v29
  %v72 = vpack.c.bf16 %v32, %v31
  %v73 = vpack.c.bf16 %v34, %v33
  %v74 = vpack.c.bf16 %v36, %v35
  %v75 = vpack.c.bf16 %v38, %v37
  %v76 = vpack.c.bf16 %v40, %v39
  %v77 = vpack.c.bf16 %v42, %v41
  %v78 = vpack.c.bf16 %v44, %v43
  %v79 = vpack.c.bf16 %v46, %v45
  %v80 = vpack.c.bf16 %v48, %v47
  %v81 = vpack.c.bf16 %v50, %v49
  %v82 = vpack.c.bf16 %v52, %v51
  %v83 = vpack.c.bf16 %v54, %v53
  %v84 = vpack.c.bf16 %v56, %v55
  %v85 = vpack.c.bf16 %v58, %v57
  %v86 = vpack.c.bf16 %v60, %v59
  %v87 = vpack.c.bf16 %v62, %v61
  %v88 = vpack.c.bf16 %v63, %v63
  %v89 = vld [vmem:[%s1] sm:$0xf]
  %v90 = vld [vmem:[%s1 + $0x4] sm:$0xf]
  %v91 = vld [vmem:[%s2] sm:$0x1]
  %v93 = vlaneseq
  %v94 = vshrl.u32 %v93, 7
  %v95 = vsub.s32 0, %v94
  %v96 = vrot.slane %v91, %v95
  %v100 = vunpack.c.l.b16 %v89
  %v101 = vunpack.c.l.b16 %v90
  %v102 = vpack.c.b16 %v101, %v100
  %vm104 = vcmask 130048
  %v106 = vsel %vm104, %v64, 0
  %v109 = vsel %vm104, %v65, 0
  %v112 = vsel %vm104, %v66, 0
  %v115 = vsel %vm104, %v67, 0
  %v118 = vsel %vm104, %v68, 0
  %v121 = vsel %vm104, %v69, 0
  %v124 = vsel %vm104, %v70, 0
  %v127 = vsel %vm104, %v71, 0
  %v130 = vsel %vm104, %v72, 0
  %v133 = vsel %vm104, %v73, 0
  %v136 = vsel %vm104, %v74, 0
  %v139 = vsel %vm104, %v75, 0
  %v142 = vsel %vm104, %v76, 0
  %v145 = vsel %vm104, %v77, 0
  %v148 = vsel %vm104, %v78, 0
  %v151 = vsel %vm104, %v79, 0
  %v154 = vsel %vm104, %v80, 0
  %v157 = vsel %vm104, %v81, 0
  %v160 = vsel %vm104, %v82, 0
  %v163 = vsel %vm104, %v83, 0
  %v166 = vsel %vm104, %v84, 0
  %v169 = vsel %vm104, %v85, 0
  %v172 = vsel %vm104, %v86, 0
  %v175 = vsel %vm104, %v87, 0
  %v178 = vsel %vm104, %v88, 0
  %180 = vmatprep.subr.bf16.mxu0 0
  %181 = vmatpush1.bf16.msra.mxu0 0
  %182 = vmatprep.subr.bf16.mxu0 0
  %183 = vmatpush1.bf16.msra.mxu0 0
  %184 = vmatprep.subr.bf16.mxu0 0
  %185 = vmatpush1.bf16.msra.mxu0 0
  %186 = vmatprep.subr.bf16.mxu0 0
  %187 = vmatpush1.bf16.msra.mxu0 0
  %188 = vmatprep.subr.bf16.mxu0 0
  %189 = vmatpush1.bf16.msra.mxu0 0
  %190 = vmatprep.subr.bf16.mxu0 0
  %191 = vmatpush1.bf16.msra.mxu0 0
  %192 = vmatprep.subr.bf16.mxu0 0
  %193 = vmatpush1.bf16.msra.mxu0 0
  %194 = vmatprep.subr.bf16.mxu0 0
  %195 = vmatpush1.bf16.msra.mxu0 %v102
  %196 = vmatprep.subr.bf16.mxu0 0
  %197 = vmatpush2.bf16.msra.mxu0 0
  %198 = vmatprep.subr.bf16.mxu0 0
  %199 = vmatpush2.bf16.msra.mxu0 0
  %200 = vmatprep.subr.bf16.mxu0 0
  %201 = vmatpush2.bf16.msra.mxu0 0
  %202 = vmatprep.subr.bf16.mxu0 0
  %203 = vmatpush2.bf16.msra.mxu0 0
  %204 = vmatprep.subr.bf16.mxu0 0
  %205 = vmatpush2.bf16.msra.mxu0 0
  %206 = vmatprep.subr.bf16.mxu0 0
  %207 = vmatpush2.bf16.msra.mxu0 0
  %208 = vmatprep.subr.bf16.mxu0 0
  %209 = vmatpush2.bf16.msra.mxu0 0
  %210 = vmatprep.subr.bf16.mxu0 0
  %211 = vmatpush2.bf16.msra.mxu0 0
  %212 = vmatprep.mubr.bf16.mxu0 0
  %213 = vmatmul.mubr.bf16.gmra.mxu0 %v106
  %v214 = vpop.f32.mrf.mxu0
  %v215 = vadd.f32 %v96, %v214
  %v216 = vpop.f32.mrf.mxu0
  %v217 = vpop.f32.mrf.mxu0
  %v218 = vadd.f32 %v96, %v217
  %v219 = vpop.f32.mrf.mxu0
  %220 = vmatprep.mubr.bf16.mxu0 0
  %221 = vmatmul.mubr.bf16.gmra.mxu0 %v109
  %v222 = vpop.f32.mrf.mxu0
  %v223 = vadd.f32 %v96, %v222
  %v224 = vpop.f32.mrf.mxu0
  %v225 = vpop.f32.mrf.mxu0
  %v226 = vadd.f32 %v96, %v225
  %v227 = vpop.f32.mrf.mxu0
  %228 = vmatprep.mubr.bf16.mxu0 0
  %229 = vmatmul.mubr.bf16.gmra.mxu0 %v112
  %v230 = vpop.f32.mrf.mxu0
  %v231 = vadd.f32 %v96, %v230
  %v232 = vpop.f32.mrf.mxu0
  %v233 = vpop.f32.mrf.mxu0
  %v234 = vadd.f32 %v96, %v233
  %v235 = vpop.f32.mrf.mxu0
  %236 = vmatprep.mubr.bf16.mxu0 0
  %237 = vmatmul.mubr.bf16.gmra.mxu0 %v115
  %v238 = vpop.f32.mrf.mxu0
  %v239 = vadd.f32 %v96, %v238
  %v240 = vpop.f32.mrf.mxu0
  %v241 = vpop.f32.mrf.mxu0
  %v242 = vadd.f32 %v96, %v241
  %v243 = vpop.f32.mrf.mxu0
  %244 = vmatprep.mubr.bf16.mxu0 0
  %245 = vmatmul.mubr.bf16.gmra.mxu0 %v118
  %v246 = vpop.f32.mrf.mxu0
  %v247 = vadd.f32 %v96, %v246
  %v248 = vpop.f32.mrf.mxu0
  %v249 = vpop.f32.mrf.mxu0
  %v250 = vadd.f32 %v96, %v249
  %v251 = vpop.f32.mrf.mxu0
  %252 = vmatprep.mubr.bf16.mxu0 0
  %253 = vmatmul.mubr.bf16.gmra.mxu0 %v121
  %v254 = vpop.f32.mrf.mxu0
  %v255 = vadd.f32 %v96, %v254
  %v256 = vpop.f32.mrf.mxu0
  %v257 = vpop.f32.mrf.mxu0
  %v258 = vadd.f32 %v96, %v257
  %v259 = vpop.f32.mrf.mxu0
  %260 = vmatprep.mubr.bf16.mxu0 0
  %261 = vmatmul.mubr.bf16.gmra.mxu0 %v124
  %v262 = vpop.f32.mrf.mxu0
  %v263 = vadd.f32 %v96, %v262
  %v264 = vpop.f32.mrf.mxu0
  %v265 = vpop.f32.mrf.mxu0
  %v266 = vadd.f32 %v96, %v265
  %v267 = vpop.f32.mrf.mxu0
  %268 = vmatprep.mubr.bf16.mxu0 0
  %269 = vmatmul.mubr.bf16.gmra.mxu0 %v127
  %v270 = vpop.f32.mrf.mxu0
  %v271 = vadd.f32 %v96, %v270
  %v272 = vpop.f32.mrf.mxu0
  %v273 = vpop.f32.mrf.mxu0
  %v274 = vadd.f32 %v96, %v273
  %v275 = vpop.f32.mrf.mxu0
  %276 = vmatprep.mubr.bf16.mxu0 0
  %277 = vmatmul.mubr.bf16.gmra.mxu0 %v130
  %v278 = vpop.f32.mrf.mxu0
  %v279 = vadd.f32 %v96, %v278
  %v280 = vpop.f32.mrf.mxu0
  %v281 = vpop.f32.mrf.mxu0
  %v282 = vadd.f32 %v96, %v281
  %v283 = vpop.f32.mrf.mxu0
  %284 = vmatprep.mubr.bf16.mxu0 0
  %285 = vmatmul.mubr.bf16.gmra.mxu0 %v133
  %v286 = vpop.f32.mrf.mxu0
  %v287 = vadd.f32 %v96, %v286
  %v288 = vpop.f32.mrf.mxu0
  %v289 = vpop.f32.mrf.mxu0
  %v290 = vadd.f32 %v96, %v289
  %v291 = vpop.f32.mrf.mxu0
  %292 = vmatprep.mubr.bf16.mxu0 0
  %293 = vmatmul.mubr.bf16.gmra.mxu0 %v136
  %v294 = vpop.f32.mrf.mxu0
  %v295 = vadd.f32 %v96, %v294
  %v296 = vpop.f32.mrf.mxu0
  %v297 = vpop.f32.mrf.mxu0
  %v298 = vadd.f32 %v96, %v297
  %v299 = vpop.f32.mrf.mxu0
  %300 = vmatprep.mubr.bf16.mxu0 0
  %301 = vmatmul.mubr.bf16.gmra.mxu0 %v139
  %v302 = vpop.f32.mrf.mxu0
  %v303 = vadd.f32 %v96, %v302
  %v304 = vpop.f32.mrf.mxu0
  %v305 = vpop.f32.mrf.mxu0
  %v306 = vadd.f32 %v96, %v305
  %v307 = vpop.f32.mrf.mxu0
  %308 = vmatprep.mubr.bf16.mxu0 0
  %309 = vmatmul.mubr.bf16.gmra.mxu0 %v142
  %v310 = vpop.f32.mrf.mxu0
  %v311 = vadd.f32 %v96, %v310
  %v312 = vpop.f32.mrf.mxu0
  %v313 = vpop.f32.mrf.mxu0
  %v314 = vadd.f32 %v96, %v313
  %v315 = vpop.f32.mrf.mxu0
  %316 = vmatprep.mubr.bf16.mxu0 0
  %317 = vmatmul.mubr.bf16.gmra.mxu0 %v145
  %v318 = vpop.f32.mrf.mxu0
  %v319 = vadd.f32 %v96, %v318
  %v320 = vpop.f32.mrf.mxu0
  %v321 = vpop.f32.mrf.mxu0
  %v322 = vadd.f32 %v96, %v321
  %v323 = vpop.f32.mrf.mxu0
  %324 = vmatprep.mubr.bf16.mxu0 0
  %325 = vmatmul.mubr.bf16.gmra.mxu0 %v148
  %v326 = vpop.f32.mrf.mxu0
  %v327 = vadd.f32 %v96, %v326
  %v328 = vpop.f32.mrf.mxu0
  %v329 = vpop.f32.mrf.mxu0
  %v330 = vadd.f32 %v96, %v329
  %v331 = vpop.f32.mrf.mxu0
  %332 = vmatprep.mubr.bf16.mxu0 0
  %333 = vmatmul.mubr.bf16.gmra.mxu0 %v151
  %v334 = vpop.f32.mrf.mxu0
  %v335 = vadd.f32 %v96, %v334
  %v336 = vpop.f32.mrf.mxu0
  %v337 = vpop.f32.mrf.mxu0
  %v338 = vadd.f32 %v96, %v337
  %v339 = vpop.f32.mrf.mxu0
  %340 = vmatprep.mubr.bf16.mxu0 0
  %341 = vmatmul.mubr.bf16.gmra.mxu0 %v154
  %v342 = vpop.f32.mrf.mxu0
  %v343 = vadd.f32 %v96, %v342
  %v344 = vpop.f32.mrf.mxu0
  %v345 = vpop.f32.mrf.mxu0
  %v346 = vadd.f32 %v96, %v345
  %v347 = vpop.f32.mrf.mxu0
  %348 = vmatprep.mubr.bf16.mxu0 0
  %349 = vmatmul.mubr.bf16.gmra.mxu0 %v157
  %v350 = vpop.f32.mrf.mxu0
  %v351 = vadd.f32 %v96, %v350
  %v352 = vpop.f32.mrf.mxu0
  %v353 = vpop.f32.mrf.mxu0
  %v354 = vadd.f32 %v96, %v353
  %v355 = vpop.f32.mrf.mxu0
  %356 = vmatprep.mubr.bf16.mxu0 0
  %357 = vmatmul.mubr.bf16.gmra.mxu0 %v160
  %v358 = vpop.f32.mrf.mxu0
  %v359 = vadd.f32 %v96, %v358
  %v360 = vpop.f32.mrf.mxu0
  %v361 = vpop.f32.mrf.mxu0
  %v362 = vadd.f32 %v96, %v361
  %v363 = vpop.f32.mrf.mxu0
  %364 = vmatprep.mubr.bf16.mxu0 0
  %365 = vmatmul.mubr.bf16.gmra.mxu0 %v163
  %v366 = vpop.f32.mrf.mxu0
  %v367 = vadd.f32 %v96, %v366
  %v368 = vpop.f32.mrf.mxu0
  %v369 = vpop.f32.mrf.mxu0
  %v370 = vadd.f32 %v96, %v369
  %v371 = vpop.f32.mrf.mxu0
  %372 = vmatprep.mubr.bf16.mxu0 0
  %373 = vmatmul.mubr.bf16.gmra.mxu0 %v166
  %v374 = vpop.f32.mrf.mxu0
  %v375 = vadd.f32 %v96, %v374
  %v376 = vpop.f32.mrf.mxu0
  %v377 = vpop.f32.mrf.mxu0
  %v378 = vadd.f32 %v96, %v377
  %v379 = vpop.f32.mrf.mxu0
  %380 = vmatprep.mubr.bf16.mxu0 0
  %381 = vmatmul.mubr.bf16.gmra.mxu0 %v169
  %v382 = vpop.f32.mrf.mxu0
  %v383 = vadd.f32 %v96, %v382
  %v384 = vpop.f32.mrf.mxu0
  %v385 = vpop.f32.mrf.mxu0
  %v386 = vadd.f32 %v96, %v385
  %v387 = vpop.f32.mrf.mxu0
  %388 = vmatprep.mubr.bf16.mxu0 0
  %389 = vmatmul.mubr.bf16.gmra.mxu0 %v172
  %v390 = vpop.f32.mrf.mxu0
  %v391 = vadd.f32 %v96, %v390
  %v392 = vpop.f32.mrf.mxu0
  %v393 = vpop.f32.mrf.mxu0
  %v394 = vadd.f32 %v96, %v393
  %v395 = vpop.f32.mrf.mxu0
  %396 = vmatprep.mubr.bf16.mxu0 0
  %397 = vmatmul.mubr.bf16.gmra.mxu0 %v175
  %v398 = vpop.f32.mrf.mxu0
  %v399 = vadd.f32 %v96, %v398
  %v400 = vpop.f32.mrf.mxu0
  %v401 = vpop.f32.mrf.mxu0
  %v402 = vadd.f32 %v96, %v401
  %v403 = vpop.f32.mrf.mxu0
  %404 = vmatprep.mubr.bf16.mxu0 0
  %405 = vmatmul.mubr.bf16.gmra.mxu0 %v178
  %v406 = vpop.f32.mrf.mxu0
  %v407 = vadd.f32 %v96, %v406
  %v408 = vpop.f32.mrf.mxu0
  %v409 = vpop.f32.mrf.mxu0
  %v410 = vpop.f32.mrf.mxu0
  %411 = vdwg.mxu0
  %v412 = vmax.f32 %v215, 0.0
  %v413 = vmax.f32 %v218, 0.0
  %v414 = vmax.f32 %v223, 0.0
  %v415 = vmax.f32 %v226, 0.0
  %v416 = vmax.f32 %v231, 0.0
  %v417 = vmax.f32 %v234, 0.0
  %v418 = vmax.f32 %v239, 0.0
  %v419 = vmax.f32 %v242, 0.0
  %v420 = vmax.f32 %v247, 0.0
  %v421 = vmax.f32 %v250, 0.0
  %v422 = vmax.f32 %v255, 0.0
  %v423 = vmax.f32 %v258, 0.0
  %v424 = vmax.f32 %v263, 0.0
  %v425 = vmax.f32 %v266, 0.0
  %v426 = vmax.f32 %v271, 0.0
  %v427 = vmax.f32 %v274, 0.0
  %v428 = vmax.f32 %v279, 0.0
  %v429 = vmax.f32 %v282, 0.0
  %v430 = vmax.f32 %v287, 0.0
  %v431 = vmax.f32 %v290, 0.0
  %v432 = vmax.f32 %v295, 0.0
  %v433 = vmax.f32 %v298, 0.0
  %v434 = vmax.f32 %v303, 0.0
  %v435 = vmax.f32 %v306, 0.0
  %v436 = vmax.f32 %v311, 0.0
  %v437 = vmax.f32 %v314, 0.0
  %v438 = vmax.f32 %v319, 0.0
  %v439 = vmax.f32 %v322, 0.0
  %v440 = vmax.f32 %v327, 0.0
  %v441 = vmax.f32 %v330, 0.0
  %v442 = vmax.f32 %v335, 0.0
  %v443 = vmax.f32 %v338, 0.0
  %v444 = vmax.f32 %v343, 0.0
  %v445 = vmax.f32 %v346, 0.0
  %v446 = vmax.f32 %v351, 0.0
  %v447 = vmax.f32 %v354, 0.0
  %v448 = vmax.f32 %v359, 0.0
  %v449 = vmax.f32 %v362, 0.0
  %v450 = vmax.f32 %v367, 0.0
  %v451 = vmax.f32 %v370, 0.0
  %v452 = vmax.f32 %v375, 0.0
  %v453 = vmax.f32 %v378, 0.0
  %v454 = vmax.f32 %v383, 0.0
  %v455 = vmax.f32 %v386, 0.0
  %v456 = vmax.f32 %v391, 0.0
  %v457 = vmax.f32 %v394, 0.0
  %v458 = vmax.f32 %v399, 0.0
  %v459 = vmax.f32 %v402, 0.0
  %v460 = vmax.f32 %v407, 0.0
  %vm461 = vcmask 261120
  %462 = vst.msk [vmem:[%s3] sm:$0xff] %vm461, %v412
  %463 = vst.msk [vmem:[%s3 + $0x8] sm:$0xff] %vm461, %v413
  %464 = vst.msk [vmem:[%s3 + $0x10] sm:$0xff] %vm461, %v414
  %465 = vst.msk [vmem:[%s3 + $0x18] sm:$0xff] %vm461, %v415
  %466 = vst.msk [vmem:[%s3 + $0x20] sm:$0xff] %vm461, %v416
  %467 = vst.msk [vmem:[%s3 + $0x28] sm:$0xff] %vm461, %v417
  %468 = vst.msk [vmem:[%s3 + $0x30] sm:$0xff] %vm461, %v418
  %469 = vst.msk [vmem:[%s3 + $0x38] sm:$0xff] %vm461, %v419
  %470 = vst.msk [vmem:[%s3 + $0x40] sm:$0xff] %vm461, %v420
  %471 = vst.msk [vmem:[%s3 + $0x48] sm:$0xff] %vm461, %v421
  %472 = vst.msk [vmem:[%s3 + $0x50] sm:$0xff] %vm461, %v422
  %473 = vst.msk [vmem:[%s3 + $0x58] sm:$0xff] %vm461, %v423
  %474 = vst.msk [vmem:[%s3 + $0x60] sm:$0xff] %vm461, %v424
  %475 = vst.msk [vmem:[%s3 + $0x68] sm:$0xff] %vm461, %v425
  %476 = vst.msk [vmem:[%s3 + $0x70] sm:$0xff] %vm461, %v426
  %477 = vst.msk [vmem:[%s3 + $0x78] sm:$0xff] %vm461, %v427
  %478 = vst.msk [vmem:[%s3 + $0x80] sm:$0xff] %vm461, %v428
  %479 = vst.msk [vmem:[%s3 + $0x88] sm:$0xff] %vm461, %v429
  %480 = vst.msk [vmem:[%s3 + $0x90] sm:$0xff] %vm461, %v430
  %481 = vst.msk [vmem:[%s3 + $0x98] sm:$0xff] %vm461, %v431
  %482 = vst.msk [vmem:[%s3 + $0xa0] sm:$0xff] %vm461, %v432
  %483 = vst.msk [vmem:[%s3 + $0xa8] sm:$0xff] %vm461, %v433
  %484 = vst.msk [vmem:[%s3 + $0xb0] sm:$0xff] %vm461, %v434
  %485 = vst.msk [vmem:[%s3 + $0xb8] sm:$0xff] %vm461, %v435
  %486 = vst.msk [vmem:[%s3 + $0xc0] sm:$0xff] %vm461, %v436
  %487 = vst.msk [vmem:[%s3 + $0xc8] sm:$0xff] %vm461, %v437
  %488 = vst.msk [vmem:[%s3 + $0xd0] sm:$0xff] %vm461, %v438
  %489 = vst.msk [vmem:[%s3 + $0xd8] sm:$0xff] %vm461, %v439
  %490 = vst.msk [vmem:[%s3 + $0xe0] sm:$0xff] %vm461, %v440
  %491 = vst.msk [vmem:[%s3 + $0xe8] sm:$0xff] %vm461, %v441
  %492 = vst.msk [vmem:[%s3 + $0xf0] sm:$0xff] %vm461, %v442
  %493 = vst.msk [vmem:[%s3 + $0xf8] sm:$0xff] %vm461, %v443
  %494 = vst.msk [vmem:[%s3 + $0x100] sm:$0xff] %vm461, %v444
  %495 = vst.msk [vmem:[%s3 + $0x108] sm:$0xff] %vm461, %v445
  %496 = vst.msk [vmem:[%s3 + $0x110] sm:$0xff] %vm461, %v446
  %497 = vst.msk [vmem:[%s3 + $0x118] sm:$0xff] %vm461, %v447
  %498 = vst.msk [vmem:[%s3 + $0x120] sm:$0xff] %vm461, %v448
  %499 = vst.msk [vmem:[%s3 + $0x128] sm:$0xff] %vm461, %v449
  %500 = vst.msk [vmem:[%s3 + $0x130] sm:$0xff] %vm461, %v450
  %501 = vst.msk [vmem:[%s3 + $0x138] sm:$0xff] %vm461, %v451
  %502 = vst.msk [vmem:[%s3 + $0x140] sm:$0xff] %vm461, %v452
  %503 = vst.msk [vmem:[%s3 + $0x148] sm:$0xff] %vm461, %v453
  %504 = vst.msk [vmem:[%s3 + $0x150] sm:$0xff] %vm461, %v454
  %505 = vst.msk [vmem:[%s3 + $0x158] sm:$0xff] %vm461, %v455
  %506 = vst.msk [vmem:[%s3 + $0x160] sm:$0xff] %vm461, %v456
  %507 = vst.msk [vmem:[%s3 + $0x168] sm:$0xff] %vm461, %v457
  %508 = vst.msk [vmem:[%s3 + $0x170] sm:$0xff] %vm461, %v458
  %509 = vst.msk [vmem:[%s3 + $0x178] sm:$0xff] %vm461, %v459
  %510 = vst.msk [vmem:[%s3 + $0x180] sm:$0xff] %vm461, %v460
  // Predicated region
  $region14: #{vae_forward.5} parent=0 // pred_check
    _
  $region15: #{vae_forward.5} parent=0 // pred_check_branch
    %512 = sbr.rel (0) target = $region17
  $region16: #{vae_forward.5} parent=0 // pred_region
    _
  $region17: #{vae_forward.5} parent=0 // pred_fallthru
    _
  // Predicated region
  $region18: #{vae_forward.5} parent=0 // pred_check
    _
  $region19: #{vae_forward.5} parent=0 // pred_check_branch
    %514 = sbr.rel (0) target = $region21
  $region20: #{vae_forward.5} parent=0 // pred_region
    _
  $region21: #{vae_forward.5} parent=0 // pred_fallthru
    _

// kernel: vae_forward.6
$region0: #{vae_forward.6}
  #allocation0 [shape = 'u32[]', space=smem, size = 0x4, offset = 0x4, fixed_abs, tag = 'smem constant byte address 0x4 - core index']
  #allocation1 [shape = 'u32[144,128]{1,0:T(1,128)}', space=vmem, size = 0x12000, scoped, tag = 'internal scratch']
  %s0 = inlined_call_operand.vmem [shape: f32[98,512], index: 0, kind: input, shape index: {}]
  %s1 = inlined_call_operand.vmem [shape: bf16[512,64], index: 1, kind: input, shape index: {}]
  %s2 = inlined_call_operand.vmem [shape: f32[1,64], index: 2, kind: input, shape index: {}]
  %s3 = inlined_call_operand.vmem [shape: f32[98,64], index: 3, kind: output, shape index: {}]
  %s4 = sld [smem:[#allocation0]]
  $region22: #{vae_forward.6} parent=0
    _
  %s6 = ssub.s32 1, %s4
  %s7 = scalar_select 0, %s6, %s4
  // Predicated region
  $region2: #{vae_forward.6} parent=0 // pred_check
    _
  $region3: #{vae_forward.6} parent=0 // pred_check_branch
    %9 = sbr.rel (0) target = $region5
  $region4: #{vae_forward.6} parent=0 // pred_region
    _
  $region5: #{vae_forward.6} parent=0 // pred_fallthru
    _
  // Predicated region
  $region6: #{vae_forward.6} parent=0 // pred_check
    _
  $region7: #{vae_forward.6} parent=0 // pred_check_branch
    %11 = sbr.rel (0) target = $region9
  $region8: #{vae_forward.6} parent=0 // pred_region
    _
  $region9: #{vae_forward.6} parent=0 // pred_fallthru
    _
  // Predicated region
  $region10: #{vae_forward.6} parent=0 // pred_check
    _
  $region11: #{vae_forward.6} parent=0 // pred_check_branch
    %13 = sbr.rel (0) target = $region13
  $region12: #{vae_forward.6} parent=0 // pred_region
    _
  $region13: #{vae_forward.6} parent=0 // pred_fallthru
    _
  %v15 = vld [vmem:[%s0] sm:$0xff]
  %v16 = vld [vmem:[%s0 + $0x8] sm:$0xff]
  %v17 = vld [vmem:[%s0 + $0x10] sm:$0xff]
  %v18 = vld [vmem:[%s0 + $0x18] sm:$0xff]
  %v19 = vld [vmem:[%s0 + $0x20] sm:$0xff]
  %v20 = vld [vmem:[%s0 + $0x28] sm:$0xff]
  %v21 = vld [vmem:[%s0 + $0x30] sm:$0xff]
  %v22 = vld [vmem:[%s0 + $0x38] sm:$0xff]
  %v23 = vld [vmem:[%s0 + $0x40] sm:$0xff]
  %v24 = vld [vmem:[%s0 + $0x48] sm:$0xff]
  %v25 = vld [vmem:[%s0 + $0x50] sm:$0xff]
  %v26 = vld [vmem:[%s0 + $0x58] sm:$0xff]
  %v27 = vld [vmem:[%s0 + $0x60] sm:$0xff]
  %v28 = vld [vmem:[%s0 + $0x68] sm:$0xff]
  %v29 = vld [vmem:[%s0 + $0x70] sm:$0xff]
  %v30 = vld [vmem:[%s0 + $0x78] sm:$0xff]
  %v31 = vld [vmem:[%s0 + $0x80] sm:$0xff]
  %v32 = vld [vmem:[%s0 + $0x88] sm:$0xff]
  %v33 = vld [vmem:[%s0 + $0x90] sm:$0xff]
  %v34 = vld [vmem:[%s0 + $0x98] sm:$0xff]
  %v35 = vld [vmem:[%s0 + $0xa0] sm:$0xff]
  %v36 = vld [vmem:[%s0 + $0xa8] sm:$0xff]
  %v37 = vld [vmem:[%s0 + $0xb0] sm:$0xff]
  %v38 = vld [vmem:[%s0 + $0xb8] sm:$0xff]
  %v39 = vld [vmem:[%s0 + $0xc0] sm:$0xff]
  %v40 = vld [vmem:[%s0 + $0xc8] sm:$0xff]
  %v41 = vld [vmem:[%s0 + $0xd0] sm:$0xff]
  %v42 = vld [vmem:[%s0 + $0xd8] sm:$0xff]
  %v43 = vld [vmem:[%s0 + $0xe0] sm:$0xff]
  %v44 = vld [vmem:[%s0 + $0xe8] sm:$0xff]
  %v45 = vld [vmem:[%s0 + $0xf0] sm:$0xff]
  %v46 = vld [vmem:[%s0 + $0xf8] sm:$0xff]
  %v47 = vld [vmem:[%s0 + $0x100] sm:$0xff]
  %v48 = vld [vmem:[%s0 + $0x108] sm:$0xff]
  %v49 = vld [vmem:[%s0 + $0x110] sm:$0xff]
  %v50 = vld [vmem:[%s0 + $0x118] sm:$0xff]
  %v51 = vld [vmem:[%s0 + $0x120] sm:$0xff]
  %v52 = vld [vmem:[%s0 + $0x128] sm:$0xff]
  %v53 = vld [vmem:[%s0 + $0x130] sm:$0xff]
  %v54 = vld [vmem:[%s0 + $0x138] sm:$0xff]
  %v55 = vld [vmem:[%s0 + $0x140] sm:$0xff]
  %v56 = vld [vmem:[%s0 + $0x148] sm:$0xff]
  %v57 = vld [vmem:[%s0 + $0x150] sm:$0xff]
  %v58 = vld [vmem:[%s0 + $0x158] sm:$0xff]
  %v59 = vld [vmem:[%s0 + $0x160] sm:$0xff]
  %v60 = vld [vmem:[%s0 + $0x168] sm:$0xff]
  %v61 = vld [vmem:[%s0 + $0x170] sm:$0xff]
  %v62 = vld [vmem:[%s0 + $0x178] sm:$0xff]
  %v63 = vld [vmem:[%s0 + $0x180] sm:$0x3]
  %v64 = vld [vmem:[%s0 + $0x188] sm:$0x3]
  %v65 = vld [vmem:[%s0 + $0x190] sm:$0x3]
  %v66 = vld [vmem:[%s0 + $0x198] sm:$0x3]
  %v67 = vpack.c.bf16 %v19, %v15
  %v68 = vpack.c.bf16 %v20, %v16
  %v69 = vpack.c.bf16 %v21, %v17
  %v70 = vpack.c.bf16 %v22, %v18
  %v71 = vpack.c.bf16 %v27, %v23
  %v72 = vpack.c.bf16 %v28, %v24
  %v73 = vpack.c.bf16 %v29, %v25
  %v74 = vpack.c.bf16 %v30, %v26
  %v75 = vpack.c.bf16 %v35, %v31
  %v76 = vpack.c.bf16 %v36, %v32
  %v77 = vpack.c.bf16 %v37, %v33
  %v78 = vpack.c.bf16 %v38, %v34
  %v79 = vpack.c.bf16 %v43, %v39
  %v80 = vpack.c.bf16 %v44, %v40
  %v81 = vpack.c.bf16 %v45, %v41
  %v82 = vpack.c.bf16 %v46, %v42
  %v83 = vpack.c.bf16 %v51, %v47
  %v84 = vpack.c.bf16 %v52, %v48
  %v85 = vpack.c.bf16 %v53, %v49
  %v86 = vpack.c.bf16 %v54, %v50
  %v87 = vpack.c.bf16 %v59, %v55
  %v88 = vpack.c.bf16 %v60, %v56
  %v89 = vpack.c.bf16 %v61, %v57
  %v90 = vpack.c.bf16 %v62, %v58
  %v91 = vpack.c.bf16 %v63, %v63
  %v92 = vpack.c.bf16 %v64, %v64
  %v93 = vpack.c.bf16 %v65, %v65
  %v94 = vpack.c.bf16 %v66, %v66
  %v95 = vld [vmem:[%s1] sm:$0xf]
  %v96 = vld [vmem:[%s1 + $0x4] sm:$0xf]
  %v97 = vld [vmem:[%s1 + $0x8] sm:$0xf]
  %v98 = vld [vmem:[%s1 + $0xc] sm:$0xf]
  %v99 = vld [vmem:[%s1 + $0x10] sm:$0xf]
  %v100 = vld [vmem:[%s1 + $0x14] sm:$0xf]
  %v101 = vld [vmem:[%s1 + $0x18] sm:$0xf]
  %v102 = vld [vmem:[%s1 + $0x1c] sm:$0xf]
  %v103 = vld [vmem:[%s1 + $0x20] sm:$0xf]
  %v104 = vld [vmem:[%s1 + $0x24] sm:$0xf]
  %v105 = vld [vmem:[%s1 + $0x28] sm:$0xf]
  %v106 = vld [vmem:[%s1 + $0x2c] sm:$0xf]
  %v107 = vld [vmem:[%s1 + $0x30] sm:$0xf]
  %v108 = vld [vmem:[%s1 + $0x34] sm:$0xf]
  %v109 = vld [vmem:[%s1 + $0x38] sm:$0xf]
  %v110 = vld [vmem:[%s1 + $0x3c] sm:$0xf]
  %v111 = vld [vmem:[%s1 + $0x40] sm:$0xf]
  %v112 = vld [vmem:[%s1 + $0x44] sm:$0xf]
  %v113 = vld [vmem:[%s1 + $0x48] sm:$0xf]
  %v114 = vld [vmem:[%s1 + $0x4c] sm:$0xf]
  %v115 = vld [vmem:[%s1 + $0x50] sm:$0xf]
  %v116 = vld [vmem:[%s1 + $0x54] sm:$0xf]
  %v117 = vld [vmem:[%s1 + $0x58] sm:$0xf]
  %v118 = vld [vmem:[%s1 + $0x5c] sm:$0xf]
  %v119 = vld [vmem:[%s1 + $0x60] sm:$0xf]
  %v120 = vld [vmem:[%s1 + $0x64] sm:$0xf]
  %v121 = vld [vmem:[%s1 + $0x68] sm:$0xf]
  %v122 = vld [vmem:[%s1 + $0x6c] sm:$0xf]
  %v123 = vld [vmem:[%s1 + $0x70] sm:$0xf]
  %v124 = vld [vmem:[%s1 + $0x74] sm:$0xf]
  %v125 = vld [vmem:[%s1 + $0x78] sm:$0xf]
  %v126 = vld [vmem:[%s1 + $0x7c] sm:$0xf]
  %v127 = vld [vmem:[%s1 + $0x80] sm:$0xf]
  %v128 = vld [vmem:[%s1 + $0x84] sm:$0xf]
  %v129 = vld [vmem:[%s1 + $0x88] sm:$0xf]
  %v130 = vld [vmem:[%s1 + $0x8c] sm:$0xf]
  %v131 = vld [vmem:[%s1 + $0x90] sm:$0xf]
  %v132 = vld [vmem:[%s1 + $0x94] sm:$0xf]
  %v133 = vld [vmem:[%s1 + $0x98] sm:$0xf]
  %v134 = vld [vmem:[%s1 + $0x9c] sm:$0xf]
  %v135 = vld [vmem:[%s1 + $0xa0] sm:$0xf]
  %v136 = vld [vmem:[%s1 + $0xa4] sm:$0xf]
  %v137 = vld [vmem:[%s1 + $0xa8] sm:$0xf]
  %v138 = vld [vmem:[%s1 + $0xac] sm:$0xf]
  %v139 = vld [vmem:[%s1 + $0xb0] sm:$0xf]
  %v140 = vld [vmem:[%s1 + $0xb4] sm:$0xf]
  %v141 = vld [vmem:[%s1 + $0xb8] sm:$0xf]
  %v142 = vld [vmem:[%s1 + $0xbc] sm:$0xf]
  %v143 = vld [vmem:[%s1 + $0xc0] sm:$0xf]
  %v144 = vld [vmem:[%s1 + $0xc4] sm:$0xf]
  %v145 = vld [vmem:[%s1 + $0xc8] sm:$0xf]
  %v146 = vld [vmem:[%s1 + $0xcc] sm:$0xf]
  %v147 = vld [vmem:[%s1 + $0xd0] sm:$0xf]
  %v148 = vld [vmem:[%s1 + $0xd4] sm:$0xf]
  %v149 = vld [vmem:[%s1 + $0xd8] sm:$0xf]
  %v150 = vld [vmem:[%s1 + $0xdc] sm:$0xf]
  %v151 = vld [vmem:[%s1 + $0xe0] sm:$0xf]
  %v152 = vld [vmem:[%s1 + $0xe4] sm:$0xf]
  %v153 = vld [vmem:[%s1 + $0xe8] sm:$0xf]
  %v154 = vld [vmem:[%s1 + $0xec] sm:$0xf]
  %v155 = vld [vmem:[%s1 + $0xf0] sm:$0xf]
  %v156 = vld [vmem:[%s1 + $0xf4] sm:$0xf]
  %v157 = vld [vmem:[%s1 + $0xf8] sm:$0xf]
  %v158 = vld [vmem:[%s1 + $0xfc] sm:$0xf]
  %v159 = vld [vmem:[%s2] sm:$0x1]
  %v161 = vlaneseq
  %v162 = vshrl.u32 %v161, 7
  %v163 = vsub.s32 0, %v162
  %v164 = vrot.slane %v159, %v163
  %v230 = vunpack.c.l.b16 %v95
  %v231 = vunpack.c.l.b16 %v96
  %v232 = vunpack.c.l.b16 %v97
  %v233 = vunpack.c.l.b16 %v98
  %v234 = vunpack.c.l.b16 %v99
  %v235 = vunpack.c.l.b16 %v100
  %v236 = vunpack.c.l.b16 %v101
  %v237 = vunpack.c.l.b16 %v102
  %v238 = vunpack.c.l.b16 %v103
  %v239 = vunpack.c.l.b16 %v104
  %v240 = vunpack.c.l.b16 %v105
  %v241 = vunpack.c.l.b16 %v106
  %v242 = vunpack.c.l.b16 %v107
  %v243 = vunpack.c.l.b16 %v108
  %v244 = vunpack.c.l.b16 %v109
  %v245 = vunpack.c.l.b16 %v110
  %v246 = vunpack.c.l.b16 %v111
  %v247 = vunpack.c.l.b16 %v112
  %v248 = vunpack.c.l.b16 %v113
  %v249 = vunpack.c.l.b16 %v114
  %v250 = vunpack.c.l.b16 %v115
  %v251 = vunpack.c.l.b16 %v116
  %v252 = vunpack.c.l.b16 %v117
  %v253 = vunpack.c.l.b16 %v118
  %v254 = vunpack.c.l.b16 %v119
  %v255 = vunpack.c.l.b16 %v120
  %v256 = vunpack.c.l.b16 %v121
  %v257 = vunpack.c.l.b16 %v122
  %v258 = vunpack.c.l.b16 %v123
  %v259 = vunpack.c.l.b16 %v124
  %v260 = vunpack.c.l.b16 %v125
  %v261 = vunpack.c.l.b16 %v126
  %v262 = vunpack.c.l.b16 %v127
  %v263 = vunpack.c.l.b16 %v128
  %v264 = vunpack.c.l.b16 %v129
  %v265 = vunpack.c.l.b16 %v130
  %v266 = vunpack.c.l.b16 %v131
  %v267 = vunpack.c.l.b16 %v132
  %v268 = vunpack.c.l.b16 %v133
  %v269 = vunpack.c.l.b16 %v134
  %v270 = vunpack.c.l.b16 %v135
  %v271 = vunpack.c.l.b16 %v136
  %v272 = vunpack.c.l.b16 %v137
  %v273 = vunpack.c.l.b16 %v138
  %v274 = vunpack.c.l.b16 %v139
  %v275 = vunpack.c.l.b16 %v140
  %v276 = vunpack.c.l.b16 %v141
  %v277 = vunpack.c.l.b16 %v142
  %v278 = vunpack.c.l.b16 %v143
  %v279 = vunpack.c.l.b16 %v144
  %v280 = vunpack.c.l.b16 %v145
  %v281 = vunpack.c.l.b16 %v146
  %v282 = vunpack.c.l.b16 %v147
  %v283 = vunpack.c.l.b16 %v148
  %v284 = vunpack.c.l.b16 %v149
  %v285 = vunpack.c.l.b16 %v150
  %v286 = vunpack.c.l.b16 %v151
  %v287 = vunpack.c.l.b16 %v152
  %v288 = vunpack.c.l.b16 %v153
  %v289 = vunpack.c.l.b16 %v154
  %v290 = vunpack.c.l.b16 %v155
  %v291 = vunpack.c.l.b16 %v156
  %v292 = vunpack.c.l.b16 %v157
  %v293 = vunpack.c.l.b16 %v158
  %v294 = vpack.c.b16 %v231, %v230
  %v295 = vpack.c.b16 %v233, %v232
  %v296 = vpack.c.b16 %v235, %v234
  %v297 = vpack.c.b16 %v237, %v236
  %v298 = vpack.c.b16 %v239, %v238
  %v299 = vpack.c.b16 %v241, %v240
  %v300 = vpack.c.b16 %v243, %v242
  %v301 = vpack.c.b16 %v245, %v244
  %v302 = vpack.c.b16 %v247, %v246
  %v303 = vpack.c.b16 %v249, %v248
  %v304 = vpack.c.b16 %v251, %v250
  %v305 = vpack.c.b16 %v253, %v252
  %v306 = vpack.c.b16 %v255, %v254
  %v307 = vpack.c.b16 %v257, %v256
  %v308 = vpack.c.b16 %v259, %v258
  %v309 = vpack.c.b16 %v261, %v260
  %v310 = vpack.c.b16 %v263, %v262
  %v311 = vpack.c.b16 %v265, %v264
  %v312 = vpack.c.b16 %v267, %v266
  %v313 = vpack.c.b16 %v269, %v268
  %v314 = vpack.c.b16 %v271, %v270
  %v315 = vpack.c.b16 %v273, %v272
  %v316 = vpack.c.b16 %v275, %v274
  %v317 = vpack.c.b16 %v277, %v276
  %v318 = vpack.c.b16 %v279, %v278
  %v319 = vpack.c.b16 %v281, %v280
  %v320 = vpack.c.b16 %v283, %v282
  %v321 = vpack.c.b16 %v285, %v284
  %v322 = vpack.c.b16 %v287, %v286
  %v323 = vpack.c.b16 %v289, %v288
  %v324 = vpack.c.b16 %v291, %v290
  %v325 = vpack.c.b16 %v293, %v292
  %358 = vmatprep.subr.bf16.mxu0 0
  %359 = vmatpush1.bf16.msra.mxu0 %v301
  %360 = vmatprep.subr.bf16.mxu0 0
  %361 = vmatpush1.bf16.msra.mxu0 %v300
  %362 = vmatprep.subr.bf16.mxu0 0
  %363 = vmatpush1.bf16.msra.mxu0 %v299
  %364 = vmatprep.subr.bf16.mxu0 0
  %365 = vmatpush1.bf16.msra.mxu0 %v298
  %366 = vmatprep.subr.bf16.mxu0 0
  %367 = vmatpush1.bf16.msra.mxu0 %v297
  %368 = vmatprep.subr.bf16.mxu0 0
  %369 = vmatpush1.bf16.msra.mxu0 %v296
  %370 = vmatprep.subr.bf16.mxu0 0
  %371 = vmatpush1.bf16.msra.mxu0 %v295
  %372 = vmatprep.subr.bf16.mxu0 0
  %373 = vmatpush1.bf16.msra.mxu0 %v294
  %374 = vmatprep.subr.bf16.mxu0 0
  %375 = vmatpush2.bf16.msra.mxu0 %v309
  %376 = vmatprep.subr.bf16.mxu0 0
  %377 = vmatpush2.bf16.msra.mxu0 %v308
  %378 = vmatprep.subr.bf16.mxu0 0
  %379 = vmatpush2.bf16.msra.mxu0 %v307
  %380 = vmatprep.subr.bf16.mxu0 0
  %381 = vmatpush2.bf16.msra.mxu0 %v306
  %382 = vmatprep.subr.bf16.mxu0 0
  %383 = vmatpush2.bf16.msra.mxu0 %v305
  %384 = vmatprep.subr.bf16.mxu0 0
  %385 = vmatpush2.bf16.msra.mxu0 %v304
  %386 = vmatprep.subr.bf16.mxu0 0
  %387 = vmatpush2.bf16.msra.mxu0 %v303
  %388 = vmatprep.subr.bf16.mxu0 0
  %389 = vmatpush2.bf16.msra.mxu0 %v302
  %390 = vmatprep.mubr.bf16.mxu0 %v68
  %391 = vmatmul.mubr.bf16.gmra.mxu0 %v67
  %v392 = vpop.f32.mrf.mxu0
  %v393 = vadd.f32 %v164, %v392
  %v394 = vpop.f32.mrf.mxu0
  %v395 = vpop.f32.mrf.mxu0
  %v396 = vadd.f32 %v164, %v395
  %v397 = vpop.f32.mrf.mxu0
  %398 = vmatprep.mubr.bf16.mxu0 %v72
  %399 = vmatmul.mubr.bf16.gmra.mxu0 %v71
  %v400 = vpop.f32.mrf.mxu0
  %v401 = vadd.f32 %v164, %v400
  %v402 = vpop.f32.mrf.mxu0
  %v403 = vpop.f32.mrf.mxu0
  %v404 = vadd.f32 %v164, %v403
  %v405 = vpop.f32.mrf.mxu0
  %406 = vmatprep.mubr.bf16.mxu0 %v76
  %407 = vmatmul.mubr.bf16.gmra.mxu0 %v75
  %v408 = vpop.f32.mrf.mxu0
  %v409 = vadd.f32 %v164, %v408
  %v410 = vpop.f32.mrf.mxu0
  %v411 = vpop.f32.mrf.mxu0
  %v412 = vadd.f32 %v164, %v411
  %v413 = vpop.f32.mrf.mxu0
  %414 = vmatprep.mubr.bf16.mxu0 %v80
  %415 = vmatmul.mubr.bf16.gmra.mxu0 %v79
  %v416 = vpop.f32.mrf.mxu0
  %v417 = vadd.f32 %v164, %v416
  %v418 = vpop.f32.mrf.mxu0
  %v419 = vpop.f32.mrf.mxu0
  %v420 = vadd.f32 %v164, %v419
  %v421 = vpop.f32.mrf.mxu0
  %422 = vmatprep.mubr.bf16.mxu0 %v84
  %423 = vmatmul.mubr.bf16.gmra.mxu0 %v83
  %v424 = vpop.f32.mrf.mxu0
  %v425 = vadd.f32 %v164, %v424
  %v426 = vpop.f32.mrf.mxu0
  %v427 = vpop.f32.mrf.mxu0
  %v428 = vadd.f32 %v164, %v427
  %v429 = vpop.f32.mrf.mxu0
  %430 = vmatprep.mubr.bf16.mxu0 %v88
  %431 = vmatmul.mubr.bf16.gmra.mxu0 %v87
  %v432 = vpop.f32.mrf.mxu0
  %v433 = vadd.f32 %v164, %v432
  %v434 = vpop.f32.mrf.mxu0
  %v435 = vpop.f32.mrf.mxu0
  %v436 = vadd.f32 %v164, %v435
  %v437 = vpop.f32.mrf.mxu0
  %438 = vmatprep.mubr.bf16.mxu0 %v92
  %439 = vmatmul.mubr.bf16.gmra.mxu0 %v91
  %v440 = vpop.f32.mrf.mxu0
  %v441 = vadd.f32 %v164, %v440
  %v442 = vpop.f32.mrf.mxu0
  %v443 = vpop.f32.mrf.mxu0
  %v444 = vpop.f32.mrf.mxu0
  %445 = vdwg.mxu0
  %446 = vmatprep.subr.bf16.mxu0 0
  %447 = vmatpush1.bf16.msra.mxu0 %v317
  %448 = vmatprep.subr.bf16.mxu0 0
  %449 = vmatpush1.bf16.msra.mxu0 %v316
  %450 = vmatprep.subr.bf16.mxu0 0
  %451 = vmatpush1.bf16.msra.mxu0 %v315
  %452 = vmatprep.subr.bf16.mxu0 0
  %453 = vmatpush1.bf16.msra.mxu0 %v314
  %454 = vmatprep.subr.bf16.mxu0 0
  %455 = vmatpush1.bf16.msra.mxu0 %v313
  %456 = vmatprep.subr.bf16.mxu0 0
  %457 = vmatpush1.bf16.msra.mxu0 %v312
  %458 = vmatprep.subr.bf16.mxu0 0
  %459 = vmatpush1.bf16.msra.mxu0 %v311
  %460 = vmatprep.subr.bf16.mxu0 0
  %461 = vmatpush1.bf16.msra.mxu0 %v310
  %462 = vmatprep.subr.bf16.mxu0 0
  %463 = vmatpush2.bf16.msra.mxu0 %v325
  %464 = vmatprep.subr.bf16.mxu0 0
  %465 = vmatpush2.bf16.msra.mxu0 %v324
  %466 = vmatprep.subr.bf16.mxu0 0
  %467 = vmatpush2.bf16.msra.mxu0 %v323
  %468 = vmatprep.subr.bf16.mxu0 0
  %469 = vmatpush2.bf16.msra.mxu0 %v322
  %470 = vmatprep.subr.bf16.mxu0 0
  %471 = vmatpush2.bf16.msra.mxu0 %v321
  %472 = vmatprep.subr.bf16.mxu0 0
  %473 = vmatpush2.bf16.msra.mxu0 %v320
  %474 = vmatprep.subr.bf16.mxu0 0
  %475 = vmatpush2.bf16.msra.mxu0 %v319
  %476 = vmatprep.subr.bf16.mxu0 0
  %477 = vmatpush2.bf16.msra.mxu0 %v318
  %478 = vmatprep.mubr.bf16.mxu0 %v70
  %479 = vmatmul.mubr.bf16.gmra.mxu0 %v69
  %v480 = vpop.f32.mrf.mxu0
  %v481 = vadd.f32 %v393, %v480
  %v482 = vpop.f32.mrf.mxu0
  %v483 = vpop.f32.mrf.mxu0
  %v484 = vadd.f32 %v396, %v483
  %v485 = vpop.f32.mrf.mxu0
  %486 = vmatprep.mubr.bf16.mxu0 %v74
  %487 = vmatmul.mubr.bf16.gmra.mxu0 %v73
  %v488 = vpop.f32.mrf.mxu0
  %v489 = vadd.f32 %v401, %v488
  %v490 = vpop.f32.mrf.mxu0
  %v491 = vpop.f32.mrf.mxu0
  %v492 = vadd.f32 %v404, %v491
  %v493 = vpop.f32.mrf.mxu0
  %494 = vmatprep.mubr.bf16.mxu0 %v78
  %495 = vmatmul.mubr.bf16.gmra.mxu0 %v77
  %v496 = vpop.f32.mrf.mxu0
  %v497 = vadd.f32 %v409, %v496
  %v498 = vpop.f32.mrf.mxu0
  %v499 = vpop.f32.mrf.mxu0
  %v500 = vadd.f32 %v412, %v499
  %v501 = vpop.f32.mrf.mxu0
  %502 = vmatprep.mubr.bf16.mxu0 %v82
  %503 = vmatmul.mubr.bf16.gmra.mxu0 %v81
  %v504 = vpop.f32.mrf.mxu0
  %v505 = vadd.f32 %v417, %v504
  %v506 = vpop.f32.mrf.mxu0
  %v507 = vpop.f32.mrf.mxu0
  %v508 = vadd.f32 %v420, %v507
  %v509 = vpop.f32.mrf.mxu0
  %510 = vmatprep.mubr.bf16.mxu0 %v86
  %511 = vmatmul.mubr.bf16.gmra.mxu0 %v85
  %v512 = vpop.f32.mrf.mxu0
  %v513 = vadd.f32 %v425, %v512
  %v514 = vpop.f32.mrf.mxu0
  %v515 = vpop.f32.mrf.mxu0
  %v516 = vadd.f32 %v428, %v515
  %v517 = vpop.f32.mrf.mxu0
  %518 = vmatprep.mubr.bf16.mxu0 %v90
  %519 = vmatmul.mubr.bf16.gmra.mxu0 %v89
  %v520 = vpop.f32.mrf.mxu0
  %v521 = vadd.f32 %v433, %v520
  %v522 = vpop.f32.mrf.mxu0
  %v523 = vpop.f32.mrf.mxu0
  %v524 = vadd.f32 %v436, %v523
  %v525 = vpop.f32.mrf.mxu0
  %526 = vmatprep.mubr.bf16.mxu0 %v94
  %527 = vmatmul.mubr.bf16.gmra.mxu0 %v93
  %v528 = vpop.f32.mrf.mxu0
  %v529 = vadd.f32 %v441, %v528
  %v530 = vpop.f32.mrf.mxu0
  %v531 = vpop.f32.mrf.mxu0
  %v532 = vpop.f32.mrf.mxu0
  %533 = vdwg.mxu0
  %v534 = vmax.f32 %v481, 0.0
  %v535 = vmax.f32 %v484, 0.0
  %v536 = vmax.f32 %v489, 0.0
  %v537 = vmax.f32 %v492, 0.0
  %v538 = vmax.f32 %v497, 0.0
  %v539 = vmax.f32 %v500, 0.0
  %v540 = vmax.f32 %v505, 0.0
  %v541 = vmax.f32 %v508, 0.0
  %v542 = vmax.f32 %v513, 0.0
  %v543 = vmax.f32 %v516, 0.0
  %v544 = vmax.f32 %v521, 0.0
  %v545 = vmax.f32 %v524, 0.0
  %v546 = vmax.f32 %v529, 0.0
  %vm547 = vcmask 523264
  %548 = vst.msk [vmem:[%s3] sm:$0xff] %vm547, %v534
  %549 = vst.msk [vmem:[%s3 + $0x8] sm:$0xff] %vm547, %v535
  %550 = vst.msk [vmem:[%s3 + $0x10] sm:$0xff] %vm547, %v536
  %551 = vst.msk [vmem:[%s3 + $0x18] sm:$0xff] %vm547, %v537
  %552 = vst.msk [vmem:[%s3 + $0x20] sm:$0xff] %vm547, %v538
  %553 = vst.msk [vmem:[%s3 + $0x28] sm:$0xff] %vm547, %v539
  %554 = vst.msk [vmem:[%s3 + $0x30] sm:$0xff] %vm547, %v540
  %555 = vst.msk [vmem:[%s3 + $0x38] sm:$0xff] %vm547, %v541
  %556 = vst.msk [vmem:[%s3 + $0x40] sm:$0xff] %vm547, %v542
  %557 = vst.msk [vmem:[%s3 + $0x48] sm:$0xff] %vm547, %v543
  %558 = vst.msk [vmem:[%s3 + $0x50] sm:$0xff] %vm547, %v544
  %559 = vst.msk [vmem:[%s3 + $0x58] sm:$0xff] %vm547, %v545
  %vm560 = vcmask 517120
  %561 = vst.msk [vmem:[%s3 + $0x60] sm:$0x3] %vm560, %v546
  // Predicated region
  $region14: #{vae_forward.6} parent=0 // pred_check
    _
  $region15: #{vae_forward.6} parent=0 // pred_check_branch
    %563 = sbr.rel (0) target = $region17
  $region16: #{vae_forward.6} parent=0 // pred_region
    _
  $region17: #{vae_forward.6} parent=0 // pred_fallthru
    _
  // Predicated region
  $region18: #{vae_forward.6} parent=0 // pred_check
    _
  $region19: #{vae_forward.6} parent=0 // pred_check_branch
    %565 = sbr.rel (0) target = $region21
  $region20: #{vae_forward.6} parent=0 // pred_region
    _
  $region21: #{vae_forward.6} parent=0 // pred_fallthru
    _

// kernel: vae_forward.8
$region0: #{vae_forward.8}
  #allocation0 [shape = 'u32[]', space=smem, size = 0x4, offset = 0x4, fixed_abs, tag = 'smem constant byte address 0x4 - core index']
  #allocation1 [shape = 'u32[144,128]{1,0:T(1,128)}', space=vmem, size = 0x12000, scoped, tag = 'internal scratch']
  %s0 = inlined_call_operand.vmem [shape: f32[128,256], index: 0, kind: input, shape index: {}]
  %s1 = inlined_call_operand.vmem [shape: bf16[256,128], index: 1, kind: input, shape index: {}]
  %s2 = inlined_call_operand.vmem [shape: f32[1,128], index: 2, kind: input, shape index: {}]
  %s3 = inlined_call_operand.vmem [shape: f32[128,128], index: 3, kind: output, shape index: {}]
  %s4 = sld [smem:[#allocation0]]
  $region22: #{vae_forward.8} parent=0
    _
  %s6 = ssub.s32 1, %s4
  %s7 = scalar_select 0, %s6, %s4
  // Predicated region
  $region2: #{vae_forward.8} parent=0 // pred_check
    _
  $region3: #{vae_forward.8} parent=0 // pred_check_branch
    %9 = sbr.rel (0) target = $region5
  $region4: #{vae_forward.8} parent=0 // pred_region
    _
  $region5: #{vae_forward.8} parent=0 // pred_fallthru
    _
  // Predicated region
  $region6: #{vae_forward.8} parent=0 // pred_check
    _
  $region7: #{vae_forward.8} parent=0 // pred_check_branch
    %11 = sbr.rel (0) target = $region9
  $region8: #{vae_forward.8} parent=0 // pred_region
    _
  $region9: #{vae_forward.8} parent=0 // pred_fallthru
    _
  // Predicated region
  $region10: #{vae_forward.8} parent=0 // pred_check
    _
  $region11: #{vae_forward.8} parent=0 // pred_check_branch
    %13 = sbr.rel (0) target = $region13
  $region12: #{vae_forward.8} parent=0 // pred_region
    _
  $region13: #{vae_forward.8} parent=0 // pred_fallthru
    _
  %v15 = vld [vmem:[%s0] sm:$0xff]
  %v16 = vld [vmem:[%s0 + $0x8] sm:$0xff]
  %v17 = vld [vmem:[%s0 + $0x10] sm:$0xff]
  %v18 = vld [vmem:[%s0 + $0x18] sm:$0xff]
  %v19 = vld [vmem:[%s0 + $0x20] sm:$0xff]
  %v20 = vld [vmem:[%s0 + $0x28] sm:$0xff]
  %v21 = vld [vmem:[%s0 + $0x30] sm:$0xff]
  %v22 = vld [vmem:[%s0 + $0x38] sm:$0xff]
  %v23 = vld [vmem:[%s0 + $0x40] sm:$0xff]
  %v24 = vld [vmem:[%s0 + $0x48] sm:$0xff]
  %v25 = vld [vmem:[%s0 + $0x50] sm:$0xff]
  %v26 = vld [vmem:[%s0 + $0x58] sm:$0xff]
  %v27 = vld [vmem:[%s0 + $0x60] sm:$0xff]
  %v28 = vld [vmem:[%s0 + $0x68] sm:$0xff]
  %v29 = vld [vmem:[%s0 + $0x70] sm:$0xff]
  %v30 = vld [vmem:[%s0 + $0x78] sm:$0xff]
  %v31 = vld [vmem:[%s0 + $0x80] sm:$0xff]
  %v32 = vld [vmem:[%s0 + $0x88] sm:$0xff]
  %v33 = vld [vmem:[%s0 + $0x90] sm:$0xff]
  %v34 = vld [vmem:[%s0 + $0x98] sm:$0xff]
  %v35 = vld [vmem:[%s0 + $0xa0] sm:$0xff]
  %v36 = vld [vmem:[%s0 + $0xa8] sm:$0xff]
  %v37 = vld [vmem:[%s0 + $0xb0] sm:$0xff]
  %v38 = vld [vmem:[%s0 + $0xb8] sm:$0xff]
  %v39 = vld [vmem:[%s0 + $0xc0] sm:$0xff]
  %v40 = vld [vmem:[%s0 + $0xc8] sm:$0xff]
  %v41 = vld [vmem:[%s0 + $0xd0] sm:$0xff]
  %v42 = vld [vmem:[%s0 + $0xd8] sm:$0xff]
  %v43 = vld [vmem:[%s0 + $0xe0] sm:$0xff]
  %v44 = vld [vmem:[%s0 + $0xe8] sm:$0xff]
  %v45 = vld [vmem:[%s0 + $0xf0] sm:$0xff]
  %v46 = vld [vmem:[%s0 + $0xf8] sm:$0xff]
  %v47 = vpack.c.bf16 %v17, %v15
  %v48 = vpack.c.bf16 %v18, %v16
  %v49 = vpack.c.bf16 %v21, %v19
  %v50 = vpack.c.bf16 %v22, %v20
  %v51 = vpack.c.bf16 %v25, %v23
  %v52 = vpack.c.bf16 %v26, %v24
  %v53 = vpack.c.bf16 %v29, %v27
  %v54 = vpack.c.bf16 %v30, %v28
  %v55 = vpack.c.bf16 %v33, %v31
  %v56 = vpack.c.bf16 %v34, %v32
  %v57 = vpack.c.bf16 %v37, %v35
  %v58 = vpack.c.bf16 %v38, %v36
  %v59 = vpack.c.bf16 %v41, %v39
  %v60 = vpack.c.bf16 %v42, %v40
  %v61 = vpack.c.bf16 %v45, %v43
  %v62 = vpack.c.bf16 %v46, %v44
  %v63 = vld [vmem:[%s1] sm:$0xf]
  %v64 = vld [vmem:[%s1 + $0x4] sm:$0xf]
  %v65 = vld [vmem:[%s1 + $0x8] sm:$0xf]
  %v66 = vld [vmem:[%s1 + $0xc] sm:$0xf]
  %v67 = vld [vmem:[%s1 + $0x10] sm:$0xf]
  %v68 = vld [vmem:[%s1 + $0x14] sm:$0xf]
  %v69 = vld [vmem:[%s1 + $0x18] sm:$0xf]
  %v70 = vld [vmem:[%s1 + $0x1c] sm:$0xf]
  %v71 = vld [vmem:[%s1 + $0x20] sm:$0xf]
  %v72 = vld [vmem:[%s1 + $0x24] sm:$0xf]
  %v73 = vld [vmem:[%s1 + $0x28] sm:$0xf]
  %v74 = vld [vmem:[%s1 + $0x2c] sm:$0xf]
  %v75 = vld [vmem:[%s1 + $0x30] sm:$0xf]
  %v76 = vld [vmem:[%s1 + $0x34] sm:$0xf]
  %v77 = vld [vmem:[%s1 + $0x38] sm:$0xf]
  %v78 = vld [vmem:[%s1 + $0x3c] sm:$0xf]
  %v79 = vld [vmem:[%s1 + $0x40] sm:$0xf]
  %v80 = vld [vmem:[%s1 + $0x44] sm:$0xf]
  %v81 = vld [vmem:[%s1 + $0x48] sm:$0xf]
  %v82 = vld [vmem:[%s1 + $0x4c] sm:$0xf]
  %v83 = vld [vmem:[%s1 + $0x50] sm:$0xf]
  %v84 = vld [vmem:[%s1 + $0x54] sm:$0xf]
  %v85 = vld [vmem:[%s1 + $0x58] sm:$0xf]
  %v86 = vld [vmem:[%s1 + $0x5c] sm:$0xf]
  %v87 = vld [vmem:[%s1 + $0x60] sm:$0xf]
  %v88 = vld [vmem:[%s1 + $0x64] sm:$0xf]
  %v89 = vld [vmem:[%s1 + $0x68] sm:$0xf]
  %v90 = vld [vmem:[%s1 + $0x6c] sm:$0xf]
  %v91 = vld [vmem:[%s1 + $0x70] sm:$0xf]
  %v92 = vld [vmem:[%s1 + $0x74] sm:$0xf]
  %v93 = vld [vmem:[%s1 + $0x78] sm:$0xf]
  %v94 = vld [vmem:[%s1 + $0x7c] sm:$0xf]
  %v95 = vld [vmem:[%s2] sm:$0x1]
  %v97 = vlaneseq
  %v98 = vshrl.u32 %v97, 7
  %v99 = vsub.s32 0, %v98
  %v100 = vrot.slane %v95, %v99
  %v134 = vunpack.c.l.b16 %v63
  %v135 = vunpack.c.l.b16 %v64
  %v136 = vunpack.c.l.b16 %v65
  %v137 = vunpack.c.l.b16 %v66
  %v138 = vunpack.c.l.b16 %v67
  %v139 = vunpack.c.l.b16 %v68
  %v140 = vunpack.c.l.b16 %v69
  %v141 = vunpack.c.l.b16 %v70
  %v142 = vunpack.c.l.b16 %v71
  %v143 = vunpack.c.l.b16 %v72
  %v144 = vunpack.c.l.b16 %v73
  %v145 = vunpack.c.l.b16 %v74
  %v146 = vunpack.c.l.b16 %v75
  %v147 = vunpack.c.l.b16 %v76
  %v148 = vunpack.c.l.b16 %v77
  %v149 = vunpack.c.l.b16 %v78
  %v150 = vunpack.c.l.b16 %v79
  %v151 = vunpack.c.l.b16 %v80
  %v152 = vunpack.c.l.b16 %v81
  %v153 = vunpack.c.l.b16 %v82
  %v154 = vunpack.c.l.b16 %v83
  %v155 = vunpack.c.l.b16 %v84
  %v156 = vunpack.c.l.b16 %v85
  %v157 = vunpack.c.l.b16 %v86
  %v158 = vunpack.c.l.b16 %v87
  %v159 = vunpack.c.l.b16 %v88
  %v160 = vunpack.c.l.b16 %v89
  %v161 = vunpack.c.l.b16 %v90
  %v162 = vunpack.c.l.b16 %v91
  %v163 = vunpack.c.l.b16 %v92
  %v164 = vunpack.c.l.b16 %v93
  %v165 = vunpack.c.l.b16 %v94
  %v166 = vpack.c.b16 %v135, %v134
  %v167 = vpack.c.b16 %v137, %v136
  %v168 = vpack.c.b16 %v139, %v138
  %v169 = vpack.c.b16 %v141, %v140
  %v170 = vpack.c.b16 %v143, %v142
  %v171 = vpack.c.b16 %v145, %v144
  %v172 = vpack.c.b16 %v147, %v146
  %v173 = vpack.c.b16 %v149, %v148
  %v174 = vpack.c.b16 %v151, %v150
  %v175 = vpack.c.b16 %v153, %v152
  %v176 = vpack.c.b16 %v155, %v154
  %v177 = vpack.c.b16 %v157, %v156
  %v178 = vpack.c.b16 %v159, %v158
  %v179 = vpack.c.b16 %v161, %v160
  %v180 = vpack.c.b16 %v163, %v162
  %v181 = vpack.c.b16 %v165, %v164
  %198 = vmatprep.subr.bf16.mxu0 0
  %199 = vmatpush1.bf16.msra.mxu0 %v173
  %200 = vmatprep.subr.bf16.mxu0 0
  %201 = vmatpush1.bf16.msra.mxu0 %v172
  %202 = vmatprep.subr.bf16.mxu0 0
  %203 = vmatpush1.bf16.msra.mxu0 %v171
  %204 = vmatprep.subr.bf16.mxu0 0
  %205 = vmatpush1.bf16.msra.mxu0 %v170
  %206 = vmatprep.subr.bf16.mxu0 0
  %207 = vmatpush1.bf16.msra.mxu0 %v169
  %208 = vmatprep.subr.bf16.mxu0 0
  %209 = vmatpush1.bf16.msra.mxu0 %v168
  %210 = vmatprep.subr.bf16.mxu0 0
  %211 = vmatpush1.bf16.msra.mxu0 %v167
  %212 = vmatprep.subr.bf16.mxu0 0
  %213 = vmatpush1.bf16.msra.mxu0 %v166
  %214 = vmatprep.subr.bf16.mxu0 0
  %215 = vmatpush2.bf16.msra.mxu0 %v181
  %216 = vmatprep.subr.bf16.mxu0 0
  %217 = vmatpush2.bf16.msra.mxu0 %v180
  %218 = vmatprep.subr.bf16.mxu0 0
  %219 = vmatpush2.bf16.msra.mxu0 %v179
  %220 = vmatprep.subr.bf16.mxu0 0
  %221 = vmatpush2.bf16.msra.mxu0 %v178
  %222 = vmatprep.subr.bf16.mxu0 0
  %223 = vmatpush2.bf16.msra.mxu0 %v177
  %224 = vmatprep.subr.bf16.mxu0 0
  %225 = vmatpush2.bf16.msra.mxu0 %v176
  %226 = vmatprep.subr.bf16.mxu0 0
  %227 = vmatpush2.bf16.msra.mxu0 %v175
  %228 = vmatprep.subr.bf16.mxu0 0
  %229 = vmatpush2.bf16.msra.mxu0 %v174
  %230 = vmatprep.mubr.bf16.mxu0 %v48
  %231 = vmatmul.mubr.bf16.gmra.mxu0 %v47
  %v232 = vpop.f32.mrf.mxu0
  %v233 = vadd.f32 %v100, %v232
  %v234 = vpop.f32.mrf.mxu0
  %v235 = vpop.f32.mrf.mxu0
  %v236 = vadd.f32 %v100, %v235
  %v237 = vpop.f32.mrf.mxu0
  %238 = vmatprep.mubr.bf16.mxu0 %v50
  %239 = vmatmul.mubr.bf16.gmra.mxu0 %v49
  %v240 = vpop.f32.mrf.mxu0
  %v241 = vadd.f32 %v100, %v240
  %v242 = vpop.f32.mrf.mxu0
  %v243 = vpop.f32.mrf.mxu0
  %v244 = vadd.f32 %v100, %v243
  %v245 = vpop.f32.mrf.mxu0
  %246 = vmatprep.mubr.bf16.mxu0 %v52
  %247 = vmatmul.mubr.bf16.gmra.mxu0 %v51
  %v248 = vpop.f32.mrf.mxu0
  %v249 = vadd.f32 %v100, %v248
  %v250 = vpop.f32.mrf.mxu0
  %v251 = vpop.f32.mrf.mxu0
  %v252 = vadd.f32 %v100, %v251
  %v253 = vpop.f32.mrf.mxu0
  %254 = vmatprep.mubr.bf16.mxu0 %v54
  %255 = vmatmul.mubr.bf16.gmra.mxu0 %v53
  %v256 = vpop.f32.mrf.mxu0
  %v257 = vadd.f32 %v100, %v256
  %v258 = vpop.f32.mrf.mxu0
  %v259 = vpop.f32.mrf.mxu0
  %v260 = vadd.f32 %v100, %v259
  %v261 = vpop.f32.mrf.mxu0
  %262 = vmatprep.mubr.bf16.mxu0 %v56
  %263 = vmatmul.mubr.bf16.gmra.mxu0 %v55
  %v264 = vpop.f32.mrf.mxu0
  %v265 = vadd.f32 %v100, %v264
  %v266 = vpop.f32.mrf.mxu0
  %v267 = vpop.f32.mrf.mxu0
  %v268 = vadd.f32 %v100, %v267
  %v269 = vpop.f32.mrf.mxu0
  %270 = vmatprep.mubr.bf16.mxu0 %v58
  %271 = vmatmul.mubr.bf16.gmra.mxu0 %v57
  %v272 = vpop.f32.mrf.mxu0
  %v273 = vadd.f32 %v100, %v272
  %v274 = vpop.f32.mrf.mxu0
  %v275 = vpop.f32.mrf.mxu0
  %v276 = vadd.f32 %v100, %v275
  %v277 = vpop.f32.mrf.mxu0
  %278 = vmatprep.mubr.bf16.mxu0 %v60
  %279 = vmatmul.mubr.bf16.gmra.mxu0 %v59
  %v280 = vpop.f32.mrf.mxu0
  %v281 = vadd.f32 %v100, %v280
  %v282 = vpop.f32.mrf.mxu0
  %v283 = vpop.f32.mrf.mxu0
  %v284 = vadd.f32 %v100, %v283
  %v285 = vpop.f32.mrf.mxu0
  %286 = vmatprep.mubr.bf16.mxu0 %v62
  %287 = vmatmul.mubr.bf16.gmra.mxu0 %v61
  %v288 = vpop.f32.mrf.mxu0
  %v289 = vadd.f32 %v100, %v288
  %v290 = vpop.f32.mrf.mxu0
  %v291 = vpop.f32.mrf.mxu0
  %v292 = vadd.f32 %v100, %v291
  %v293 = vpop.f32.mrf.mxu0
  %294 = vdwg.mxu0
  %v295 = vmax.f32 %v233, 0.0
  %v296 = vmax.f32 %v236, 0.0
  %v297 = vmax.f32 %v241, 0.0
  %v298 = vmax.f32 %v244, 0.0
  %v299 = vmax.f32 %v249, 0.0
  %v300 = vmax.f32 %v252, 0.0
  %v301 = vmax.f32 %v257, 0.0
  %v302 = vmax.f32 %v260, 0.0
  %v303 = vmax.f32 %v265, 0.0
  %v304 = vmax.f32 %v268, 0.0
  %v305 = vmax.f32 %v273, 0.0
  %v306 = vmax.f32 %v276, 0.0
  %v307 = vmax.f32 %v281, 0.0
  %v308 = vmax.f32 %v284, 0.0
  %v309 = vmax.f32 %v289, 0.0
  %v310 = vmax.f32 %v292, 0.0
  %311 = vst [vmem:[%s3] sm:$0xff] %v295
  %312 = vst [vmem:[%s3 + $0x8] sm:$0xff] %v296
  %313 = vst [vmem:[%s3 + $0x10] sm:$0xff] %v297
  %314 = vst [vmem:[%s3 + $0x18] sm:$0xff] %v298
  %315 = vst [vmem:[%s3 + $0x20] sm:$0xff] %v299
  %316 = vst [vmem:[%s3 + $0x28] sm:$0xff] %v300
  %317 = vst [vmem:[%s3 + $0x30] sm:$0xff] %v301
  %318 = vst [vmem:[%s3 + $0x38] sm:$0xff] %v302
  %319 = vst [vmem:[%s3 + $0x40] sm:$0xff] %v303
  %320 = vst [vmem:[%s3 + $0x48] sm:$0xff] %v304
  %321 = vst [vmem:[%s3 + $0x50] sm:$0xff] %v305
  %322 = vst [vmem:[%s3 + $0x58] sm:$0xff] %v306
  %323 = vst [vmem:[%s3 + $0x60] sm:$0xff] %v307
  %324 = vst [vmem:[%s3 + $0x68] sm:$0xff] %v308
  %325 = vst [vmem:[%s3 + $0x70] sm:$0xff] %v309
  %326 = vst [vmem:[%s3 + $0x78] sm:$0xff] %v310
  // Predicated region
  $region14: #{vae_forward.8} parent=0 // pred_check
    _
  $region15: #{vae_forward.8} parent=0 // pred_check_branch
    %328 = sbr.rel (0) target = $region17
  $region16: #{vae_forward.8} parent=0 // pred_region
    _
  $region17: #{vae_forward.8} parent=0 // pred_fallthru
    _
  // Predicated region
  $region18: #{vae_forward.8} parent=0 // pred_check
    _
  $region19: #{vae_forward.8} parent=0 // pred_check_branch
    %330 = sbr.rel (0) target = $region21
  $region20: #{vae_forward.8} parent=0 // pred_region
    _
  $region21: #{vae_forward.8} parent=0 // pred_fallthru
    _

// kernel: vae_forward.7
$region0: #{vae_forward.7}
  #allocation0 [shape = 'u32[]', space=smem, size = 0x4, offset = 0x4, fixed_abs, tag = 'smem constant byte address 0x4 - core index']
  #allocation1 [shape = 'u32[144,128]{1,0:T(1,128)}', space=vmem, size = 0x12000, scoped, tag = 'internal scratch']
  %s0 = inlined_call_operand.vmem [shape: f32[2,3136], index: 0, kind: input, shape index: {}]
  %s1 = inlined_call_operand.vmem [shape: f32[2,16], index: 1, kind: input, shape index: {}]
  %s2 = inlined_call_operand.vmem [shape: bf16[3136,256], index: 2, kind: input, shape index: {}]
  %s3 = inlined_call_operand.vmem [shape: f32[1,256], index: 3, kind: input, shape index: {}]
  %s4 = inlined_call_operand.vmem [shape: f32[256,32], index: 4, kind: input, shape index: {}]
  %s5 = inlined_call_operand.vmem [shape: f32[1,32], index: 5, kind: input, shape index: {}]
  %s6 = inlined_call_operand.vmem [shape: f32[16,256], index: 6, kind: input, shape index: {}]
  %s7 = inlined_call_operand.vmem [shape: f32[1,256], index: 7, kind: input, shape index: {}]
  %s8 = inlined_call_operand.vmem [shape: bf16[256,3136], index: 8, kind: input, shape index: {}]
  %s9 = inlined_call_operand.vmem [shape: f32[1,3136], index: 9, kind: input, shape index: {}]
  %s10 = inlined_call_operand.hbm [shape: f32[2,16], index: 10, kind: output, shape index: {0}]
  %s11 = inlined_call_operand.hbm [shape: f32[2,16], index: 11, kind: output, shape index: {1}]
  %s12 = inlined_call_operand.vmem [shape: f32[2,3136], index: 12, kind: output, shape index: {2}]
  %13 = xla_tuple %s10, %s11, %s12
  %s14 = sld [smem:[#allocation0]]
  $region66: #{vae_forward.7} parent=0
    _
  %s16 = ssub.s32 1, %s14
  %s17 = scalar_select 0, %s16, %s14
  $region1: #{vae_forward.7} parent=0
    #allocation2 [shape = 'u8[1024]{0}', space=vmem, size = 0x400, scoped, tag = 'output window, operand 0, single buffered']
    #allocation3 [shape = 's32[1]{0}', space=sflag, size = 0x4, scoped, tag = 'scoped memory for vae_forward.7']
    #allocation4 [shape = 'u8[1024]{0}', space=vmem, size = 0x400, scoped, tag = 'output window, operand 1, single buffered']
    #allocation5 [shape = 's32[1]{0}', space=sflag, size = 0x4, scoped, tag = 'scoped memory for vae_forward.7']
    %18 = vsyncpa [#allocation3], 0
    %19 = vsyncpa [#allocation5], 0
    // Predicated region
    $region2: #{vae_forward.7} parent=1 // pred_check
      _
    $region3: #{vae_forward.7} parent=1 // pred_check_branch
      %21 = sbr.rel (0) target = $region5
    $region4: #{vae_forward.7} parent=1 // pred_region
      _
    $region5: #{vae_forward.7} parent=1 // pred_fallthru
      _
    // Predicated region
    $region6: #{vae_forward.7} parent=1 // pred_check
      _
    $region7: #{vae_forward.7} parent=1 // pred_check_branch
      %23 = sbr.rel (0) target = $region9
    $region8: #{vae_forward.7} parent=1 // pred_region
      _
    $region9: #{vae_forward.7} parent=1 // pred_fallthru
      _
    // Predicated region
    $region10: #{vae_forward.7} parent=1 // pred_check
      _
    $region11: #{vae_forward.7} parent=1 // pred_check_branch
      %25 = sbr.rel (0) target = $region13
    $region12: #{vae_forward.7} parent=1 // pred_region
      _
    $region13: #{vae_forward.7} parent=1 // pred_fallthru
      _
    // Predicated region
    $region14: #{vae_forward.7} parent=1 // pred_check
      _
    $region15: #{vae_forward.7} parent=1 // pred_check_branch
      %27 = sbr.rel (0) target = $region17
    $region16: #{vae_forward.7} parent=1 // pred_region
      _
    $region17: #{vae_forward.7} parent=1 // pred_fallthru
      _
    // Predicated region
    $region18: #{vae_forward.7} parent=1 // pred_check
      _
    $region19: #{vae_forward.7} parent=1 // pred_check_branch
      %29 = sbr.rel (0) target = $region21
    $region20: #{vae_forward.7} parent=1 // pred_region
      _
    $region21: #{vae_forward.7} parent=1 // pred_fallthru
      _
    // Predicated region
    $region22: #{vae_forward.7} parent=1 // pred_check
      _
    $region23: #{vae_forward.7} parent=1 // pred_check_branch
      %31 = sbr.rel (0) target = $region25
    $region24: #{vae_forward.7} parent=1 // pred_region
      _
    $region25: #{vae_forward.7} parent=1 // pred_fallthru
      _
    // Predicated region
    $region26: #{vae_forward.7} parent=1 // pred_check
      _
    $region27: #{vae_forward.7} parent=1 // pred_check_branch
      %33 = sbr.rel (0) target = $region29
    $region28: #{vae_forward.7} parent=1 // pred_region
      _
    $region29: #{vae_forward.7} parent=1 // pred_fallthru
      _
    // Predicated region
    $region30: #{vae_forward.7} parent=1 // pred_check
      _
    $region31: #{vae_forward.7} parent=1 // pred_check_branch
      %35 = sbr.rel (0) target = $region33
    $region32: #{vae_forward.7} parent=1 // pred_region
      _
    $region33: #{vae_forward.7} parent=1 // pred_fallthru
      _
    // Predicated region
    $region34: #{vae_forward.7} parent=1 // pred_check
      _
    $region35: #{vae_forward.7} parent=1 // pred_check_branch
      %37 = sbr.rel (0) target = $region37
    $region36: #{vae_forward.7} parent=1 // pred_region
      _
    $region37: #{vae_forward.7} parent=1 // pred_fallthru
      _
    // Predicated region
    $region38: #{vae_forward.7} parent=1 // pred_check
      _
    $region39: #{vae_forward.7} parent=1 // pred_check_branch
      %39 = sbr.rel (0) target = $region41
    $region40: #{vae_forward.7} parent=1 // pred_region
      _
    $region41: #{vae_forward.7} parent=1 // pred_fallthru
      _
    %v41 = vld [vmem:[%s0] sm:$0xff]
    %v42 = vld [vmem:[%s0 + $0x8] sm:$0xff]
    %v43 = vld [vmem:[%s0 + $0x10] sm:$0xff]
    %v44 = vld [vmem:[%s0 + $0x18] sm:$0xff]
    %v45 = vld [vmem:[%s0 + $0x20] sm:$0xff]
    %v46 = vld [vmem:[%s0 + $0x28] sm:$0xff]
    %v47 = vld [vmem:[%s0 + $0x30] sm:$0x3]
    %v55 = vcombine.high %v41, %v41
    %v57 = vunpack.c.l.s4 1983009808
    %v58 = vunpack.c.0.s8 %v57
    %v59 = vlaneseq
    %v60 = vshrl.u32 %v59, 7
    %v61 = vsub.s32 %v58, %v60
    %v62 = vrot.slane %v41, %v61
    %v64 = vunpack.c.l.s4 1983009808
    %v65 = vunpack.c.0.s8 %v64
    %v66 = vlaneseq
    %v67 = vshrl.u32 %v66, 7
    %v68 = vsub.s32 %v65, %v67
    %v69 = vrot.slane %v55, %v68
    %v70 = vcombine.high %v62, %v62
    %v71 = vcombine.high %v69, %v69
    %v72 = vcombine.high %v42, %v42
    %v74 = vunpack.c.l.s4 1983009808
    %v75 = vunpack.c.0.s8 %v74
    %v76 = vlaneseq
    %v77 = vshrl.u32 %v76, 7
    %v78 = vsub.s32 %v75, %v77
    %v79 = vrot.slane %v42, %v78
    %v81 = vunpack.c.l.s4 1983009808
    %v82 = vunpack.c.0.s8 %v81
    %v83 = vlaneseq
    %v84 = vshrl.u32 %v83, 7
    %v85 = vsub.s32 %v82, %v84
    %v86 = vrot.slane %v72, %v85
    %v87 = vcombine.high %v79, %v79
    %v88 = vcombine.high %v86, %v86
    %v89 = vcombine.high %v43, %v43
    %v91 = vunpack.c.l.s4 1983009808
    %v92 = vunpack.c.0.s8 %v91
    %v93 = vlaneseq
    %v94 = vshrl.u32 %v93, 7
    %v95 = vsub.s32 %v92, %v94
    %v96 = vrot.slane %v43, %v95
    %v98 = vunpack.c.l.s4 1983009808
    %v99 = vunpack.c.0.s8 %v98
    %v100 = vlaneseq
    %v101 = vshrl.u32 %v100, 7
    %v102 = vsub.s32 %v99, %v101
    %v103 = vrot.slane %v89, %v102
    %v104 = vcombine.high %v96, %v96
    %v105 = vcombine.high %v103, %v103
    %v106 = vcombine.high %v44, %v44
    %v108 = vunpack.c.l.s4 1983009808
    %v109 = vunpack.c.0.s8 %v108
    %v110 = vlaneseq
    %v111 = vshrl.u32 %v110, 7
    %v112 = vsub.s32 %v109, %v111
    %v113 = vrot.slane %v44, %v112
    %v115 = vunpack.c.l.s4 1983009808
    %v116 = vunpack.c.0.s8 %v115
    %v117 = vlaneseq
    %v118 = vshrl.u32 %v117, 7
    %v119 = vsub.s32 %v116, %v118
    %v120 = vrot.slane %v106, %v119
    %v121 = vcombine.high %v113, %v113
    %v122 = vcombine.high %v120, %v120
    %v123 = vcombine.high %v45, %v45
    %v125 = vunpack.c.l.s4 1983009808
    %v126 = vunpack.c.0.s8 %v125
    %v127 = vlaneseq
    %v128 = vshrl.u32 %v127, 7
    %v129 = vsub.s32 %v126, %v128
    %v130 = vrot.slane %v45, %v129
    %v132 = vunpack.c.l.s4 1983009808
    %v133 = vunpack.c.0.s8 %v132
    %v134 = vlaneseq
    %v135 = vshrl.u32 %v134, 7
    %v136 = vsub.s32 %v133, %v135
    %v137 = vrot.slane %v123, %v136
    %v138 = vcombine.high %v130, %v130
    %v139 = vcombine.high %v137, %v137
    %v140 = vcombine.high %v46, %v46
    %v142 = vunpack.c.l.s4 1983009808
    %v143 = vunpack.c.0.s8 %v142
    %v144 = vlaneseq
    %v145 = vshrl.u32 %v144, 7
    %v146 = vsub.s32 %v143, %v145
    %v147 = vrot.slane %v46, %v146
    %v149 = vunpack.c.l.s4 1983009808
    %v150 = vunpack.c.0.s8 %v149
    %v151 = vlaneseq
    %v152 = vshrl.u32 %v151, 7
    %v153 = vsub.s32 %v150, %v152
    %v154 = vrot.slane %v140, %v153
    %v155 = vcombine.high %v147, %v147
    %v156 = vcombine.high %v154, %v154
    %v158 = vunpack.c.l.s4 1983009808
    %v159 = vunpack.c.0.s8 %v158
    %v160 = vlaneseq
    %v161 = vshrl.u32 %v160, 7
    %v162 = vsub.s32 %v159, %v161
    %v163 = vrot.slane %v47, %v162
    %v189 = vpack.c.bf16 %v62, %v62
    %v190 = vpack.c.bf16 %v70, %v70
    %v191 = vpack.c.bf16 %v69, %v69
    %v192 = vpack.c.bf16 %v71, %v71
    %v193 = vpack.c.bf16 %v79, %v79
    %v194 = vpack.c.bf16 %v87, %v87
    %v195 = vpack.c.bf16 %v86, %v86
    %v196 = vpack.c.bf16 %v88, %v88
    %v197 = vpack.c.bf16 %v96, %v96
    %v198 = vpack.c.bf16 %v104, %v104
    %v199 = vpack.c.bf16 %v103, %v103
    %v200 = vpack.c.bf16 %v105, %v105
    %v201 = vpack.c.bf16 %v113, %v113
    %v202 = vpack.c.bf16 %v121, %v121
    %v203 = vpack.c.bf16 %v120, %v120
    %v204 = vpack.c.bf16 %v122, %v122
    %v205 = vpack.c.bf16 %v130, %v130
    %v206 = vpack.c.bf16 %v138, %v138
    %v207 = vpack.c.bf16 %v137, %v137
    %v208 = vpack.c.bf16 %v139, %v139
    %v209 = vpack.c.bf16 %v147, %v147
    %v210 = vpack.c.bf16 %v155, %v155
    %v211 = vpack.c.bf16 %v154, %v154
    %v212 = vpack.c.bf16 %v156, %v156
    %v213 = vpack.c.bf16 %v163, %v163
    %v214 = vld [vmem:[%s2] sm:$0xff]
    %v215 = vld [vmem:[%s2 + $0x8] sm:$0xff]
    %v216 = vld [vmem:[%s2 + $0x10] sm:$0xff]
    %v217 = vld [vmem:[%s2 + $0x18] sm:$0xff]
    %v218 = vld [vmem:[%s2 + $0x20] sm:$0xff]
    %v219 = vld [vmem:[%s2 + $0x28] sm:$0xff]
    %v220 = vld [vmem:[%s2 + $0x30] sm:$0xff]
    %v221 = vld [vmem:[%s2 + $0x38] sm:$0xff]
    %v222 = vld [vmem:[%s2 + $0x40] sm:$0xff]
    %v223 = vld [vmem:[%s2 + $0x48] sm:$0xff]
    %v224 = vld [vmem:[%s2 + $0x50] sm:$0xff]
    %v225 = vld [vmem:[%s2 + $0x58] sm:$0xff]
    %v226 = vld [vmem:[%s2 + $0x60] sm:$0xff]
    %v227 = vld [vmem:[%s2 + $0x68] sm:$0xff]
    %v228 = vld [vmem:[%s2 + $0x70] sm:$0xff]
    %v229 = vld [vmem:[%s2 + $0x78] sm:$0xff]
    %v230 = vld [vmem:[%s2 + $0x80] sm:$0xff]
    %v231 = vld [vmem:[%s2 + $0x88] sm:$0xff]
    %v232 = vld [vmem:[%s2 + $0x90] sm:$0xff]
    %v233 = vld [vmem:[%s2 + $0x98] sm:$0xff]
    %v234 = vld [vmem:[%s2 + $0xa0] sm:$0xff]
    %v235 = vld [vmem:[%s2 + $0xa8] sm:$0xff]
    %v236 = vld [vmem:[%s2 + $0xb0] sm:$0xff]
    %v237 = vld [vmem:[%s2 + $0xb8] sm:$0xff]
    %v238 = vld [vmem:[%s2 + $0xc0] sm:$0xff]
    %v239 = vld [vmem:[%s2 + $0xc8] sm:$0xff]
    %v240 = vld [vmem:[%s2 + $0xd0] sm:$0xff]
    %v241 = vld [vmem:[%s2 + $0xd8] sm:$0xff]
    %v242 = vld [vmem:[%s2 + $0xe0] sm:$0xff]
    %v243 = vld [vmem:[%s2 + $0xe8] sm:$0xff]
    %v244 = vld [vmem:[%s2 + $0xf0] sm:$0xff]
    %v245 = vld [vmem:[%s2 + $0xf8] sm:$0xff]
    %v246 = vld [vmem:[%s2 + $0x100] sm:$0xff]
    %v247 = vld [vmem:[%s2 + $0x108] sm:$0xff]
    %v248 = vld [vmem:[%s2 + $0x110] sm:$0xff]
    %v249 = vld [vmem:[%s2 + $0x118] sm:$0xff]
    %v250 = vld [vmem:[%s2 + $0x120] sm:$0xff]
    %v251 = vld [vmem:[%s2 + $0x128] sm:$0xff]
    %v252 = vld [vmem:[%s2 + $0x130] sm:$0xff]
    %v253 = vld [vmem:[%s2 + $0x138] sm:$0xff]
    %v254 = vld [vmem:[%s2 + $0x140] sm:$0xff]
    %v255 = vld [vmem:[%s2 + $0x148] sm:$0xff]
    %v256 = vld [vmem:[%s2 + $0x150] sm:$0xff]
    %v257 = vld [vmem:[%s2 + $0x158] sm:$0xff]
    %v258 = vld [vmem:[%s2 + $0x160] sm:$0xff]
    %v259 = vld [vmem:[%s2 + $0x168] sm:$0xff]
    %v260 = vld [vmem:[%s2 + $0x170] sm:$0xff]
    %v261 = vld [vmem:[%s2 + $0x178] sm:$0xff]
    %v262 = vld [vmem:[%s2 + $0x180] sm:$0xff]
    %v263 = vld [vmem:[%s2 + $0x188] sm:$0xff]
    %v264 = vld [vmem:[%s2 + $0x190] sm:$0xff]
    %v265 = vld [vmem:[%s2 + $0x198] sm:$0xff]
    %v266 = vld [vmem:[%s2 + $0x1a0] sm:$0xff]
    %v267 = vld [vmem:[%s2 + $0x1a8] sm:$0xff]
    %v268 = vld [vmem:[%s2 + $0x1b0] sm:$0xff]
    %v269 = vld [vmem:[%s2 + $0x1b8] sm:$0xff]
    %v270 = vld [vmem:[%s2 + $0x1c0] sm:$0xff]
    %v271 = vld [vmem:[%s2 + $0x1c8] sm:$0xff]
    %v272 = vld [vmem:[%s2 + $0x1d0] sm:$0xff]
    %v273 = vld [vmem:[%s2 + $0x1d8] sm:$0xff]
    %v274 = vld [vmem:[%s2 + $0x1e0] sm:$0xff]
    %v275 = vld [vmem:[%s2 + $0x1e8] sm:$0xff]
    %v276 = vld [vmem:[%s2 + $0x1f0] sm:$0xff]
    %v277 = vld [vmem:[%s2 + $0x1f8] sm:$0xff]
    %v278 = vld [vmem:[%s2 + $0x200] sm:$0xff]
    %v279 = vld [vmem:[%s2 + $0x208] sm:$0xff]
    %v280 = vld [vmem:[%s2 + $0x210] sm:$0xff]
    %v281 = vld [vmem:[%s2 + $0x218] sm:$0xff]
    %v282 = vld [vmem:[%s2 + $0x220] sm:$0xff]
    %v283 = vld [vmem:[%s2 + $0x228] sm:$0xff]
    %v284 = vld [vmem:[%s2 + $0x230] sm:$0xff]
    %v285 = vld [vmem:[%s2 + $0x238] sm:$0xff]
    %v286 = vld [vmem:[%s2 + $0x240] sm:$0xff]
    %v287 = vld [vmem:[%s2 + $0x248] sm:$0xff]
    %v288 = vld [vmem:[%s2 + $0x250] sm:$0xff]
    %v289 = vld [vmem:[%s2 + $0x258] sm:$0xff]
    %v290 = vld [vmem:[%s2 + $0x260] sm:$0xff]
    %v291 = vld [vmem:[%s2 + $0x268] sm:$0xff]
    %v292 = vld [vmem:[%s2 + $0x270] sm:$0xff]
    %v293 = vld [vmem:[%s2 + $0x278] sm:$0xff]
    %v294 = vld [vmem:[%s2 + $0x280] sm:$0xff]
    %v295 = vld [vmem:[%s2 + $0x288] sm:$0xff]
    %v296 = vld [vmem:[%s2 + $0x290] sm:$0xff]
    %v297 = vld [vmem:[%s2 + $0x298] sm:$0xff]
    %v298 = vld [vmem:[%s2 + $0x2a0] sm:$0xff]
    %v299 = vld [vmem:[%s2 + $0x2a8] sm:$0xff]
    %v300 = vld [vmem:[%s2 + $0x2b0] sm:$0xff]
    %v301 = vld [vmem:[%s2 + $0x2b8] sm:$0xff]
    %v302 = vld [vmem:[%s2 + $0x2c0] sm:$0xff]
    %v303 = vld [vmem:[%s2 + $0x2c8] sm:$0xff]
    %v304 = vld [vmem:[%s2 + $0x2d0] sm:$0xff]
    %v305 = vld [vmem:[%s2 + $0x2d8] sm:$0xff]
    %v306 = vld [vmem:[%s2 + $0x2e0] sm:$0xff]
    %v307 = vld [vmem:[%s2 + $0x2e8] sm:$0xff]
    %v308 = vld [vmem:[%s2 + $0x2f0] sm:$0xff]
    %v309 = vld [vmem:[%s2 + $0x2f8] sm:$0xff]
    %v310 = vld [vmem:[%s2 + $0x300] sm:$0xff]
    %v311 = vld [vmem:[%s2 + $0x308] sm:$0xff]
    %v312 = vld [vmem:[%s2 + $0x310] sm:$0xff]
    %v313 = vld [vmem:[%s2 + $0x318] sm:$0xff]
    %v314 = vld [vmem:[%s2 + $0x320] sm:$0xff]
    %v315 = vld [vmem:[%s2 + $0x328] sm:$0xff]
    %v316 = vld [vmem:[%s2 + $0x330] sm:$0xff]
    %v317 = vld [vmem:[%s2 + $0x338] sm:$0xff]
    %v318 = vld [vmem:[%s2 + $0x340] sm:$0xff]
    %v319 = vld [vmem:[%s2 + $0x348] sm:$0xff]
    %v320 = vld [vmem:[%s2 + $0x350] sm:$0xff]
    %v321 = vld [vmem:[%s2 + $0x358] sm:$0xff]
    %v322 = vld [vmem:[%s2 + $0x360] sm:$0xff]
    %v323 = vld [vmem:[%s2 + $0x368] sm:$0xff]
    %v324 = vld [vmem:[%s2 + $0x370] sm:$0xff]
    %v325 = vld [vmem:[%s2 + $0x378] sm:$0xff]
    %v326 = vld [vmem:[%s2 + $0x380] sm:$0xff]
    %v327 = vld [vmem:[%s2 + $0x388] sm:$0xff]
    %v328 = vld [vmem:[%s2 + $0x390] sm:$0xff]
    %v329 = vld [vmem:[%s2 + $0x398] sm:$0xff]
    %v330 = vld [vmem:[%s2 + $0x3a0] sm:$0xff]
    %v331 = vld [vmem:[%s2 + $0x3a8] sm:$0xff]
    %v332 = vld [vmem:[%s2 + $0x3b0] sm:$0xff]
    %v333 = vld [vmem:[%s2 + $0x3b8] sm:$0xff]
    %v334 = vld [vmem:[%s2 + $0x3c0] sm:$0xff]
    %v335 = vld [vmem:[%s2 + $0x3c8] sm:$0xff]
    %v336 = vld [vmem:[%s2 + $0x3d0] sm:$0xff]
    %v337 = vld [vmem:[%s2 + $0x3d8] sm:$0xff]
    %v338 = vld [vmem:[%s2 + $0x3e0] sm:$0xff]
    %v339 = vld [vmem:[%s2 + $0x3e8] sm:$0xff]
    %v340 = vld [vmem:[%s2 + $0x3f0] sm:$0xff]
    %v341 = vld [vmem:[%s2 + $0x3f8] sm:$0xff]
    %v342 = vld [vmem:[%s2 + $0x400] sm:$0xff]
    %v343 = vld [vmem:[%s2 + $0x408] sm:$0xff]
    %v344 = vld [vmem:[%s2 + $0x410] sm:$0xff]
    %v345 = vld [vmem:[%s2 + $0x418] sm:$0xff]
    %v346 = vld [vmem:[%s2 + $0x420] sm:$0xff]
    %v347 = vld [vmem:[%s2 + $0x428] sm:$0xff]
    %v348 = vld [vmem:[%s2 + $0x430] sm:$0xff]
    %v349 = vld [vmem:[%s2 + $0x438] sm:$0xff]
    %v350 = vld [vmem:[%s2 + $0x440] sm:$0xff]
    %v351 = vld [vmem:[%s2 + $0x448] sm:$0xff]
    %v352 = vld [vmem:[%s2 + $0x450] sm:$0xff]
    %v353 = vld [vmem:[%s2 + $0x458] sm:$0xff]
    %v354 = vld [vmem:[%s2 + $0x460] sm:$0xff]
    %v355 = vld [vmem:[%s2 + $0x468] sm:$0xff]
    %v356 = vld [vmem:[%s2 + $0x470] sm:$0xff]
    %v357 = vld [vmem:[%s2 + $0x478] sm:$0xff]
    %v358 = vld [vmem:[%s2 + $0x480] sm:$0xff]
    %v359 = vld [vmem:[%s2 + $0x488] sm:$0xff]
    %v360 = vld [vmem:[%s2 + $0x490] sm:$0xff]
    %v361 = vld [vmem:[%s2 + $0x498] sm:$0xff]
    %v362 = vld [vmem:[%s2 + $0x4a0] sm:$0xff]
    %v363 = vld [vmem:[%s2 + $0x4a8] sm:$0xff]
    %v364 = vld [vmem:[%s2 + $0x4b0] sm:$0xff]
    %v365 = vld [vmem:[%s2 + $0x4b8] sm:$0xff]
    %v366 = vld [vmem:[%s2 + $0x4c0] sm:$0xff]
    %v367 = vld [vmem:[%s2 + $0x4c8] sm:$0xff]
    %v368 = vld [vmem:[%s2 + $0x4d0] sm:$0xff]
    %v369 = vld [vmem:[%s2 + $0x4d8] sm:$0xff]
    %v370 = vld [vmem:[%s2 + $0x4e0] sm:$0xff]
    %v371 = vld [vmem:[%s2 + $0x4e8] sm:$0xff]
    %v372 = vld [vmem:[%s2 + $0x4f0] sm:$0xff]
    %v373 = vld [vmem:[%s2 + $0x4f8] sm:$0xff]
    %v374 = vld [vmem:[%s2 + $0x500] sm:$0xff]
    %v375 = vld [vmem:[%s2 + $0x508] sm:$0xff]
    %v376 = vld [vmem:[%s2 + $0x510] sm:$0xff]
    %v377 = vld [vmem:[%s2 + $0x518] sm:$0xff]
    %v378 = vld [vmem:[%s2 + $0x520] sm:$0xff]
    %v379 = vld [vmem:[%s2 + $0x528] sm:$0xff]
    %v380 = vld [vmem:[%s2 + $0x530] sm:$0xff]
    %v381 = vld [vmem:[%s2 + $0x538] sm:$0xff]
    %v382 = vld [vmem:[%s2 + $0x540] sm:$0xff]
    %v383 = vld [vmem:[%s2 + $0x548] sm:$0xff]
    %v384 = vld [vmem:[%s2 + $0x550] sm:$0xff]
    %v385 = vld [vmem:[%s2 + $0x558] sm:$0xff]
    %v386 = vld [vmem:[%s2 + $0x560] sm:$0xff]
    %v387 = vld [vmem:[%s2 + $0x568] sm:$0xff]
    %v388 = vld [vmem:[%s2 + $0x570] sm:$0xff]
    %v389 = vld [vmem:[%s2 + $0x578] sm:$0xff]
    %v390 = vld [vmem:[%s2 + $0x580] sm:$0xff]
    %v391 = vld [vmem:[%s2 + $0x588] sm:$0xff]
    %v392 = vld [vmem:[%s2 + $0x590] sm:$0xff]
    %v393 = vld [vmem:[%s2 + $0x598] sm:$0xff]
    %v394 = vld [vmem:[%s2 + $0x5a0] sm:$0xff]
    %v395 = vld [vmem:[%s2 + $0x5a8] sm:$0xff]
    %v396 = vld [vmem:[%s2 + $0x5b0] sm:$0xff]
    %v397 = vld [vmem:[%s2 + $0x5b8] sm:$0xff]
    %v398 = vld [vmem:[%s2 + $0x5c0] sm:$0xff]
    %v399 = vld [vmem:[%s2 + $0x5c8] sm:$0xff]
    %v400 = vld [vmem:[%s2 + $0x5d0] sm:$0xff]
    %v401 = vld [vmem:[%s2 + $0x5d8] sm:$0xff]
    %v402 = vld [vmem:[%s2 + $0x5e0] sm:$0xff]
    %v403 = vld [vmem:[%s2 + $0x5e8] sm:$0xff]
    %v404 = vld [vmem:[%s2 + $0x5f0] sm:$0xff]
    %v405 = vld [vmem:[%s2 + $0x5f8] sm:$0xff]
    %v406 = vld [vmem:[%s2 + $0x600] sm:$0xff]
    %v407 = vld [vmem:[%s2 + $0x608] sm:$0xff]
    %v408 = vld [vmem:[%s2 + $0x610] sm:$0xff]
    %v409 = vld [vmem:[%s2 + $0x618] sm:$0xff]
    %v410 = vld [vmem:[%s2 + $0x620] sm:$0xff]
    %v411 = vld [vmem:[%s2 + $0x628] sm:$0xff]
    %v412 = vld [vmem:[%s2 + $0x630] sm:$0xff]
    %v413 = vld [vmem:[%s2 + $0x638] sm:$0xff]
    %v414 = vld [vmem:[%s2 + $0x640] sm:$0xff]
    %v415 = vld [vmem:[%s2 + $0x648] sm:$0xff]
    %v416 = vld [vmem:[%s2 + $0x650] sm:$0xff]
    %v417 = vld [vmem:[%s2 + $0x658] sm:$0xff]
    %v418 = vld [vmem:[%s2 + $0x660] sm:$0xff]
    %v419 = vld [vmem:[%s2 + $0x668] sm:$0xff]
    %v420 = vld [vmem:[%s2 + $0x670] sm:$0xff]
    %v421 = vld [vmem:[%s2 + $0x678] sm:$0xff]
    %v422 = vld [vmem:[%s2 + $0x680] sm:$0xff]
    %v423 = vld [vmem:[%s2 + $0x688] sm:$0xff]
    %v424 = vld [vmem:[%s2 + $0x690] sm:$0xff]
    %v425 = vld [vmem:[%s2 + $0x698] sm:$0xff]
    %v426 = vld [vmem:[%s2 + $0x6a0] sm:$0xff]
    %v427 = vld [vmem:[%s2 + $0x6a8] sm:$0xff]
    %v428 = vld [vmem:[%s2 + $0x6b0] sm:$0xff]
    %v429 = vld [vmem:[%s2 + $0x6b8] sm:$0xff]
    %v430 = vld [vmem:[%s2 + $0x6c0] sm:$0xff]
    %v431 = vld [vmem:[%s2 + $0x6c8] sm:$0xff]
    %v432 = vld [vmem:[%s2 + $0x6d0] sm:$0xff]
    %v433 = vld [vmem:[%s2 + $0x6d8] sm:$0xff]
    %v434 = vld [vmem:[%s2 + $0x6e0] sm:$0xff]
    %v435 = vld [vmem:[%s2 + $0x6e8] sm:$0xff]
    %v436 = vld [vmem:[%s2 + $0x6f0] sm:$0xff]
    %v437 = vld [vmem:[%s2 + $0x6f8] sm:$0xff]
    %v438 = vld [vmem:[%s2 + $0x700] sm:$0xff]
    %v439 = vld [vmem:[%s2 + $0x708] sm:$0xff]
    %v440 = vld [vmem:[%s2 + $0x710] sm:$0xff]
    %v441 = vld [vmem:[%s2 + $0x718] sm:$0xff]
    %v442 = vld [vmem:[%s2 + $0x720] sm:$0xff]
    %v443 = vld [vmem:[%s2 + $0x728] sm:$0xff]
    %v444 = vld [vmem:[%s2 + $0x730] sm:$0xff]
    %v445 = vld [vmem:[%s2 + $0x738] sm:$0xff]
    %v446 = vld [vmem:[%s2 + $0x740] sm:$0xff]
    %v447 = vld [vmem:[%s2 + $0x748] sm:$0xff]
    %v448 = vld [vmem:[%s2 + $0x750] sm:$0xff]
    %v449 = vld [vmem:[%s2 + $0x758] sm:$0xff]
    %v450 = vld [vmem:[%s2 + $0x760] sm:$0xff]
    %v451 = vld [vmem:[%s2 + $0x768] sm:$0xff]
    %v452 = vld [vmem:[%s2 + $0x770] sm:$0xff]
    %v453 = vld [vmem:[%s2 + $0x778] sm:$0xff]
    %v454 = vld [vmem:[%s2 + $0x780] sm:$0xff]
    %v455 = vld [vmem:[%s2 + $0x788] sm:$0xff]
    %v456 = vld [vmem:[%s2 + $0x790] sm:$0xff]
    %v457 = vld [vmem:[%s2 + $0x798] sm:$0xff]
    %v458 = vld [vmem:[%s2 + $0x7a0] sm:$0xff]
    %v459 = vld [vmem:[%s2 + $0x7a8] sm:$0xff]
    %v460 = vld [vmem:[%s2 + $0x7b0] sm:$0xff]
    %v461 = vld [vmem:[%s2 + $0x7b8] sm:$0xff]
    %v462 = vld [vmem:[%s2 + $0x7c0] sm:$0xff]
    %v463 = vld [vmem:[%s2 + $0x7c8] sm:$0xff]
    %v464 = vld [vmem:[%s2 + $0x7d0] sm:$0xff]
    %v465 = vld [vmem:[%s2 + $0x7d8] sm:$0xff]
    %v466 = vld [vmem:[%s2 + $0x7e0] sm:$0xff]
    %v467 = vld [vmem:[%s2 + $0x7e8] sm:$0xff]
    %v468 = vld [vmem:[%s2 + $0x7f0] sm:$0xff]
    %v469 = vld [vmem:[%s2 + $0x7f8] sm:$0xff]
    %v470 = vld [vmem:[%s2 + $0x800] sm:$0xff]
    %v471 = vld [vmem:[%s2 + $0x808] sm:$0xff]
    %v472 = vld [vmem:[%s2 + $0x810] sm:$0xff]
    %v473 = vld [vmem:[%s2 + $0x818] sm:$0xff]
    %v474 = vld [vmem:[%s2 + $0x820] sm:$0xff]
    %v475 = vld [vmem:[%s2 + $0x828] sm:$0xff]
    %v476 = vld [vmem:[%s2 + $0x830] sm:$0xff]
    %v477 = vld [vmem:[%s2 + $0x838] sm:$0xff]
    %v478 = vld [vmem:[%s2 + $0x840] sm:$0xff]
    %v479 = vld [vmem:[%s2 + $0x848] sm:$0xff]
    %v480 = vld [vmem:[%s2 + $0x850] sm:$0xff]
    %v481 = vld [vmem:[%s2 + $0x858] sm:$0xff]
    %v482 = vld [vmem:[%s2 + $0x860] sm:$0xff]
    %v483 = vld [vmem:[%s2 + $0x868] sm:$0xff]
    %v484 = vld [vmem:[%s2 + $0x870] sm:$0xff]
    %v485 = vld [vmem:[%s2 + $0x878] sm:$0xff]
    %v486 = vld [vmem:[%s2 + $0x880] sm:$0xff]
    %v487 = vld [vmem:[%s2 + $0x888] sm:$0xff]
    %v488 = vld [vmem:[%s2 + $0x890] sm:$0xff]
    %v489 = vld [vmem:[%s2 + $0x898] sm:$0xff]
    %v490 = vld [vmem:[%s2 + $0x8a0] sm:$0xff]
    %v491 = vld [vmem:[%s2 + $0x8a8] sm:$0xff]
    %v492 = vld [vmem:[%s2 + $0x8b0] sm:$0xff]
    %v493 = vld [vmem:[%s2 + $0x8b8] sm:$0xff]
    %v494 = vld [vmem:[%s2 + $0x8c0] sm:$0xff]
    %v495 = vld [vmem:[%s2 + $0x8c8] sm:$0xff]
    %v496 = vld [vmem:[%s2 + $0x8d0] sm:$0xff]
    %v497 = vld [vmem:[%s2 + $0x8d8] sm:$0xff]
    %v498 = vld [vmem:[%s2 + $0x8e0] sm:$0xff]
    %v499 = vld [vmem:[%s2 + $0x8e8] sm:$0xff]
    %v500 = vld [vmem:[%s2 + $0x8f0] sm:$0xff]
    %v501 = vld [vmem:[%s2 + $0x8f8] sm:$0xff]
    %v502 = vld [vmem:[%s2 + $0x900] sm:$0xff]
    %v503 = vld [vmem:[%s2 + $0x908] sm:$0xff]
    %v504 = vld [vmem:[%s2 + $0x910] sm:$0xff]
    %v505 = vld [vmem:[%s2 + $0x918] sm:$0xff]
    %v506 = vld [vmem:[%s2 + $0x920] sm:$0xff]
    %v507 = vld [vmem:[%s2 + $0x928] sm:$0xff]
    %v508 = vld [vmem:[%s2 + $0x930] sm:$0xff]
    %v509 = vld [vmem:[%s2 + $0x938] sm:$0xff]
    %v510 = vld [vmem:[%s2 + $0x940] sm:$0xff]
    %v511 = vld [vmem:[%s2 + $0x948] sm:$0xff]
    %v512 = vld [vmem:[%s2 + $0x950] sm:$0xff]
    %v513 = vld [vmem:[%s2 + $0x958] sm:$0xff]
    %v514 = vld [vmem:[%s2 + $0x960] sm:$0xff]
    %v515 = vld [vmem:[%s2 + $0x968] sm:$0xff]
    %v516 = vld [vmem:[%s2 + $0x970] sm:$0xff]
    %v517 = vld [vmem:[%s2 + $0x978] sm:$0xff]
    %v518 = vld [vmem:[%s2 + $0x980] sm:$0xff]
    %v519 = vld [vmem:[%s2 + $0x988] sm:$0xff]
    %v520 = vld [vmem:[%s2 + $0x990] sm:$0xff]
    %v521 = vld [vmem:[%s2 + $0x998] sm:$0xff]
    %v522 = vld [vmem:[%s2 + $0x9a0] sm:$0xff]
    %v523 = vld [vmem:[%s2 + $0x9a8] sm:$0xff]
    %v524 = vld [vmem:[%s2 + $0x9b0] sm:$0xff]
    %v525 = vld [vmem:[%s2 + $0x9b8] sm:$0xff]
    %v526 = vld [vmem:[%s2 + $0x9c0] sm:$0xff]
    %v527 = vld [vmem:[%s2 + $0x9c8] sm:$0xff]
    %v528 = vld [vmem:[%s2 + $0x9d0] sm:$0xff]
    %v529 = vld [vmem:[%s2 + $0x9d8] sm:$0xff]
    %v530 = vld [vmem:[%s2 + $0x9e0] sm:$0xff]
    %v531 = vld [vmem:[%s2 + $0x9e8] sm:$0xff]
    %v532 = vld [vmem:[%s2 + $0x9f0] sm:$0xff]
    %v533 = vld [vmem:[%s2 + $0x9f8] sm:$0xff]
    %v534 = vld [vmem:[%s2 + $0xa00] sm:$0xff]
    %v535 = vld [vmem:[%s2 + $0xa08] sm:$0xff]
    %v536 = vld [vmem:[%s2 + $0xa10] sm:$0xff]
    %v537 = vld [vmem:[%s2 + $0xa18] sm:$0xff]
    %v538 = vld [vmem:[%s2 + $0xa20] sm:$0xff]
    %v539 = vld [vmem:[%s2 + $0xa28] sm:$0xff]
    %v540 = vld [vmem:[%s2 + $0xa30] sm:$0xff]
    %v541 = vld [vmem:[%s2 + $0xa38] sm:$0xff]
    %v542 = vld [vmem:[%s2 + $0xa40] sm:$0xff]
    %v543 = vld [vmem:[%s2 + $0xa48] sm:$0xff]
    %v544 = vld [vmem:[%s2 + $0xa50] sm:$0xff]
    %v545 = vld [vmem:[%s2 + $0xa58] sm:$0xff]
    %v546 = vld [vmem:[%s2 + $0xa60] sm:$0xff]
    %v547 = vld [vmem:[%s2 + $0xa68] sm:$0xff]
    %v548 = vld [vmem:[%s2 + $0xa70] sm:$0xff]
    %v549 = vld [vmem:[%s2 + $0xa78] sm:$0xff]
    %v550 = vld [vmem:[%s2 + $0xa80] sm:$0xff]
    %v551 = vld [vmem:[%s2 + $0xa88] sm:$0xff]
    %v552 = vld [vmem:[%s2 + $0xa90] sm:$0xff]
    %v553 = vld [vmem:[%s2 + $0xa98] sm:$0xff]
    %v554 = vld [vmem:[%s2 + $0xaa0] sm:$0xff]
    %v555 = vld [vmem:[%s2 + $0xaa8] sm:$0xff]
    %v556 = vld [vmem:[%s2 + $0xab0] sm:$0xff]
    %v557 = vld [vmem:[%s2 + $0xab8] sm:$0xff]
    %v558 = vld [vmem:[%s2 + $0xac0] sm:$0xff]
    %v559 = vld [vmem:[%s2 + $0xac8] sm:$0xff]
    %v560 = vld [vmem:[%s2 + $0xad0] sm:$0xff]
    %v561 = vld [vmem:[%s2 + $0xad8] sm:$0xff]
    %v562 = vld [vmem:[%s2 + $0xae0] sm:$0xff]
    %v563 = vld [vmem:[%s2 + $0xae8] sm:$0xff]
    %v564 = vld [vmem:[%s2 + $0xaf0] sm:$0xff]
    %v565 = vld [vmem:[%s2 + $0xaf8] sm:$0xff]
    %v566 = vld [vmem:[%s2 + $0xb00] sm:$0xff]
    %v567 = vld [vmem:[%s2 + $0xb08] sm:$0xff]
    %v568 = vld [vmem:[%s2 + $0xb10] sm:$0xff]
    %v569 = vld [vmem:[%s2 + $0xb18] sm:$0xff]
    %v570 = vld [vmem:[%s2 + $0xb20] sm:$0xff]
    %v571 = vld [vmem:[%s2 + $0xb28] sm:$0xff]
    %v572 = vld [vmem:[%s2 + $0xb30] sm:$0xff]
    %v573 = vld [vmem:[%s2 + $0xb38] sm:$0xff]
    %v574 = vld [vmem:[%s2 + $0xb40] sm:$0xff]
    %v575 = vld [vmem:[%s2 + $0xb48] sm:$0xff]
    %v576 = vld [vmem:[%s2 + $0xb50] sm:$0xff]
    %v577 = vld [vmem:[%s2 + $0xb58] sm:$0xff]
    %v578 = vld [vmem:[%s2 + $0xb60] sm:$0xff]
    %v579 = vld [vmem:[%s2 + $0xb68] sm:$0xff]
    %v580 = vld [vmem:[%s2 + $0xb70] sm:$0xff]
    %v581 = vld [vmem:[%s2 + $0xb78] sm:$0xff]
    %v582 = vld [vmem:[%s2 + $0xb80] sm:$0xff]
    %v583 = vld [vmem:[%s2 + $0xb88] sm:$0xff]
    %v584 = vld [vmem:[%s2 + $0xb90] sm:$0xff]
    %v585 = vld [vmem:[%s2 + $0xb98] sm:$0xff]
    %v586 = vld [vmem:[%s2 + $0xba0] sm:$0xff]
    %v587 = vld [vmem:[%s2 + $0xba8] sm:$0xff]
    %v588 = vld [vmem:[%s2 + $0xbb0] sm:$0xff]
    %v589 = vld [vmem:[%s2 + $0xbb8] sm:$0xff]
    %v590 = vld [vmem:[%s2 + $0xbc0] sm:$0xff]
    %v591 = vld [vmem:[%s2 + $0xbc8] sm:$0xff]
    %v592 = vld [vmem:[%s2 + $0xbd0] sm:$0xff]
    %v593 = vld [vmem:[%s2 + $0xbd8] sm:$0xff]
    %v594 = vld [vmem:[%s2 + $0xbe0] sm:$0xff]
    %v595 = vld [vmem:[%s2 + $0xbe8] sm:$0xff]
    %v596 = vld [vmem:[%s2 + $0xbf0] sm:$0xff]
    %v597 = vld [vmem:[%s2 + $0xbf8] sm:$0xff]
    %v598 = vld [vmem:[%s2 + $0xc00] sm:$0xff]
    %v599 = vld [vmem:[%s2 + $0xc08] sm:$0xff]
    %v600 = vld [vmem:[%s2 + $0xc10] sm:$0xff]
    %v601 = vld [vmem:[%s2 + $0xc18] sm:$0xff]
    %v602 = vld [vmem:[%s2 + $0xc20] sm:$0xff]
    %v603 = vld [vmem:[%s2 + $0xc28] sm:$0xff]
    %v604 = vld [vmem:[%s2 + $0xc30] sm:$0xff]
    %v605 = vld [vmem:[%s2 + $0xc38] sm:$0xff]
    %v606 = vld [vmem:[%s3] sm:$0x3]
    %v608 = vlaneseq
    %v609 = vshrl.u32 %v608, 7
    %v610 = vsub.s32 0, %v609
    %v611 = vrot.slane %v606, %v610
    %v612 = vlaneseq
    %v613 = vshrl.u32 %v612, 7
    %v614 = vsub.s32 1, %v613
    %v615 = vrot.slane %v606, %v614
    %v1010 = vunpack.c.l.b16 %v214
    %v1011 = vunpack.c.h.b16 %v214
    %v1012 = vunpack.c.l.b16 %v215
    %v1013 = vunpack.c.h.b16 %v215
    %v1014 = vunpack.c.l.b16 %v216
    %v1015 = vunpack.c.h.b16 %v216
    %v1016 = vunpack.c.l.b16 %v217
    %v1017 = vunpack.c.h.b16 %v217
    %v1018 = vunpack.c.l.b16 %v218
    %v1019 = vunpack.c.h.b16 %v218
    %v1020 = vunpack.c.l.b16 %v219
    %v1021 = vunpack.c.h.b16 %v219
    %v1022 = vunpack.c.l.b16 %v220
    %v1023 = vunpack.c.h.b16 %v220
    %v1024 = vunpack.c.l.b16 %v221
    %v1025 = vunpack.c.h.b16 %v221
    %v1026 = vunpack.c.l.b16 %v222
    %v1027 = vunpack.c.h.b16 %v222
    %v1028 = vunpack.c.l.b16 %v223
    %v1029 = vunpack.c.h.b16 %v223
    %v1030 = vunpack.c.l.b16 %v224
    %v1031 = vunpack.c.h.b16 %v224
    %v1032 = vunpack.c.l.b16 %v225
    %v1033 = vunpack.c.h.b16 %v225
    %v1034 = vunpack.c.l.b16 %v226
    %v1035 = vunpack.c.h.b16 %v226
    %v1036 = vunpack.c.l.b16 %v227
    %v1037 = vunpack.c.h.b16 %v227
    %v1038 = vunpack.c.l.b16 %v228
    %v1039 = vunpack.c.h.b16 %v228
    %v1040 = vunpack.c.l.b16 %v229
    %v1041 = vunpack.c.h.b16 %v229
    %v1042 = vunpack.c.l.b16 %v230
    %v1043 = vunpack.c.h.b16 %v230
    %v1044 = vunpack.c.l.b16 %v231
    %v1045 = vunpack.c.h.b16 %v231
    %v1046 = vunpack.c.l.b16 %v232
    %v1047 = vunpack.c.h.b16 %v232
    %v1048 = vunpack.c.l.b16 %v233
    %v1049 = vunpack.c.h.b16 %v233
    %v1050 = vunpack.c.l.b16 %v234
    %v1051 = vunpack.c.h.b16 %v234
    %v1052 = vunpack.c.l.b16 %v235
    %v1053 = vunpack.c.h.b16 %v235
    %v1054 = vunpack.c.l.b16 %v236
    %v1055 = vunpack.c.h.b16 %v236
    %v1056 = vunpack.c.l.b16 %v237
    %v1057 = vunpack.c.h.b16 %v237
    %v1058 = vunpack.c.l.b16 %v238
    %v1059 = vunpack.c.h.b16 %v238
    %v1060 = vunpack.c.l.b16 %v239
    %v1061 = vunpack.c.h.b16 %v239
    %v1062 = vunpack.c.l.b16 %v240
    %v1063 = vunpack.c.h.b16 %v240
    %v1064 = vunpack.c.l.b16 %v241
    %v1065 = vunpack.c.h.b16 %v241
    %v1066 = vunpack.c.l.b16 %v242
    %v1067 = vunpack.c.h.b16 %v242
    %v1068 = vunpack.c.l.b16 %v243
    %v1069 = vunpack.c.h.b16 %v243
    %v1070 = vunpack.c.l.b16 %v244
    %v1071 = vunpack.c.h.b16 %v244
    %v1072 = vunpack.c.l.b16 %v245
    %v1073 = vunpack.c.h.b16 %v245
    %v1074 = vunpack.c.l.b16 %v246
    %v1075 = vunpack.c.h.b16 %v246
    %v1076 = vunpack.c.l.b16 %v247
    %v1077 = vunpack.c.h.b16 %v247
    %v1078 = vunpack.c.l.b16 %v248
    %v1079 = vunpack.c.h.b16 %v248
    %v1080 = vunpack.c.l.b16 %v249
    %v1081 = vunpack.c.h.b16 %v249
    %v1082 = vunpack.c.l.b16 %v250
    %v1083 = vunpack.c.h.b16 %v250
    %v1084 = vunpack.c.l.b16 %v251
    %v1085 = vunpack.c.h.b16 %v251
    %v1086 = vunpack.c.l.b16 %v252
    %v1087 = vunpack.c.h.b16 %v252
    %v1088 = vunpack.c.l.b16 %v253
    %v1089 = vunpack.c.h.b16 %v253
    %v1090 = vunpack.c.l.b16 %v254
    %v1091 = vunpack.c.h.b16 %v254
    %v1092 = vunpack.c.l.b16 %v255
    %v1093 = vunpack.c.h.b16 %v255
    %v1094 = vunpack.c.l.b16 %v256
    %v1095 = vunpack.c.h.b16 %v256
    %v1096 = vunpack.c.l.b16 %v257
    %v1097 = vunpack.c.h.b16 %v257
    %v1098 = vunpack.c.l.b16 %v258
    %v1099 = vunpack.c.h.b16 %v258
    %v1100 = vunpack.c.l.b16 %v259
    %v1101 = vunpack.c.h.b16 %v259
    %v1102 = vunpack.c.l.b16 %v260
    %v1103 = vunpack.c.h.b16 %v260
    %v1104 = vunpack.c.l.b16 %v261
    %v1105 = vunpack.c.h.b16 %v261
    %v1106 = vunpack.c.l.b16 %v262
    %v1107 = vunpack.c.h.b16 %v262
    %v1108 = vunpack.c.l.b16 %v263
    %v1109 = vunpack.c.h.b16 %v263
    %v1110 = vunpack.c.l.b16 %v264
    %v1111 = vunpack.c.h.b16 %v264
    %v1112 = vunpack.c.l.b16 %v265
    %v1113 = vunpack.c.h.b16 %v265
    %v1114 = vunpack.c.l.b16 %v266
    %v1115 = vunpack.c.h.b16 %v266
    %v1116 = vunpack.c.l.b16 %v267
    %v1117 = vunpack.c.h.b16 %v267
    %v1118 = vunpack.c.l.b16 %v268
    %v1119 = vunpack.c.h.b16 %v268
    %v1120 = vunpack.c.l.b16 %v269
    %v1121 = vunpack.c.h.b16 %v269
    %v1122 = vunpack.c.l.b16 %v270
    %v1123 = vunpack.c.h.b16 %v270
    %v1124 = vunpack.c.l.b16 %v271
    %v1125 = vunpack.c.h.b16 %v271
    %v1126 = vunpack.c.l.b16 %v272
    %v1127 = vunpack.c.h.b16 %v272
    %v1128 = vunpack.c.l.b16 %v273
    %v1129 = vunpack.c.h.b16 %v273
    %v1130 = vunpack.c.l.b16 %v274
    %v1131 = vunpack.c.h.b16 %v274
    %v1132 = vunpack.c.l.b16 %v275
    %v1133 = vunpack.c.h.b16 %v275
    %v1134 = vunpack.c.l.b16 %v276
    %v1135 = vunpack.c.h.b16 %v276
    %v1136 = vunpack.c.l.b16 %v277
    %v1137 = vunpack.c.h.b16 %v277
    %v1138 = vunpack.c.l.b16 %v278
    %v1139 = vunpack.c.h.b16 %v278
    %v1140 = vunpack.c.l.b16 %v279
    %v1141 = vunpack.c.h.b16 %v279
    %v1142 = vunpack.c.l.b16 %v280
    %v1143 = vunpack.c.h.b16 %v280
    %v1144 = vunpack.c.l.b16 %v281
    %v1145 = vunpack.c.h.b16 %v281
    %v1146 = vunpack.c.l.b16 %v282
    %v1147 = vunpack.c.h.b16 %v282
    %v1148 = vunpack.c.l.b16 %v283
    %v1149 = vunpack.c.h.b16 %v283
    %v1150 = vunpack.c.l.b16 %v284
    %v1151 = vunpack.c.h.b16 %v284
    %v1152 = vunpack.c.l.b16 %v285
    %v1153 = vunpack.c.h.b16 %v285
    %v1154 = vunpack.c.l.b16 %v286
    %v1155 = vunpack.c.h.b16 %v286
    %v1156 = vunpack.c.l.b16 %v287
    %v1157 = vunpack.c.h.b16 %v287
    %v1158 = vunpack.c.l.b16 %v288
    %v1159 = vunpack.c.h.b16 %v288
    %v1160 = vunpack.c.l.b16 %v289
    %v1161 = vunpack.c.h.b16 %v289
    %v1162 = vunpack.c.l.b16 %v290
    %v1163 = vunpack.c.h.b16 %v290
    %v1164 = vunpack.c.l.b16 %v291
    %v1165 = vunpack.c.h.b16 %v291
    %v1166 = vunpack.c.l.b16 %v292
    %v1167 = vunpack.c.h.b16 %v292
    %v1168 = vunpack.c.l.b16 %v293
    %v1169 = vunpack.c.h.b16 %v293
    %v1170 = vunpack.c.l.b16 %v294
    %v1171 = vunpack.c.h.b16 %v294
    %v1172 = vunpack.c.l.b16 %v295
    %v1173 = vunpack.c.h.b16 %v295
    %v1174 = vunpack.c.l.b16 %v296
    %v1175 = vunpack.c.h.b16 %v296
    %v1176 = vunpack.c.l.b16 %v297
    %v1177 = vunpack.c.h.b16 %v297
    %v1178 = vunpack.c.l.b16 %v298
    %v1179 = vunpack.c.h.b16 %v298
    %v1180 = vunpack.c.l.b16 %v299
    %v1181 = vunpack.c.h.b16 %v299
    %v1182 = vunpack.c.l.b16 %v300
    %v1183 = vunpack.c.h.b16 %v300
    %v1184 = vunpack.c.l.b16 %v301
    %v1185 = vunpack.c.h.b16 %v301
    %v1186 = vunpack.c.l.b16 %v302
    %v1187 = vunpack.c.h.b16 %v302
    %v1188 = vunpack.c.l.b16 %v303
    %v1189 = vunpack.c.h.b16 %v303
    %v1190 = vunpack.c.l.b16 %v304
    %v1191 = vunpack.c.h.b16 %v304
    %v1192 = vunpack.c.l.b16 %v305
    %v1193 = vunpack.c.h.b16 %v305
    %v1194 = vunpack.c.l.b16 %v306
    %v1195 = vunpack.c.h.b16 %v306
    %v1196 = vunpack.c.l.b16 %v307
    %v1197 = vunpack.c.h.b16 %v307
    %v1198 = vunpack.c.l.b16 %v308
    %v1199 = vunpack.c.h.b16 %v308
    %v1200 = vunpack.c.l.b16 %v309
    %v1201 = vunpack.c.h.b16 %v309
    %v1202 = vunpack.c.l.b16 %v310
    %v1203 = vunpack.c.h.b16 %v310
    %v1204 = vunpack.c.l.b16 %v311
    %v1205 = vunpack.c.h.b16 %v311
    %v1206 = vunpack.c.l.b16 %v312
    %v1207 = vunpack.c.h.b16 %v312
    %v1208 = vunpack.c.l.b16 %v313
    %v1209 = vunpack.c.h.b16 %v313
    %v1210 = vunpack.c.l.b16 %v314
    %v1211 = vunpack.c.h.b16 %v314
    %v1212 = vunpack.c.l.b16 %v315
    %v1213 = vunpack.c.h.b16 %v315
    %v1214 = vunpack.c.l.b16 %v316
    %v1215 = vunpack.c.h.b16 %v316
    %v1216 = vunpack.c.l.b16 %v317
    %v1217 = vunpack.c.h.b16 %v317
    %v1218 = vunpack.c.l.b16 %v318
    %v1219 = vunpack.c.h.b16 %v318
    %v1220 = vunpack.c.l.b16 %v319
    %v1221 = vunpack.c.h.b16 %v319
    %v1222 = vunpack.c.l.b16 %v320
    %v1223 = vunpack.c.h.b16 %v320
    %v1224 = vunpack.c.l.b16 %v321
    %v1225 = vunpack.c.h.b16 %v321
    %v1226 = vunpack.c.l.b16 %v322
    %v1227 = vunpack.c.h.b16 %v322
    %v1228 = vunpack.c.l.b16 %v323
    %v1229 = vunpack.c.h.b16 %v323
    %v1230 = vunpack.c.l.b16 %v324
    %v1231 = vunpack.c.h.b16 %v324
    %v1232 = vunpack.c.l.b16 %v325
    %v1233 = vunpack.c.h.b16 %v325
    %v1234 = vunpack.c.l.b16 %v326
    %v1235 = vunpack.c.h.b16 %v326
    %v1236 = vunpack.c.l.b16 %v327
    %v1237 = vunpack.c.h.b16 %v327
    %v1238 = vunpack.c.l.b16 %v328
    %v1239 = vunpack.c.h.b16 %v328
    %v1240 = vunpack.c.l.b16 %v329
    %v1241 = vunpack.c.h.b16 %v329
    %v1242 = vunpack.c.l.b16 %v330
    %v1243 = vunpack.c.h.b16 %v330
    %v1244 = vunpack.c.l.b16 %v331
    %v1245 = vunpack.c.h.b16 %v331
    %v1246 = vunpack.c.l.b16 %v332
    %v1247 = vunpack.c.h.b16 %v332
    %v1248 = vunpack.c.l.b16 %v333
    %v1249 = vunpack.c.h.b16 %v333
    %v1250 = vunpack.c.l.b16 %v334
    %v1251 = vunpack.c.h.b16 %v334
    %v1252 = vunpack.c.l.b16 %v335
    %v1253 = vunpack.c.h.b16 %v335
    %v1254 = vunpack.c.l.b16 %v336
    %v1255 = vunpack.c.h.b16 %v336
    %v1256 = vunpack.c.l.b16 %v337
    %v1257 = vunpack.c.h.b16 %v337
    %v1258 = vunpack.c.l.b16 %v338
    %v1259 = vunpack.c.h.b16 %v338
    %v1260 = vunpack.c.l.b16 %v339
    %v1261 = vunpack.c.h.b16 %v339
    %v1262 = vunpack.c.l.b16 %v340
    %v1263 = vunpack.c.h.b16 %v340
    %v1264 = vunpack.c.l.b16 %v341
    %v1265 = vunpack.c.h.b16 %v341
    %v1266 = vunpack.c.l.b16 %v342
    %v1267 = vunpack.c.h.b16 %v342
    %v1268 = vunpack.c.l.b16 %v343
    %v1269 = vunpack.c.h.b16 %v343
    %v1270 = vunpack.c.l.b16 %v344
    %v1271 = vunpack.c.h.b16 %v344
    %v1272 = vunpack.c.l.b16 %v345
    %v1273 = vunpack.c.h.b16 %v345
    %v1274 = vunpack.c.l.b16 %v346
    %v1275 = vunpack.c.h.b16 %v346
    %v1276 = vunpack.c.l.b16 %v347
    %v1277 = vunpack.c.h.b16 %v347
    %v1278 = vunpack.c.l.b16 %v348
    %v1279 = vunpack.c.h.b16 %v348
    %v1280 = vunpack.c.l.b16 %v349
    %v1281 = vunpack.c.h.b16 %v349
    %v1282 = vunpack.c.l.b16 %v350
    %v1283 = vunpack.c.h.b16 %v350
    %v1284 = vunpack.c.l.b16 %v351
    %v1285 = vunpack.c.h.b16 %v351
    %v1286 = vunpack.c.l.b16 %v352
    %v1287 = vunpack.c.h.b16 %v352
    %v1288 = vunpack.c.l.b16 %v353
    %v1289 = vunpack.c.h.b16 %v353
    %v1290 = vunpack.c.l.b16 %v354
    %v1291 = vunpack.c.h.b16 %v354
    %v1292 = vunpack.c.l.b16 %v355
    %v1293 = vunpack.c.h.b16 %v355
    %v1294 = vunpack.c.l.b16 %v356
    %v1295 = vunpack.c.h.b16 %v356
    %v1296 = vunpack.c.l.b16 %v357
    %v1297 = vunpack.c.h.b16 %v357
    %v1298 = vunpack.c.l.b16 %v358
    %v1299 = vunpack.c.h.b16 %v358
    %v1300 = vunpack.c.l.b16 %v359
    %v1301 = vunpack.c.h.b16 %v359
    %v1302 = vunpack.c.l.b16 %v360
    %v1303 = vunpack.c.h.b16 %v360
    %v1304 = vunpack.c.l.b16 %v361
    %v1305 = vunpack.c.h.b16 %v361
    %v1306 = vunpack.c.l.b16 %v362
    %v1307 = vunpack.c.h.b16 %v362
    %v1308 = vunpack.c.l.b16 %v363
    %v1309 = vunpack.c.h.b16 %v363
    %v1310 = vunpack.c.l.b16 %v364
    %v1311 = vunpack.c.h.b16 %v364
    %v1312 = vunpack.c.l.b16 %v365
    %v1313 = vunpack.c.h.b16 %v365
    %v1314 = vunpack.c.l.b16 %v366
    %v1315 = vunpack.c.h.b16 %v366
    %v1316 = vunpack.c.l.b16 %v367
    %v1317 = vunpack.c.h.b16 %v367
    %v1318 = vunpack.c.l.b16 %v368
    %v1319 = vunpack.c.h.b16 %v368
    %v1320 = vunpack.c.l.b16 %v369
    %v1321 = vunpack.c.h.b16 %v369
    %v1322 = vunpack.c.l.b16 %v370
    %v1323 = vunpack.c.h.b16 %v370
    %v1324 = vunpack.c.l.b16 %v371
    %v1325 = vunpack.c.h.b16 %v371
    %v1326 = vunpack.c.l.b16 %v372
    %v1327 = vunpack.c.h.b16 %v372
    %v1328 = vunpack.c.l.b16 %v373
    %v1329 = vunpack.c.h.b16 %v373
    %v1330 = vunpack.c.l.b16 %v374
    %v1331 = vunpack.c.h.b16 %v374
    %v1332 = vunpack.c.l.b16 %v375
    %v1333 = vunpack.c.h.b16 %v375
    %v1334 = vunpack.c.l.b16 %v376
    %v1335 = vunpack.c.h.b16 %v376
    %v1336 = vunpack.c.l.b16 %v377
    %v1337 = vunpack.c.h.b16 %v377
    %v1338 = vunpack.c.l.b16 %v378
    %v1339 = vunpack.c.h.b16 %v378
    %v1340 = vunpack.c.l.b16 %v379
    %v1341 = vunpack.c.h.b16 %v379
    %v1342 = vunpack.c.l.b16 %v380
    %v1343 = vunpack.c.h.b16 %v380
    %v1344 = vunpack.c.l.b16 %v381
    %v1345 = vunpack.c.h.b16 %v381
    %v1346 = vunpack.c.l.b16 %v382
    %v1347 = vunpack.c.h.b16 %v382
    %v1348 = vunpack.c.l.b16 %v383
    %v1349 = vunpack.c.h.b16 %v383
    %v1350 = vunpack.c.l.b16 %v384
    %v1351 = vunpack.c.h.b16 %v384
    %v1352 = vunpack.c.l.b16 %v385
    %v1353 = vunpack.c.h.b16 %v385
    %v1354 = vunpack.c.l.b16 %v386
    %v1355 = vunpack.c.h.b16 %v386
    %v1356 = vunpack.c.l.b16 %v387
    %v1357 = vunpack.c.h.b16 %v387
    %v1358 = vunpack.c.l.b16 %v388
    %v1359 = vunpack.c.h.b16 %v388
    %v1360 = vunpack.c.l.b16 %v389
    %v1361 = vunpack.c.h.b16 %v389
    %v1362 = vunpack.c.l.b16 %v390
    %v1363 = vunpack.c.h.b16 %v390
    %v1364 = vunpack.c.l.b16 %v391
    %v1365 = vunpack.c.h.b16 %v391
    %v1366 = vunpack.c.l.b16 %v392
    %v1367 = vunpack.c.h.b16 %v392
    %v1368 = vunpack.c.l.b16 %v393
    %v1369 = vunpack.c.h.b16 %v393
    %v1370 = vunpack.c.l.b16 %v394
    %v1371 = vunpack.c.h.b16 %v394
    %v1372 = vunpack.c.l.b16 %v395
    %v1373 = vunpack.c.h.b16 %v395
    %v1374 = vunpack.c.l.b16 %v396
    %v1375 = vunpack.c.h.b16 %v396
    %v1376 = vunpack.c.l.b16 %v397
    %v1377 = vunpack.c.h.b16 %v397
    %v1378 = vunpack.c.l.b16 %v398
    %v1379 = vunpack.c.h.b16 %v398
    %v1380 = vunpack.c.l.b16 %v399
    %v1381 = vunpack.c.h.b16 %v399
    %v1382 = vunpack.c.l.b16 %v400
    %v1383 = vunpack.c.h.b16 %v400
    %v1384 = vunpack.c.l.b16 %v401
    %v1385 = vunpack.c.h.b16 %v401
    %v1386 = vunpack.c.l.b16 %v402
    %v1387 = vunpack.c.h.b16 %v402
    %v1388 = vunpack.c.l.b16 %v403
    %v1389 = vunpack.c.h.b16 %v403
    %v1390 = vunpack.c.l.b16 %v404
    %v1391 = vunpack.c.h.b16 %v404
    %v1392 = vunpack.c.l.b16 %v405
    %v1393 = vunpack.c.h.b16 %v405
    %v1394 = vunpack.c.l.b16 %v406
    %v1395 = vunpack.c.h.b16 %v406
    %v1396 = vunpack.c.l.b16 %v407
    %v1397 = vunpack.c.h.b16 %v407
    %v1398 = vunpack.c.l.b16 %v408
    %v1399 = vunpack.c.h.b16 %v408
    %v1400 = vunpack.c.l.b16 %v409
    %v1401 = vunpack.c.h.b16 %v409
    %v1402 = vunpack.c.l.b16 %v410
    %v1403 = vunpack.c.h.b16 %v410
    %v1404 = vunpack.c.l.b16 %v411
    %v1405 = vunpack.c.h.b16 %v411
    %v1406 = vunpack.c.l.b16 %v412
    %v1407 = vunpack.c.h.b16 %v412
    %v1408 = vunpack.c.l.b16 %v413
    %v1409 = vunpack.c.h.b16 %v413
    %v1410 = vunpack.c.l.b16 %v414
    %v1411 = vunpack.c.h.b16 %v414
    %v1412 = vunpack.c.l.b16 %v415
    %v1413 = vunpack.c.h.b16 %v415
    %v1414 = vunpack.c.l.b16 %v416
    %v1415 = vunpack.c.h.b16 %v416
    %v1416 = vunpack.c.l.b16 %v417
    %v1417 = vunpack.c.h.b16 %v417
    %v1418 = vunpack.c.l.b16 %v418
    %v1419 = vunpack.c.h.b16 %v418
    %v1420 = vunpack.c.l.b16 %v419
    %v1421 = vunpack.c.h.b16 %v419
    %v1422 = vunpack.c.l.b16 %v420
    %v1423 = vunpack.c.h.b16 %v420
    %v1424 = vunpack.c.l.b16 %v421
    %v1425 = vunpack.c.h.b16 %v421
    %v1426 = vunpack.c.l.b16 %v422
    %v1427 = vunpack.c.h.b16 %v422
    %v1428 = vunpack.c.l.b16 %v423
    %v1429 = vunpack.c.h.b16 %v423
    %v1430 = vunpack.c.l.b16 %v424
    %v1431 = vunpack.c.h.b16 %v424
    %v1432 = vunpack.c.l.b16 %v425
    %v1433 = vunpack.c.h.b16 %v425
    %v1434 = vunpack.c.l.b16 %v426
    %v1435 = vunpack.c.h.b16 %v426
    %v1436 = vunpack.c.l.b16 %v427
    %v1437 = vunpack.c.h.b16 %v427
    %v1438 = vunpack.c.l.b16 %v428
    %v1439 = vunpack.c.h.b16 %v428
    %v1440 = vunpack.c.l.b16 %v429
    %v1441 = vunpack.c.h.b16 %v429
    %v1442 = vunpack.c.l.b16 %v430
    %v1443 = vunpack.c.h.b16 %v430
    %v1444 = vunpack.c.l.b16 %v431
    %v1445 = vunpack.c.h.b16 %v431
    %v1446 = vunpack.c.l.b16 %v432
    %v1447 = vunpack.c.h.b16 %v432
    %v1448 = vunpack.c.l.b16 %v433
    %v1449 = vunpack.c.h.b16 %v433
    %v1450 = vunpack.c.l.b16 %v434
    %v1451 = vunpack.c.h.b16 %v434
    %v1452 = vunpack.c.l.b16 %v435
    %v1453 = vunpack.c.h.b16 %v435
    %v1454 = vunpack.c.l.b16 %v436
    %v1455 = vunpack.c.h.b16 %v436
    %v1456 = vunpack.c.l.b16 %v437
    %v1457 = vunpack.c.h.b16 %v437
    %v1458 = vunpack.c.l.b16 %v438
    %v1459 = vunpack.c.h.b16 %v438
    %v1460 = vunpack.c.l.b16 %v439
    %v1461 = vunpack.c.h.b16 %v439
    %v1462 = vunpack.c.l.b16 %v440
    %v1463 = vunpack.c.h.b16 %v440
    %v1464 = vunpack.c.l.b16 %v441
    %v1465 = vunpack.c.h.b16 %v441
    %v1466 = vunpack.c.l.b16 %v442
    %v1467 = vunpack.c.h.b16 %v442
    %v1468 = vunpack.c.l.b16 %v443
    %v1469 = vunpack.c.h.b16 %v443
    %v1470 = vunpack.c.l.b16 %v444
    %v1471 = vunpack.c.h.b16 %v444
    %v1472 = vunpack.c.l.b16 %v445
    %v1473 = vunpack.c.h.b16 %v445
    %v1474 = vunpack.c.l.b16 %v446
    %v1475 = vunpack.c.h.b16 %v446
    %v1476 = vunpack.c.l.b16 %v447
    %v1477 = vunpack.c.h.b16 %v447
    %v1478 = vunpack.c.l.b16 %v448
    %v1479 = vunpack.c.h.b16 %v448
    %v1480 = vunpack.c.l.b16 %v449
    %v1481 = vunpack.c.h.b16 %v449
    %v1482 = vunpack.c.l.b16 %v450
    %v1483 = vunpack.c.h.b16 %v450
    %v1484 = vunpack.c.l.b16 %v451
    %v1485 = vunpack.c.h.b16 %v451
    %v1486 = vunpack.c.l.b16 %v452
    %v1487 = vunpack.c.h.b16 %v452
    %v1488 = vunpack.c.l.b16 %v453
    %v1489 = vunpack.c.h.b16 %v453
    %v1490 = vunpack.c.l.b16 %v454
    %v1491 = vunpack.c.h.b16 %v454
    %v1492 = vunpack.c.l.b16 %v455
    %v1493 = vunpack.c.h.b16 %v455
    %v1494 = vunpack.c.l.b16 %v456
    %v1495 = vunpack.c.h.b16 %v456
    %v1496 = vunpack.c.l.b16 %v457
    %v1497 = vunpack.c.h.b16 %v457
    %v1498 = vunpack.c.l.b16 %v458
    %v1499 = vunpack.c.h.b16 %v458
    %v1500 = vunpack.c.l.b16 %v459
    %v1501 = vunpack.c.h.b16 %v459
    %v1502 = vunpack.c.l.b16 %v460
    %v1503 = vunpack.c.h.b16 %v460
    %v1504 = vunpack.c.l.b16 %v461
    %v1505 = vunpack.c.h.b16 %v461
    %v1506 = vunpack.c.l.b16 %v462
    %v1507 = vunpack.c.h.b16 %v462
    %v1508 = vunpack.c.l.b16 %v463
    %v1509 = vunpack.c.h.b16 %v463
    %v1510 = vunpack.c.l.b16 %v464
    %v1511 = vunpack.c.h.b16 %v464
    %v1512 = vunpack.c.l.b16 %v465
    %v1513 = vunpack.c.h.b16 %v465
    %v1514 = vunpack.c.l.b16 %v466
    %v1515 = vunpack.c.h.b16 %v466
    %v1516 = vunpack.c.l.b16 %v467
    %v1517 = vunpack.c.h.b16 %v467
    %v1518 = vunpack.c.l.b16 %v468
    %v1519 = vunpack.c.h.b16 %v468
    %v1520 = vunpack.c.l.b16 %v469
    %v1521 = vunpack.c.h.b16 %v469
    %v1522 = vunpack.c.l.b16 %v470
    %v1523 = vunpack.c.h.b16 %v470
    %v1524 = vunpack.c.l.b16 %v471
    %v1525 = vunpack.c.h.b16 %v471
    %v1526 = vunpack.c.l.b16 %v472
    %v1527 = vunpack.c.h.b16 %v472
    %v1528 = vunpack.c.l.b16 %v473
    %v1529 = vunpack.c.h.b16 %v473
    %v1530 = vunpack.c.l.b16 %v474
    %v1531 = vunpack.c.h.b16 %v474
    %v1532 = vunpack.c.l.b16 %v475
    %v1533 = vunpack.c.h.b16 %v475
    %v1534 = vunpack.c.l.b16 %v476
    %v1535 = vunpack.c.h.b16 %v476
    %v1536 = vunpack.c.l.b16 %v477
    %v1537 = vunpack.c.h.b16 %v477
    %v1538 = vunpack.c.l.b16 %v478
    %v1539 = vunpack.c.h.b16 %v478
    %v1540 = vunpack.c.l.b16 %v479
    %v1541 = vunpack.c.h.b16 %v479
    %v1542 = vunpack.c.l.b16 %v480
    %v1543 = vunpack.c.h.b16 %v480
    %v1544 = vunpack.c.l.b16 %v481
    %v1545 = vunpack.c.h.b16 %v481
    %v1546 = vunpack.c.l.b16 %v482
    %v1547 = vunpack.c.h.b16 %v482
    %v1548 = vunpack.c.l.b16 %v483
    %v1549 = vunpack.c.h.b16 %v483
    %v1550 = vunpack.c.l.b16 %v484
    %v1551 = vunpack.c.h.b16 %v484
    %v1552 = vunpack.c.l.b16 %v485
    %v1553 = vunpack.c.h.b16 %v485
    %v1554 = vunpack.c.l.b16 %v486
    %v1555 = vunpack.c.h.b16 %v486
    %v1556 = vunpack.c.l.b16 %v487
    %v1557 = vunpack.c.h.b16 %v487
    %v1558 = vunpack.c.l.b16 %v488
    %v1559 = vunpack.c.h.b16 %v488
    %v1560 = vunpack.c.l.b16 %v489
    %v1561 = vunpack.c.h.b16 %v489
    %v1562 = vunpack.c.l.b16 %v490
    %v1563 = vunpack.c.h.b16 %v490
    %v1564 = vunpack.c.l.b16 %v491
    %v1565 = vunpack.c.h.b16 %v491
    %v1566 = vunpack.c.l.b16 %v492
    %v1567 = vunpack.c.h.b16 %v492
    %v1568 = vunpack.c.l.b16 %v493
    %v1569 = vunpack.c.h.b16 %v493
    %v1570 = vunpack.c.l.b16 %v494
    %v1571 = vunpack.c.h.b16 %v494
    %v1572 = vunpack.c.l.b16 %v495
    %v1573 = vunpack.c.h.b16 %v495
    %v1574 = vunpack.c.l.b16 %v496
    %v1575 = vunpack.c.h.b16 %v496
    %v1576 = vunpack.c.l.b16 %v497
    %v1577 = vunpack.c.h.b16 %v497
    %v1578 = vunpack.c.l.b16 %v498
    %v1579 = vunpack.c.h.b16 %v498
    %v1580 = vunpack.c.l.b16 %v499
    %v1581 = vunpack.c.h.b16 %v499
    %v1582 = vunpack.c.l.b16 %v500
    %v1583 = vunpack.c.h.b16 %v500
    %v1584 = vunpack.c.l.b16 %v501
    %v1585 = vunpack.c.h.b16 %v501
    %v1586 = vunpack.c.l.b16 %v502
    %v1587 = vunpack.c.h.b16 %v502
    %v1588 = vunpack.c.l.b16 %v503
    %v1589 = vunpack.c.h.b16 %v503
    %v1590 = vunpack.c.l.b16 %v504
    %v1591 = vunpack.c.h.b16 %v504
    %v1592 = vunpack.c.l.b16 %v505
    %v1593 = vunpack.c.h.b16 %v505
    %v1594 = vunpack.c.l.b16 %v506
    %v1595 = vunpack.c.h.b16 %v506
    %v1596 = vunpack.c.l.b16 %v507
    %v1597 = vunpack.c.h.b16 %v507
    %v1598 = vunpack.c.l.b16 %v508
    %v1599 = vunpack.c.h.b16 %v508
    %v1600 = vunpack.c.l.b16 %v509
    %v1601 = vunpack.c.h.b16 %v509
    %v1602 = vunpack.c.l.b16 %v510
    %v1603 = vunpack.c.h.b16 %v510
    %v1604 = vunpack.c.l.b16 %v511
    %v1605 = vunpack.c.h.b16 %v511
    %v1606 = vunpack.c.l.b16 %v512
    %v1607 = vunpack.c.h.b16 %v512
    %v1608 = vunpack.c.l.b16 %v513
    %v1609 = vunpack.c.h.b16 %v513
    %v1610 = vunpack.c.l.b16 %v514
    %v1611 = vunpack.c.h.b16 %v514
    %v1612 = vunpack.c.l.b16 %v515
    %v1613 = vunpack.c.h.b16 %v515
    %v1614 = vunpack.c.l.b16 %v516
    %v1615 = vunpack.c.h.b16 %v516
    %v1616 = vunpack.c.l.b16 %v517
    %v1617 = vunpack.c.h.b16 %v517
    %v1618 = vunpack.c.l.b16 %v518
    %v1619 = vunpack.c.h.b16 %v518
    %v1620 = vunpack.c.l.b16 %v519
    %v1621 = vunpack.c.h.b16 %v519
    %v1622 = vunpack.c.l.b16 %v520
    %v1623 = vunpack.c.h.b16 %v520
    %v1624 = vunpack.c.l.b16 %v521
    %v1625 = vunpack.c.h.b16 %v521
    %v1626 = vunpack.c.l.b16 %v522
    %v1627 = vunpack.c.h.b16 %v522
    %v1628 = vunpack.c.l.b16 %v523
    %v1629 = vunpack.c.h.b16 %v523
    %v1630 = vunpack.c.l.b16 %v524
    %v1631 = vunpack.c.h.b16 %v524
    %v1632 = vunpack.c.l.b16 %v525
    %v1633 = vunpack.c.h.b16 %v525
    %v1634 = vunpack.c.l.b16 %v526
    %v1635 = vunpack.c.h.b16 %v526
    %v1636 = vunpack.c.l.b16 %v527
    %v1637 = vunpack.c.h.b16 %v527
    %v1638 = vunpack.c.l.b16 %v528
    %v1639 = vunpack.c.h.b16 %v528
    %v1640 = vunpack.c.l.b16 %v529
    %v1641 = vunpack.c.h.b16 %v529
    %v1642 = vunpack.c.l.b16 %v530
    %v1643 = vunpack.c.h.b16 %v530
    %v1644 = vunpack.c.l.b16 %v531
    %v1645 = vunpack.c.h.b16 %v531
    %v1646 = vunpack.c.l.b16 %v532
    %v1647 = vunpack.c.h.b16 %v532
    %v1648 = vunpack.c.l.b16 %v533
    %v1649 = vunpack.c.h.b16 %v533
    %v1650 = vunpack.c.l.b16 %v534
    %v1651 = vunpack.c.h.b16 %v534
    %v1652 = vunpack.c.l.b16 %v535
    %v1653 = vunpack.c.h.b16 %v535
    %v1654 = vunpack.c.l.b16 %v536
    %v1655 = vunpack.c.h.b16 %v536
    %v1656 = vunpack.c.l.b16 %v537
    %v1657 = vunpack.c.h.b16 %v537
    %v1658 = vunpack.c.l.b16 %v538
    %v1659 = vunpack.c.h.b16 %v538
    %v1660 = vunpack.c.l.b16 %v539
    %v1661 = vunpack.c.h.b16 %v539
    %v1662 = vunpack.c.l.b16 %v540
    %v1663 = vunpack.c.h.b16 %v540
    %v1664 = vunpack.c.l.b16 %v541
    %v1665 = vunpack.c.h.b16 %v541
    %v1666 = vunpack.c.l.b16 %v542
    %v1667 = vunpack.c.h.b16 %v542
    %v1668 = vunpack.c.l.b16 %v543
    %v1669 = vunpack.c.h.b16 %v543
    %v1670 = vunpack.c.l.b16 %v544
    %v1671 = vunpack.c.h.b16 %v544
    %v1672 = vunpack.c.l.b16 %v545
    %v1673 = vunpack.c.h.b16 %v545
    %v1674 = vunpack.c.l.b16 %v546
    %v1675 = vunpack.c.h.b16 %v546
    %v1676 = vunpack.c.l.b16 %v547
    %v1677 = vunpack.c.h.b16 %v547
    %v1678 = vunpack.c.l.b16 %v548
    %v1679 = vunpack.c.h.b16 %v548
    %v1680 = vunpack.c.l.b16 %v549
    %v1681 = vunpack.c.h.b16 %v549
    %v1682 = vunpack.c.l.b16 %v550
    %v1683 = vunpack.c.h.b16 %v550
    %v1684 = vunpack.c.l.b16 %v551
    %v1685 = vunpack.c.h.b16 %v551
    %v1686 = vunpack.c.l.b16 %v552
    %v1687 = vunpack.c.h.b16 %v552
    %v1688 = vunpack.c.l.b16 %v553
    %v1689 = vunpack.c.h.b16 %v553
    %v1690 = vunpack.c.l.b16 %v554
    %v1691 = vunpack.c.h.b16 %v554
    %v1692 = vunpack.c.l.b16 %v555
    %v1693 = vunpack.c.h.b16 %v555
    %v1694 = vunpack.c.l.b16 %v556
    %v1695 = vunpack.c.h.b16 %v556
    %v1696 = vunpack.c.l.b16 %v557
    %v1697 = vunpack.c.h.b16 %v557
    %v1698 = vunpack.c.l.b16 %v558
    %v1699 = vunpack.c.h.b16 %v558
    %v1700 = vunpack.c.l.b16 %v559
    %v1701 = vunpack.c.h.b16 %v559
    %v1702 = vunpack.c.l.b16 %v560
    %v1703 = vunpack.c.h.b16 %v560
    %v1704 = vunpack.c.l.b16 %v561
    %v1705 = vunpack.c.h.b16 %v561
    %v1706 = vunpack.c.l.b16 %v562
    %v1707 = vunpack.c.h.b16 %v562
    %v1708 = vunpack.c.l.b16 %v563
    %v1709 = vunpack.c.h.b16 %v563
    %v1710 = vunpack.c.l.b16 %v564
    %v1711 = vunpack.c.h.b16 %v564
    %v1712 = vunpack.c.l.b16 %v565
    %v1713 = vunpack.c.h.b16 %v565
    %v1714 = vunpack.c.l.b16 %v566
    %v1715 = vunpack.c.h.b16 %v566
    %v1716 = vunpack.c.l.b16 %v567
    %v1717 = vunpack.c.h.b16 %v567
    %v1718 = vunpack.c.l.b16 %v568
    %v1719 = vunpack.c.h.b16 %v568
    %v1720 = vunpack.c.l.b16 %v569
    %v1721 = vunpack.c.h.b16 %v569
    %v1722 = vunpack.c.l.b16 %v570
    %v1723 = vunpack.c.h.b16 %v570
    %v1724 = vunpack.c.l.b16 %v571
    %v1725 = vunpack.c.h.b16 %v571
    %v1726 = vunpack.c.l.b16 %v572
    %v1727 = vunpack.c.h.b16 %v572
    %v1728 = vunpack.c.l.b16 %v573
    %v1729 = vunpack.c.h.b16 %v573
    %v1730 = vunpack.c.l.b16 %v574
    %v1731 = vunpack.c.h.b16 %v574
    %v1732 = vunpack.c.l.b16 %v575
    %v1733 = vunpack.c.h.b16 %v575
    %v1734 = vunpack.c.l.b16 %v576
    %v1735 = vunpack.c.h.b16 %v576
    %v1736 = vunpack.c.l.b16 %v577
    %v1737 = vunpack.c.h.b16 %v577
    %v1738 = vunpack.c.l.b16 %v578
    %v1739 = vunpack.c.h.b16 %v578
    %v1740 = vunpack.c.l.b16 %v579
    %v1741 = vunpack.c.h.b16 %v579
    %v1742 = vunpack.c.l.b16 %v580
    %v1743 = vunpack.c.h.b16 %v580
    %v1744 = vunpack.c.l.b16 %v581
    %v1745 = vunpack.c.h.b16 %v581
    %v1746 = vunpack.c.l.b16 %v582
    %v1747 = vunpack.c.h.b16 %v582
    %v1748 = vunpack.c.l.b16 %v583
    %v1749 = vunpack.c.h.b16 %v583
    %v1750 = vunpack.c.l.b16 %v584
    %v1751 = vunpack.c.h.b16 %v584
    %v1752 = vunpack.c.l.b16 %v585
    %v1753 = vunpack.c.h.b16 %v585
    %v1754 = vunpack.c.l.b16 %v586
    %v1755 = vunpack.c.h.b16 %v586
    %v1756 = vunpack.c.l.b16 %v587
    %v1757 = vunpack.c.h.b16 %v587
    %v1758 = vunpack.c.l.b16 %v588
    %v1759 = vunpack.c.h.b16 %v588
    %v1760 = vunpack.c.l.b16 %v589
    %v1761 = vunpack.c.h.b16 %v589
    %v1762 = vunpack.c.l.b16 %v590
    %v1763 = vunpack.c.h.b16 %v590
    %v1764 = vunpack.c.l.b16 %v591
    %v1765 = vunpack.c.h.b16 %v591
    %v1766 = vunpack.c.l.b16 %v592
    %v1767 = vunpack.c.h.b16 %v592
    %v1768 = vunpack.c.l.b16 %v593
    %v1769 = vunpack.c.h.b16 %v593
    %v1770 = vunpack.c.l.b16 %v594
    %v1771 = vunpack.c.h.b16 %v594
    %v1772 = vunpack.c.l.b16 %v595
    %v1773 = vunpack.c.h.b16 %v595
    %v1774 = vunpack.c.l.b16 %v596
    %v1775 = vunpack.c.h.b16 %v596
    %v1776 = vunpack.c.l.b16 %v597
    %v1777 = vunpack.c.h.b16 %v597
    %v1778 = vunpack.c.l.b16 %v598
    %v1779 = vunpack.c.h.b16 %v598
    %v1780 = vunpack.c.l.b16 %v599
    %v1781 = vunpack.c.h.b16 %v599
    %v1782 = vunpack.c.l.b16 %v600
    %v1783 = vunpack.c.h.b16 %v600
    %v1784 = vunpack.c.l.b16 %v601
    %v1785 = vunpack.c.h.b16 %v601
    %v1786 = vunpack.c.l.b16 %v602
    %v1787 = vunpack.c.h.b16 %v602
    %v1788 = vunpack.c.l.b16 %v603
    %v1789 = vunpack.c.h.b16 %v603
    %v1790 = vunpack.c.l.b16 %v604
    %v1791 = vunpack.c.h.b16 %v604
    %v1792 = vunpack.c.l.b16 %v605
    %v1793 = vunpack.c.h.b16 %v605
    %v1794 = vpack.c.b16 %v1012, %v1010
    %v1795 = vpack.c.b16 %v1013, %v1011
    %v1796 = vpack.c.b16 %v1016, %v1014
    %v1797 = vpack.c.b16 %v1017, %v1015
    %v1798 = vpack.c.b16 %v1020, %v1018
    %v1799 = vpack.c.b16 %v1021, %v1019
    %v1800 = vpack.c.b16 %v1024, %v1022
    %v1801 = vpack.c.b16 %v1025, %v1023
    %v1802 = vpack.c.b16 %v1028, %v1026
    %v1803 = vpack.c.b16 %v1029, %v1027
    %v1804 = vpack.c.b16 %v1032, %v1030
    %v1805 = vpack.c.b16 %v1033, %v1031
    %v1806 = vpack.c.b16 %v1036, %v1034
    %v1807 = vpack.c.b16 %v1037, %v1035
    %v1808 = vpack.c.b16 %v1040, %v1038
    %v1809 = vpack.c.b16 %v1041, %v1039
    %v1810 = vpack.c.b16 %v1044, %v1042
    %v1811 = vpack.c.b16 %v1045, %v1043
    %v1812 = vpack.c.b16 %v1048, %v1046
    %v1813 = vpack.c.b16 %v1049, %v1047
    %v1814 = vpack.c.b16 %v1052, %v1050
    %v1815 = vpack.c.b16 %v1053, %v1051
    %v1816 = vpack.c.b16 %v1056, %v1054
    %v1817 = vpack.c.b16 %v1057, %v1055
    %v1818 = vpack.c.b16 %v1060, %v1058
    %v1819 = vpack.c.b16 %v1061, %v1059
    %v1820 = vpack.c.b16 %v1064, %v1062
    %v1821 = vpack.c.b16 %v1065, %v1063
    %v1822 = vpack.c.b16 %v1068, %v1066
    %v1823 = vpack.c.b16 %v1069, %v1067
    %v1824 = vpack.c.b16 %v1072, %v1070
    %v1825 = vpack.c.b16 %v1073, %v1071
    %v1826 = vpack.c.b16 %v1076, %v1074
    %v1827 = vpack.c.b16 %v1077, %v1075
    %v1828 = vpack.c.b16 %v1080, %v1078
    %v1829 = vpack.c.b16 %v1081, %v1079
    %v1830 = vpack.c.b16 %v1084, %v1082
    %v1831 = vpack.c.b16 %v1085, %v1083
    %v1832 = vpack.c.b16 %v1088, %v1086
    %v1833 = vpack.c.b16 %v1089, %v1087
    %v1834 = vpack.c.b16 %v1092, %v1090
    %v1835 = vpack.c.b16 %v1093, %v1091
    %v1836 = vpack.c.b16 %v1096, %v1094
    %v1837 = vpack.c.b16 %v1097, %v1095
    %v1838 = vpack.c.b16 %v1100, %v1098
    %v1839 = vpack.c.b16 %v1101, %v1099
    %v1840 = vpack.c.b16 %v1104, %v1102
    %v1841 = vpack.c.b16 %v1105, %v1103
    %v1842 = vpack.c.b16 %v1108, %v1106
    %v1843 = vpack.c.b16 %v1109, %v1107
    %v1844 = vpack.c.b16 %v1112, %v1110
    %v1845 = vpack.c.b16 %v1113, %v1111
    %v1846 = vpack.c.b16 %v1116, %v1114
    %v1847 = vpack.c.b16 %v1117, %v1115
    %v1848 = vpack.c.b16 %v1120, %v1118
    %v1849 = vpack.c.b16 %v1121, %v1119
    %v1850 = vpack.c.b16 %v1124, %v1122
    %v1851 = vpack.c.b16 %v1125, %v1123
    %v1852 = vpack.c.b16 %v1128, %v1126
    %v1853 = vpack.c.b16 %v1129, %v1127
    %v1854 = vpack.c.b16 %v1132, %v1130
    %v1855 = vpack.c.b16 %v1133, %v1131
    %v1856 = vpack.c.b16 %v1136, %v1134
    %v1857 = vpack.c.b16 %v1137, %v1135
    %v1858 = vpack.c.b16 %v1140, %v1138
    %v1859 = vpack.c.b16 %v1141, %v1139
    %v1860 = vpack.c.b16 %v1144, %v1142
    %v1861 = vpack.c.b16 %v1145, %v1143
    %v1862 = vpack.c.b16 %v1148, %v1146
    %v1863 = vpack.c.b16 %v1149, %v1147
    %v1864 = vpack.c.b16 %v1152, %v1150
    %v1865 = vpack.c.b16 %v1153, %v1151
    %v1866 = vpack.c.b16 %v1156, %v1154
    %v1867 = vpack.c.b16 %v1157, %v1155
    %v1868 = vpack.c.b16 %v1160, %v1158
    %v1869 = vpack.c.b16 %v1161, %v1159
    %v1870 = vpack.c.b16 %v1164, %v1162
    %v1871 = vpack.c.b16 %v1165, %v1163
    %v1872 = vpack.c.b16 %v1168, %v1166
    %v1873 = vpack.c.b16 %v1169, %v1167
    %v1874 = vpack.c.b16 %v1172, %v1170
    %v1875 = vpack.c.b16 %v1173, %v1171
    %v1876 = vpack.c.b16 %v1176, %v1174
    %v1877 = vpack.c.b16 %v1177, %v1175
    %v1878 = vpack.c.b16 %v1180, %v1178
    %v1879 = vpack.c.b16 %v1181, %v1179
    %v1880 = vpack.c.b16 %v1184, %v1182
    %v1881 = vpack.c.b16 %v1185, %v1183
    %v1882 = vpack.c.b16 %v1188, %v1186
    %v1883 = vpack.c.b16 %v1189, %v1187
    %v1884 = vpack.c.b16 %v1192, %v1190
    %v1885 = vpack.c.b16 %v1193, %v1191
    %v1886 = vpack.c.b16 %v1196, %v1194
    %v1887 = vpack.c.b16 %v1197, %v1195
    %v1888 = vpack.c.b16 %v1200, %v1198
    %v1889 = vpack.c.b16 %v1201, %v1199
    %v1890 = vpack.c.b16 %v1204, %v1202
    %v1891 = vpack.c.b16 %v1205, %v1203
    %v1892 = vpack.c.b16 %v1208, %v1206
    %v1893 = vpack.c.b16 %v1209, %v1207
    %v1894 = vpack.c.b16 %v1212, %v1210
    %v1895 = vpack.c.b16 %v1213, %v1211
    %v1896 = vpack.c.b16 %v1216, %v1214
    %v1897 = vpack.c.b16 %v1217, %v1215
    %v1898 = vpack.c.b16 %v1220, %v1218
    %v1899 = vpack.c.b16 %v1221, %v1219
    %v1900 = vpack.c.b16 %v1224, %v1222
    %v1901 = vpack.c.b16 %v1225, %v1223
    %v1902 = vpack.c.b16 %v1228, %v1226
    %v1903 = vpack.c.b16 %v1229, %v1227
    %v1904 = vpack.c.b16 %v1232, %v1230
    %v1905 = vpack.c.b16 %v1233, %v1231
    %v1906 = vpack.c.b16 %v1236, %v1234
    %v1907 = vpack.c.b16 %v1237, %v1235
    %v1908 = vpack.c.b16 %v1240, %v1238
    %v1909 = vpack.c.b16 %v1241, %v1239
    %v1910 = vpack.c.b16 %v1244, %v1242
    %v1911 = vpack.c.b16 %v1245, %v1243
    %v1912 = vpack.c.b16 %v1248, %v1246
    %v1913 = vpack.c.b16 %v1249, %v1247
    %v1914 = vpack.c.b16 %v1252, %v1250
    %v1915 = vpack.c.b16 %v1253, %v1251
    %v1916 = vpack.c.b16 %v1256, %v1254
    %v1917 = vpack.c.b16 %v1257, %v1255
    %v1918 = vpack.c.b16 %v1260, %v1258
    %v1919 = vpack.c.b16 %v1261, %v1259
    %v1920 = vpack.c.b16 %v1264, %v1262
    %v1921 = vpack.c.b16 %v1265, %v1263
    %v1922 = vpack.c.b16 %v1268, %v1266
    %v1923 = vpack.c.b16 %v1269, %v1267
    %v1924 = vpack.c.b16 %v1272, %v1270
    %v1925 = vpack.c.b16 %v1273, %v1271
    %v1926 = vpack.c.b16 %v1276, %v1274
    %v1927 = vpack.c.b16 %v1277, %v1275
    %v1928 = vpack.c.b16 %v1280, %v1278
    %v1929 = vpack.c.b16 %v1281, %v1279
    %v1930 = vpack.c.b16 %v1284, %v1282
    %v1931 = vpack.c.b16 %v1285, %v1283
    %v1932 = vpack.c.b16 %v1288, %v1286
    %v1933 = vpack.c.b16 %v1289, %v1287
    %v1934 = vpack.c.b16 %v1292, %v1290
    %v1935 = vpack.c.b16 %v1293, %v1291
    %v1936 = vpack.c.b16 %v1296, %v1294
    %v1937 = vpack.c.b16 %v1297, %v1295
    %v1938 = vpack.c.b16 %v1300, %v1298
    %v1939 = vpack.c.b16 %v1301, %v1299
    %v1940 = vpack.c.b16 %v1304, %v1302
    %v1941 = vpack.c.b16 %v1305, %v1303
    %v1942 = vpack.c.b16 %v1308, %v1306
    %v1943 = vpack.c.b16 %v1309, %v1307
    %v1944 = vpack.c.b16 %v1312, %v1310
    %v1945 = vpack.c.b16 %v1313, %v1311
    %v1946 = vpack.c.b16 %v1316, %v1314
    %v1947 = vpack.c.b16 %v1317, %v1315
    %v1948 = vpack.c.b16 %v1320, %v1318
    %v1949 = vpack.c.b16 %v1321, %v1319
    %v1950 = vpack.c.b16 %v1324, %v1322
    %v1951 = vpack.c.b16 %v1325, %v1323
    %v1952 = vpack.c.b16 %v1328, %v1326
    %v1953 = vpack.c.b16 %v1329, %v1327
    %v1954 = vpack.c.b16 %v1332, %v1330
    %v1955 = vpack.c.b16 %v1333, %v1331
    %v1956 = vpack.c.b16 %v1336, %v1334
    %v1957 = vpack.c.b16 %v1337, %v1335
    %v1958 = vpack.c.b16 %v1340, %v1338
    %v1959 = vpack.c.b16 %v1341, %v1339
    %v1960 = vpack.c.b16 %v1344, %v1342
    %v1961 = vpack.c.b16 %v1345, %v1343
    %v1962 = vpack.c.b16 %v1348, %v1346
    %v1963 = vpack.c.b16 %v1349, %v1347
    %v1964 = vpack.c.b16 %v1352, %v1350
    %v1965 = vpack.c.b16 %v1353, %v1351
    %v1966 = vpack.c.b16 %v1356, %v1354
    %v1967 = vpack.c.b16 %v1357, %v1355
    %v1968 = vpack.c.b16 %v1360, %v1358
    %v1969 = vpack.c.b16 %v1361, %v1359
    %v1970 = vpack.c.b16 %v1364, %v1362
    %v1971 = vpack.c.b16 %v1365, %v1363
    %v1972 = vpack.c.b16 %v1368, %v1366
    %v1973 = vpack.c.b16 %v1369, %v1367
    %v1974 = vpack.c.b16 %v1372, %v1370
    %v1975 = vpack.c.b16 %v1373, %v1371
    %v1976 = vpack.c.b16 %v1376, %v1374
    %v1977 = vpack.c.b16 %v1377, %v1375
    %v1978 = vpack.c.b16 %v1380, %v1378
    %v1979 = vpack.c.b16 %v1381, %v1379
    %v1980 = vpack.c.b16 %v1384, %v1382
    %v1981 = vpack.c.b16 %v1385, %v1383
    %v1982 = vpack.c.b16 %v1388, %v1386
    %v1983 = vpack.c.b16 %v1389, %v1387
    %v1984 = vpack.c.b16 %v1392, %v1390
    %v1985 = vpack.c.b16 %v1393, %v1391
    %v1986 = vpack.c.b16 %v1396, %v1394
    %v1987 = vpack.c.b16 %v1397, %v1395
    %v1988 = vpack.c.b16 %v1400, %v1398
    %v1989 = vpack.c.b16 %v1401, %v1399
    %v1990 = vpack.c.b16 %v1404, %v1402
    %v1991 = vpack.c.b16 %v1405, %v1403
    %v1992 = vpack.c.b16 %v1408, %v1406
    %v1993 = vpack.c.b16 %v1409, %v1407
    %v1994 = vpack.c.b16 %v1412, %v1410
    %v1995 = vpack.c.b16 %v1413, %v1411
    %v1996 = vpack.c.b16 %v1416, %v1414
    %v1997 = vpack.c.b16 %v1417, %v1415
    %v1998 = vpack.c.b16 %v1420, %v1418
    %v1999 = vpack.c.b16 %v1421, %v1419
    %v2000 = vpack.c.b16 %v1424, %v1422
    %v2001 = vpack.c.b16 %v1425, %v1423
    %v2002 = vpack.c.b16 %v1428, %v1426
    %v2003 = vpack.c.b16 %v1429, %v1427
    %v2004 = vpack.c.b16 %v1432, %v1430
    %v2005 = vpack.c.b16 %v1433, %v1431
    %v2006 = vpack.c.b16 %v1436, %v1434
    %v2007 = vpack.c.b16 %v1437, %v1435
    %v2008 = vpack.c.b16 %v1440, %v1438
    %v2009 = vpack.c.b16 %v1441, %v1439
    %v2010 = vpack.c.b16 %v1444, %v1442
    %v2011 = vpack.c.b16 %v1445, %v1443
    %v2012 = vpack.c.b16 %v1448, %v1446
    %v2013 = vpack.c.b16 %v1449, %v1447
    %v2014 = vpack.c.b16 %v1452, %v1450
    %v2015 = vpack.c.b16 %v1453, %v1451
    %v2016 = vpack.c.b16 %v1456, %v1454
    %v2017 = vpack.c.b16 %v1457, %v1455
    %v2018 = vpack.c.b16 %v1460, %v1458
    %v2019 = vpack.c.b16 %v1461, %v1459
    %v2020 = vpack.c.b16 %v1464, %v1462
    %v2021 = vpack.c.b16 %v1465, %v1463
    %v2022 = vpack.c.b16 %v1468, %v1466
    %v2023 = vpack.c.b16 %v1469, %v1467
    %v2024 = vpack.c.b16 %v1472, %v1470
    %v2025 = vpack.c.b16 %v1473, %v1471
    %v2026 = vpack.c.b16 %v1476, %v1474
    %v2027 = vpack.c.b16 %v1477, %v1475
    %v2028 = vpack.c.b16 %v1480, %v1478
    %v2029 = vpack.c.b16 %v1481, %v1479
    %v2030 = vpack.c.b16 %v1484, %v1482
    %v2031 = vpack.c.b16 %v1485, %v1483
    %v2032 = vpack.c.b16 %v1488, %v1486
    %v2033 = vpack.c.b16 %v1489, %v1487
    %v2034 = vpack.c.b16 %v1492, %v1490
    %v2035 = vpack.c.b16 %v1493, %v1491
    %v2036 = vpack.c.b16 %v1496, %v1494
    %v2037 = vpack.c.b16 %v1497, %v1495
    %v2038 = vpack.c.b16 %v1500, %v1498
    %v2039 = vpack.c.b16 %v1501, %v1499
    %v2040 = vpack.c.b16 %v1504, %v1502
    %v2041 = vpack.c.b16 %v1505, %v1503
    %v2042 = vpack.c.b16 %v1508, %v1506
    %v2043 = vpack.c.b16 %v1509, %v1507
    %v2044 = vpack.c.b16 %v1512, %v1510
    %v2045 = vpack.c.b16 %v1513, %v1511
    %v2046 = vpack.c.b16 %v1516, %v1514
    %v2047 = vpack.c.b16 %v1517, %v1515
    %v2048 = vpack.c.b16 %v1520, %v1518
    %v2049 = vpack.c.b16 %v1521, %v1519
    %v2050 = vpack.c.b16 %v1524, %v1522
    %v2051 = vpack.c.b16 %v1525, %v1523
    %v2052 = vpack.c.b16 %v1528, %v1526
    %v2053 = vpack.c.b16 %v1529, %v1527
    %v2054 = vpack.c.b16 %v1532, %v1530
    %v2055 = vpack.c.b16 %v1533, %v1531
    %v2056 = vpack.c.b16 %v1536, %v1534
    %v2057 = vpack.c.b16 %v1537, %v1535
    %v2058 = vpack.c.b16 %v1540, %v1538
    %v2059 = vpack.c.b16 %v1541, %v1539
    %v2060 = vpack.c.b16 %v1544, %v1542
    %v2061 = vpack.c.b16 %v1545, %v1543
    %v2062 = vpack.c.b16 %v1548, %v1546
    %v2063 = vpack.c.b16 %v1549, %v1547
    %v2064 = vpack.c.b16 %v1552, %v1550
    %v2065 = vpack.c.b16 %v1553, %v1551
    %v2066 = vpack.c.b16 %v1556, %v1554
    %v2067 = vpack.c.b16 %v1557, %v1555
    %v2068 = vpack.c.b16 %v1560, %v1558
    %v2069 = vpack.c.b16 %v1561, %v1559
    %v2070 = vpack.c.b16 %v1564, %v1562
    %v2071 = vpack.c.b16 %v1565, %v1563
    %v2072 = vpack.c.b16 %v1568, %v1566
    %v2073 = vpack.c.b16 %v1569, %v1567
    %v2074 = vpack.c.b16 %v1572, %v1570
    %v2075 = vpack.c.b16 %v1573, %v1571
    %v2076 = vpack.c.b16 %v1576, %v1574
    %v2077 = vpack.c.b16 %v1577, %v1575
    %v2078 = vpack.c.b16 %v1580, %v1578
    %v2079 = vpack.c.b16 %v1581, %v1579
    %v2080 = vpack.c.b16 %v1584, %v1582
    %v2081 = vpack.c.b16 %v1585, %v1583
    %v2082 = vpack.c.b16 %v1588, %v1586
    %v2083 = vpack.c.b16 %v1589, %v1587
    %v2084 = vpack.c.b16 %v1592, %v1590
    %v2085 = vpack.c.b16 %v1593, %v1591
    %v2086 = vpack.c.b16 %v1596, %v1594
    %v2087 = vpack.c.b16 %v1597, %v1595
    %v2088 = vpack.c.b16 %v1600, %v1598
    %v2089 = vpack.c.b16 %v1601, %v1599
    %v2090 = vpack.c.b16 %v1604, %v1602
    %v2091 = vpack.c.b16 %v1605, %v1603
    %v2092 = vpack.c.b16 %v1608, %v1606
    %v2093 = vpack.c.b16 %v1609, %v1607
    %v2094 = vpack.c.b16 %v1612, %v1610
    %v2095 = vpack.c.b16 %v1613, %v1611
    %v2096 = vpack.c.b16 %v1616, %v1614
    %v2097 = vpack.c.b16 %v1617, %v1615
    %v2098 = vpack.c.b16 %v1620, %v1618
    %v2099 = vpack.c.b16 %v1621, %v1619
    %v2100 = vpack.c.b16 %v1624, %v1622
    %v2101 = vpack.c.b16 %v1625, %v1623
    %v2102 = vpack.c.b16 %v1628, %v1626
    %v2103 = vpack.c.b16 %v1629, %v1627
    %v2104 = vpack.c.b16 %v1632, %v1630
    %v2105 = vpack.c.b16 %v1633, %v1631
    %v2106 = vpack.c.b16 %v1636, %v1634
    %v2107 = vpack.c.b16 %v1637, %v1635
    %v2108 = vpack.c.b16 %v1640, %v1638
    %v2109 = vpack.c.b16 %v1641, %v1639
    %v2110 = vpack.c.b16 %v1644, %v1642
    %v2111 = vpack.c.b16 %v1645, %v1643
    %v2112 = vpack.c.b16 %v1648, %v1646
    %v2113 = vpack.c.b16 %v1649, %v1647
    %v2114 = vpack.c.b16 %v1652, %v1650
    %v2115 = vpack.c.b16 %v1653, %v1651
    %v2116 = vpack.c.b16 %v1656, %v1654
    %v2117 = vpack.c.b16 %v1657, %v1655
    %v2118 = vpack.c.b16 %v1660, %v1658
    %v2119 = vpack.c.b16 %v1661, %v1659
    %v2120 = vpack.c.b16 %v1664, %v1662
    %v2121 = vpack.c.b16 %v1665, %v1663
    %v2122 = vpack.c.b16 %v1668, %v1666
    %v2123 = vpack.c.b16 %v1669, %v1667
    %v2124 = vpack.c.b16 %v1672, %v1670
    %v2125 = vpack.c.b16 %v1673, %v1671
    %v2126 = vpack.c.b16 %v1676, %v1674
    %v2127 = vpack.c.b16 %v1677, %v1675
    %v2128 = vpack.c.b16 %v1680, %v1678
    %v2129 = vpack.c.b16 %v1681, %v1679
    %v2130 = vpack.c.b16 %v1684, %v1682
    %v2131 = vpack.c.b16 %v1685, %v1683
    %v2132 = vpack.c.b16 %v1688, %v1686
    %v2133 = vpack.c.b16 %v1689, %v1687
    %v2134 = vpack.c.b16 %v1692, %v1690
    %v2135 = vpack.c.b16 %v1693, %v1691
    %v2136 = vpack.c.b16 %v1696, %v1694
    %v2137 = vpack.c.b16 %v1697, %v1695
    %v2138 = vpack.c.b16 %v1700, %v1698
    %v2139 = vpack.c.b16 %v1701, %v1699
    %v2140 = vpack.c.b16 %v1704, %v1702
    %v2141 = vpack.c.b16 %v1705, %v1703
    %v2142 = vpack.c.b16 %v1708, %v1706
    %v2143 = vpack.c.b16 %v1709, %v1707
    %v2144 = vpack.c.b16 %v1712, %v1710
    %v2145 = vpack.c.b16 %v1713, %v1711
    %v2146 = vpack.c.b16 %v1716, %v1714
    %v2147 = vpack.c.b16 %v1717, %v1715
    %v2148 = vpack.c.b16 %v1720, %v1718
    %v2149 = vpack.c.b16 %v1721, %v1719
    %v2150 = vpack.c.b16 %v1724, %v1722
    %v2151 = vpack.c.b16 %v1725, %v1723
    %v2152 = vpack.c.b16 %v1728, %v1726
    %v2153 = vpack.c.b16 %v1729, %v1727
    %v2154 = vpack.c.b16 %v1732, %v1730
    %v2155 = vpack.c.b16 %v1733, %v1731
    %v2156 = vpack.c.b16 %v1736, %v1734
    %v2157 = vpack.c.b16 %v1737, %v1735
    %v2158 = vpack.c.b16 %v1740, %v1738
    %v2159 = vpack.c.b16 %v1741, %v1739
    %v2160 = vpack.c.b16 %v1744, %v1742
    %v2161 = vpack.c.b16 %v1745, %v1743
    %v2162 = vpack.c.b16 %v1748, %v1746
    %v2163 = vpack.c.b16 %v1749, %v1747
    %v2164 = vpack.c.b16 %v1752, %v1750
    %v2165 = vpack.c.b16 %v1753, %v1751
    %v2166 = vpack.c.b16 %v1756, %v1754
    %v2167 = vpack.c.b16 %v1757, %v1755
    %v2168 = vpack.c.b16 %v1760, %v1758
    %v2169 = vpack.c.b16 %v1761, %v1759
    %v2170 = vpack.c.b16 %v1764, %v1762
    %v2171 = vpack.c.b16 %v1765, %v1763
    %v2172 = vpack.c.b16 %v1768, %v1766
    %v2173 = vpack.c.b16 %v1769, %v1767
    %v2174 = vpack.c.b16 %v1772, %v1770
    %v2175 = vpack.c.b16 %v1773, %v1771
    %v2176 = vpack.c.b16 %v1776, %v1774
    %v2177 = vpack.c.b16 %v1777, %v1775
    %v2178 = vpack.c.b16 %v1780, %v1778
    %v2179 = vpack.c.b16 %v1781, %v1779
    %v2180 = vpack.c.b16 %v1784, %v1782
    %v2181 = vpack.c.b16 %v1785, %v1783
    %v2182 = vpack.c.b16 %v1788, %v1786
    %v2183 = vpack.c.b16 %v1789, %v1787
    %v2184 = vpack.c.b16 %v1792, %v1790
    %v2185 = vpack.c.b16 %v1793, %v1791
    %vm2578 = vcmask 523264
    %v2580 = vsel %vm2578, %v213, 0
    %2582 = vmatprep.subr.bf16.mxu0 %v1809
    %2583 = vmatpush1.bf16.msra.mxu0 %v1808
    %2584 = vmatprep.subr.bf16.mxu0 %v1807
    %2585 = vmatpush1.bf16.msra.mxu0 %v1806
    %2586 = vmatprep.subr.bf16.mxu0 %v1805
    %2587 = vmatpush1.bf16.msra.mxu0 %v1804
    %2588 = vmatprep.subr.bf16.mxu0 %v1803
    %2589 = vmatpush1.bf16.msra.mxu0 %v1802
    %2590 = vmatprep.subr.bf16.mxu0 %v1801
    %2591 = vmatpush1.bf16.msra.mxu0 %v1800
    %2592 = vmatprep.subr.bf16.mxu0 %v1799
    %2593 = vmatpush1.bf16.msra.mxu0 %v1798
    %2594 = vmatprep.subr.bf16.mxu0 %v1797
    %2595 = vmatpush1.bf16.msra.mxu0 %v1796
    %2596 = vmatprep.subr.bf16.mxu0 %v1795
    %2597 = vmatpush1.bf16.msra.mxu0 %v1794
    %2598 = vmatprep.subr.bf16.mxu0 %v1825
    %2599 = vmatpush2.bf16.msra.mxu0 %v1824
    %2600 = vmatprep.subr.bf16.mxu0 %v1823
    %2601 = vmatpush2.bf16.msra.mxu0 %v1822
    %2602 = vmatprep.subr.bf16.mxu0 %v1821
    %2603 = vmatpush2.bf16.msra.mxu0 %v1820
    %2604 = vmatprep.subr.bf16.mxu0 %v1819
    %2605 = vmatpush2.bf16.msra.mxu0 %v1818
    %2606 = vmatprep.subr.bf16.mxu0 %v1817
    %2607 = vmatpush2.bf16.msra.mxu0 %v1816
    %2608 = vmatprep.subr.bf16.mxu0 %v1815
    %2609 = vmatpush2.bf16.msra.mxu0 %v1814
    %2610 = vmatprep.subr.bf16.mxu0 %v1813
    %2611 = vmatpush2.bf16.msra.mxu0 %v1812
    %2612 = vmatprep.subr.bf16.mxu0 %v1811
    %2613 = vmatpush2.bf16.msra.mxu0 %v1810
    %2614 = vmatprep.mubr.bf16.mxu0 %v190
    %2615 = vmatmul.mubr.bf16.gmra.mxu0 %v189
    %v2616 = vpop.f32.mrf.mxu0
    %v2617 = vadd.f32 %v611, %v2616
    %v2618 = vpop.f32.mrf.mxu0
    %v2619 = vadd.f32 %v615, %v2618
    %v2620 = vpop.f32.mrf.mxu0
    %v2621 = vpop.f32.mrf.mxu0
    %2622 = vdwg.mxu0
    %2623 = vmatprep.subr.bf16.mxu0 %v1841
    %2624 = vmatpush1.bf16.msra.mxu0 %v1840
    %2625 = vmatprep.subr.bf16.mxu0 %v1839
    %2626 = vmatpush1.bf16.msra.mxu0 %v1838
    %2627 = vmatprep.subr.bf16.mxu0 %v1837
    %2628 = vmatpush1.bf16.msra.mxu0 %v1836
    %2629 = vmatprep.subr.bf16.mxu0 %v1835
    %2630 = vmatpush1.bf16.msra.mxu0 %v1834
    %2631 = vmatprep.subr.bf16.mxu0 %v1833
    %2632 = vmatpush1.bf16.msra.mxu0 %v1832
    %2633 = vmatprep.subr.bf16.mxu0 %v1831
    %2634 = vmatpush1.bf16.msra.mxu0 %v1830
    %2635 = vmatprep.subr.bf16.mxu0 %v1829
    %2636 = vmatpush1.bf16.msra.mxu0 %v1828
    %2637 = vmatprep.subr.bf16.mxu0 %v1827
    %2638 = vmatpush1.bf16.msra.mxu0 %v1826
    %2639 = vmatprep.subr.bf16.mxu0 %v1857
    %2640 = vmatpush2.bf16.msra.mxu0 %v1856
    %2641 = vmatprep.subr.bf16.mxu0 %v1855
    %2642 = vmatpush2.bf16.msra.mxu0 %v1854
    %2643 = vmatprep.subr.bf16.mxu0 %v1853
    %2644 = vmatpush2.bf16.msra.mxu0 %v1852
    %2645 = vmatprep.subr.bf16.mxu0 %v1851
    %2646 = vmatpush2.bf16.msra.mxu0 %v1850
    %2647 = vmatprep.subr.bf16.mxu0 %v1849
    %2648 = vmatpush2.bf16.msra.mxu0 %v1848
    %2649 = vmatprep.subr.bf16.mxu0 %v1847
    %2650 = vmatpush2.bf16.msra.mxu0 %v1846
    %2651 = vmatprep.subr.bf16.mxu0 %v1845
    %2652 = vmatpush2.bf16.msra.mxu0 %v1844
    %2653 = vmatprep.subr.bf16.mxu0 %v1843
    %2654 = vmatpush2.bf16.msra.mxu0 %v1842
    %2655 = vmatprep.mubr.bf16.mxu0 %v192
    %2656 = vmatmul.mubr.bf16.gmra.mxu0 %v191
    %v2657 = vpop.f32.mrf.mxu0
    %v2658 = vadd.f32 %v2617, %v2657
    %v2659 = vpop.f32.mrf.mxu0
    %v2660 = vadd.f32 %v2619, %v2659
    %v2661 = vpop.f32.mrf.mxu0
    %v2662 = vpop.f32.mrf.mxu0
    %2663 = vdwg.mxu0
    %2664 = vmatprep.subr.bf16.mxu0 %v1873
    %2665 = vmatpush1.bf16.msra.mxu0 %v1872
    %2666 = vmatprep.subr.bf16.mxu0 %v1871
    %2667 = vmatpush1.bf16.msra.mxu0 %v1870
    %2668 = vmatprep.subr.bf16.mxu0 %v1869
    %2669 = vmatpush1.bf16.msra.mxu0 %v1868
    %2670 = vmatprep.subr.bf16.mxu0 %v1867
    %2671 = vmatpush1.bf16.msra.mxu0 %v1866
    %2672 = vmatprep.subr.bf16.mxu0 %v1865
    %2673 = vmatpush1.bf16.msra.mxu0 %v1864
    %2674 = vmatprep.subr.bf16.mxu0 %v1863
    %2675 = vmatpush1.bf16.msra.mxu0 %v1862
    %2676 = vmatprep.subr.bf16.mxu0 %v1861
    %2677 = vmatpush1.bf16.msra.mxu0 %v1860
    %2678 = vmatprep.subr.bf16.mxu0 %v1859
    %2679 = vmatpush1.bf16.msra.mxu0 %v1858
    %2680 = vmatprep.subr.bf16.mxu0 %v1889
    %2681 = vmatpush2.bf16.msra.mxu0 %v1888
    %2682 = vmatprep.subr.bf16.mxu0 %v1887
    %2683 = vmatpush2.bf16.msra.mxu0 %v1886
    %2684 = vmatprep.subr.bf16.mxu0 %v1885
    %2685 = vmatpush2.bf16.msra.mxu0 %v1884
    %2686 = vmatprep.subr.bf16.mxu0 %v1883
    %2687 = vmatpush2.bf16.msra.mxu0 %v1882
    %2688 = vmatprep.subr.bf16.mxu0 %v1881
    %2689 = vmatpush2.bf16.msra.mxu0 %v1880
    %2690 = vmatprep.subr.bf16.mxu0 %v1879
    %2691 = vmatpush2.bf16.msra.mxu0 %v1878
    %2692 = vmatprep.subr.bf16.mxu0 %v1877
    %2693 = vmatpush2.bf16.msra.mxu0 %v1876
    %2694 = vmatprep.subr.bf16.mxu0 %v1875
    %2695 = vmatpush2.bf16.msra.mxu0 %v1874
    %2696 = vmatprep.mubr.bf16.mxu0 %v194
    %2697 = vmatmul.mubr.bf16.gmra.mxu0 %v193
    %v2698 = vpop.f32.mrf.mxu0
    %v2699 = vadd.f32 %v2658, %v2698
    %v2700 = vpop.f32.mrf.mxu0
    %v2701 = vadd.f32 %v2660, %v2700
    %v2702 = vpop.f32.mrf.mxu0
    %v2703 = vpop.f32.mrf.mxu0
    %2704 = vdwg.mxu0
    %2705 = vmatprep.subr.bf16.mxu0 %v1905
    %2706 = vmatpush1.bf16.msra.mxu0 %v1904
    %2707 = vmatprep.subr.bf16.mxu0 %v1903
    %2708 = vmatpush1.bf16.msra.mxu0 %v1902
    %2709 = vmatprep.subr.bf16.mxu0 %v1901
    %2710 = vmatpush1.bf16.msra.mxu0 %v1900
    %2711 = vmatprep.subr.bf16.mxu0 %v1899
    %2712 = vmatpush1.bf16.msra.mxu0 %v1898
    %2713 = vmatprep.subr.bf16.mxu0 %v1897
    %2714 = vmatpush1.bf16.msra.mxu0 %v1896
    %2715 = vmatprep.subr.bf16.mxu0 %v1895
    %2716 = vmatpush1.bf16.msra.mxu0 %v1894
    %2717 = vmatprep.subr.bf16.mxu0 %v1893
    %2718 = vmatpush1.bf16.msra.mxu0 %v1892
    %2719 = vmatprep.subr.bf16.mxu0 %v1891
    %2720 = vmatpush1.bf16.msra.mxu0 %v1890
    %2721 = vmatprep.subr.bf16.mxu0 %v1921
    %2722 = vmatpush2.bf16.msra.mxu0 %v1920
    %2723 = vmatprep.subr.bf16.mxu0 %v1919
    %2724 = vmatpush2.bf16.msra.mxu0 %v1918
    %2725 = vmatprep.subr.bf16.mxu0 %v1917
    %2726 = vmatpush2.bf16.msra.mxu0 %v1916
    %2727 = vmatprep.subr.bf16.mxu0 %v1915
    %2728 = vmatpush2.bf16.msra.mxu0 %v1914
    %2729 = vmatprep.subr.bf16.mxu0 %v1913
    %2730 = vmatpush2.bf16.msra.mxu0 %v1912
    %2731 = vmatprep.subr.bf16.mxu0 %v1911
    %2732 = vmatpush2.bf16.msra.mxu0 %v1910
    %2733 = vmatprep.subr.bf16.mxu0 %v1909
    %2734 = vmatpush2.bf16.msra.mxu0 %v1908
    %2735 = vmatprep.subr.bf16.mxu0 %v1907
    %2736 = vmatpush2.bf16.msra.mxu0 %v1906
    %2737 = vmatprep.mubr.bf16.mxu0 %v196
    %2738 = vmatmul.mubr.bf16.gmra.mxu0 %v195
    %v2739 = vpop.f32.mrf.mxu0
    %v2740 = vadd.f32 %v2699, %v2739
    %v2741 = vpop.f32.mrf.mxu0
    %v2742 = vadd.f32 %v2701, %v2741
    %v2743 = vpop.f32.mrf.mxu0
    %v2744 = vpop.f32.mrf.mxu0
    %2745 = vdwg.mxu0
    %2746 = vmatprep.subr.bf16.mxu0 %v1937
    %2747 = vmatpush1.bf16.msra.mxu0 %v1936
    %2748 = vmatprep.subr.bf16.mxu0 %v1935
    %2749 = vmatpush1.bf16.msra.mxu0 %v1934
    %2750 = vmatprep.subr.bf16.mxu0 %v1933
    %2751 = vmatpush1.bf16.msra.mxu0 %v1932
    %2752 = vmatprep.subr.bf16.mxu0 %v1931
    %2753 = vmatpush1.bf16.msra.mxu0 %v1930
    %2754 = vmatprep.subr.bf16.mxu0 %v1929
    %2755 = vmatpush1.bf16.msra.mxu0 %v1928
    %2756 = vmatprep.subr.bf16.mxu0 %v1927
    %2757 = vmatpush1.bf16.msra.mxu0 %v1926
    %2758 = vmatprep.subr.bf16.mxu0 %v1925
    %2759 = vmatpush1.bf16.msra.mxu0 %v1924
    %2760 = vmatprep.subr.bf16.mxu0 %v1923
    %2761 = vmatpush1.bf16.msra.mxu0 %v1922
    %2762 = vmatprep.subr.bf16.mxu0 %v1953
    %2763 = vmatpush2.bf16.msra.mxu0 %v1952
    %2764 = vmatprep.subr.bf16.mxu0 %v1951
    %2765 = vmatpush2.bf16.msra.mxu0 %v1950
    %2766 = vmatprep.subr.bf16.mxu0 %v1949
    %2767 = vmatpush2.bf16.msra.mxu0 %v1948
    %2768 = vmatprep.subr.bf16.mxu0 %v1947
    %2769 = vmatpush2.bf16.msra.mxu0 %v1946
    %2770 = vmatprep.subr.bf16.mxu0 %v1945
    %2771 = vmatpush2.bf16.msra.mxu0 %v1944
    %2772 = vmatprep.subr.bf16.mxu0 %v1943
    %2773 = vmatpush2.bf16.msra.mxu0 %v1942
    %2774 = vmatprep.subr.bf16.mxu0 %v1941
    %2775 = vmatpush2.bf16.msra.mxu0 %v1940
    %2776 = vmatprep.subr.bf16.mxu0 %v1939
    %2777 = vmatpush2.bf16.msra.mxu0 %v1938
    %2778 = vmatprep.mubr.bf16.mxu0 %v198
    %2779 = vmatmul.mubr.bf16.gmra.mxu0 %v197
    %v2780 = vpop.f32.mrf.mxu0
    %v2781 = vadd.f32 %v2740, %v2780
    %v2782 = vpop.f32.mrf.mxu0
    %v2783 = vadd.f32 %v2742, %v2782
    %v2784 = vpop.f32.mrf.mxu0
    %v2785 = vpop.f32.mrf.mxu0
    %2786 = vdwg.mxu0
    %2787 = vmatprep.subr.bf16.mxu0 %v1969
    %2788 = vmatpush1.bf16.msra.mxu0 %v1968
    %2789 = vmatprep.subr.bf16.mxu0 %v1967
    %2790 = vmatpush1.bf16.msra.mxu0 %v1966
    %2791 = vmatprep.subr.bf16.mxu0 %v1965
    %2792 = vmatpush1.bf16.msra.mxu0 %v1964
    %2793 = vmatprep.subr.bf16.mxu0 %v1963
    %2794 = vmatpush1.bf16.msra.mxu0 %v1962
    %2795 = vmatprep.subr.bf16.mxu0 %v1961
    %2796 = vmatpush1.bf16.msra.mxu0 %v1960
    %2797 = vmatprep.subr.bf16.mxu0 %v1959
    %2798 = vmatpush1.bf16.msra.mxu0 %v1958
    %2799 = vmatprep.subr.bf16.mxu0 %v1957
    %2800 = vmatpush1.bf16.msra.mxu0 %v1956
    %2801 = vmatprep.subr.bf16.mxu0 %v1955
    %2802 = vmatpush1.bf16.msra.mxu0 %v1954
    %2803 = vmatprep.subr.bf16.mxu0 %v1985
    %2804 = vmatpush2.bf16.msra.mxu0 %v1984
    %2805 = vmatprep.subr.bf16.mxu0 %v1983
    %2806 = vmatpush2.bf16.msra.mxu0 %v1982
    %2807 = vmatprep.subr.bf16.mxu0 %v1981
    %2808 = vmatpush2.bf16.msra.mxu0 %v1980
    %2809 = vmatprep.subr.bf16.mxu0 %v1979
    %2810 = vmatpush2.bf16.msra.mxu0 %v1978
    %2811 = vmatprep.subr.bf16.mxu0 %v1977
    %2812 = vmatpush2.bf16.msra.mxu0 %v1976
    %2813 = vmatprep.subr.bf16.mxu0 %v1975
    %2814 = vmatpush2.bf16.msra.mxu0 %v1974
    %2815 = vmatprep.subr.bf16.mxu0 %v1973
    %2816 = vmatpush2.bf16.msra.mxu0 %v1972
    %2817 = vmatprep.subr.bf16.mxu0 %v1971
    %2818 = vmatpush2.bf16.msra.mxu0 %v1970
    %2819 = vmatprep.mubr.bf16.mxu0 %v200
    %2820 = vmatmul.mubr.bf16.gmra.mxu0 %v199
    %v2821 = vpop.f32.mrf.mxu0
    %v2822 = vadd.f32 %v2781, %v2821
    %v2823 = vpop.f32.mrf.mxu0
    %v2824 = vadd.f32 %v2783, %v2823
    %v2825 = vpop.f32.mrf.mxu0
    %v2826 = vpop.f32.mrf.mxu0
    %2827 = vdwg.mxu0
    %2828 = vmatprep.subr.bf16.mxu0 %v2001
    %2829 = vmatpush1.bf16.msra.mxu0 %v2000
    %2830 = vmatprep.subr.bf16.mxu0 %v1999
    %2831 = vmatpush1.bf16.msra.mxu0 %v1998
    %2832 = vmatprep.subr.bf16.mxu0 %v1997
    %2833 = vmatpush1.bf16.msra.mxu0 %v1996
    %2834 = vmatprep.subr.bf16.mxu0 %v1995
    %2835 = vmatpush1.bf16.msra.mxu0 %v1994
    %2836 = vmatprep.subr.bf16.mxu0 %v1993
    %2837 = vmatpush1.bf16.msra.mxu0 %v1992
    %2838 = vmatprep.subr.bf16.mxu0 %v1991
    %2839 = vmatpush1.bf16.msra.mxu0 %v1990
    %2840 = vmatprep.subr.bf16.mxu0 %v1989
    %2841 = vmatpush1.bf16.msra.mxu0 %v1988
    %2842 = vmatprep.subr.bf16.mxu0 %v1987
    %2843 = vmatpush1.bf16.msra.mxu0 %v1986
    %2844 = vmatprep.subr.bf16.mxu0 %v2017
    %2845 = vmatpush2.bf16.msra.mxu0 %v2016
    %2846 = vmatprep.subr.bf16.mxu0 %v2015
    %2847 = vmatpush2.bf16.msra.mxu0 %v2014
    %2848 = vmatprep.subr.bf16.mxu0 %v2013
    %2849 = vmatpush2.bf16.msra.mxu0 %v2012
    %2850 = vmatprep.subr.bf16.mxu0 %v2011
    %2851 = vmatpush2.bf16.msra.mxu0 %v2010
    %2852 = vmatprep.subr.bf16.mxu0 %v2009
    %2853 = vmatpush2.bf16.msra.mxu0 %v2008
    %2854 = vmatprep.subr.bf16.mxu0 %v2007
    %2855 = vmatpush2.bf16.msra.mxu0 %v2006
    %2856 = vmatprep.subr.bf16.mxu0 %v2005
    %2857 = vmatpush2.bf16.msra.mxu0 %v2004
    %2858 = vmatprep.subr.bf16.mxu0 %v2003
    %2859 = vmatpush2.bf16.msra.mxu0 %v2002
    %2860 = vmatprep.mubr.bf16.mxu0 %v202
    %2861 = vmatmul.mubr.bf16.gmra.mxu0 %v201
    %v2862 = vpop.f32.mrf.mxu0
    %v2863 = vadd.f32 %v2822, %v2862
    %v2864 = vpop.f32.mrf.mxu0
    %v2865 = vadd.f32 %v2824, %v2864
    %v2866 = vpop.f32.mrf.mxu0
    %v2867 = vpop.f32.mrf.mxu0
    %2868 = vdwg.mxu0
    %2869 = vmatprep.subr.bf16.mxu0 %v2033
    %2870 = vmatpush1.bf16.msra.mxu0 %v2032
    %2871 = vmatprep.subr.bf16.mxu0 %v2031
    %2872 = vmatpush1.bf16.msra.mxu0 %v2030
    %2873 = vmatprep.subr.bf16.mxu0 %v2029
    %2874 = vmatpush1.bf16.msra.mxu0 %v2028
    %2875 = vmatprep.subr.bf16.mxu0 %v2027
    %2876 = vmatpush1.bf16.msra.mxu0 %v2026
    %2877 = vmatprep.subr.bf16.mxu0 %v2025
    %2878 = vmatpush1.bf16.msra.mxu0 %v2024
    %2879 = vmatprep.subr.bf16.mxu0 %v2023
    %2880 = vmatpush1.bf16.msra.mxu0 %v2022
    %2881 = vmatprep.subr.bf16.mxu0 %v2021
    %2882 = vmatpush1.bf16.msra.mxu0 %v2020
    %2883 = vmatprep.subr.bf16.mxu0 %v2019
    %2884 = vmatpush1.bf16.msra.mxu0 %v2018
    %2885 = vmatprep.subr.bf16.mxu0 %v2049
    %2886 = vmatpush2.bf16.msra.mxu0 %v2048
    %2887 = vmatprep.subr.bf16.mxu0 %v2047
    %2888 = vmatpush2.bf16.msra.mxu0 %v2046
    %2889 = vmatprep.subr.bf16.mxu0 %v2045
    %2890 = vmatpush2.bf16.msra.mxu0 %v2044
    %2891 = vmatprep.subr.bf16.mxu0 %v2043
    %2892 = vmatpush2.bf16.msra.mxu0 %v2042
    %2893 = vmatprep.subr.bf16.mxu0 %v2041
    %2894 = vmatpush2.bf16.msra.mxu0 %v2040
    %2895 = vmatprep.subr.bf16.mxu0 %v2039
    %2896 = vmatpush2.bf16.msra.mxu0 %v2038
    %2897 = vmatprep.subr.bf16.mxu0 %v2037
    %2898 = vmatpush2.bf16.msra.mxu0 %v2036
    %2899 = vmatprep.subr.bf16.mxu0 %v2035
    %2900 = vmatpush2.bf16.msra.mxu0 %v2034
    %2901 = vmatprep.mubr.bf16.mxu0 %v204
    %2902 = vmatmul.mubr.bf16.gmra.mxu0 %v203
    %v2903 = vpop.f32.mrf.mxu0
    %v2904 = vadd.f32 %v2863, %v2903
    %v2905 = vpop.f32.mrf.mxu0
    %v2906 = vadd.f32 %v2865, %v2905
    %v2907 = vpop.f32.mrf.mxu0
    %v2908 = vpop.f32.mrf.mxu0
    %2909 = vdwg.mxu0
    %2910 = vmatprep.subr.bf16.mxu0 %v2065
    %2911 = vmatpush1.bf16.msra.mxu0 %v2064
    %2912 = vmatprep.subr.bf16.mxu0 %v2063
    %2913 = vmatpush1.bf16.msra.mxu0 %v2062
    %2914 = vmatprep.subr.bf16.mxu0 %v2061
    %2915 = vmatpush1.bf16.msra.mxu0 %v2060
    %2916 = vmatprep.subr.bf16.mxu0 %v2059
    %2917 = vmatpush1.bf16.msra.mxu0 %v2058
    %2918 = vmatprep.subr.bf16.mxu0 %v2057
    %2919 = vmatpush1.bf16.msra.mxu0 %v2056
    %2920 = vmatprep.subr.bf16.mxu0 %v2055
    %2921 = vmatpush1.bf16.msra.mxu0 %v2054
    %2922 = vmatprep.subr.bf16.mxu0 %v2053
    %2923 = vmatpush1.bf16.msra.mxu0 %v2052
    %2924 = vmatprep.subr.bf16.mxu0 %v2051
    %2925 = vmatpush1.bf16.msra.mxu0 %v2050
    %2926 = vmatprep.subr.bf16.mxu0 %v2081
    %2927 = vmatpush2.bf16.msra.mxu0 %v2080
    %2928 = vmatprep.subr.bf16.mxu0 %v2079
    %2929 = vmatpush2.bf16.msra.mxu0 %v2078
    %2930 = vmatprep.subr.bf16.mxu0 %v2077
    %2931 = vmatpush2.bf16.msra.mxu0 %v2076
    %2932 = vmatprep.subr.bf16.mxu0 %v2075
    %2933 = vmatpush2.bf16.msra.mxu0 %v2074
    %2934 = vmatprep.subr.bf16.mxu0 %v2073
    %2935 = vmatpush2.bf16.msra.mxu0 %v2072
    %2936 = vmatprep.subr.bf16.mxu0 %v2071
    %2937 = vmatpush2.bf16.msra.mxu0 %v2070
    %2938 = vmatprep.subr.bf16.mxu0 %v2069
    %2939 = vmatpush2.bf16.msra.mxu0 %v2068
    %2940 = vmatprep.subr.bf16.mxu0 %v2067
    %2941 = vmatpush2.bf16.msra.mxu0 %v2066
    %2942 = vmatprep.mubr.bf16.mxu0 %v206
    %2943 = vmatmul.mubr.bf16.gmra.mxu0 %v205
    %v2944 = vpop.f32.mrf.mxu0
    %v2945 = vadd.f32 %v2904, %v2944
    %v2946 = vpop.f32.mrf.mxu0
    %v2947 = vadd.f32 %v2906, %v2946
    %v2948 = vpop.f32.mrf.mxu0
    %v2949 = vpop.f32.mrf.mxu0
    %2950 = vdwg.mxu0
    %2951 = vmatprep.subr.bf16.mxu0 %v2097
    %2952 = vmatpush1.bf16.msra.mxu0 %v2096
    %2953 = vmatprep.subr.bf16.mxu0 %v2095
    %2954 = vmatpush1.bf16.msra.mxu0 %v2094
    %2955 = vmatprep.subr.bf16.mxu0 %v2093
    %2956 = vmatpush1.bf16.msra.mxu0 %v2092
    %2957 = vmatprep.subr.bf16.mxu0 %v2091
    %2958 = vmatpush1.bf16.msra.mxu0 %v2090
    %2959 = vmatprep.subr.bf16.mxu0 %v2089
    %2960 = vmatpush1.bf16.msra.mxu0 %v2088
    %2961 = vmatprep.subr.bf16.mxu0 %v2087
    %2962 = vmatpush1.bf16.msra.mxu0 %v2086
    %2963 = vmatprep.subr.bf16.mxu0 %v2085
    %2964 = vmatpush1.bf16.msra.mxu0 %v2084
    %2965 = vmatprep.subr.bf16.mxu0 %v2083
    %2966 = vmatpush1.bf16.msra.mxu0 %v2082
    %2967 = vmatprep.subr.bf16.mxu0 %v2113
    %2968 = vmatpush2.bf16.msra.mxu0 %v2112
    %2969 = vmatprep.subr.bf16.mxu0 %v2111
    %2970 = vmatpush2.bf16.msra.mxu0 %v2110
    %2971 = vmatprep.subr.bf16.mxu0 %v2109
    %2972 = vmatpush2.bf16.msra.mxu0 %v2108
    %2973 = vmatprep.subr.bf16.mxu0 %v2107
    %2974 = vmatpush2.bf16.msra.mxu0 %v2106
    %2975 = vmatprep.subr.bf16.mxu0 %v2105
    %2976 = vmatpush2.bf16.msra.mxu0 %v2104
    %2977 = vmatprep.subr.bf16.mxu0 %v2103
    %2978 = vmatpush2.bf16.msra.mxu0 %v2102
    %2979 = vmatprep.subr.bf16.mxu0 %v2101
    %2980 = vmatpush2.bf16.msra.mxu0 %v2100
    %2981 = vmatprep.subr.bf16.mxu0 %v2099
    %2982 = vmatpush2.bf16.msra.mxu0 %v2098
    %2983 = vmatprep.mubr.bf16.mxu0 %v208
    %2984 = vmatmul.mubr.bf16.gmra.mxu0 %v207
    %v2985 = vpop.f32.mrf.mxu0
    %v2986 = vadd.f32 %v2945, %v2985
    %v2987 = vpop.f32.mrf.mxu0
    %v2988 = vadd.f32 %v2947, %v2987
    %v2989 = vpop.f32.mrf.mxu0
    %v2990 = vpop.f32.mrf.mxu0
    %2991 = vdwg.mxu0
    %2992 = vmatprep.subr.bf16.mxu0 %v2129
    %2993 = vmatpush1.bf16.msra.mxu0 %v2128
    %2994 = vmatprep.subr.bf16.mxu0 %v2127
    %2995 = vmatpush1.bf16.msra.mxu0 %v2126
    %2996 = vmatprep.subr.bf16.mxu0 %v2125
    %2997 = vmatpush1.bf16.msra.mxu0 %v2124
    %2998 = vmatprep.subr.bf16.mxu0 %v2123
    %2999 = vmatpush1.bf16.msra.mxu0 %v2122
    %3000 = vmatprep.subr.bf16.mxu0 %v2121
    %3001 = vmatpush1.bf16.msra.mxu0 %v2120
    %3002 = vmatprep.subr.bf16.mxu0 %v2119
    %3003 = vmatpush1.bf16.msra.mxu0 %v2118
    %3004 = vmatprep.subr.bf16.mxu0 %v2117
    %3005 = vmatpush1.bf16.msra.mxu0 %v2116
    %3006 = vmatprep.subr.bf16.mxu0 %v2115
    %3007 = vmatpush1.bf16.msra.mxu0 %v2114
    %3008 = vmatprep.subr.bf16.mxu0 %v2145
    %3009 = vmatpush2.bf16.msra.mxu0 %v2144
    %3010 = vmatprep.subr.bf16.mxu0 %v2143
    %3011 = vmatpush2.bf16.msra.mxu0 %v2142
    %3012 = vmatprep.subr.bf16.mxu0 %v2141
    %3013 = vmatpush2.bf16.msra.mxu0 %v2140
    %3014 = vmatprep.subr.bf16.mxu0 %v2139
    %3015 = vmatpush2.bf16.msra.mxu0 %v2138
    %3016 = vmatprep.subr.bf16.mxu0 %v2137
    %3017 = vmatpush2.bf16.msra.mxu0 %v2136
    %3018 = vmatprep.subr.bf16.mxu0 %v2135
    %3019 = vmatpush2.bf16.msra.mxu0 %v2134
    %3020 = vmatprep.subr.bf16.mxu0 %v2133
    %3021 = vmatpush2.bf16.msra.mxu0 %v2132
    %3022 = vmatprep.subr.bf16.mxu0 %v2131
    %3023 = vmatpush2.bf16.msra.mxu0 %v2130
    %3024 = vmatprep.mubr.bf16.mxu0 %v210
    %3025 = vmatmul.mubr.bf16.gmra.mxu0 %v209
    %v3026 = vpop.f32.mrf.mxu0
    %v3027 = vadd.f32 %v2986, %v3026
    %v3028 = vpop.f32.mrf.mxu0
    %v3029 = vadd.f32 %v2988, %v3028
    %v3030 = vpop.f32.mrf.mxu0
    %v3031 = vpop.f32.mrf.mxu0
    %3032 = vdwg.mxu0
    %3033 = vmatprep.subr.bf16.mxu0 %v2161
    %3034 = vmatpush1.bf16.msra.mxu0 %v2160
    %3035 = vmatprep.subr.bf16.mxu0 %v2159
    %3036 = vmatpush1.bf16.msra.mxu0 %v2158
    %3037 = vmatprep.subr.bf16.mxu0 %v2157
    %3038 = vmatpush1.bf16.msra.mxu0 %v2156
    %3039 = vmatprep.subr.bf16.mxu0 %v2155
    %3040 = vmatpush1.bf16.msra.mxu0 %v2154
    %3041 = vmatprep.subr.bf16.mxu0 %v2153
    %3042 = vmatpush1.bf16.msra.mxu0 %v2152
    %3043 = vmatprep.subr.bf16.mxu0 %v2151
    %3044 = vmatpush1.bf16.msra.mxu0 %v2150
    %3045 = vmatprep.subr.bf16.mxu0 %v2149
    %3046 = vmatpush1.bf16.msra.mxu0 %v2148
    %3047 = vmatprep.subr.bf16.mxu0 %v2147
    %3048 = vmatpush1.bf16.msra.mxu0 %v2146
    %3049 = vmatprep.subr.bf16.mxu0 %v2177
    %3050 = vmatpush2.bf16.msra.mxu0 %v2176
    %3051 = vmatprep.subr.bf16.mxu0 %v2175
    %3052 = vmatpush2.bf16.msra.mxu0 %v2174
    %3053 = vmatprep.subr.bf16.mxu0 %v2173
    %3054 = vmatpush2.bf16.msra.mxu0 %v2172
    %3055 = vmatprep.subr.bf16.mxu0 %v2171
    %3056 = vmatpush2.bf16.msra.mxu0 %v2170
    %3057 = vmatprep.subr.bf16.mxu0 %v2169
    %3058 = vmatpush2.bf16.msra.mxu0 %v2168
    %3059 = vmatprep.subr.bf16.mxu0 %v2167
    %3060 = vmatpush2.bf16.msra.mxu0 %v2166
    %3061 = vmatprep.subr.bf16.mxu0 %v2165
    %3062 = vmatpush2.bf16.msra.mxu0 %v2164
    %3063 = vmatprep.subr.bf16.mxu0 %v2163
    %3064 = vmatpush2.bf16.msra.mxu0 %v2162
    %3065 = vmatprep.mubr.bf16.mxu0 %v212
    %3066 = vmatmul.mubr.bf16.gmra.mxu0 %v211
    %v3067 = vpop.f32.mrf.mxu0
    %v3068 = vadd.f32 %v3027, %v3067
    %v3069 = vpop.f32.mrf.mxu0
    %v3070 = vadd.f32 %v3029, %v3069
    %v3071 = vpop.f32.mrf.mxu0
    %v3072 = vpop.f32.mrf.mxu0
    %3073 = vdwg.mxu0
    %3074 = vmatprep.subr.bf16.mxu0 0
    %3075 = vmatpush1.bf16.msra.mxu0 0
    %3076 = vmatprep.subr.bf16.mxu0 0
    %3077 = vmatpush1.bf16.msra.mxu0 0
    %3078 = vmatprep.subr.bf16.mxu0 0
    %3079 = vmatpush1.bf16.msra.mxu0 0
    %3080 = vmatprep.subr.bf16.mxu0 0
    %3081 = vmatpush1.bf16.msra.mxu0 0
    %3082 = vmatprep.subr.bf16.mxu0 %v2185
    %3083 = vmatpush1.bf16.msra.mxu0 %v2184
    %3084 = vmatprep.subr.bf16.mxu0 %v2183
    %3085 = vmatpush1.bf16.msra.mxu0 %v2182
    %3086 = vmatprep.subr.bf16.mxu0 %v2181
    %3087 = vmatpush1.bf16.msra.mxu0 %v2180
    %3088 = vmatprep.subr.bf16.mxu0 %v2179
    %3089 = vmatpush1.bf16.msra.mxu0 %v2178
    %3090 = vmatprep.subr.bf16.mxu0 0
    %3091 = vmatpush2.bf16.msra.mxu0 0
    %3092 = vmatprep.subr.bf16.mxu0 0
    %3093 = vmatpush2.bf16.msra.mxu0 0
    %3094 = vmatprep.subr.bf16.mxu0 0
    %3095 = vmatpush2.bf16.msra.mxu0 0
    %3096 = vmatprep.subr.bf16.mxu0 0
    %3097 = vmatpush2.bf16.msra.mxu0 0
    %3098 = vmatprep.subr.bf16.mxu0 0
    %3099 = vmatpush2.bf16.msra.mxu0 0
    %3100 = vmatprep.subr.bf16.mxu0 0
    %3101 = vmatpush2.bf16.msra.mxu0 0
    %3102 = vmatprep.subr.bf16.mxu0 0
    %3103 = vmatpush2.bf16.msra.mxu0 0
    %3104 = vmatprep.subr.bf16.mxu0 0
    %3105 = vmatpush2.bf16.msra.mxu0 0
    %3106 = vmatprep.mubr.bf16.mxu0 0
    %3107 = vmatmul.mubr.bf16.gmra.mxu0 %v2580
    %v3108 = vpop.f32.mrf.mxu0
    %v3109 = vadd.f32 %v3068, %v3108
    %v3110 = vpop.f32.mrf.mxu0
    %v3111 = vadd.f32 %v3070, %v3110
    %v3112 = vpop.f32.mrf.mxu0
    %v3113 = vpop.f32.mrf.mxu0
    %3114 = vdwg.mxu0
    %v3115 = vmax.f32 %v3109, 0.0
    %v3116 = vmax.f32 %v3111, 0.0
    %v3117 = vld [vmem:[%s4] sm:$0xff]
    %v3118 = vld [vmem:[%s4 + $0x8] sm:$0xff]
    %v3119 = vld [vmem:[%s4 + $0x10] sm:$0xff]
    %v3120 = vld [vmem:[%s4 + $0x18] sm:$0xff]
    %v3121 = vld [vmem:[%s4 + $0x20] sm:$0xff]
    %v3122 = vld [vmem:[%s4 + $0x28] sm:$0xff]
    %v3123 = vld [vmem:[%s4 + $0x30] sm:$0xff]
    %v3124 = vld [vmem:[%s4 + $0x38] sm:$0xff]
    %v3125 = vld [vmem:[%s4 + $0x40] sm:$0xff]
    %v3126 = vld [vmem:[%s4 + $0x48] sm:$0xff]
    %v3127 = vld [vmem:[%s4 + $0x50] sm:$0xff]
    %v3128 = vld [vmem:[%s4 + $0x58] sm:$0xff]
    %v3129 = vld [vmem:[%s4 + $0x60] sm:$0xff]
    %v3130 = vld [vmem:[%s4 + $0x68] sm:$0xff]
    %v3131 = vld [vmem:[%s4 + $0x70] sm:$0xff]
    %v3132 = vld [vmem:[%s4 + $0x78] sm:$0xff]
    %v3133 = vld [vmem:[%s4 + $0x80] sm:$0xff]
    %v3134 = vld [vmem:[%s4 + $0x88] sm:$0xff]
    %v3135 = vld [vmem:[%s4 + $0x90] sm:$0xff]
    %v3136 = vld [vmem:[%s4 + $0x98] sm:$0xff]
    %v3137 = vld [vmem:[%s4 + $0xa0] sm:$0xff]
    %v3138 = vld [vmem:[%s4 + $0xa8] sm:$0xff]
    %v3139 = vld [vmem:[%s4 + $0xb0] sm:$0xff]
    %v3140 = vld [vmem:[%s4 + $0xb8] sm:$0xff]
    %v3141 = vld [vmem:[%s4 + $0xc0] sm:$0xff]
    %v3142 = vld [vmem:[%s4 + $0xc8] sm:$0xff]
    %v3143 = vld [vmem:[%s4 + $0xd0] sm:$0xff]
    %v3144 = vld [vmem:[%s4 + $0xd8] sm:$0xff]
    %v3145 = vld [vmem:[%s4 + $0xe0] sm:$0xff]
    %v3146 = vld [vmem:[%s4 + $0xe8] sm:$0xff]
    %v3147 = vld [vmem:[%s4 + $0xf0] sm:$0xff]
    %v3148 = vld [vmem:[%s4 + $0xf8] sm:$0xff]
    %v3149 = vld [vmem:[%s5] sm:$0x1]
    %v3151 = vlaneseq
    %v3152 = vshrl.u32 %v3151, 7
    %v3153 = vsub.s32 0, %v3152
    %v3154 = vrot.slane %v3149, %v3153
    %3156 = vmatprep.subr.mxu0 0.0
    %3157 = vmatpush1.msra.mxu0 %v3132
    %3158 = vmatprep.subr.mxu0 0.0
    %3159 = vmatpush1.msra.mxu0 %v3131
    %3160 = vmatprep.subr.mxu0 0.0
    %3161 = vmatpush1.msra.mxu0 %v3130
    %3162 = vmatprep.subr.mxu0 0.0
    %3163 = vmatpush1.msra.mxu0 %v3129
    %3164 = vmatprep.subr.mxu0 0.0
    %3165 = vmatpush1.msra.mxu0 %v3128
    %3166 = vmatprep.subr.mxu0 0.0
    %3167 = vmatpush1.msra.mxu0 %v3127
    %3168 = vmatprep.subr.mxu0 0.0
    %3169 = vmatpush1.msra.mxu0 %v3126
    %3170 = vmatprep.subr.mxu0 0.0
    %3171 = vmatpush1.msra.mxu0 %v3125
    %3172 = vmatprep.subr.mxu0 0.0
    %3173 = vmatpush1.msra.mxu0 %v3124
    %3174 = vmatprep.subr.mxu0 0.0
    %3175 = vmatpush1.msra.mxu0 %v3123
    %3176 = vmatprep.subr.mxu0 0.0
    %3177 = vmatpush1.msra.mxu0 %v3122
    %3178 = vmatprep.subr.mxu0 0.0
    %3179 = vmatpush1.msra.mxu0 %v3121
    %3180 = vmatprep.subr.mxu0 0.0
    %3181 = vmatpush1.msra.mxu0 %v3120
    %3182 = vmatprep.subr.mxu0 0.0
    %3183 = vmatpush1.msra.mxu0 %v3119
    %3184 = vmatprep.subr.mxu0 0.0
    %3185 = vmatpush1.msra.mxu0 %v3118
    %3186 = vmatprep.subr.mxu0 0.0
    %3187 = vmatpush1.msra.mxu0 %v3117
    %3188 = vmatprep.subr.mxu0 0.0
    %3189 = vmatpush2.msra.mxu0 %v3148
    %3190 = vmatprep.subr.mxu0 0.0
    %3191 = vmatpush2.msra.mxu0 %v3147
    %3192 = vmatprep.subr.mxu0 0.0
    %3193 = vmatpush2.msra.mxu0 %v3146
    %3194 = vmatprep.subr.mxu0 0.0
    %3195 = vmatpush2.msra.mxu0 %v3145
    %3196 = vmatprep.subr.mxu0 0.0
    %3197 = vmatpush2.msra.mxu0 %v3144
    %3198 = vmatprep.subr.mxu0 0.0
    %3199 = vmatpush2.msra.mxu0 %v3143
    %3200 = vmatprep.subr.mxu0 0.0
    %3201 = vmatpush2.msra.mxu0 %v3142
    %3202 = vmatprep.subr.mxu0 0.0
    %3203 = vmatpush2.msra.mxu0 %v3141
    %3204 = vmatprep.subr.mxu0 0.0
    %3205 = vmatpush2.msra.mxu0 %v3140
    %3206 = vmatprep.subr.mxu0 0.0
    %3207 = vmatpush2.msra.mxu0 %v3139
    %3208 = vmatprep.subr.mxu0 0.0
    %3209 = vmatpush2.msra.mxu0 %v3138
    %3210 = vmatprep.subr.mxu0 0.0
    %3211 = vmatpush2.msra.mxu0 %v3137
    %3212 = vmatprep.subr.mxu0 0.0
    %3213 = vmatpush2.msra.mxu0 %v3136
    %3214 = vmatprep.subr.mxu0 0.0
    %3215 = vmatpush2.msra.mxu0 %v3135
    %3216 = vmatprep.subr.mxu0 0.0
    %3217 = vmatpush2.msra.mxu0 %v3134
    %3218 = vmatprep.subr.mxu0 0.0
    %3219 = vmatpush2.msra.mxu0 %v3133
    %3220 = vmatprep.mubr.f32.mxu0 %v3116
    %3221 = vmatmul.mubr.f32.gmra.mxu0 %v3115
    %v3222 = vpop.f32.mrf.mxu0
    %v3223 = vadd.f32 %v3154, %v3222
    %v3224 = vpop.f32.mrf.mxu0
    %3225 = vdwg.mxu0
    %v3226 = vld [vmem:[%s1] sm:$0x3]
    %v3227 = vmul.f32 %v3223, 0.5
    %v3228 = vmul.f32 %v3227, 1.442695
    %v3229 = vpow.pop %v3228
    %3231 = vrot.lane.b32.xlu0 %v3229, 112
    %v3232 = vpop.permute.xlu0 %3231
    %v3234 = vmul.f32 %v3226, %v3232
    %v3235 = vadd.f32 %v3223, %v3234
    %v3236 = vld [vmem:[%s6] sm:$0xff]
    %v3237 = vld [vmem:[%s6 + $0x8] sm:$0xff]
    %v3238 = vld [vmem:[%s6 + $0x10] sm:$0xff]
    %v3239 = vld [vmem:[%s6 + $0x18] sm:$0xff]
    %v3240 = vld [vmem:[%s7] sm:$0x3]
    %v3242 = vlaneseq
    %v3243 = vshrl.u32 %v3242, 7
    %v3244 = vsub.s32 0, %v3243
    %v3245 = vrot.slane %v3240, %v3244
    %v3246 = vlaneseq
    %v3247 = vshrl.u32 %v3246, 7
    %v3248 = vsub.s32 1, %v3247
    %v3249 = vrot.slane %v3240, %v3248
    %vm3252 = vcmask 130048
    %v3254 = vsel %vm3252, %v3235, 0
    %3256 = vmatprep.subr.mxu0 0.0
    %3257 = vmatpush1.msra.mxu0 0.0
    %3258 = vmatprep.subr.mxu0 0.0
    %3259 = vmatpush1.msra.mxu0 0.0
    %3260 = vmatprep.subr.mxu0 0.0
    %3261 = vmatpush1.msra.mxu0 0.0
    %3262 = vmatprep.subr.mxu0 0.0
    %3263 = vmatpush1.msra.mxu0 0.0
    %3264 = vmatprep.subr.mxu0 0.0
    %3265 = vmatpush1.msra.mxu0 0.0
    %3266 = vmatprep.subr.mxu0 0.0
    %3267 = vmatpush1.msra.mxu0 0.0
    %3268 = vmatprep.subr.mxu0 0.0
    %3269 = vmatpush1.msra.mxu0 0.0
    %3270 = vmatprep.subr.mxu0 0.0
    %3271 = vmatpush1.msra.mxu0 0.0
    %3272 = vmatprep.subr.mxu0 0.0
    %3273 = vmatpush1.msra.mxu0 0.0
    %3274 = vmatprep.subr.mxu0 0.0
    %3275 = vmatpush1.msra.mxu0 0.0
    %3276 = vmatprep.subr.mxu0 0.0
    %3277 = vmatpush1.msra.mxu0 0.0
    %3278 = vmatprep.subr.mxu0 0.0
    %3279 = vmatpush1.msra.mxu0 0.0
    %3280 = vmatprep.subr.mxu0 0.0
    %3281 = vmatpush1.msra.mxu0 0.0
    %3282 = vmatprep.subr.mxu0 0.0
    %3283 = vmatpush1.msra.mxu0 0.0
    %3284 = vmatprep.subr.mxu0 %v3239
    %3285 = vmatpush1.msra.mxu0 %v3238
    %3286 = vmatprep.subr.mxu0 %v3237
    %3287 = vmatpush1.msra.mxu0 %v3236
    %3288 = vmatprep.subr.mxu0 0.0
    %3289 = vmatpush2.msra.mxu0 0.0
    %3290 = vmatprep.subr.mxu0 0.0
    %3291 = vmatpush2.msra.mxu0 0.0
    %3292 = vmatprep.subr.mxu0 0.0
    %3293 = vmatpush2.msra.mxu0 0.0
    %3294 = vmatprep.subr.mxu0 0.0
    %3295 = vmatpush2.msra.mxu0 0.0
    %3296 = vmatprep.subr.mxu0 0.0
    %3297 = vmatpush2.msra.mxu0 0.0
    %3298 = vmatprep.subr.mxu0 0.0
    %3299 = vmatpush2.msra.mxu0 0.0
    %3300 = vmatprep.subr.mxu0 0.0
    %3301 = vmatpush2.msra.mxu0 0.0
    %3302 = vmatprep.subr.mxu0 0.0
    %3303 = vmatpush2.msra.mxu0 0.0
    %3304 = vmatprep.subr.mxu0 0.0
    %3305 = vmatpush2.msra.mxu0 0.0
    %3306 = vmatprep.subr.mxu0 0.0
    %3307 = vmatpush2.msra.mxu0 0.0
    %3308 = vmatprep.subr.mxu0 0.0
    %3309 = vmatpush2.msra.mxu0 0.0
    %3310 = vmatprep.subr.mxu0 0.0
    %3311 = vmatpush2.msra.mxu0 0.0
    %3312 = vmatprep.subr.mxu0 0.0
    %3313 = vmatpush2.msra.mxu0 0.0
    %3314 = vmatprep.subr.mxu0 0.0
    %3315 = vmatpush2.msra.mxu0 0.0
    %3316 = vmatprep.subr.mxu0 0.0
    %3317 = vmatpush2.msra.mxu0 0.0
    %3318 = vmatprep.subr.mxu0 0.0
    %3319 = vmatpush2.msra.mxu0 0.0
    %3320 = vmatprep.mubr.f32.mxu0 0.0
    %3321 = vmatmul.mubr.f32.gmra.mxu0 %v3254
    %v3322 = vpop.f32.mrf.mxu0
    %v3323 = vadd.f32 %v3245, %v3322
    %v3324 = vpop.f32.mrf.mxu0
    %v3325 = vadd.f32 %v3249, %v3324
    %3326 = vdwg.mxu0
    %v3327 = vmax.f32 %v3323, 0.0
    %v3328 = vmax.f32 %v3325, 0.0
    %v3329 = vpack.c.bf16 %v3327, %v3327
    %v3330 = vpack.c.bf16 %v3328, %v3328
    %v3331 = vld [vmem:[%s8] sm:$0xff]
    %v3332 = vld [vmem:[%s8 + $0x8] sm:$0xff]
    %v3333 = vld [vmem:[%s8 + $0x10] sm:$0xff]
    %v3334 = vld [vmem:[%s8 + $0x18] sm:$0xff]
    %v3335 = vld [vmem:[%s8 + $0x20] sm:$0xff]
    %v3336 = vld [vmem:[%s8 + $0x28] sm:$0xff]
    %v3337 = vld [vmem:[%s8 + $0x30] sm:$0xff]
    %v3338 = vld [vmem:[%s8 + $0x38] sm:$0xff]
    %v3339 = vld [vmem:[%s8 + $0x40] sm:$0xff]
    %v3340 = vld [vmem:[%s8 + $0x48] sm:$0xff]
    %v3341 = vld [vmem:[%s8 + $0x50] sm:$0xff]
    %v3342 = vld [vmem:[%s8 + $0x58] sm:$0xff]
    %v3343 = vld [vmem:[%s8 + $0x60] sm:$0xf]
    %v3344 = vld [vmem:[%s8 + $0x64] sm:$0xff]
    %v3345 = vld [vmem:[%s8 + $0x6c] sm:$0xff]
    %v3346 = vld [vmem:[%s8 + $0x74] sm:$0xff]
    %v3347 = vld [vmem:[%s8 + $0x7c] sm:$0xff]
    %v3348 = vld [vmem:[%s8 + $0x84] sm:$0xff]
    %v3349 = vld [vmem:[%s8 + $0x8c] sm:$0xff]
    %v3350 = vld [vmem:[%s8 + $0x94] sm:$0xff]
    %v3351 = vld [vmem:[%s8 + $0x9c] sm:$0xff]
    %v3352 = vld [vmem:[%s8 + $0xa4] sm:$0xff]
    %v3353 = vld [vmem:[%s8 + $0xac] sm:$0xff]
    %v3354 = vld [vmem:[%s8 + $0xb4] sm:$0xff]
    %v3355 = vld [vmem:[%s8 + $0xbc] sm:$0xff]
    %v3356 = vld [vmem:[%s8 + $0xc4] sm:$0xf]
    %v3357 = vld [vmem:[%s8 + $0xc8] sm:$0xff]
    %v3358 = vld [vmem:[%s8 + $0xd0] sm:$0xff]
    %v3359 = vld [vmem:[%s8 + $0xd8] sm:$0xff]
    %v3360 = vld [vmem:[%s8 + $0xe0] sm:$0xff]
    %v3361 = vld [vmem:[%s8 + $0xe8] sm:$0xff]
    %v3362 = vld [vmem:[%s8 + $0xf0] sm:$0xff]
    %v3363 = vld [vmem:[%s8 + $0xf8] sm:$0xff]
    %v3364 = vld [vmem:[%s8 + $0x100] sm:$0xff]
    %v3365 = vld [vmem:[%s8 + $0x108] sm:$0xff]
    %v3366 = vld [vmem:[%s8 + $0x110] sm:$0xff]
    %v3367 = vld [vmem:[%s8 + $0x118] sm:$0xff]
    %v3368 = vld [vmem:[%s8 + $0x120] sm:$0xff]
    %v3369 = vld [vmem:[%s8 + $0x128] sm:$0xf]
    %v3370 = vld [vmem:[%s8 + $0x12c] sm:$0xff]
    %v3371 = vld [vmem:[%s8 + $0x134] sm:$0xff]
    %v3372 = vld [vmem:[%s8 + $0x13c] sm:$0xff]
    %v3373 = vld [vmem:[%s8 + $0x144] sm:$0xff]
    %v3374 = vld [vmem:[%s8 + $0x14c] sm:$0xff]
    %v3375 = vld [vmem:[%s8 + $0x154] sm:$0xff]
    %v3376 = vld [vmem:[%s8 + $0x15c] sm:$0xff]
    %v3377 = vld [vmem:[%s8 + $0x164] sm:$0xff]
    %v3378 = vld [vmem:[%s8 + $0x16c] sm:$0xff]
    %v3379 = vld [vmem:[%s8 + $0x174] sm:$0xff]
    %v3380 = vld [vmem:[%s8 + $0x17c] sm:$0xff]
    %v3381 = vld [vmem:[%s8 + $0x184] sm:$0xff]
    %v3382 = vld [vmem:[%s8 + $0x18c] sm:$0xf]
    %v3383 = vld [vmem:[%s8 + $0x190] sm:$0xff]
    %v3384 = vld [vmem:[%s8 + $0x198] sm:$0xff]
    %v3385 = vld [vmem:[%s8 + $0x1a0] sm:$0xff]
    %v3386 = vld [vmem:[%s8 + $0x1a8] sm:$0xff]
    %v3387 = vld [vmem:[%s8 + $0x1b0] sm:$0xff]
    %v3388 = vld [vmem:[%s8 + $0x1b8] sm:$0xff]
    %v3389 = vld [vmem:[%s8 + $0x1c0] sm:$0xff]
    %v3390 = vld [vmem:[%s8 + $0x1c8] sm:$0xff]
    %v3391 = vld [vmem:[%s8 + $0x1d0] sm:$0xff]
    %v3392 = vld [vmem:[%s8 + $0x1d8] sm:$0xff]
    %v3393 = vld [vmem:[%s8 + $0x1e0] sm:$0xff]
    %v3394 = vld [vmem:[%s8 + $0x1e8] sm:$0xff]
    %v3395 = vld [vmem:[%s8 + $0x1f0] sm:$0xf]
    %v3396 = vld [vmem:[%s8 + $0x1f4] sm:$0xff]
    %v3397 = vld [vmem:[%s8 + $0x1fc] sm:$0xff]
    %v3398 = vld [vmem:[%s8 + $0x204] sm:$0xff]
    %v3399 = vld [vmem:[%s8 + $0x20c] sm:$0xff]
    %v3400 = vld [vmem:[%s8 + $0x214] sm:$0xff]
    %v3401 = vld [vmem:[%s8 + $0x21c] sm:$0xff]
    %v3402 = vld [vmem:[%s8 + $0x224] sm:$0xff]
    %v3403 = vld [vmem:[%s8 + $0x22c] sm:$0xff]
    %v3404 = vld [vmem:[%s8 + $0x234] sm:$0xff]
    %v3405 = vld [vmem:[%s8 + $0x23c] sm:$0xff]
    %v3406 = vld [vmem:[%s8 + $0x244] sm:$0xff]
    %v3407 = vld [vmem:[%s8 + $0x24c] sm:$0xff]
    %v3408 = vld [vmem:[%s8 + $0x254] sm:$0xf]
    %v3409 = vld [vmem:[%s8 + $0x258] sm:$0xff]
    %v3410 = vld [vmem:[%s8 + $0x260] sm:$0xff]
    %v3411 = vld [vmem:[%s8 + $0x268] sm:$0xff]
    %v3412 = vld [vmem:[%s8 + $0x270] sm:$0xff]
    %v3413 = vld [vmem:[%s8 + $0x278] sm:$0xff]
    %v3414 = vld [vmem:[%s8 + $0x280] sm:$0xff]
    %v3415 = vld [vmem:[%s8 + $0x288] sm:$0xff]
    %v3416 = vld [vmem:[%s8 + $0x290] sm:$0xff]
    %v3417 = vld [vmem:[%s8 + $0x298] sm:$0xff]
    %v3418 = vld [vmem:[%s8 + $0x2a0] sm:$0xff]
    %v3419 = vld [vmem:[%s8 + $0x2a8] sm:$0xff]
    %v3420 = vld [vmem:[%s8 + $0x2b0] sm:$0xff]
    %v3421 = vld [vmem:[%s8 + $0x2b8] sm:$0xf]
    %v3422 = vld [vmem:[%s8 + $0x2bc] sm:$0xff]
    %v3423 = vld [vmem:[%s8 + $0x2c4] sm:$0xff]
    %v3424 = vld [vmem:[%s8 + $0x2cc] sm:$0xff]
    %v3425 = vld [vmem:[%s8 + $0x2d4] sm:$0xff]
    %v3426 = vld [vmem:[%s8 + $0x2dc] sm:$0xff]
    %v3427 = vld [vmem:[%s8 + $0x2e4] sm:$0xff]
    %v3428 = vld [vmem:[%s8 + $0x2ec] sm:$0xff]
    %v3429 = vld [vmem:[%s8 + $0x2f4] sm:$0xff]
    %v3430 = vld [vmem:[%s8 + $0x2fc] sm:$0xff]
    %v3431 = vld [vmem:[%s8 + $0x304] sm:$0xff]
    %v3432 = vld [vmem:[%s8 + $0x30c] sm:$0xff]
    %v3433 = vld [vmem:[%s8 + $0x314] sm:$0xff]
    %v3434 = vld [vmem:[%s8 + $0x31c] sm:$0xf]
    %v3435 = vld [vmem:[%s8 + $0x320] sm:$0xff]
    %v3436 = vld [vmem:[%s8 + $0x328] sm:$0xff]
    %v3437 = vld [vmem:[%s8 + $0x330] sm:$0xff]
    %v3438 = vld [vmem:[%s8 + $0x338] sm:$0xff]
    %v3439 = vld [vmem:[%s8 + $0x340] sm:$0xff]
    %v3440 = vld [vmem:[%s8 + $0x348] sm:$0xff]
    %v3441 = vld [vmem:[%s8 + $0x350] sm:$0xff]
    %v3442 = vld [vmem:[%s8 + $0x358] sm:$0xff]
    %v3443 = vld [vmem:[%s8 + $0x360] sm:$0xff]
    %v3444 = vld [vmem:[%s8 + $0x368] sm:$0xff]
    %v3445 = vld [vmem:[%s8 + $0x370] sm:$0xff]
    %v3446 = vld [vmem:[%s8 + $0x378] sm:$0xff]
    %v3447 = vld [vmem:[%s8 + $0x380] sm:$0xf]
    %v3448 = vld [vmem:[%s8 + $0x384] sm:$0xff]
    %v3449 = vld [vmem:[%s8 + $0x38c] sm:$0xff]
    %v3450 = vld [vmem:[%s8 + $0x394] sm:$0xff]
    %v3451 = vld [vmem:[%s8 + $0x39c] sm:$0xff]
    %v3452 = vld [vmem:[%s8 + $0x3a4] sm:$0xff]
    %v3453 = vld [vmem:[%s8 + $0x3ac] sm:$0xff]
    %v3454 = vld [vmem:[%s8 + $0x3b4] sm:$0xff]
    %v3455 = vld [vmem:[%s8 + $0x3bc] sm:$0xff]
    %v3456 = vld [vmem:[%s8 + $0x3c4] sm:$0xff]
    %v3457 = vld [vmem:[%s8 + $0x3cc] sm:$0xff]
    %v3458 = vld [vmem:[%s8 + $0x3d4] sm:$0xff]
    %v3459 = vld [vmem:[%s8 + $0x3dc] sm:$0xff]
    %v3460 = vld [vmem:[%s8 + $0x3e4] sm:$0xf]
    %v3461 = vld [vmem:[%s8 + $0x3e8] sm:$0xff]
    %v3462 = vld [vmem:[%s8 + $0x3f0] sm:$0xff]
    %v3463 = vld [vmem:[%s8 + $0x3f8] sm:$0xff]
    %v3464 = vld [vmem:[%s8 + $0x400] sm:$0xff]
    %v3465 = vld [vmem:[%s8 + $0x408] sm:$0xff]
    %v3466 = vld [vmem:[%s8 + $0x410] sm:$0xff]
    %v3467 = vld [vmem:[%s8 + $0x418] sm:$0xff]
    %v3468 = vld [vmem:[%s8 + $0x420] sm:$0xff]
    %v3469 = vld [vmem:[%s8 + $0x428] sm:$0xff]
    %v3470 = vld [vmem:[%s8 + $0x430] sm:$0xff]
    %v3471 = vld [vmem:[%s8 + $0x438] sm:$0xff]
    %v3472 = vld [vmem:[%s8 + $0x440] sm:$0xff]
    %v3473 = vld [vmem:[%s8 + $0x448] sm:$0xf]
    %v3474 = vld [vmem:[%s8 + $0x44c] sm:$0xff]
    %v3475 = vld [vmem:[%s8 + $0x454] sm:$0xff]
    %v3476 = vld [vmem:[%s8 + $0x45c] sm:$0xff]
    %v3477 = vld [vmem:[%s8 + $0x464] sm:$0xff]
    %v3478 = vld [vmem:[%s8 + $0x46c] sm:$0xff]
    %v3479 = vld [vmem:[%s8 + $0x474] sm:$0xff]
    %v3480 = vld [vmem:[%s8 + $0x47c] sm:$0xff]
    %v3481 = vld [vmem:[%s8 + $0x484] sm:$0xff]
    %v3482 = vld [vmem:[%s8 + $0x48c] sm:$0xff]
    %v3483 = vld [vmem:[%s8 + $0x494] sm:$0xff]
    %v3484 = vld [vmem:[%s8 + $0x49c] sm:$0xff]
    %v3485 = vld [vmem:[%s8 + $0x4a4] sm:$0xff]
    %v3486 = vld [vmem:[%s8 + $0x4ac] sm:$0xf]
    %v3487 = vld [vmem:[%s8 + $0x4b0] sm:$0xff]
    %v3488 = vld [vmem:[%s8 + $0x4b8] sm:$0xff]
    %v3489 = vld [vmem:[%s8 + $0x4c0] sm:$0xff]
    %v3490 = vld [vmem:[%s8 + $0x4c8] sm:$0xff]
    %v3491 = vld [vmem:[%s8 + $0x4d0] sm:$0xff]
    %v3492 = vld [vmem:[%s8 + $0x4d8] sm:$0xff]
    %v3493 = vld [vmem:[%s8 + $0x4e0] sm:$0xff]
    %v3494 = vld [vmem:[%s8 + $0x4e8] sm:$0xff]
    %v3495 = vld [vmem:[%s8 + $0x4f0] sm:$0xff]
    %v3496 = vld [vmem:[%s8 + $0x4f8] sm:$0xff]
    %v3497 = vld [vmem:[%s8 + $0x500] sm:$0xff]
    %v3498 = vld [vmem:[%s8 + $0x508] sm:$0xff]
    %v3499 = vld [vmem:[%s8 + $0x510] sm:$0xf]
    %v3500 = vld [vmem:[%s8 + $0x514] sm:$0xff]
    %v3501 = vld [vmem:[%s8 + $0x51c] sm:$0xff]
    %v3502 = vld [vmem:[%s8 + $0x524] sm:$0xff]
    %v3503 = vld [vmem:[%s8 + $0x52c] sm:$0xff]
    %v3504 = vld [vmem:[%s8 + $0x534] sm:$0xff]
    %v3505 = vld [vmem:[%s8 + $0x53c] sm:$0xff]
    %v3506 = vld [vmem:[%s8 + $0x544] sm:$0xff]
    %v3507 = vld [vmem:[%s8 + $0x54c] sm:$0xff]
    %v3508 = vld [vmem:[%s8 + $0x554] sm:$0xff]
    %v3509 = vld [vmem:[%s8 + $0x55c] sm:$0xff]
    %v3510 = vld [vmem:[%s8 + $0x564] sm:$0xff]
    %v3511 = vld [vmem:[%s8 + $0x56c] sm:$0xff]
    %v3512 = vld [vmem:[%s8 + $0x574] sm:$0xf]
    %v3513 = vld [vmem:[%s8 + $0x578] sm:$0xff]
    %v3514 = vld [vmem:[%s8 + $0x580] sm:$0xff]
    %v3515 = vld [vmem:[%s8 + $0x588] sm:$0xff]
    %v3516 = vld [vmem:[%s8 + $0x590] sm:$0xff]
    %v3517 = vld [vmem:[%s8 + $0x598] sm:$0xff]
    %v3518 = vld [vmem:[%s8 + $0x5a0] sm:$0xff]
    %v3519 = vld [vmem:[%s8 + $0x5a8] sm:$0xff]
    %v3520 = vld [vmem:[%s8 + $0x5b0] sm:$0xff]
    %v3521 = vld [vmem:[%s8 + $0x5b8] sm:$0xff]
    %v3522 = vld [vmem:[%s8 + $0x5c0] sm:$0xff]
    %v3523 = vld [vmem:[%s8 + $0x5c8] sm:$0xff]
    %v3524 = vld [vmem:[%s8 + $0x5d0] sm:$0xff]
    %v3525 = vld [vmem:[%s8 + $0x5d8] sm:$0xf]
    %v3526 = vld [vmem:[%s8 + $0x5dc] sm:$0xff]
    %v3527 = vld [vmem:[%s8 + $0x5e4] sm:$0xff]
    %v3528 = vld [vmem:[%s8 + $0x5ec] sm:$0xff]
    %v3529 = vld [vmem:[%s8 + $0x5f4] sm:$0xff]
    %v3530 = vld [vmem:[%s8 + $0x5fc] sm:$0xff]
    %v3531 = vld [vmem:[%s8 + $0x604] sm:$0xff]
    %v3532 = vld [vmem:[%s8 + $0x60c] sm:$0xff]
    %v3533 = vld [vmem:[%s8 + $0x614] sm:$0xff]
    %v3534 = vld [vmem:[%s8 + $0x61c] sm:$0xff]
    %v3535 = vld [vmem:[%s8 + $0x624] sm:$0xff]
    %v3536 = vld [vmem:[%s8 + $0x62c] sm:$0xff]
    %v3537 = vld [vmem:[%s8 + $0x634] sm:$0xff]
    %v3538 = vld [vmem:[%s8 + $0x63c] sm:$0xf]
    %v3539 = vld [vmem:[%s8 + $0x640] sm:$0xff]
    %v3540 = vld [vmem:[%s8 + $0x648] sm:$0xff]
    %v3541 = vld [vmem:[%s8 + $0x650] sm:$0xff]
    %v3542 = vld [vmem:[%s8 + $0x658] sm:$0xff]
    %v3543 = vld [vmem:[%s8 + $0x660] sm:$0xff]
    %v3544 = vld [vmem:[%s8 + $0x668] sm:$0xff]
    %v3545 = vld [vmem:[%s8 + $0x670] sm:$0xff]
    %v3546 = vld [vmem:[%s8 + $0x678] sm:$0xff]
    %v3547 = vld [vmem:[%s8 + $0x680] sm:$0xff]
    %v3548 = vld [vmem:[%s8 + $0x688] sm:$0xff]
    %v3549 = vld [vmem:[%s8 + $0x690] sm:$0xff]
    %v3550 = vld [vmem:[%s8 + $0x698] sm:$0xff]
    %v3551 = vld [vmem:[%s8 + $0x6a0] sm:$0xf]
    %v3552 = vld [vmem:[%s8 + $0x6a4] sm:$0xff]
    %v3553 = vld [vmem:[%s8 + $0x6ac] sm:$0xff]
    %v3554 = vld [vmem:[%s8 + $0x6b4] sm:$0xff]
    %v3555 = vld [vmem:[%s8 + $0x6bc] sm:$0xff]
    %v3556 = vld [vmem:[%s8 + $0x6c4] sm:$0xff]
    %v3557 = vld [vmem:[%s8 + $0x6cc] sm:$0xff]
    %v3558 = vld [vmem:[%s8 + $0x6d4] sm:$0xff]
    %v3559 = vld [vmem:[%s8 + $0x6dc] sm:$0xff]
    %v3560 = vld [vmem:[%s8 + $0x6e4] sm:$0xff]
    %v3561 = vld [vmem:[%s8 + $0x6ec] sm:$0xff]
    %v3562 = vld [vmem:[%s8 + $0x6f4] sm:$0xff]
    %v3563 = vld [vmem:[%s8 + $0x6fc] sm:$0xff]
    %v3564 = vld [vmem:[%s8 + $0x704] sm:$0xf]
    %v3565 = vld [vmem:[%s8 + $0x708] sm:$0xff]
    %v3566 = vld [vmem:[%s8 + $0x710] sm:$0xff]
    %v3567 = vld [vmem:[%s8 + $0x718] sm:$0xff]
    %v3568 = vld [vmem:[%s8 + $0x720] sm:$0xff]
    %v3569 = vld [vmem:[%s8 + $0x728] sm:$0xff]
    %v3570 = vld [vmem:[%s8 + $0x730] sm:$0xff]
    %v3571 = vld [vmem:[%s8 + $0x738] sm:$0xff]
    %v3572 = vld [vmem:[%s8 + $0x740] sm:$0xff]
    %v3573 = vld [vmem:[%s8 + $0x748] sm:$0xff]
    %v3574 = vld [vmem:[%s8 + $0x750] sm:$0xff]
    %v3575 = vld [vmem:[%s8 + $0x758] sm:$0xff]
    %v3576 = vld [vmem:[%s8 + $0x760] sm:$0xff]
    %v3577 = vld [vmem:[%s8 + $0x768] sm:$0xf]
    %v3578 = vld [vmem:[%s8 + $0x76c] sm:$0xff]
    %v3579 = vld [vmem:[%s8 + $0x774] sm:$0xff]
    %v3580 = vld [vmem:[%s8 + $0x77c] sm:$0xff]
    %v3581 = vld [vmem:[%s8 + $0x784] sm:$0xff]
    %v3582 = vld [vmem:[%s8 + $0x78c] sm:$0xff]
    %v3583 = vld [vmem:[%s8 + $0x794] sm:$0xff]
    %v3584 = vld [vmem:[%s8 + $0x79c] sm:$0xff]
    %v3585 = vld [vmem:[%s8 + $0x7a4] sm:$0xff]
    %v3586 = vld [vmem:[%s8 + $0x7ac] sm:$0xff]
    %v3587 = vld [vmem:[%s8 + $0x7b4] sm:$0xff]
    %v3588 = vld [vmem:[%s8 + $0x7bc] sm:$0xff]
    %v3589 = vld [vmem:[%s8 + $0x7c4] sm:$0xff]
    %v3590 = vld [vmem:[%s8 + $0x7cc] sm:$0xf]
    %v3591 = vld [vmem:[%s8 + $0x7d0] sm:$0xff]
    %v3592 = vld [vmem:[%s8 + $0x7d8] sm:$0xff]
    %v3593 = vld [vmem:[%s8 + $0x7e0] sm:$0xff]
    %v3594 = vld [vmem:[%s8 + $0x7e8] sm:$0xff]
    %v3595 = vld [vmem:[%s8 + $0x7f0] sm:$0xff]
    %v3596 = vld [vmem:[%s8 + $0x7f8] sm:$0xff]
    %v3597 = vld [vmem:[%s8 + $0x800] sm:$0xff]
    %v3598 = vld [vmem:[%s8 + $0x808] sm:$0xff]
    %v3599 = vld [vmem:[%s8 + $0x810] sm:$0xff]
    %v3600 = vld [vmem:[%s8 + $0x818] sm:$0xff]
    %v3601 = vld [vmem:[%s8 + $0x820] sm:$0xff]
    %v3602 = vld [vmem:[%s8 + $0x828] sm:$0xff]
    %v3603 = vld [vmem:[%s8 + $0x830] sm:$0xf]
    %v3604 = vld [vmem:[%s8 + $0x834] sm:$0xff]
    %v3605 = vld [vmem:[%s8 + $0x83c] sm:$0xff]
    %v3606 = vld [vmem:[%s8 + $0x844] sm:$0xff]
    %v3607 = vld [vmem:[%s8 + $0x84c] sm:$0xff]
    %v3608 = vld [vmem:[%s8 + $0x854] sm:$0xff]
    %v3609 = vld [vmem:[%s8 + $0x85c] sm:$0xff]
    %v3610 = vld [vmem:[%s8 + $0x864] sm:$0xff]
    %v3611 = vld [vmem:[%s8 + $0x86c] sm:$0xff]
    %v3612 = vld [vmem:[%s8 + $0x874] sm:$0xff]
    %v3613 = vld [vmem:[%s8 + $0x87c] sm:$0xff]
    %v3614 = vld [vmem:[%s8 + $0x884] sm:$0xff]
    %v3615 = vld [vmem:[%s8 + $0x88c] sm:$0xff]
    %v3616 = vld [vmem:[%s8 + $0x894] sm:$0xf]
    %v3617 = vld [vmem:[%s8 + $0x898] sm:$0xff]
    %v3618 = vld [vmem:[%s8 + $0x8a0] sm:$0xff]
    %v3619 = vld [vmem:[%s8 + $0x8a8] sm:$0xff]
    %v3620 = vld [vmem:[%s8 + $0x8b0] sm:$0xff]
    %v3621 = vld [vmem:[%s8 + $0x8b8] sm:$0xff]
    %v3622 = vld [vmem:[%s8 + $0x8c0] sm:$0xff]
    %v3623 = vld [vmem:[%s8 + $0x8c8] sm:$0xff]
    %v3624 = vld [vmem:[%s8 + $0x8d0] sm:$0xff]
    %v3625 = vld [vmem:[%s8 + $0x8d8] sm:$0xff]
    %v3626 = vld [vmem:[%s8 + $0x8e0] sm:$0xff]
    %v3627 = vld [vmem:[%s8 + $0x8e8] sm:$0xff]
    %v3628 = vld [vmem:[%s8 + $0x8f0] sm:$0xff]
    %v3629 = vld [vmem:[%s8 + $0x8f8] sm:$0xf]
    %v3630 = vld [vmem:[%s8 + $0x8fc] sm:$0xff]
    %v3631 = vld [vmem:[%s8 + $0x904] sm:$0xff]
    %v3632 = vld [vmem:[%s8 + $0x90c] sm:$0xff]
    %v3633 = vld [vmem:[%s8 + $0x914] sm:$0xff]
    %v3634 = vld [vmem:[%s8 + $0x91c] sm:$0xff]
    %v3635 = vld [vmem:[%s8 + $0x924] sm:$0xff]
    %v3636 = vld [vmem:[%s8 + $0x92c] sm:$0xff]
    %v3637 = vld [vmem:[%s8 + $0x934] sm:$0xff]
    %v3638 = vld [vmem:[%s8 + $0x93c] sm:$0xff]
    %v3639 = vld [vmem:[%s8 + $0x944] sm:$0xff]
    %v3640 = vld [vmem:[%s8 + $0x94c] sm:$0xff]
    %v3641 = vld [vmem:[%s8 + $0x954] sm:$0xff]
    %v3642 = vld [vmem:[%s8 + $0x95c] sm:$0xf]
    %v3643 = vld [vmem:[%s8 + $0x960] sm:$0xff]
    %v3644 = vld [vmem:[%s8 + $0x968] sm:$0xff]
    %v3645 = vld [vmem:[%s8 + $0x970] sm:$0xff]
    %v3646 = vld [vmem:[%s8 + $0x978] sm:$0xff]
    %v3647 = vld [vmem:[%s8 + $0x980] sm:$0xff]
    %v3648 = vld [vmem:[%s8 + $0x988] sm:$0xff]
    %v3649 = vld [vmem:[%s8 + $0x990] sm:$0xff]
    %v3650 = vld [vmem:[%s8 + $0x998] sm:$0xff]
    %v3651 = vld [vmem:[%s8 + $0x9a0] sm:$0xff]
    %v3652 = vld [vmem:[%s8 + $0x9a8] sm:$0xff]
    %v3653 = vld [vmem:[%s8 + $0x9b0] sm:$0xff]
    %v3654 = vld [vmem:[%s8 + $0x9b8] sm:$0xff]
    %v3655 = vld [vmem:[%s8 + $0x9c0] sm:$0xf]
    %v3656 = vld [vmem:[%s8 + $0x9c4] sm:$0xff]
    %v3657 = vld [vmem:[%s8 + $0x9cc] sm:$0xff]
    %v3658 = vld [vmem:[%s8 + $0x9d4] sm:$0xff]
    %v3659 = vld [vmem:[%s8 + $0x9dc] sm:$0xff]
    %v3660 = vld [vmem:[%s8 + $0x9e4] sm:$0xff]
    %v3661 = vld [vmem:[%s8 + $0x9ec] sm:$0xff]
    %v3662 = vld [vmem:[%s8 + $0x9f4] sm:$0xff]
    %v3663 = vld [vmem:[%s8 + $0x9fc] sm:$0xff]
    %v3664 = vld [vmem:[%s8 + $0xa04] sm:$0xff]
    %v3665 = vld [vmem:[%s8 + $0xa0c] sm:$0xff]
    %v3666 = vld [vmem:[%s8 + $0xa14] sm:$0xff]
    %v3667 = vld [vmem:[%s8 + $0xa1c] sm:$0xff]
    %v3668 = vld [vmem:[%s8 + $0xa24] sm:$0xf]
    %v3669 = vld [vmem:[%s8 + $0xa28] sm:$0xff]
    %v3670 = vld [vmem:[%s8 + $0xa30] sm:$0xff]
    %v3671 = vld [vmem:[%s8 + $0xa38] sm:$0xff]
    %v3672 = vld [vmem:[%s8 + $0xa40] sm:$0xff]
    %v3673 = vld [vmem:[%s8 + $0xa48] sm:$0xff]
    %v3674 = vld [vmem:[%s8 + $0xa50] sm:$0xff]
    %v3675 = vld [vmem:[%s8 + $0xa58] sm:$0xff]
    %v3676 = vld [vmem:[%s8 + $0xa60] sm:$0xff]
    %v3677 = vld [vmem:[%s8 + $0xa68] sm:$0xff]
    %v3678 = vld [vmem:[%s8 + $0xa70] sm:$0xff]
    %v3679 = vld [vmem:[%s8 + $0xa78] sm:$0xff]
    %v3680 = vld [vmem:[%s8 + $0xa80] sm:$0xff]
    %v3681 = vld [vmem:[%s8 + $0xa88] sm:$0xf]
    %v3682 = vld [vmem:[%s8 + $0xa8c] sm:$0xff]
    %v3683 = vld [vmem:[%s8 + $0xa94] sm:$0xff]
    %v3684 = vld [vmem:[%s8 + $0xa9c] sm:$0xff]
    %v3685 = vld [vmem:[%s8 + $0xaa4] sm:$0xff]
    %v3686 = vld [vmem:[%s8 + $0xaac] sm:$0xff]
    %v3687 = vld [vmem:[%s8 + $0xab4] sm:$0xff]
    %v3688 = vld [vmem:[%s8 + $0xabc] sm:$0xff]
    %v3689 = vld [vmem:[%s8 + $0xac4] sm:$0xff]
    %v3690 = vld [vmem:[%s8 + $0xacc] sm:$0xff]
    %v3691 = vld [vmem:[%s8 + $0xad4] sm:$0xff]
    %v3692 = vld [vmem:[%s8 + $0xadc] sm:$0xff]
    %v3693 = vld [vmem:[%s8 + $0xae4] sm:$0xff]
    %v3694 = vld [vmem:[%s8 + $0xaec] sm:$0xf]
    %v3695 = vld [vmem:[%s8 + $0xaf0] sm:$0xff]
    %v3696 = vld [vmem:[%s8 + $0xaf8] sm:$0xff]
    %v3697 = vld [vmem:[%s8 + $0xb00] sm:$0xff]
    %v3698 = vld [vmem:[%s8 + $0xb08] sm:$0xff]
    %v3699 = vld [vmem:[%s8 + $0xb10] sm:$0xff]
    %v3700 = vld [vmem:[%s8 + $0xb18] sm:$0xff]
    %v3701 = vld [vmem:[%s8 + $0xb20] sm:$0xff]
    %v3702 = vld [vmem:[%s8 + $0xb28] sm:$0xff]
    %v3703 = vld [vmem:[%s8 + $0xb30] sm:$0xff]
    %v3704 = vld [vmem:[%s8 + $0xb38] sm:$0xff]
    %v3705 = vld [vmem:[%s8 + $0xb40] sm:$0xff]
    %v3706 = vld [vmem:[%s8 + $0xb48] sm:$0xff]
    %v3707 = vld [vmem:[%s8 + $0xb50] sm:$0xf]
    %v3708 = vld [vmem:[%s8 + $0xb54] sm:$0xff]
    %v3709 = vld [vmem:[%s8 + $0xb5c] sm:$0xff]
    %v3710 = vld [vmem:[%s8 + $0xb64] sm:$0xff]
    %v3711 = vld [vmem:[%s8 + $0xb6c] sm:$0xff]
    %v3712 = vld [vmem:[%s8 + $0xb74] sm:$0xff]
    %v3713 = vld [vmem:[%s8 + $0xb7c] sm:$0xff]
    %v3714 = vld [vmem:[%s8 + $0xb84] sm:$0xff]
    %v3715 = vld [vmem:[%s8 + $0xb8c] sm:$0xff]
    %v3716 = vld [vmem:[%s8 + $0xb94] sm:$0xff]
    %v3717 = vld [vmem:[%s8 + $0xb9c] sm:$0xff]
    %v3718 = vld [vmem:[%s8 + $0xba4] sm:$0xff]
    %v3719 = vld [vmem:[%s8 + $0xbac] sm:$0xff]
    %v3720 = vld [vmem:[%s8 + $0xbb4] sm:$0xf]
    %v3721 = vld [vmem:[%s8 + $0xbb8] sm:$0xff]
    %v3722 = vld [vmem:[%s8 + $0xbc0] sm:$0xff]
    %v3723 = vld [vmem:[%s8 + $0xbc8] sm:$0xff]
    %v3724 = vld [vmem:[%s8 + $0xbd0] sm:$0xff]
    %v3725 = vld [vmem:[%s8 + $0xbd8] sm:$0xff]
    %v3726 = vld [vmem:[%s8 + $0xbe0] sm:$0xff]
    %v3727 = vld [vmem:[%s8 + $0xbe8] sm:$0xff]
    %v3728 = vld [vmem:[%s8 + $0xbf0] sm:$0xff]
    %v3729 = vld [vmem:[%s8 + $0xbf8] sm:$0xff]
    %v3730 = vld [vmem:[%s8 + $0xc00] sm:$0xff]
    %v3731 = vld [vmem:[%s8 + $0xc08] sm:$0xff]
    %v3732 = vld [vmem:[%s8 + $0xc10] sm:$0xff]
    %v3733 = vld [vmem:[%s8 + $0xc18] sm:$0xf]
    %v3734 = vld [vmem:[%s8 + $0xc1c] sm:$0xff]
    %v3735 = vld [vmem:[%s8 + $0xc24] sm:$0xff]
    %v3736 = vld [vmem:[%s8 + $0xc2c] sm:$0xff]
    %v3737 = vld [vmem:[%s8 + $0xc34] sm:$0xff]
    %v3738 = vld [vmem:[%s8 + $0xc3c] sm:$0xff]
    %v3739 = vld [vmem:[%s8 + $0xc44] sm:$0xff]
    %v3740 = vld [vmem:[%s8 + $0xc4c] sm:$0xff]
    %v3741 = vld [vmem:[%s8 + $0xc54] sm:$0xff]
    %v3742 = vld [vmem:[%s8 + $0xc5c] sm:$0xff]
    %v3743 = vld [vmem:[%s8 + $0xc64] sm:$0xff]
    %v3744 = vld [vmem:[%s8 + $0xc6c] sm:$0xff]
    %v3745 = vld [vmem:[%s8 + $0xc74] sm:$0xff]
    %v3746 = vld [vmem:[%s8 + $0xc7c] sm:$0xf]
    %v3747 = vld [vmem:[%s9] sm:$0xff]
    %v3748 = vld [vmem:[%s9 + $0x8] sm:$0xff]
    %v3749 = vld [vmem:[%s9 + $0x10] sm:$0xff]
    %v3750 = vld [vmem:[%s9 + $0x18] sm:$0x1]
    %v3755 = vlaneseq
    %v3756 = vshrl.u32 %v3755, 7
    %v3757 = vsub.s32 0, %v3756
    %v3758 = vrot.slane %v3747, %v3757
    %v3759 = vlaneseq
    %v3760 = vshrl.u32 %v3759, 7
    %v3761 = vsub.s32 1, %v3760
    %v3762 = vrot.slane %v3747, %v3761
    %v3763 = vlaneseq
    %v3764 = vshrl.u32 %v3763, 7
    %v3765 = vsub.s32 2, %v3764
    %v3766 = vrot.slane %v3747, %v3765
    %v3767 = vlaneseq
    %v3768 = vshrl.u32 %v3767, 7
    %v3769 = vsub.s32 3, %v3768
    %v3770 = vrot.slane %v3747, %v3769
    %v3771 = vlaneseq
    %v3772 = vshrl.u32 %v3771, 7
    %v3773 = vsub.s32 4, %v3772
    %v3774 = vrot.slane %v3747, %v3773
    %v3775 = vlaneseq
    %v3776 = vshrl.u32 %v3775, 7
    %v3777 = vsub.s32 5, %v3776
    %v3778 = vrot.slane %v3747, %v3777
    %v3779 = vlaneseq
    %v3780 = vshrl.u32 %v3779, 7
    %v3781 = vsub.s32 6, %v3780
    %v3782 = vrot.slane %v3747, %v3781
    %v3783 = vlaneseq
    %v3784 = vshrl.u32 %v3783, 7
    %v3785 = vsub.s32 7, %v3784
    %v3786 = vrot.slane %v3747, %v3785
    %v3787 = vlaneseq
    %v3788 = vshrl.u32 %v3787, 7
    %v3789 = vsub.s32 0, %v3788
    %v3790 = vrot.slane %v3748, %v3789
    %v3791 = vlaneseq
    %v3792 = vshrl.u32 %v3791, 7
    %v3793 = vsub.s32 1, %v3792
    %v3794 = vrot.slane %v3748, %v3793
    %v3795 = vlaneseq
    %v3796 = vshrl.u32 %v3795, 7
    %v3797 = vsub.s32 2, %v3796
    %v3798 = vrot.slane %v3748, %v3797
    %v3799 = vlaneseq
    %v3800 = vshrl.u32 %v3799, 7
    %v3801 = vsub.s32 3, %v3800
    %v3802 = vrot.slane %v3748, %v3801
    %v3803 = vlaneseq
    %v3804 = vshrl.u32 %v3803, 7
    %v3805 = vsub.s32 4, %v3804
    %v3806 = vrot.slane %v3748, %v3805
    %v3807 = vlaneseq
    %v3808 = vshrl.u32 %v3807, 7
    %v3809 = vsub.s32 5, %v3808
    %v3810 = vrot.slane %v3748, %v3809
    %v3811 = vlaneseq
    %v3812 = vshrl.u32 %v3811, 7
    %v3813 = vsub.s32 6, %v3812
    %v3814 = vrot.slane %v3748, %v3813
    %v3815 = vlaneseq
    %v3816 = vshrl.u32 %v3815, 7
    %v3817 = vsub.s32 7, %v3816
    %v3818 = vrot.slane %v3748, %v3817
    %v3819 = vlaneseq
    %v3820 = vshrl.u32 %v3819, 7
    %v3821 = vsub.s32 0, %v3820
    %v3822 = vrot.slane %v3749, %v3821
    %v3823 = vlaneseq
    %v3824 = vshrl.u32 %v3823, 7
    %v3825 = vsub.s32 1, %v3824
    %v3826 = vrot.slane %v3749, %v3825
    %v3827 = vlaneseq
    %v3828 = vshrl.u32 %v3827, 7
    %v3829 = vsub.s32 2, %v3828
    %v3830 = vrot.slane %v3749, %v3829
    %v3831 = vlaneseq
    %v3832 = vshrl.u32 %v3831, 7
    %v3833 = vsub.s32 3, %v3832
    %v3834 = vrot.slane %v3749, %v3833
    %v3835 = vlaneseq
    %v3836 = vshrl.u32 %v3835, 7
    %v3837 = vsub.s32 4, %v3836
    %v3838 = vrot.slane %v3749, %v3837
    %v3839 = vlaneseq
    %v3840 = vshrl.u32 %v3839, 7
    %v3841 = vsub.s32 5, %v3840
    %v3842 = vrot.slane %v3749, %v3841
    %v3843 = vlaneseq
    %v3844 = vshrl.u32 %v3843, 7
    %v3845 = vsub.s32 6, %v3844
    %v3846 = vrot.slane %v3749, %v3845
    %v3847 = vlaneseq
    %v3848 = vshrl.u32 %v3847, 7
    %v3849 = vsub.s32 7, %v3848
    %v3850 = vrot.slane %v3749, %v3849
    %v3851 = vlaneseq
    %v3852 = vshrl.u32 %v3851, 7
    %v3853 = vsub.s32 0, %v3852
    %v3854 = vrot.slane %v3750, %v3853
    %v4296 = vunpack.c.l.b16 %v3331
    %v4297 = vunpack.c.h.b16 %v3331
    %v4298 = vunpack.c.l.b16 %v3332
    %v4299 = vunpack.c.h.b16 %v3332
    %v4300 = vunpack.c.l.b16 %v3333
    %v4301 = vunpack.c.h.b16 %v3333
    %v4302 = vunpack.c.l.b16 %v3334
    %v4303 = vunpack.c.h.b16 %v3334
    %v4304 = vunpack.c.l.b16 %v3335
    %v4305 = vunpack.c.h.b16 %v3335
    %v4306 = vunpack.c.l.b16 %v3336
    %v4307 = vunpack.c.h.b16 %v3336
    %v4308 = vunpack.c.l.b16 %v3337
    %v4309 = vunpack.c.h.b16 %v3337
    %v4310 = vunpack.c.l.b16 %v3338
    %v4311 = vunpack.c.h.b16 %v3338
    %v4312 = vunpack.c.l.b16 %v3339
    %v4313 = vunpack.c.h.b16 %v3339
    %v4314 = vunpack.c.l.b16 %v3340
    %v4315 = vunpack.c.h.b16 %v3340
    %v4316 = vunpack.c.l.b16 %v3341
    %v4317 = vunpack.c.h.b16 %v3341
    %v4318 = vunpack.c.l.b16 %v3342
    %v4319 = vunpack.c.h.b16 %v3342
    %v4320 = vunpack.c.l.b16 %v3343
    %v4321 = vunpack.c.l.b16 %v3344
    %v4322 = vunpack.c.h.b16 %v3344
    %v4323 = vunpack.c.l.b16 %v3345
    %v4324 = vunpack.c.h.b16 %v3345
    %v4325 = vunpack.c.l.b16 %v3346
    %v4326 = vunpack.c.h.b16 %v3346
    %v4327 = vunpack.c.l.b16 %v3347
    %v4328 = vunpack.c.h.b16 %v3347
    %v4329 = vunpack.c.l.b16 %v3348
    %v4330 = vunpack.c.h.b16 %v3348
    %v4331 = vunpack.c.l.b16 %v3349
    %v4332 = vunpack.c.h.b16 %v3349
    %v4333 = vunpack.c.l.b16 %v3350
    %v4334 = vunpack.c.h.b16 %v3350
    %v4335 = vunpack.c.l.b16 %v3351
    %v4336 = vunpack.c.h.b16 %v3351
    %v4337 = vunpack.c.l.b16 %v3352
    %v4338 = vunpack.c.h.b16 %v3352
    %v4339 = vunpack.c.l.b16 %v3353
    %v4340 = vunpack.c.h.b16 %v3353
    %v4341 = vunpack.c.l.b16 %v3354
    %v4342 = vunpack.c.h.b16 %v3354
    %v4343 = vunpack.c.l.b16 %v3355
    %v4344 = vunpack.c.h.b16 %v3355
    %v4345 = vunpack.c.l.b16 %v3356
    %v4346 = vunpack.c.l.b16 %v3357
    %v4347 = vunpack.c.h.b16 %v3357
    %v4348 = vunpack.c.l.b16 %v3358
    %v4349 = vunpack.c.h.b16 %v3358
    %v4350 = vunpack.c.l.b16 %v3359
    %v4351 = vunpack.c.h.b16 %v3359
    %v4352 = vunpack.c.l.b16 %v3360
    %v4353 = vunpack.c.h.b16 %v3360
    %v4354 = vunpack.c.l.b16 %v3361
    %v4355 = vunpack.c.h.b16 %v3361
    %v4356 = vunpack.c.l.b16 %v3362
    %v4357 = vunpack.c.h.b16 %v3362
    %v4358 = vunpack.c.l.b16 %v3363
    %v4359 = vunpack.c.h.b16 %v3363
    %v4360 = vunpack.c.l.b16 %v3364
    %v4361 = vunpack.c.h.b16 %v3364
    %v4362 = vunpack.c.l.b16 %v3365
    %v4363 = vunpack.c.h.b16 %v3365
    %v4364 = vunpack.c.l.b16 %v3366
    %v4365 = vunpack.c.h.b16 %v3366
    %v4366 = vunpack.c.l.b16 %v3367
    %v4367 = vunpack.c.h.b16 %v3367
    %v4368 = vunpack.c.l.b16 %v3368
    %v4369 = vunpack.c.h.b16 %v3368
    %v4370 = vunpack.c.l.b16 %v3369
    %v4371 = vunpack.c.l.b16 %v3370
    %v4372 = vunpack.c.h.b16 %v3370
    %v4373 = vunpack.c.l.b16 %v3371
    %v4374 = vunpack.c.h.b16 %v3371
    %v4375 = vunpack.c.l.b16 %v3372
    %v4376 = vunpack.c.h.b16 %v3372
    %v4377 = vunpack.c.l.b16 %v3373
    %v4378 = vunpack.c.h.b16 %v3373
    %v4379 = vunpack.c.l.b16 %v3374
    %v4380 = vunpack.c.h.b16 %v3374
    %v4381 = vunpack.c.l.b16 %v3375
    %v4382 = vunpack.c.h.b16 %v3375
    %v4383 = vunpack.c.l.b16 %v3376
    %v4384 = vunpack.c.h.b16 %v3376
    %v4385 = vunpack.c.l.b16 %v3377
    %v4386 = vunpack.c.h.b16 %v3377
    %v4387 = vunpack.c.l.b16 %v3378
    %v4388 = vunpack.c.h.b16 %v3378
    %v4389 = vunpack.c.l.b16 %v3379
    %v4390 = vunpack.c.h.b16 %v3379
    %v4391 = vunpack.c.l.b16 %v3380
    %v4392 = vunpack.c.h.b16 %v3380
    %v4393 = vunpack.c.l.b16 %v3381
    %v4394 = vunpack.c.h.b16 %v3381
    %v4395 = vunpack.c.l.b16 %v3382
    %v4396 = vunpack.c.l.b16 %v3383
    %v4397 = vunpack.c.h.b16 %v3383
    %v4398 = vunpack.c.l.b16 %v3384
    %v4399 = vunpack.c.h.b16 %v3384
    %v4400 = vunpack.c.l.b16 %v3385
    %v4401 = vunpack.c.h.b16 %v3385
    %v4402 = vunpack.c.l.b16 %v3386
    %v4403 = vunpack.c.h.b16 %v3386
    %v4404 = vunpack.c.l.b16 %v3387
    %v4405 = vunpack.c.h.b16 %v3387
    %v4406 = vunpack.c.l.b16 %v3388
    %v4407 = vunpack.c.h.b16 %v3388
    %v4408 = vunpack.c.l.b16 %v3389
    %v4409 = vunpack.c.h.b16 %v3389
    %v4410 = vunpack.c.l.b16 %v3390
    %v4411 = vunpack.c.h.b16 %v3390
    %v4412 = vunpack.c.l.b16 %v3391
    %v4413 = vunpack.c.h.b16 %v3391
    %v4414 = vunpack.c.l.b16 %v3392
    %v4415 = vunpack.c.h.b16 %v3392
    %v4416 = vunpack.c.l.b16 %v3393
    %v4417 = vunpack.c.h.b16 %v3393
    %v4418 = vunpack.c.l.b16 %v3394
    %v4419 = vunpack.c.h.b16 %v3394
    %v4420 = vunpack.c.l.b16 %v3395
    %v4421 = vunpack.c.l.b16 %v3396
    %v4422 = vunpack.c.h.b16 %v3396
    %v4423 = vunpack.c.l.b16 %v3397
    %v4424 = vunpack.c.h.b16 %v3397
    %v4425 = vunpack.c.l.b16 %v3398
    %v4426 = vunpack.c.h.b16 %v3398
    %v4427 = vunpack.c.l.b16 %v3399
    %v4428 = vunpack.c.h.b16 %v3399
    %v4429 = vunpack.c.l.b16 %v3400
    %v4430 = vunpack.c.h.b16 %v3400
    %v4431 = vunpack.c.l.b16 %v3401
    %v4432 = vunpack.c.h.b16 %v3401
    %v4433 = vunpack.c.l.b16 %v3402
    %v4434 = vunpack.c.h.b16 %v3402
    %v4435 = vunpack.c.l.b16 %v3403
    %v4436 = vunpack.c.h.b16 %v3403
    %v4437 = vunpack.c.l.b16 %v3404
    %v4438 = vunpack.c.h.b16 %v3404
    %v4439 = vunpack.c.l.b16 %v3405
    %v4440 = vunpack.c.h.b16 %v3405
    %v4441 = vunpack.c.l.b16 %v3406
    %v4442 = vunpack.c.h.b16 %v3406
    %v4443 = vunpack.c.l.b16 %v3407
    %v4444 = vunpack.c.h.b16 %v3407
    %v4445 = vunpack.c.l.b16 %v3408
    %v4446 = vunpack.c.l.b16 %v3409
    %v4447 = vunpack.c.h.b16 %v3409
    %v4448 = vunpack.c.l.b16 %v3410
    %v4449 = vunpack.c.h.b16 %v3410
    %v4450 = vunpack.c.l.b16 %v3411
    %v4451 = vunpack.c.h.b16 %v3411
    %v4452 = vunpack.c.l.b16 %v3412
    %v4453 = vunpack.c.h.b16 %v3412
    %v4454 = vunpack.c.l.b16 %v3413
    %v4455 = vunpack.c.h.b16 %v3413
    %v4456 = vunpack.c.l.b16 %v3414
    %v4457 = vunpack.c.h.b16 %v3414
    %v4458 = vunpack.c.l.b16 %v3415
    %v4459 = vunpack.c.h.b16 %v3415
    %v4460 = vunpack.c.l.b16 %v3416
    %v4461 = vunpack.c.h.b16 %v3416
    %v4462 = vunpack.c.l.b16 %v3417
    %v4463 = vunpack.c.h.b16 %v3417
    %v4464 = vunpack.c.l.b16 %v3418
    %v4465 = vunpack.c.h.b16 %v3418
    %v4466 = vunpack.c.l.b16 %v3419
    %v4467 = vunpack.c.h.b16 %v3419
    %v4468 = vunpack.c.l.b16 %v3420
    %v4469 = vunpack.c.h.b16 %v3420
    %v4470 = vunpack.c.l.b16 %v3421
    %v4471 = vunpack.c.l.b16 %v3422
    %v4472 = vunpack.c.h.b16 %v3422
    %v4473 = vunpack.c.l.b16 %v3423
    %v4474 = vunpack.c.h.b16 %v3423
    %v4475 = vunpack.c.l.b16 %v3424
    %v4476 = vunpack.c.h.b16 %v3424
    %v4477 = vunpack.c.l.b16 %v3425
    %v4478 = vunpack.c.h.b16 %v3425
    %v4479 = vunpack.c.l.b16 %v3426
    %v4480 = vunpack.c.h.b16 %v3426
    %v4481 = vunpack.c.l.b16 %v3427
    %v4482 = vunpack.c.h.b16 %v3427
    %v4483 = vunpack.c.l.b16 %v3428
    %v4484 = vunpack.c.h.b16 %v3428
    %v4485 = vunpack.c.l.b16 %v3429
    %v4486 = vunpack.c.h.b16 %v3429
    %v4487 = vunpack.c.l.b16 %v3430
    %v4488 = vunpack.c.h.b16 %v3430
    %v4489 = vunpack.c.l.b16 %v3431
    %v4490 = vunpack.c.h.b16 %v3431
    %v4491 = vunpack.c.l.b16 %v3432
    %v4492 = vunpack.c.h.b16 %v3432
    %v4493 = vunpack.c.l.b16 %v3433
    %v4494 = vunpack.c.h.b16 %v3433
    %v4495 = vunpack.c.l.b16 %v3434
    %v4496 = vunpack.c.l.b16 %v3435
    %v4497 = vunpack.c.h.b16 %v3435
    %v4498 = vunpack.c.l.b16 %v3436
    %v4499 = vunpack.c.h.b16 %v3436
    %v4500 = vunpack.c.l.b16 %v3437
    %v4501 = vunpack.c.h.b16 %v3437
    %v4502 = vunpack.c.l.b16 %v3438
    %v4503 = vunpack.c.h.b16 %v3438
    %v4504 = vunpack.c.l.b16 %v3439
    %v4505 = vunpack.c.h.b16 %v3439
    %v4506 = vunpack.c.l.b16 %v3440
    %v4507 = vunpack.c.h.b16 %v3440
    %v4508 = vunpack.c.l.b16 %v3441
    %v4509 = vunpack.c.h.b16 %v3441
    %v4510 = vunpack.c.l.b16 %v3442
    %v4511 = vunpack.c.h.b16 %v3442
    %v4512 = vunpack.c.l.b16 %v3443
    %v4513 = vunpack.c.h.b16 %v3443
    %v4514 = vunpack.c.l.b16 %v3444
    %v4515 = vunpack.c.h.b16 %v3444
    %v4516 = vunpack.c.l.b16 %v3445
    %v4517 = vunpack.c.h.b16 %v3445
    %v4518 = vunpack.c.l.b16 %v3446
    %v4519 = vunpack.c.h.b16 %v3446
    %v4520 = vunpack.c.l.b16 %v3447
    %v4521 = vunpack.c.l.b16 %v3448
    %v4522 = vunpack.c.h.b16 %v3448
    %v4523 = vunpack.c.l.b16 %v3449
    %v4524 = vunpack.c.h.b16 %v3449
    %v4525 = vunpack.c.l.b16 %v3450
    %v4526 = vunpack.c.h.b16 %v3450
    %v4527 = vunpack.c.l.b16 %v3451
    %v4528 = vunpack.c.h.b16 %v3451
    %v4529 = vunpack.c.l.b16 %v3452
    %v4530 = vunpack.c.h.b16 %v3452
    %v4531 = vunpack.c.l.b16 %v3453
    %v4532 = vunpack.c.h.b16 %v3453
    %v4533 = vunpack.c.l.b16 %v3454
    %v4534 = vunpack.c.h.b16 %v3454
    %v4535 = vunpack.c.l.b16 %v3455
    %v4536 = vunpack.c.h.b16 %v3455
    %v4537 = vunpack.c.l.b16 %v3456
    %v4538 = vunpack.c.h.b16 %v3456
    %v4539 = vunpack.c.l.b16 %v3457
    %v4540 = vunpack.c.h.b16 %v3457
    %v4541 = vunpack.c.l.b16 %v3458
    %v4542 = vunpack.c.h.b16 %v3458
    %v4543 = vunpack.c.l.b16 %v3459
    %v4544 = vunpack.c.h.b16 %v3459
    %v4545 = vunpack.c.l.b16 %v3460
    %v4546 = vunpack.c.l.b16 %v3461
    %v4547 = vunpack.c.h.b16 %v3461
    %v4548 = vunpack.c.l.b16 %v3462
    %v4549 = vunpack.c.h.b16 %v3462
    %v4550 = vunpack.c.l.b16 %v3463
    %v4551 = vunpack.c.h.b16 %v3463
    %v4552 = vunpack.c.l.b16 %v3464
    %v4553 = vunpack.c.h.b16 %v3464
    %v4554 = vunpack.c.l.b16 %v3465
    %v4555 = vunpack.c.h.b16 %v3465
    %v4556 = vunpack.c.l.b16 %v3466
    %v4557 = vunpack.c.h.b16 %v3466
    %v4558 = vunpack.c.l.b16 %v3467
    %v4559 = vunpack.c.h.b16 %v3467
    %v4560 = vunpack.c.l.b16 %v3468
    %v4561 = vunpack.c.h.b16 %v3468
    %v4562 = vunpack.c.l.b16 %v3469
    %v4563 = vunpack.c.h.b16 %v3469
    %v4564 = vunpack.c.l.b16 %v3470
    %v4565 = vunpack.c.h.b16 %v3470
    %v4566 = vunpack.c.l.b16 %v3471
    %v4567 = vunpack.c.h.b16 %v3471
    %v4568 = vunpack.c.l.b16 %v3472
    %v4569 = vunpack.c.h.b16 %v3472
    %v4570 = vunpack.c.l.b16 %v3473
    %v4571 = vunpack.c.l.b16 %v3474
    %v4572 = vunpack.c.h.b16 %v3474
    %v4573 = vunpack.c.l.b16 %v3475
    %v4574 = vunpack.c.h.b16 %v3475
    %v4575 = vunpack.c.l.b16 %v3476
    %v4576 = vunpack.c.h.b16 %v3476
    %v4577 = vunpack.c.l.b16 %v3477
    %v4578 = vunpack.c.h.b16 %v3477
    %v4579 = vunpack.c.l.b16 %v3478
    %v4580 = vunpack.c.h.b16 %v3478
    %v4581 = vunpack.c.l.b16 %v3479
    %v4582 = vunpack.c.h.b16 %v3479
    %v4583 = vunpack.c.l.b16 %v3480
    %v4584 = vunpack.c.h.b16 %v3480
    %v4585 = vunpack.c.l.b16 %v3481
    %v4586 = vunpack.c.h.b16 %v3481
    %v4587 = vunpack.c.l.b16 %v3482
    %v4588 = vunpack.c.h.b16 %v3482
    %v4589 = vunpack.c.l.b16 %v3483
    %v4590 = vunpack.c.h.b16 %v3483
    %v4591 = vunpack.c.l.b16 %v3484
    %v4592 = vunpack.c.h.b16 %v3484
    %v4593 = vunpack.c.l.b16 %v3485
    %v4594 = vunpack.c.h.b16 %v3485
    %v4595 = vunpack.c.l.b16 %v3486
    %v4596 = vunpack.c.l.b16 %v3487
    %v4597 = vunpack.c.h.b16 %v3487
    %v4598 = vunpack.c.l.b16 %v3488
    %v4599 = vunpack.c.h.b16 %v3488
    %v4600 = vunpack.c.l.b16 %v3489
    %v4601 = vunpack.c.h.b16 %v3489
    %v4602 = vunpack.c.l.b16 %v3490
    %v4603 = vunpack.c.h.b16 %v3490
    %v4604 = vunpack.c.l.b16 %v3491
    %v4605 = vunpack.c.h.b16 %v3491
    %v4606 = vunpack.c.l.b16 %v3492
    %v4607 = vunpack.c.h.b16 %v3492
    %v4608 = vunpack.c.l.b16 %v3493
    %v4609 = vunpack.c.h.b16 %v3493
    %v4610 = vunpack.c.l.b16 %v3494
    %v4611 = vunpack.c.h.b16 %v3494
    %v4612 = vunpack.c.l.b16 %v3495
    %v4613 = vunpack.c.h.b16 %v3495
    %v4614 = vunpack.c.l.b16 %v3496
    %v4615 = vunpack.c.h.b16 %v3496
    %v4616 = vunpack.c.l.b16 %v3497
    %v4617 = vunpack.c.h.b16 %v3497
    %v4618 = vunpack.c.l.b16 %v3498
    %v4619 = vunpack.c.h.b16 %v3498
    %v4620 = vunpack.c.l.b16 %v3499
    %v4621 = vunpack.c.l.b16 %v3500
    %v4622 = vunpack.c.h.b16 %v3500
    %v4623 = vunpack.c.l.b16 %v3501
    %v4624 = vunpack.c.h.b16 %v3501
    %v4625 = vunpack.c.l.b16 %v3502
    %v4626 = vunpack.c.h.b16 %v3502
    %v4627 = vunpack.c.l.b16 %v3503
    %v4628 = vunpack.c.h.b16 %v3503
    %v4629 = vunpack.c.l.b16 %v3504
    %v4630 = vunpack.c.h.b16 %v3504
    %v4631 = vunpack.c.l.b16 %v3505
    %v4632 = vunpack.c.h.b16 %v3505
    %v4633 = vunpack.c.l.b16 %v3506
    %v4634 = vunpack.c.h.b16 %v3506
    %v4635 = vunpack.c.l.b16 %v3507
    %v4636 = vunpack.c.h.b16 %v3507
    %v4637 = vunpack.c.l.b16 %v3508
    %v4638 = vunpack.c.h.b16 %v3508
    %v4639 = vunpack.c.l.b16 %v3509
    %v4640 = vunpack.c.h.b16 %v3509
    %v4641 = vunpack.c.l.b16 %v3510
    %v4642 = vunpack.c.h.b16 %v3510
    %v4643 = vunpack.c.l.b16 %v3511
    %v4644 = vunpack.c.h.b16 %v3511
    %v4645 = vunpack.c.l.b16 %v3512
    %v4646 = vunpack.c.l.b16 %v3513
    %v4647 = vunpack.c.h.b16 %v3513
    %v4648 = vunpack.c.l.b16 %v3514
    %v4649 = vunpack.c.h.b16 %v3514
    %v4650 = vunpack.c.l.b16 %v3515
    %v4651 = vunpack.c.h.b16 %v3515
    %v4652 = vunpack.c.l.b16 %v3516
    %v4653 = vunpack.c.h.b16 %v3516
    %v4654 = vunpack.c.l.b16 %v3517
    %v4655 = vunpack.c.h.b16 %v3517
    %v4656 = vunpack.c.l.b16 %v3518
    %v4657 = vunpack.c.h.b16 %v3518
    %v4658 = vunpack.c.l.b16 %v3519
    %v4659 = vunpack.c.h.b16 %v3519
    %v4660 = vunpack.c.l.b16 %v3520
    %v4661 = vunpack.c.h.b16 %v3520
    %v4662 = vunpack.c.l.b16 %v3521
    %v4663 = vunpack.c.h.b16 %v3521
    %v4664 = vunpack.c.l.b16 %v3522
    %v4665 = vunpack.c.h.b16 %v3522
    %v4666 = vunpack.c.l.b16 %v3523
    %v4667 = vunpack.c.h.b16 %v3523
    %v4668 = vunpack.c.l.b16 %v3524
    %v4669 = vunpack.c.h.b16 %v3524
    %v4670 = vunpack.c.l.b16 %v3525
    %v4671 = vunpack.c.l.b16 %v3526
    %v4672 = vunpack.c.h.b16 %v3526
    %v4673 = vunpack.c.l.b16 %v3527
    %v4674 = vunpack.c.h.b16 %v3527
    %v4675 = vunpack.c.l.b16 %v3528
    %v4676 = vunpack.c.h.b16 %v3528
    %v4677 = vunpack.c.l.b16 %v3529
    %v4678 = vunpack.c.h.b16 %v3529
    %v4679 = vunpack.c.l.b16 %v3530
    %v4680 = vunpack.c.h.b16 %v3530
    %v4681 = vunpack.c.l.b16 %v3531
    %v4682 = vunpack.c.h.b16 %v3531
    %v4683 = vunpack.c.l.b16 %v3532
    %v4684 = vunpack.c.h.b16 %v3532
    %v4685 = vunpack.c.l.b16 %v3533
    %v4686 = vunpack.c.h.b16 %v3533
    %v4687 = vunpack.c.l.b16 %v3534
    %v4688 = vunpack.c.h.b16 %v3534
    %v4689 = vunpack.c.l.b16 %v3535
    %v4690 = vunpack.c.h.b16 %v3535
    %v4691 = vunpack.c.l.b16 %v3536
    %v4692 = vunpack.c.h.b16 %v3536
    %v4693 = vunpack.c.l.b16 %v3537
    %v4694 = vunpack.c.h.b16 %v3537
    %v4695 = vunpack.c.l.b16 %v3538
    %v4696 = vunpack.c.l.b16 %v3539
    %v4697 = vunpack.c.h.b16 %v3539
    %v4698 = vunpack.c.l.b16 %v3540
    %v4699 = vunpack.c.h.b16 %v3540
    %v4700 = vunpack.c.l.b16 %v3541
    %v4701 = vunpack.c.h.b16 %v3541
    %v4702 = vunpack.c.l.b16 %v3542
    %v4703 = vunpack.c.h.b16 %v3542
    %v4704 = vunpack.c.l.b16 %v3543
    %v4705 = vunpack.c.h.b16 %v3543
    %v4706 = vunpack.c.l.b16 %v3544
    %v4707 = vunpack.c.h.b16 %v3544
    %v4708 = vunpack.c.l.b16 %v3545
    %v4709 = vunpack.c.h.b16 %v3545
    %v4710 = vunpack.c.l.b16 %v3546
    %v4711 = vunpack.c.h.b16 %v3546
    %v4712 = vunpack.c.l.b16 %v3547
    %v4713 = vunpack.c.h.b16 %v3547
    %v4714 = vunpack.c.l.b16 %v3548
    %v4715 = vunpack.c.h.b16 %v3548
    %v4716 = vunpack.c.l.b16 %v3549
    %v4717 = vunpack.c.h.b16 %v3549
    %v4718 = vunpack.c.l.b16 %v3550
    %v4719 = vunpack.c.h.b16 %v3550
    %v4720 = vunpack.c.l.b16 %v3551
    %v4721 = vunpack.c.l.b16 %v3552
    %v4722 = vunpack.c.h.b16 %v3552
    %v4723 = vunpack.c.l.b16 %v3553
    %v4724 = vunpack.c.h.b16 %v3553
    %v4725 = vunpack.c.l.b16 %v3554
    %v4726 = vunpack.c.h.b16 %v3554
    %v4727 = vunpack.c.l.b16 %v3555
    %v4728 = vunpack.c.h.b16 %v3555
    %v4729 = vunpack.c.l.b16 %v3556
    %v4730 = vunpack.c.h.b16 %v3556
    %v4731 = vunpack.c.l.b16 %v3557
    %v4732 = vunpack.c.h.b16 %v3557
    %v4733 = vunpack.c.l.b16 %v3558
    %v4734 = vunpack.c.h.b16 %v3558
    %v4735 = vunpack.c.l.b16 %v3559
    %v4736 = vunpack.c.h.b16 %v3559
    %v4737 = vunpack.c.l.b16 %v3560
    %v4738 = vunpack.c.h.b16 %v3560
    %v4739 = vunpack.c.l.b16 %v3561
    %v4740 = vunpack.c.h.b16 %v3561
    %v4741 = vunpack.c.l.b16 %v3562
    %v4742 = vunpack.c.h.b16 %v3562
    %v4743 = vunpack.c.l.b16 %v3563
    %v4744 = vunpack.c.h.b16 %v3563
    %v4745 = vunpack.c.l.b16 %v3564
    %v4746 = vunpack.c.l.b16 %v3565
    %v4747 = vunpack.c.h.b16 %v3565
    %v4748 = vunpack.c.l.b16 %v3566
    %v4749 = vunpack.c.h.b16 %v3566
    %v4750 = vunpack.c.l.b16 %v3567
    %v4751 = vunpack.c.h.b16 %v3567
    %v4752 = vunpack.c.l.b16 %v3568
    %v4753 = vunpack.c.h.b16 %v3568
    %v4754 = vunpack.c.l.b16 %v3569
    %v4755 = vunpack.c.h.b16 %v3569
    %v4756 = vunpack.c.l.b16 %v3570
    %v4757 = vunpack.c.h.b16 %v3570
    %v4758 = vunpack.c.l.b16 %v3571
    %v4759 = vunpack.c.h.b16 %v3571
    %v4760 = vunpack.c.l.b16 %v3572
    %v4761 = vunpack.c.h.b16 %v3572
    %v4762 = vunpack.c.l.b16 %v3573
    %v4763 = vunpack.c.h.b16 %v3573
    %v4764 = vunpack.c.l.b16 %v3574
    %v4765 = vunpack.c.h.b16 %v3574
    %v4766 = vunpack.c.l.b16 %v3575
    %v4767 = vunpack.c.h.b16 %v3575
    %v4768 = vunpack.c.l.b16 %v3576
    %v4769 = vunpack.c.h.b16 %v3576
    %v4770 = vunpack.c.l.b16 %v3577
    %v4771 = vunpack.c.l.b16 %v3578
    %v4772 = vunpack.c.h.b16 %v3578
    %v4773 = vunpack.c.l.b16 %v3579
    %v4774 = vunpack.c.h.b16 %v3579
    %v4775 = vunpack.c.l.b16 %v3580
    %v4776 = vunpack.c.h.b16 %v3580
    %v4777 = vunpack.c.l.b16 %v3581
    %v4778 = vunpack.c.h.b16 %v3581
    %v4779 = vunpack.c.l.b16 %v3582
    %v4780 = vunpack.c.h.b16 %v3582
    %v4781 = vunpack.c.l.b16 %v3583
    %v4782 = vunpack.c.h.b16 %v3583
    %v4783 = vunpack.c.l.b16 %v3584
    %v4784 = vunpack.c.h.b16 %v3584
    %v4785 = vunpack.c.l.b16 %v3585
    %v4786 = vunpack.c.h.b16 %v3585
    %v4787 = vunpack.c.l.b16 %v3586
    %v4788 = vunpack.c.h.b16 %v3586
    %v4789 = vunpack.c.l.b16 %v3587
    %v4790 = vunpack.c.h.b16 %v3587
    %v4791 = vunpack.c.l.b16 %v3588
    %v4792 = vunpack.c.h.b16 %v3588
    %v4793 = vunpack.c.l.b16 %v3589
    %v4794 = vunpack.c.h.b16 %v3589
    %v4795 = vunpack.c.l.b16 %v3590
    %v4796 = vunpack.c.l.b16 %v3591
    %v4797 = vunpack.c.h.b16 %v3591
    %v4798 = vunpack.c.l.b16 %v3592
    %v4799 = vunpack.c.h.b16 %v3592
    %v4800 = vunpack.c.l.b16 %v3593
    %v4801 = vunpack.c.h.b16 %v3593
    %v4802 = vunpack.c.l.b16 %v3594
    %v4803 = vunpack.c.h.b16 %v3594
    %v4804 = vunpack.c.l.b16 %v3595
    %v4805 = vunpack.c.h.b16 %v3595
    %v4806 = vunpack.c.l.b16 %v3596
    %v4807 = vunpack.c.h.b16 %v3596
    %v4808 = vunpack.c.l.b16 %v3597
    %v4809 = vunpack.c.h.b16 %v3597
    %v4810 = vunpack.c.l.b16 %v3598
    %v4811 = vunpack.c.h.b16 %v3598
    %v4812 = vunpack.c.l.b16 %v3599
    %v4813 = vunpack.c.h.b16 %v3599
    %v4814 = vunpack.c.l.b16 %v3600
    %v4815 = vunpack.c.h.b16 %v3600
    %v4816 = vunpack.c.l.b16 %v3601
    %v4817 = vunpack.c.h.b16 %v3601
    %v4818 = vunpack.c.l.b16 %v3602
    %v4819 = vunpack.c.h.b16 %v3602
    %v4820 = vunpack.c.l.b16 %v3603
    %v4821 = vunpack.c.l.b16 %v3604
    %v4822 = vunpack.c.h.b16 %v3604
    %v4823 = vunpack.c.l.b16 %v3605
    %v4824 = vunpack.c.h.b16 %v3605
    %v4825 = vunpack.c.l.b16 %v3606
    %v4826 = vunpack.c.h.b16 %v3606
    %v4827 = vunpack.c.l.b16 %v3607
    %v4828 = vunpack.c.h.b16 %v3607
    %v4829 = vunpack.c.l.b16 %v3608
    %v4830 = vunpack.c.h.b16 %v3608
    %v4831 = vunpack.c.l.b16 %v3609
    %v4832 = vunpack.c.h.b16 %v3609
    %v4833 = vunpack.c.l.b16 %v3610
    %v4834 = vunpack.c.h.b16 %v3610
    %v4835 = vunpack.c.l.b16 %v3611
    %v4836 = vunpack.c.h.b16 %v3611
    %v4837 = vunpack.c.l.b16 %v3612
    %v4838 = vunpack.c.h.b16 %v3612
    %v4839 = vunpack.c.l.b16 %v3613
    %v4840 = vunpack.c.h.b16 %v3613
    %v4841 = vunpack.c.l.b16 %v3614
    %v4842 = vunpack.c.h.b16 %v3614
    %v4843 = vunpack.c.l.b16 %v3615
    %v4844 = vunpack.c.h.b16 %v3615
    %v4845 = vunpack.c.l.b16 %v3616
    %v4846 = vunpack.c.l.b16 %v3617
    %v4847 = vunpack.c.h.b16 %v3617
    %v4848 = vunpack.c.l.b16 %v3618
    %v4849 = vunpack.c.h.b16 %v3618
    %v4850 = vunpack.c.l.b16 %v3619
    %v4851 = vunpack.c.h.b16 %v3619
    %v4852 = vunpack.c.l.b16 %v3620
    %v4853 = vunpack.c.h.b16 %v3620
    %v4854 = vunpack.c.l.b16 %v3621
    %v4855 = vunpack.c.h.b16 %v3621
    %v4856 = vunpack.c.l.b16 %v3622
    %v4857 = vunpack.c.h.b16 %v3622
    %v4858 = vunpack.c.l.b16 %v3623
    %v4859 = vunpack.c.h.b16 %v3623
    %v4860 = vunpack.c.l.b16 %v3624
    %v4861 = vunpack.c.h.b16 %v3624
    %v4862 = vunpack.c.l.b16 %v3625
    %v4863 = vunpack.c.h.b16 %v3625
    %v4864 = vunpack.c.l.b16 %v3626
    %v4865 = vunpack.c.h.b16 %v3626
    %v4866 = vunpack.c.l.b16 %v3627
    %v4867 = vunpack.c.h.b16 %v3627
    %v4868 = vunpack.c.l.b16 %v3628
    %v4869 = vunpack.c.h.b16 %v3628
    %v4870 = vunpack.c.l.b16 %v3629
    %v4871 = vunpack.c.l.b16 %v3630
    %v4872 = vunpack.c.h.b16 %v3630
    %v4873 = vunpack.c.l.b16 %v3631
    %v4874 = vunpack.c.h.b16 %v3631
    %v4875 = vunpack.c.l.b16 %v3632
    %v4876 = vunpack.c.h.b16 %v3632
    %v4877 = vunpack.c.l.b16 %v3633
    %v4878 = vunpack.c.h.b16 %v3633
    %v4879 = vunpack.c.l.b16 %v3634
    %v4880 = vunpack.c.h.b16 %v3634
    %v4881 = vunpack.c.l.b16 %v3635
    %v4882 = vunpack.c.h.b16 %v3635
    %v4883 = vunpack.c.l.b16 %v3636
    %v4884 = vunpack.c.h.b16 %v3636
    %v4885 = vunpack.c.l.b16 %v3637
    %v4886 = vunpack.c.h.b16 %v3637
    %v4887 = vunpack.c.l.b16 %v3638
    %v4888 = vunpack.c.h.b16 %v3638
    %v4889 = vunpack.c.l.b16 %v3639
    %v4890 = vunpack.c.h.b16 %v3639
    %v4891 = vunpack.c.l.b16 %v3640
    %v4892 = vunpack.c.h.b16 %v3640
    %v4893 = vunpack.c.l.b16 %v3641
    %v4894 = vunpack.c.h.b16 %v3641
    %v4895 = vunpack.c.l.b16 %v3642
    %v4896 = vunpack.c.l.b16 %v3643
    %v4897 = vunpack.c.h.b16 %v3643
    %v4898 = vunpack.c.l.b16 %v3644
    %v4899 = vunpack.c.h.b16 %v3644
    %v4900 = vunpack.c.l.b16 %v3645
    %v4901 = vunpack.c.h.b16 %v3645
    %v4902 = vunpack.c.l.b16 %v3646
    %v4903 = vunpack.c.h.b16 %v3646
    %v4904 = vunpack.c.l.b16 %v3647
    %v4905 = vunpack.c.h.b16 %v3647
    %v4906 = vunpack.c.l.b16 %v3648
    %v4907 = vunpack.c.h.b16 %v3648
    %v4908 = vunpack.c.l.b16 %v3649
    %v4909 = vunpack.c.h.b16 %v3649
    %v4910 = vunpack.c.l.b16 %v3650
    %v4911 = vunpack.c.h.b16 %v3650
    %v4912 = vunpack.c.l.b16 %v3651
    %v4913 = vunpack.c.h.b16 %v3651
    %v4914 = vunpack.c.l.b16 %v3652
    %v4915 = vunpack.c.h.b16 %v3652
    %v4916 = vunpack.c.l.b16 %v3653
    %v4917 = vunpack.c.h.b16 %v3653
    %v4918 = vunpack.c.l.b16 %v3654
    %v4919 = vunpack.c.h.b16 %v3654
    %v4920 = vunpack.c.l.b16 %v3655
    %v4921 = vunpack.c.l.b16 %v3656
    %v4922 = vunpack.c.h.b16 %v3656
    %v4923 = vunpack.c.l.b16 %v3657
    %v4924 = vunpack.c.h.b16 %v3657
    %v4925 = vunpack.c.l.b16 %v3658
    %v4926 = vunpack.c.h.b16 %v3658
    %v4927 = vunpack.c.l.b16 %v3659
    %v4928 = vunpack.c.h.b16 %v3659
    %v4929 = vunpack.c.l.b16 %v3660
    %v4930 = vunpack.c.h.b16 %v3660
    %v4931 = vunpack.c.l.b16 %v3661
    %v4932 = vunpack.c.h.b16 %v3661
    %v4933 = vunpack.c.l.b16 %v3662
    %v4934 = vunpack.c.h.b16 %v3662
    %v4935 = vunpack.c.l.b16 %v3663
    %v4936 = vunpack.c.h.b16 %v3663
    %v4937 = vunpack.c.l.b16 %v3664
    %v4938 = vunpack.c.h.b16 %v3664
    %v4939 = vunpack.c.l.b16 %v3665
    %v4940 = vunpack.c.h.b16 %v3665
    %v4941 = vunpack.c.l.b16 %v3666
    %v4942 = vunpack.c.h.b16 %v3666
    %v4943 = vunpack.c.l.b16 %v3667
    %v4944 = vunpack.c.h.b16 %v3667
    %v4945 = vunpack.c.l.b16 %v3668
    %v4946 = vunpack.c.l.b16 %v3669
    %v4947 = vunpack.c.h.b16 %v3669
    %v4948 = vunpack.c.l.b16 %v3670
    %v4949 = vunpack.c.h.b16 %v3670
    %v4950 = vunpack.c.l.b16 %v3671
    %v4951 = vunpack.c.h.b16 %v3671
    %v4952 = vunpack.c.l.b16 %v3672
    %v4953 = vunpack.c.h.b16 %v3672
    %v4954 = vunpack.c.l.b16 %v3673
    %v4955 = vunpack.c.h.b16 %v3673
    %v4956 = vunpack.c.l.b16 %v3674
    %v4957 = vunpack.c.h.b16 %v3674
    %v4958 = vunpack.c.l.b16 %v3675
    %v4959 = vunpack.c.h.b16 %v3675
    %v4960 = vunpack.c.l.b16 %v3676
    %v4961 = vunpack.c.h.b16 %v3676
    %v4962 = vunpack.c.l.b16 %v3677
    %v4963 = vunpack.c.h.b16 %v3677
    %v4964 = vunpack.c.l.b16 %v3678
    %v4965 = vunpack.c.h.b16 %v3678
    %v4966 = vunpack.c.l.b16 %v3679
    %v4967 = vunpack.c.h.b16 %v3679
    %v4968 = vunpack.c.l.b16 %v3680
    %v4969 = vunpack.c.h.b16 %v3680
    %v4970 = vunpack.c.l.b16 %v3681
    %v4971 = vunpack.c.l.b16 %v3682
    %v4972 = vunpack.c.h.b16 %v3682
    %v4973 = vunpack.c.l.b16 %v3683
    %v4974 = vunpack.c.h.b16 %v3683
    %v4975 = vunpack.c.l.b16 %v3684
    %v4976 = vunpack.c.h.b16 %v3684
    %v4977 = vunpack.c.l.b16 %v3685
    %v4978 = vunpack.c.h.b16 %v3685
    %v4979 = vunpack.c.l.b16 %v3686
    %v4980 = vunpack.c.h.b16 %v3686
    %v4981 = vunpack.c.l.b16 %v3687
    %v4982 = vunpack.c.h.b16 %v3687
    %v4983 = vunpack.c.l.b16 %v3688
    %v4984 = vunpack.c.h.b16 %v3688
    %v4985 = vunpack.c.l.b16 %v3689
    %v4986 = vunpack.c.h.b16 %v3689
    %v4987 = vunpack.c.l.b16 %v3690
    %v4988 = vunpack.c.h.b16 %v3690
    %v4989 = vunpack.c.l.b16 %v3691
    %v4990 = vunpack.c.h.b16 %v3691
    %v4991 = vunpack.c.l.b16 %v3692
    %v4992 = vunpack.c.h.b16 %v3692
    %v4993 = vunpack.c.l.b16 %v3693
    %v4994 = vunpack.c.h.b16 %v3693
    %v4995 = vunpack.c.l.b16 %v3694
    %v4996 = vunpack.c.l.b16 %v3695
    %v4997 = vunpack.c.h.b16 %v3695
    %v4998 = vunpack.c.l.b16 %v3696
    %v4999 = vunpack.c.h.b16 %v3696
    %v5000 = vunpack.c.l.b16 %v3697
    %v5001 = vunpack.c.h.b16 %v3697
    %v5002 = vunpack.c.l.b16 %v3698
    %v5003 = vunpack.c.h.b16 %v3698
    %v5004 = vunpack.c.l.b16 %v3699
    %v5005 = vunpack.c.h.b16 %v3699
    %v5006 = vunpack.c.l.b16 %v3700
    %v5007 = vunpack.c.h.b16 %v3700
    %v5008 = vunpack.c.l.b16 %v3701
    %v5009 = vunpack.c.h.b16 %v3701
    %v5010 = vunpack.c.l.b16 %v3702
    %v5011 = vunpack.c.h.b16 %v3702
    %v5012 = vunpack.c.l.b16 %v3703
    %v5013 = vunpack.c.h.b16 %v3703
    %v5014 = vunpack.c.l.b16 %v3704
    %v5015 = vunpack.c.h.b16 %v3704
    %v5016 = vunpack.c.l.b16 %v3705
    %v5017 = vunpack.c.h.b16 %v3705
    %v5018 = vunpack.c.l.b16 %v3706
    %v5019 = vunpack.c.h.b16 %v3706
    %v5020 = vunpack.c.l.b16 %v3707
    %v5021 = vunpack.c.l.b16 %v3708
    %v5022 = vunpack.c.h.b16 %v3708
    %v5023 = vunpack.c.l.b16 %v3709
    %v5024 = vunpack.c.h.b16 %v3709
    %v5025 = vunpack.c.l.b16 %v3710
    %v5026 = vunpack.c.h.b16 %v3710
    %v5027 = vunpack.c.l.b16 %v3711
    %v5028 = vunpack.c.h.b16 %v3711
    %v5029 = vunpack.c.l.b16 %v3712
    %v5030 = vunpack.c.h.b16 %v3712
    %v5031 = vunpack.c.l.b16 %v3713
    %v5032 = vunpack.c.h.b16 %v3713
    %v5033 = vunpack.c.l.b16 %v3714
    %v5034 = vunpack.c.h.b16 %v3714
    %v5035 = vunpack.c.l.b16 %v3715
    %v5036 = vunpack.c.h.b16 %v3715
    %v5037 = vunpack.c.l.b16 %v3716
    %v5038 = vunpack.c.h.b16 %v3716
    %v5039 = vunpack.c.l.b16 %v3717
    %v5040 = vunpack.c.h.b16 %v3717
    %v5041 = vunpack.c.l.b16 %v3718
    %v5042 = vunpack.c.h.b16 %v3718
    %v5043 = vunpack.c.l.b16 %v3719
    %v5044 = vunpack.c.h.b16 %v3719
    %v5045 = vunpack.c.l.b16 %v3720
    %v5046 = vunpack.c.l.b16 %v3721
    %v5047 = vunpack.c.h.b16 %v3721
    %v5048 = vunpack.c.l.b16 %v3722
    %v5049 = vunpack.c.h.b16 %v3722
    %v5050 = vunpack.c.l.b16 %v3723
    %v5051 = vunpack.c.h.b16 %v3723
    %v5052 = vunpack.c.l.b16 %v3724
    %v5053 = vunpack.c.h.b16 %v3724
    %v5054 = vunpack.c.l.b16 %v3725
    %v5055 = vunpack.c.h.b16 %v3725
    %v5056 = vunpack.c.l.b16 %v3726
    %v5057 = vunpack.c.h.b16 %v3726
    %v5058 = vunpack.c.l.b16 %v3727
    %v5059 = vunpack.c.h.b16 %v3727
    %v5060 = vunpack.c.l.b16 %v3728
    %v5061 = vunpack.c.h.b16 %v3728
    %v5062 = vunpack.c.l.b16 %v3729
    %v5063 = vunpack.c.h.b16 %v3729
    %v5064 = vunpack.c.l.b16 %v3730
    %v5065 = vunpack.c.h.b16 %v3730
    %v5066 = vunpack.c.l.b16 %v3731
    %v5067 = vunpack.c.h.b16 %v3731
    %v5068 = vunpack.c.l.b16 %v3732
    %v5069 = vunpack.c.h.b16 %v3732
    %v5070 = vunpack.c.l.b16 %v3733
    %v5071 = vunpack.c.l.b16 %v3734
    %v5072 = vunpack.c.h.b16 %v3734
    %v5073 = vunpack.c.l.b16 %v3735
    %v5074 = vunpack.c.h.b16 %v3735
    %v5075 = vunpack.c.l.b16 %v3736
    %v5076 = vunpack.c.h.b16 %v3736
    %v5077 = vunpack.c.l.b16 %v3737
    %v5078 = vunpack.c.h.b16 %v3737
    %v5079 = vunpack.c.l.b16 %v3738
    %v5080 = vunpack.c.h.b16 %v3738
    %v5081 = vunpack.c.l.b16 %v3739
    %v5082 = vunpack.c.h.b16 %v3739
    %v5083 = vunpack.c.l.b16 %v3740
    %v5084 = vunpack.c.h.b16 %v3740
    %v5085 = vunpack.c.l.b16 %v3741
    %v5086 = vunpack.c.h.b16 %v3741
    %v5087 = vunpack.c.l.b16 %v3742
    %v5088 = vunpack.c.h.b16 %v3742
    %v5089 = vunpack.c.l.b16 %v3743
    %v5090 = vunpack.c.h.b16 %v3743
    %v5091 = vunpack.c.l.b16 %v3744
    %v5092 = vunpack.c.h.b16 %v3744
    %v5093 = vunpack.c.l.b16 %v3745
    %v5094 = vunpack.c.h.b16 %v3745
    %v5095 = vunpack.c.l.b16 %v3746
    %v5096 = vpack.c.b16 %v4321, %v4296
    %v5097 = vpack.c.b16 %v4322, %v4297
    %v5098 = vpack.c.b16 %v4323, %v4298
    %v5099 = vpack.c.b16 %v4324, %v4299
    %v5100 = vpack.c.b16 %v4325, %v4300
    %v5101 = vpack.c.b16 %v4326, %v4301
    %v5102 = vpack.c.b16 %v4327, %v4302
    %v5103 = vpack.c.b16 %v4328, %v4303
    %v5104 = vpack.c.b16 %v4329, %v4304
    %v5105 = vpack.c.b16 %v4330, %v4305
    %v5106 = vpack.c.b16 %v4331, %v4306
    %v5107 = vpack.c.b16 %v4332, %v4307
    %v5108 = vpack.c.b16 %v4333, %v4308
    %v5109 = vpack.c.b16 %v4334, %v4309
    %v5110 = vpack.c.b16 %v4335, %v4310
    %v5111 = vpack.c.b16 %v4336, %v4311
    %v5112 = vpack.c.b16 %v4337, %v4312
    %v5113 = vpack.c.b16 %v4338, %v4313
    %v5114 = vpack.c.b16 %v4339, %v4314
    %v5115 = vpack.c.b16 %v4340, %v4315
    %v5116 = vpack.c.b16 %v4341, %v4316
    %v5117 = vpack.c.b16 %v4342, %v4317
    %v5118 = vpack.c.b16 %v4343, %v4318
    %v5119 = vpack.c.b16 %v4344, %v4319
    %v5120 = vpack.c.b16 %v4345, %v4320
    %v5121 = vpack.c.b16 %v4371, %v4346
    %v5122 = vpack.c.b16 %v4372, %v4347
    %v5123 = vpack.c.b16 %v4373, %v4348
    %v5124 = vpack.c.b16 %v4374, %v4349
    %v5125 = vpack.c.b16 %v4375, %v4350
    %v5126 = vpack.c.b16 %v4376, %v4351
    %v5127 = vpack.c.b16 %v4377, %v4352
    %v5128 = vpack.c.b16 %v4378, %v4353
    %v5129 = vpack.c.b16 %v4379, %v4354
    %v5130 = vpack.c.b16 %v4380, %v4355
    %v5131 = vpack.c.b16 %v4381, %v4356
    %v5132 = vpack.c.b16 %v4382, %v4357
    %v5133 = vpack.c.b16 %v4383, %v4358
    %v5134 = vpack.c.b16 %v4384, %v4359
    %v5135 = vpack.c.b16 %v4385, %v4360
    %v5136 = vpack.c.b16 %v4386, %v4361
    %v5137 = vpack.c.b16 %v4387, %v4362
    %v5138 = vpack.c.b16 %v4388, %v4363
    %v5139 = vpack.c.b16 %v4389, %v4364
    %v5140 = vpack.c.b16 %v4390, %v4365
    %v5141 = vpack.c.b16 %v4391, %v4366
    %v5142 = vpack.c.b16 %v4392, %v4367
    %v5143 = vpack.c.b16 %v4393, %v4368
    %v5144 = vpack.c.b16 %v4394, %v4369
    %v5145 = vpack.c.b16 %v4395, %v4370
    %v5146 = vpack.c.b16 %v4421, %v4396
    %v5147 = vpack.c.b16 %v4422, %v4397
    %v5148 = vpack.c.b16 %v4423, %v4398
    %v5149 = vpack.c.b16 %v4424, %v4399
    %v5150 = vpack.c.b16 %v4425, %v4400
    %v5151 = vpack.c.b16 %v4426, %v4401
    %v5152 = vpack.c.b16 %v4427, %v4402
    %v5153 = vpack.c.b16 %v4428, %v4403
    %v5154 = vpack.c.b16 %v4429, %v4404
    %v5155 = vpack.c.b16 %v4430, %v4405
    %v5156 = vpack.c.b16 %v4431, %v4406
    %v5157 = vpack.c.b16 %v4432, %v4407
    %v5158 = vpack.c.b16 %v4433, %v4408
    %v5159 = vpack.c.b16 %v4434, %v4409
    %v5160 = vpack.c.b16 %v4435, %v4410
    %v5161 = vpack.c.b16 %v4436, %v4411
    %v5162 = vpack.c.b16 %v4437, %v4412
    %v5163 = vpack.c.b16 %v4438, %v4413
    %v5164 = vpack.c.b16 %v4439, %v4414
    %v5165 = vpack.c.b16 %v4440, %v4415
    %v5166 = vpack.c.b16 %v4441, %v4416
    %v5167 = vpack.c.b16 %v4442, %v4417
    %v5168 = vpack.c.b16 %v4443, %v4418
    %v5169 = vpack.c.b16 %v4444, %v4419
    %v5170 = vpack.c.b16 %v4445, %v4420
    %v5171 = vpack.c.b16 %v4471, %v4446
    %v5172 = vpack.c.b16 %v4472, %v4447
    %v5173 = vpack.c.b16 %v4473, %v4448
    %v5174 = vpack.c.b16 %v4474, %v4449
    %v5175 = vpack.c.b16 %v4475, %v4450
    %v5176 = vpack.c.b16 %v4476, %v4451
    %v5177 = vpack.c.b16 %v4477, %v4452
    %v5178 = vpack.c.b16 %v4478, %v4453
    %v5179 = vpack.c.b16 %v4479, %v4454
    %v5180 = vpack.c.b16 %v4480, %v4455
    %v5181 = vpack.c.b16 %v4481, %v4456
    %v5182 = vpack.c.b16 %v4482, %v4457
    %v5183 = vpack.c.b16 %v4483, %v4458
    %v5184 = vpack.c.b16 %v4484, %v4459
    %v5185 = vpack.c.b16 %v4485, %v4460
    %v5186 = vpack.c.b16 %v4486, %v4461
    %v5187 = vpack.c.b16 %v4487, %v4462
    %v5188 = vpack.c.b16 %v4488, %v4463
    %v5189 = vpack.c.b16 %v4489, %v4464
    %v5190 = vpack.c.b16 %v4490, %v4465
    %v5191 = vpack.c.b16 %v4491, %v4466
    %v5192 = vpack.c.b16 %v4492, %v4467
    %v5193 = vpack.c.b16 %v4493, %v4468
    %v5194 = vpack.c.b16 %v4494, %v4469
    %v5195 = vpack.c.b16 %v4495, %v4470
    %v5196 = vpack.c.b16 %v4521, %v4496
    %v5197 = vpack.c.b16 %v4522, %v4497
    %v5198 = vpack.c.b16 %v4523, %v4498
    %v5199 = vpack.c.b16 %v4524, %v4499
    %v5200 = vpack.c.b16 %v4525, %v4500
    %v5201 = vpack.c.b16 %v4526, %v4501
    %v5202 = vpack.c.b16 %v4527, %v4502
    %v5203 = vpack.c.b16 %v4528, %v4503
    %v5204 = vpack.c.b16 %v4529, %v4504
    %v5205 = vpack.c.b16 %v4530, %v4505
    %v5206 = vpack.c.b16 %v4531, %v4506
    %v5207 = vpack.c.b16 %v4532, %v4507
    %v5208 = vpack.c.b16 %v4533, %v4508
    %v5209 = vpack.c.b16 %v4534, %v4509
    %v5210 = vpack.c.b16 %v4535, %v4510
    %v5211 = vpack.c.b16 %v4536, %v4511
    %v5212 = vpack.c.b16 %v4537, %v4512
    %v5213 = vpack.c.b16 %v4538, %v4513
    %v5214 = vpack.c.b16 %v4539, %v4514
    %v5215 = vpack.c.b16 %v4540, %v4515
    %v5216 = vpack.c.b16 %v4541, %v4516
    %v5217 = vpack.c.b16 %v4542, %v4517
    %v5218 = vpack.c.b16 %v4543, %v4518
    %v5219 = vpack.c.b16 %v4544, %v4519
    %v5220 = vpack.c.b16 %v4545, %v4520
    %v5221 = vpack.c.b16 %v4571, %v4546
    %v5222 = vpack.c.b16 %v4572, %v4547
    %v5223 = vpack.c.b16 %v4573, %v4548
    %v5224 = vpack.c.b16 %v4574, %v4549
    %v5225 = vpack.c.b16 %v4575, %v4550
    %v5226 = vpack.c.b16 %v4576, %v4551
    %v5227 = vpack.c.b16 %v4577, %v4552
    %v5228 = vpack.c.b16 %v4578, %v4553
    %v5229 = vpack.c.b16 %v4579, %v4554
    %v5230 = vpack.c.b16 %v4580, %v4555
    %v5231 = vpack.c.b16 %v4581, %v4556
    %v5232 = vpack.c.b16 %v4582, %v4557
    %v5233 = vpack.c.b16 %v4583, %v4558
    %v5234 = vpack.c.b16 %v4584, %v4559
    %v5235 = vpack.c.b16 %v4585, %v4560
    %v5236 = vpack.c.b16 %v4586, %v4561
    %v5237 = vpack.c.b16 %v4587, %v4562
    %v5238 = vpack.c.b16 %v4588, %v4563
    %v5239 = vpack.c.b16 %v4589, %v4564
    %v5240 = vpack.c.b16 %v4590, %v4565
    %v5241 = vpack.c.b16 %v4591, %v4566
    %v5242 = vpack.c.b16 %v4592, %v4567
    %v5243 = vpack.c.b16 %v4593, %v4568
    %v5244 = vpack.c.b16 %v4594, %v4569
    %v5245 = vpack.c.b16 %v4595, %v4570
    %v5246 = vpack.c.b16 %v4621, %v4596
    %v5247 = vpack.c.b16 %v4622, %v4597
    %v5248 = vpack.c.b16 %v4623, %v4598
    %v5249 = vpack.c.b16 %v4624, %v4599
    %v5250 = vpack.c.b16 %v4625, %v4600
    %v5251 = vpack.c.b16 %v4626, %v4601
    %v5252 = vpack.c.b16 %v4627, %v4602
    %v5253 = vpack.c.b16 %v4628, %v4603
    %v5254 = vpack.c.b16 %v4629, %v4604
    %v5255 = vpack.c.b16 %v4630, %v4605
    %v5256 = vpack.c.b16 %v4631, %v4606
    %v5257 = vpack.c.b16 %v4632, %v4607
    %v5258 = vpack.c.b16 %v4633, %v4608
    %v5259 = vpack.c.b16 %v4634, %v4609
    %v5260 = vpack.c.b16 %v4635, %v4610
    %v5261 = vpack.c.b16 %v4636, %v4611
    %v5262 = vpack.c.b16 %v4637, %v4612
    %v5263 = vpack.c.b16 %v4638, %v4613
    %v5264 = vpack.c.b16 %v4639, %v4614
    %v5265 = vpack.c.b16 %v4640, %v4615
    %v5266 = vpack.c.b16 %v4641, %v4616
    %v5267 = vpack.c.b16 %v4642, %v4617
    %v5268 = vpack.c.b16 %v4643, %v4618
    %v5269 = vpack.c.b16 %v4644, %v4619
    %v5270 = vpack.c.b16 %v4645, %v4620
    %v5271 = vpack.c.b16 %v4671, %v4646
    %v5272 = vpack.c.b16 %v4672, %v4647
    %v5273 = vpack.c.b16 %v4673, %v4648
    %v5274 = vpack.c.b16 %v4674, %v4649
    %v5275 = vpack.c.b16 %v4675, %v4650
    %v5276 = vpack.c.b16 %v4676, %v4651
    %v5277 = vpack.c.b16 %v4677, %v4652
    %v5278 = vpack.c.b16 %v4678, %v4653
    %v5279 = vpack.c.b16 %v4679, %v4654
    %v5280 = vpack.c.b16 %v4680, %v4655
    %v5281 = vpack.c.b16 %v4681, %v4656
    %v5282 = vpack.c.b16 %v4682, %v4657
    %v5283 = vpack.c.b16 %v4683, %v4658
    %v5284 = vpack.c.b16 %v4684, %v4659
    %v5285 = vpack.c.b16 %v4685, %v4660
    %v5286 = vpack.c.b16 %v4686, %v4661
    %v5287 = vpack.c.b16 %v4687, %v4662
    %v5288 = vpack.c.b16 %v4688, %v4663
    %v5289 = vpack.c.b16 %v4689, %v4664
    %v5290 = vpack.c.b16 %v4690, %v4665
    %v5291 = vpack.c.b16 %v4691, %v4666
    %v5292 = vpack.c.b16 %v4692, %v4667
    %v5293 = vpack.c.b16 %v4693, %v4668
    %v5294 = vpack.c.b16 %v4694, %v4669
    %v5295 = vpack.c.b16 %v4695, %v4670
    %v5296 = vpack.c.b16 %v4721, %v4696
    %v5297 = vpack.c.b16 %v4722, %v4697
    %v5298 = vpack.c.b16 %v4723, %v4698
    %v5299 = vpack.c.b16 %v4724, %v4699
    %v5300 = vpack.c.b16 %v4725, %v4700
    %v5301 = vpack.c.b16 %v4726, %v4701
    %v5302 = vpack.c.b16 %v4727, %v4702
    %v5303 = vpack.c.b16 %v4728, %v4703
    %v5304 = vpack.c.b16 %v4729, %v4704
    %v5305 = vpack.c.b16 %v4730, %v4705
    %v5306 = vpack.c.b16 %v4731, %v4706
    %v5307 = vpack.c.b16 %v4732, %v4707
    %v5308 = vpack.c.b16 %v4733, %v4708
    %v5309 = vpack.c.b16 %v4734, %v4709
    %v5310 = vpack.c.b16 %v4735, %v4710
    %v5311 = vpack.c.b16 %v4736, %v4711
    %v5312 = vpack.c.b16 %v4737, %v4712
    %v5313 = vpack.c.b16 %v4738, %v4713
    %v5314 = vpack.c.b16 %v4739, %v4714
    %v5315 = vpack.c.b16 %v4740, %v4715
    %v5316 = vpack.c.b16 %v4741, %v4716
    %v5317 = vpack.c.b16 %v4742, %v4717
    %v5318 = vpack.c.b16 %v4743, %v4718
    %v5319 = vpack.c.b16 %v4744, %v4719
    %v5320 = vpack.c.b16 %v4745, %v4720
    %v5321 = vpack.c.b16 %v4771, %v4746
    %v5322 = vpack.c.b16 %v4772, %v4747
    %v5323 = vpack.c.b16 %v4773, %v4748
    %v5324 = vpack.c.b16 %v4774, %v4749
    %v5325 = vpack.c.b16 %v4775, %v4750
    %v5326 = vpack.c.b16 %v4776, %v4751
    %v5327 = vpack.c.b16 %v4777, %v4752
    %v5328 = vpack.c.b16 %v4778, %v4753
    %v5329 = vpack.c.b16 %v4779, %v4754
    %v5330 = vpack.c.b16 %v4780, %v4755
    %v5331 = vpack.c.b16 %v4781, %v4756
    %v5332 = vpack.c.b16 %v4782, %v4757
    %v5333 = vpack.c.b16 %v4783, %v4758
    %v5334 = vpack.c.b16 %v4784, %v4759
    %v5335 = vpack.c.b16 %v4785, %v4760
    %v5336 = vpack.c.b16 %v4786, %v4761
    %v5337 = vpack.c.b16 %v4787, %v4762
    %v5338 = vpack.c.b16 %v4788, %v4763
    %v5339 = vpack.c.b16 %v4789, %v4764
    %v5340 = vpack.c.b16 %v4790, %v4765
    %v5341 = vpack.c.b16 %v4791, %v4766
    %v5342 = vpack.c.b16 %v4792, %v4767
    %v5343 = vpack.c.b16 %v4793, %v4768
    %v5344 = vpack.c.b16 %v4794, %v4769
    %v5345 = vpack.c.b16 %v4795, %v4770
    %v5346 = vpack.c.b16 %v4821, %v4796
    %v5347 = vpack.c.b16 %v4822, %v4797
    %v5348 = vpack.c.b16 %v4823, %v4798
    %v5349 = vpack.c.b16 %v4824, %v4799
    %v5350 = vpack.c.b16 %v4825, %v4800
    %v5351 = vpack.c.b16 %v4826, %v4801
    %v5352 = vpack.c.b16 %v4827, %v4802
    %v5353 = vpack.c.b16 %v4828, %v4803
    %v5354 = vpack.c.b16 %v4829, %v4804
    %v5355 = vpack.c.b16 %v4830, %v4805
    %v5356 = vpack.c.b16 %v4831, %v4806
    %v5357 = vpack.c.b16 %v4832, %v4807
    %v5358 = vpack.c.b16 %v4833, %v4808
    %v5359 = vpack.c.b16 %v4834, %v4809
    %v5360 = vpack.c.b16 %v4835, %v4810
    %v5361 = vpack.c.b16 %v4836, %v4811
    %v5362 = vpack.c.b16 %v4837, %v4812
    %v5363 = vpack.c.b16 %v4838, %v4813
    %v5364 = vpack.c.b16 %v4839, %v4814
    %v5365 = vpack.c.b16 %v4840, %v4815
    %v5366 = vpack.c.b16 %v4841, %v4816
    %v5367 = vpack.c.b16 %v4842, %v4817
    %v5368 = vpack.c.b16 %v4843, %v4818
    %v5369 = vpack.c.b16 %v4844, %v4819
    %v5370 = vpack.c.b16 %v4845, %v4820
    %v5371 = vpack.c.b16 %v4871, %v4846
    %v5372 = vpack.c.b16 %v4872, %v4847
    %v5373 = vpack.c.b16 %v4873, %v4848
    %v5374 = vpack.c.b16 %v4874, %v4849
    %v5375 = vpack.c.b16 %v4875, %v4850
    %v5376 = vpack.c.b16 %v4876, %v4851
    %v5377 = vpack.c.b16 %v4877, %v4852
    %v5378 = vpack.c.b16 %v4878, %v4853
    %v5379 = vpack.c.b16 %v4879, %v4854
    %v5380 = vpack.c.b16 %v4880, %v4855
    %v5381 = vpack.c.b16 %v4881, %v4856
    %v5382 = vpack.c.b16 %v4882, %v4857
    %v5383 = vpack.c.b16 %v4883, %v4858
    %v5384 = vpack.c.b16 %v4884, %v4859
    %v5385 = vpack.c.b16 %v4885, %v4860
    %v5386 = vpack.c.b16 %v4886, %v4861
    %v5387 = vpack.c.b16 %v4887, %v4862
    %v5388 = vpack.c.b16 %v4888, %v4863
    %v5389 = vpack.c.b16 %v4889, %v4864
    %v5390 = vpack.c.b16 %v4890, %v4865
    %v5391 = vpack.c.b16 %v4891, %v4866
    %v5392 = vpack.c.b16 %v4892, %v4867
    %v5393 = vpack.c.b16 %v4893, %v4868
    %v5394 = vpack.c.b16 %v4894, %v4869
    %v5395 = vpack.c.b16 %v4895, %v4870
    %v5396 = vpack.c.b16 %v4921, %v4896
    %v5397 = vpack.c.b16 %v4922, %v4897
    %v5398 = vpack.c.b16 %v4923, %v4898
    %v5399 = vpack.c.b16 %v4924, %v4899
    %v5400 = vpack.c.b16 %v4925, %v4900
    %v5401 = vpack.c.b16 %v4926, %v4901
    %v5402 = vpack.c.b16 %v4927, %v4902
    %v5403 = vpack.c.b16 %v4928, %v4903
    %v5404 = vpack.c.b16 %v4929, %v4904
    %v5405 = vpack.c.b16 %v4930, %v4905
    %v5406 = vpack.c.b16 %v4931, %v4906
    %v5407 = vpack.c.b16 %v4932, %v4907
    %v5408 = vpack.c.b16 %v4933, %v4908
    %v5409 = vpack.c.b16 %v4934, %v4909
    %v5410 = vpack.c.b16 %v4935, %v4910
    %v5411 = vpack.c.b16 %v4936, %v4911
    %v5412 = vpack.c.b16 %v4937, %v4912
    %v5413 = vpack.c.b16 %v4938, %v4913
    %v5414 = vpack.c.b16 %v4939, %v4914
    %v5415 = vpack.c.b16 %v4940, %v4915
    %v5416 = vpack.c.b16 %v4941, %v4916
    %v5417 = vpack.c.b16 %v4942, %v4917
    %v5418 = vpack.c.b16 %v4943, %v4918
    %v5419 = vpack.c.b16 %v4944, %v4919
    %v5420 = vpack.c.b16 %v4945, %v4920
    %v5421 = vpack.c.b16 %v4971, %v4946
    %v5422 = vpack.c.b16 %v4972, %v4947
    %v5423 = vpack.c.b16 %v4973, %v4948
    %v5424 = vpack.c.b16 %v4974, %v4949
    %v5425 = vpack.c.b16 %v4975, %v4950
    %v5426 = vpack.c.b16 %v4976, %v4951
    %v5427 = vpack.c.b16 %v4977, %v4952
    %v5428 = vpack.c.b16 %v4978, %v4953
    %v5429 = vpack.c.b16 %v4979, %v4954
    %v5430 = vpack.c.b16 %v4980, %v4955
    %v5431 = vpack.c.b16 %v4981, %v4956
    %v5432 = vpack.c.b16 %v4982, %v4957
    %v5433 = vpack.c.b16 %v4983, %v4958
    %v5434 = vpack.c.b16 %v4984, %v4959
    %v5435 = vpack.c.b16 %v4985, %v4960
    %v5436 = vpack.c.b16 %v4986, %v4961
    %v5437 = vpack.c.b16 %v4987, %v4962
    %v5438 = vpack.c.b16 %v4988, %v4963
    %v5439 = vpack.c.b16 %v4989, %v4964
    %v5440 = vpack.c.b16 %v4990, %v4965
    %v5441 = vpack.c.b16 %v4991, %v4966
    %v5442 = vpack.c.b16 %v4992, %v4967
    %v5443 = vpack.c.b16 %v4993, %v4968
    %v5444 = vpack.c.b16 %v4994, %v4969
    %v5445 = vpack.c.b16 %v4995, %v4970
    %v5446 = vpack.c.b16 %v5021, %v4996
    %v5447 = vpack.c.b16 %v5022, %v4997
    %v5448 = vpack.c.b16 %v5023, %v4998
    %v5449 = vpack.c.b16 %v5024, %v4999
    %v5450 = vpack.c.b16 %v5025, %v5000
    %v5451 = vpack.c.b16 %v5026, %v5001
    %v5452 = vpack.c.b16 %v5027, %v5002
    %v5453 = vpack.c.b16 %v5028, %v5003
    %v5454 = vpack.c.b16 %v5029, %v5004
    %v5455 = vpack.c.b16 %v5030, %v5005
    %v5456 = vpack.c.b16 %v5031, %v5006
    %v5457 = vpack.c.b16 %v5032, %v5007
    %v5458 = vpack.c.b16 %v5033, %v5008
    %v5459 = vpack.c.b16 %v5034, %v5009
    %v5460 = vpack.c.b16 %v5035, %v5010
    %v5461 = vpack.c.b16 %v5036, %v5011
    %v5462 = vpack.c.b16 %v5037, %v5012
    %v5463 = vpack.c.b16 %v5038, %v5013
    %v5464 = vpack.c.b16 %v5039, %v5014
    %v5465 = vpack.c.b16 %v5040, %v5015
    %v5466 = vpack.c.b16 %v5041, %v5016
    %v5467 = vpack.c.b16 %v5042, %v5017
    %v5468 = vpack.c.b16 %v5043, %v5018
    %v5469 = vpack.c.b16 %v5044, %v5019
    %v5470 = vpack.c.b16 %v5045, %v5020
    %v5471 = vpack.c.b16 %v5071, %v5046
    %v5472 = vpack.c.b16 %v5072, %v5047
    %v5473 = vpack.c.b16 %v5073, %v5048
    %v5474 = vpack.c.b16 %v5074, %v5049
    %v5475 = vpack.c.b16 %v5075, %v5050
    %v5476 = vpack.c.b16 %v5076, %v5051
    %v5477 = vpack.c.b16 %v5077, %v5052
    %v5478 = vpack.c.b16 %v5078, %v5053
    %v5479 = vpack.c.b16 %v5079, %v5054
    %v5480 = vpack.c.b16 %v5080, %v5055
    %v5481 = vpack.c.b16 %v5081, %v5056
    %v5482 = vpack.c.b16 %v5082, %v5057
    %v5483 = vpack.c.b16 %v5083, %v5058
    %v5484 = vpack.c.b16 %v5084, %v5059
    %v5485 = vpack.c.b16 %v5085, %v5060
    %v5486 = vpack.c.b16 %v5086, %v5061
    %v5487 = vpack.c.b16 %v5087, %v5062
    %v5488 = vpack.c.b16 %v5088, %v5063
    %v5489 = vpack.c.b16 %v5089, %v5064
    %v5490 = vpack.c.b16 %v5090, %v5065
    %v5491 = vpack.c.b16 %v5091, %v5066
    %v5492 = vpack.c.b16 %v5092, %v5067
    %v5493 = vpack.c.b16 %v5093, %v5068
    %v5494 = vpack.c.b16 %v5094, %v5069
    %v5495 = vpack.c.b16 %v5095, %v5070
    %5896 = vmatprep.subr.bf16.mxu0 %v5272
    %5897 = vmatpush1.bf16.msra.mxu0 %v5271
    %5898 = vmatprep.subr.bf16.mxu0 %v5247
    %5899 = vmatpush1.bf16.msra.mxu0 %v5246
    %5900 = vmatprep.subr.bf16.mxu0 %v5222
    %5901 = vmatpush1.bf16.msra.mxu0 %v5221
    %5902 = vmatprep.subr.bf16.mxu0 %v5197
    %5903 = vmatpush1.bf16.msra.mxu0 %v5196
    %5904 = vmatprep.subr.bf16.mxu0 %v5172
    %5905 = vmatpush1.bf16.msra.mxu0 %v5171
    %5906 = vmatprep.subr.bf16.mxu0 %v5147
    %5907 = vmatpush1.bf16.msra.mxu0 %v5146
    %5908 = vmatprep.subr.bf16.mxu0 %v5122
    %5909 = vmatpush1.bf16.msra.mxu0 %v5121
    %5910 = vmatprep.subr.bf16.mxu0 %v5097
    %5911 = vmatpush1.bf16.msra.mxu0 %v5096
    %5912 = vmatprep.subr.bf16.mxu0 %v5472
    %5913 = vmatpush2.bf16.msra.mxu0 %v5471
    %5914 = vmatprep.subr.bf16.mxu0 %v5447
    %5915 = vmatpush2.bf16.msra.mxu0 %v5446
    %5916 = vmatprep.subr.bf16.mxu0 %v5422
    %5917 = vmatpush2.bf16.msra.mxu0 %v5421
    %5918 = vmatprep.subr.bf16.mxu0 %v5397
    %5919 = vmatpush2.bf16.msra.mxu0 %v5396
    %5920 = vmatprep.subr.bf16.mxu0 %v5372
    %5921 = vmatpush2.bf16.msra.mxu0 %v5371
    %5922 = vmatprep.subr.bf16.mxu0 %v5347
    %5923 = vmatpush2.bf16.msra.mxu0 %v5346
    %5924 = vmatprep.subr.bf16.mxu0 %v5322
    %5925 = vmatpush2.bf16.msra.mxu0 %v5321
    %5926 = vmatprep.subr.bf16.mxu0 %v5297
    %5927 = vmatpush2.bf16.msra.mxu0 %v5296
    %5928 = vmatprep.mubr.bf16.mxu0 %v3330
    %5929 = vmatmul.mubr.bf16.gmra.mxu0 %v3329
    %v5930 = vpop.f32.mrf.mxu0
    %v5931 = vadd.f32 %v3758, %v5930
    %v5932 = vpop.f32.mrf.mxu0
    %v5933 = vadd.f32 %v3762, %v5932
    %v5934 = vpop.f32.mrf.mxu0
    %v5935 = vpop.f32.mrf.mxu0
    %5936 = vdwg.mxu0
    %5937 = vmatprep.subr.bf16.mxu0 %v5274
    %5938 = vmatpush1.bf16.msra.mxu0 %v5273
    %5939 = vmatprep.subr.bf16.mxu0 %v5249
    %5940 = vmatpush1.bf16.msra.mxu0 %v5248
    %5941 = vmatprep.subr.bf16.mxu0 %v5224
    %5942 = vmatpush1.bf16.msra.mxu0 %v5223
    %5943 = vmatprep.subr.bf16.mxu0 %v5199
    %5944 = vmatpush1.bf16.msra.mxu0 %v5198
    %5945 = vmatprep.subr.bf16.mxu0 %v5174
    %5946 = vmatpush1.bf16.msra.mxu0 %v5173
    %5947 = vmatprep.subr.bf16.mxu0 %v5149
    %5948 = vmatpush1.bf16.msra.mxu0 %v5148
    %5949 = vmatprep.subr.bf16.mxu0 %v5124
    %5950 = vmatpush1.bf16.msra.mxu0 %v5123
    %5951 = vmatprep.subr.bf16.mxu0 %v5099
    %5952 = vmatpush1.bf16.msra.mxu0 %v5098
    %5953 = vmatprep.subr.bf16.mxu0 %v5474
    %5954 = vmatpush2.bf16.msra.mxu0 %v5473
    %5955 = vmatprep.subr.bf16.mxu0 %v5449
    %5956 = vmatpush2.bf16.msra.mxu0 %v5448
    %5957 = vmatprep.subr.bf16.mxu0 %v5424
    %5958 = vmatpush2.bf16.msra.mxu0 %v5423
    %5959 = vmatprep.subr.bf16.mxu0 %v5399
    %5960 = vmatpush2.bf16.msra.mxu0 %v5398
    %5961 = vmatprep.subr.bf16.mxu0 %v5374
    %5962 = vmatpush2.bf16.msra.mxu0 %v5373
    %5963 = vmatprep.subr.bf16.mxu0 %v5349
    %5964 = vmatpush2.bf16.msra.mxu0 %v5348
    %5965 = vmatprep.subr.bf16.mxu0 %v5324
    %5966 = vmatpush2.bf16.msra.mxu0 %v5323
    %5967 = vmatprep.subr.bf16.mxu0 %v5299
    %5968 = vmatpush2.bf16.msra.mxu0 %v5298
    %5969 = vmatprep.mubr.bf16.mxu0 %v3330
    %5970 = vmatmul.mubr.bf16.gmra.mxu0 %v3329
    %v5971 = vpop.f32.mrf.mxu0
    %v5972 = vadd.f32 %v3766, %v5971
    %v5973 = vpop.f32.mrf.mxu0
    %v5974 = vadd.f32 %v3770, %v5973
    %v5975 = vpop.f32.mrf.mxu0
    %v5976 = vpop.f32.mrf.mxu0
    %5977 = vdwg.mxu0
    %5978 = vmatprep.subr.bf16.mxu0 %v5276
    %5979 = vmatpush1.bf16.msra.mxu0 %v5275
    %5980 = vmatprep.subr.bf16.mxu0 %v5251
    %5981 = vmatpush1.bf16.msra.mxu0 %v5250
    %5982 = vmatprep.subr.bf16.mxu0 %v5226
    %5983 = vmatpush1.bf16.msra.mxu0 %v5225
    %5984 = vmatprep.subr.bf16.mxu0 %v5201
    %5985 = vmatpush1.bf16.msra.mxu0 %v5200
    %5986 = vmatprep.subr.bf16.mxu0 %v5176
    %5987 = vmatpush1.bf16.msra.mxu0 %v5175
    %5988 = vmatprep.subr.bf16.mxu0 %v5151
    %5989 = vmatpush1.bf16.msra.mxu0 %v5150
    %5990 = vmatprep.subr.bf16.mxu0 %v5126
    %5991 = vmatpush1.bf16.msra.mxu0 %v5125
    %5992 = vmatprep.subr.bf16.mxu0 %v5101
    %5993 = vmatpush1.bf16.msra.mxu0 %v5100
    %5994 = vmatprep.subr.bf16.mxu0 %v5476
    %5995 = vmatpush2.bf16.msra.mxu0 %v5475
    %5996 = vmatprep.subr.bf16.mxu0 %v5451
    %5997 = vmatpush2.bf16.msra.mxu0 %v5450
    %5998 = vmatprep.subr.bf16.mxu0 %v5426
    %5999 = vmatpush2.bf16.msra.mxu0 %v5425
    %6000 = vmatprep.subr.bf16.mxu0 %v5401
    %6001 = vmatpush2.bf16.msra.mxu0 %v5400
    %6002 = vmatprep.subr.bf16.mxu0 %v5376
    %6003 = vmatpush2.bf16.msra.mxu0 %v5375
    %6004 = vmatprep.subr.bf16.mxu0 %v5351
    %6005 = vmatpush2.bf16.msra.mxu0 %v5350
    %6006 = vmatprep.subr.bf16.mxu0 %v5326
    %6007 = vmatpush2.bf16.msra.mxu0 %v5325
    %6008 = vmatprep.subr.bf16.mxu0 %v5301
    %6009 = vmatpush2.bf16.msra.mxu0 %v5300
    %6010 = vmatprep.mubr.bf16.mxu0 %v3330
    %6011 = vmatmul.mubr.bf16.gmra.mxu0 %v3329
    %v6012 = vpop.f32.mrf.mxu0
    %v6013 = vadd.f32 %v3774, %v6012
    %v6014 = vpop.f32.mrf.mxu0
    %v6015 = vadd.f32 %v3778, %v6014
    %v6016 = vpop.f32.mrf.mxu0
    %v6017 = vpop.f32.mrf.mxu0
    %6018 = vdwg.mxu0
    %6019 = vmatprep.subr.bf16.mxu0 %v5278
    %6020 = vmatpush1.bf16.msra.mxu0 %v5277
    %6021 = vmatprep.subr.bf16.mxu0 %v5253
    %6022 = vmatpush1.bf16.msra.mxu0 %v5252
    %6023 = vmatprep.subr.bf16.mxu0 %v5228
    %6024 = vmatpush1.bf16.msra.mxu0 %v5227
    %6025 = vmatprep.subr.bf16.mxu0 %v5203
    %6026 = vmatpush1.bf16.msra.mxu0 %v5202
    %6027 = vmatprep.subr.bf16.mxu0 %v5178
    %6028 = vmatpush1.bf16.msra.mxu0 %v5177
    %6029 = vmatprep.subr.bf16.mxu0 %v5153
    %6030 = vmatpush1.bf16.msra.mxu0 %v5152
    %6031 = vmatprep.subr.bf16.mxu0 %v5128
    %6032 = vmatpush1.bf16.msra.mxu0 %v5127
    %6033 = vmatprep.subr.bf16.mxu0 %v5103
    %6034 = vmatpush1.bf16.msra.mxu0 %v5102
    %6035 = vmatprep.subr.bf16.mxu0 %v5478
    %6036 = vmatpush2.bf16.msra.mxu0 %v5477
    %6037 = vmatprep.subr.bf16.mxu0 %v5453
    %6038 = vmatpush2.bf16.msra.mxu0 %v5452
    %6039 = vmatprep.subr.bf16.mxu0 %v5428
    %6040 = vmatpush2.bf16.msra.mxu0 %v5427
    %6041 = vmatprep.subr.bf16.mxu0 %v5403
    %6042 = vmatpush2.bf16.msra.mxu0 %v5402
    %6043 = vmatprep.subr.bf16.mxu0 %v5378
    %6044 = vmatpush2.bf16.msra.mxu0 %v5377
    %6045 = vmatprep.subr.bf16.mxu0 %v5353
    %6046 = vmatpush2.bf16.msra.mxu0 %v5352
    %6047 = vmatprep.subr.bf16.mxu0 %v5328
    %6048 = vmatpush2.bf16.msra.mxu0 %v5327
    %6049 = vmatprep.subr.bf16.mxu0 %v5303
    %6050 = vmatpush2.bf16.msra.mxu0 %v5302
    %6051 = vmatprep.mubr.bf16.mxu0 %v3330
    %6052 = vmatmul.mubr.bf16.gmra.mxu0 %v3329
    %v6053 = vpop.f32.mrf.mxu0
    %v6054 = vadd.f32 %v3782, %v6053
    %v6055 = vpop.f32.mrf.mxu0
    %v6056 = vadd.f32 %v3786, %v6055
    %v6057 = vpop.f32.mrf.mxu0
    %v6058 = vpop.f32.mrf.mxu0
    %6059 = vdwg.mxu0
    %6060 = vmatprep.subr.bf16.mxu0 %v5280
    %6061 = vmatpush1.bf16.msra.mxu0 %v5279
    %6062 = vmatprep.subr.bf16.mxu0 %v5255
    %6063 = vmatpush1.bf16.msra.mxu0 %v5254
    %6064 = vmatprep.subr.bf16.mxu0 %v5230
    %6065 = vmatpush1.bf16.msra.mxu0 %v5229
    %6066 = vmatprep.subr.bf16.mxu0 %v5205
    %6067 = vmatpush1.bf16.msra.mxu0 %v5204
    %6068 = vmatprep.subr.bf16.mxu0 %v5180
    %6069 = vmatpush1.bf16.msra.mxu0 %v5179
    %6070 = vmatprep.subr.bf16.mxu0 %v5155
    %6071 = vmatpush1.bf16.msra.mxu0 %v5154
    %6072 = vmatprep.subr.bf16.mxu0 %v5130
    %6073 = vmatpush1.bf16.msra.mxu0 %v5129
    %6074 = vmatprep.subr.bf16.mxu0 %v5105
    %6075 = vmatpush1.bf16.msra.mxu0 %v5104
    %6076 = vmatprep.subr.bf16.mxu0 %v5480
    %6077 = vmatpush2.bf16.msra.mxu0 %v5479
    %6078 = vmatprep.subr.bf16.mxu0 %v5455
    %6079 = vmatpush2.bf16.msra.mxu0 %v5454
    %6080 = vmatprep.subr.bf16.mxu0 %v5430
    %6081 = vmatpush2.bf16.msra.mxu0 %v5429
    %6082 = vmatprep.subr.bf16.mxu0 %v5405
    %6083 = vmatpush2.bf16.msra.mxu0 %v5404
    %6084 = vmatprep.subr.bf16.mxu0 %v5380
    %6085 = vmatpush2.bf16.msra.mxu0 %v5379
    %6086 = vmatprep.subr.bf16.mxu0 %v5355
    %6087 = vmatpush2.bf16.msra.mxu0 %v5354
    %6088 = vmatprep.subr.bf16.mxu0 %v5330
    %6089 = vmatpush2.bf16.msra.mxu0 %v5329
    %6090 = vmatprep.subr.bf16.mxu0 %v5305
    %6091 = vmatpush2.bf16.msra.mxu0 %v5304
    %6092 = vmatprep.mubr.bf16.mxu0 %v3330
    %6093 = vmatmul.mubr.bf16.gmra.mxu0 %v3329
    %v6094 = vpop.f32.mrf.mxu0
    %v6095 = vadd.f32 %v3790, %v6094
    %v6096 = vpop.f32.mrf.mxu0
    %v6097 = vadd.f32 %v3794, %v6096
    %v6098 = vpop.f32.mrf.mxu0
    %v6099 = vpop.f32.mrf.mxu0
    %6100 = vdwg.mxu0
    %6101 = vmatprep.subr.bf16.mxu0 %v5282
    %6102 = vmatpush1.bf16.msra.mxu0 %v5281
    %6103 = vmatprep.subr.bf16.mxu0 %v5257
    %6104 = vmatpush1.bf16.msra.mxu0 %v5256
    %6105 = vmatprep.subr.bf16.mxu0 %v5232
    %6106 = vmatpush1.bf16.msra.mxu0 %v5231
    %6107 = vmatprep.subr.bf16.mxu0 %v5207
    %6108 = vmatpush1.bf16.msra.mxu0 %v5206
    %6109 = vmatprep.subr.bf16.mxu0 %v5182
    %6110 = vmatpush1.bf16.msra.mxu0 %v5181
    %6111 = vmatprep.subr.bf16.mxu0 %v5157
    %6112 = vmatpush1.bf16.msra.mxu0 %v5156
    %6113 = vmatprep.subr.bf16.mxu0 %v5132
    %6114 = vmatpush1.bf16.msra.mxu0 %v5131
    %6115 = vmatprep.subr.bf16.mxu0 %v5107
    %6116 = vmatpush1.bf16.msra.mxu0 %v5106
    %6117 = vmatprep.subr.bf16.mxu0 %v5482
    %6118 = vmatpush2.bf16.msra.mxu0 %v5481
    %6119 = vmatprep.subr.bf16.mxu0 %v5457
    %6120 = vmatpush2.bf16.msra.mxu0 %v5456
    %6121 = vmatprep.subr.bf16.mxu0 %v5432
    %6122 = vmatpush2.bf16.msra.mxu0 %v5431
    %6123 = vmatprep.subr.bf16.mxu0 %v5407
    %6124 = vmatpush2.bf16.msra.mxu0 %v5406
    %6125 = vmatprep.subr.bf16.mxu0 %v5382
    %6126 = vmatpush2.bf16.msra.mxu0 %v5381
    %6127 = vmatprep.subr.bf16.mxu0 %v5357
    %6128 = vmatpush2.bf16.msra.mxu0 %v5356
    %6129 = vmatprep.subr.bf16.mxu0 %v5332
    %6130 = vmatpush2.bf16.msra.mxu0 %v5331
    %6131 = vmatprep.subr.bf16.mxu0 %v5307
    %6132 = vmatpush2.bf16.msra.mxu0 %v5306
    %6133 = vmatprep.mubr.bf16.mxu0 %v3330
    %6134 = vmatmul.mubr.bf16.gmra.mxu0 %v3329
    %v6135 = vpop.f32.mrf.mxu0
    %v6136 = vadd.f32 %v3798, %v6135
    %v6137 = vpop.f32.mrf.mxu0
    %v6138 = vadd.f32 %v3802, %v6137
    %v6139 = vpop.f32.mrf.mxu0
    %v6140 = vpop.f32.mrf.mxu0
    %6141 = vdwg.mxu0
    %6142 = vmatprep.subr.bf16.mxu0 %v5284
    %6143 = vmatpush1.bf16.msra.mxu0 %v5283
    %6144 = vmatprep.subr.bf16.mxu0 %v5259
    %6145 = vmatpush1.bf16.msra.mxu0 %v5258
    %6146 = vmatprep.subr.bf16.mxu0 %v5234
    %6147 = vmatpush1.bf16.msra.mxu0 %v5233
    %6148 = vmatprep.subr.bf16.mxu0 %v5209
    %6149 = vmatpush1.bf16.msra.mxu0 %v5208
    %6150 = vmatprep.subr.bf16.mxu0 %v5184
    %6151 = vmatpush1.bf16.msra.mxu0 %v5183
    %6152 = vmatprep.subr.bf16.mxu0 %v5159
    %6153 = vmatpush1.bf16.msra.mxu0 %v5158
    %6154 = vmatprep.subr.bf16.mxu0 %v5134
    %6155 = vmatpush1.bf16.msra.mxu0 %v5133
    %6156 = vmatprep.subr.bf16.mxu0 %v5109
    %6157 = vmatpush1.bf16.msra.mxu0 %v5108
    %6158 = vmatprep.subr.bf16.mxu0 %v5484
    %6159 = vmatpush2.bf16.msra.mxu0 %v5483
    %6160 = vmatprep.subr.bf16.mxu0 %v5459
    %6161 = vmatpush2.bf16.msra.mxu0 %v5458
    %6162 = vmatprep.subr.bf16.mxu0 %v5434
    %6163 = vmatpush2.bf16.msra.mxu0 %v5433
    %6164 = vmatprep.subr.bf16.mxu0 %v5409
    %6165 = vmatpush2.bf16.msra.mxu0 %v5408
    %6166 = vmatprep.subr.bf16.mxu0 %v5384
    %6167 = vmatpush2.bf16.msra.mxu0 %v5383
    %6168 = vmatprep.subr.bf16.mxu0 %v5359
    %6169 = vmatpush2.bf16.msra.mxu0 %v5358
    %6170 = vmatprep.subr.bf16.mxu0 %v5334
    %6171 = vmatpush2.bf16.msra.mxu0 %v5333
    %6172 = vmatprep.subr.bf16.mxu0 %v5309
    %6173 = vmatpush2.bf16.msra.mxu0 %v5308
    %6174 = vmatprep.mubr.bf16.mxu0 %v3330
    %6175 = vmatmul.mubr.bf16.gmra.mxu0 %v3329
    %v6176 = vpop.f32.mrf.mxu0
    %v6177 = vadd.f32 %v3806, %v6176
    %v6178 = vpop.f32.mrf.mxu0
    %v6179 = vadd.f32 %v3810, %v6178
    %v6180 = vpop.f32.mrf.mxu0
    %v6181 = vpop.f32.mrf.mxu0
    %6182 = vdwg.mxu0
    %6183 = vmatprep.subr.bf16.mxu0 %v5286
    %6184 = vmatpush1.bf16.msra.mxu0 %v5285
    %6185 = vmatprep.subr.bf16.mxu0 %v5261
    %6186 = vmatpush1.bf16.msra.mxu0 %v5260
    %6187 = vmatprep.subr.bf16.mxu0 %v5236
    %6188 = vmatpush1.bf16.msra.mxu0 %v5235
    %6189 = vmatprep.subr.bf16.mxu0 %v5211
    %6190 = vmatpush1.bf16.msra.mxu0 %v5210
    %6191 = vmatprep.subr.bf16.mxu0 %v5186
    %6192 = vmatpush1.bf16.msra.mxu0 %v5185
    %6193 = vmatprep.subr.bf16.mxu0 %v5161
    %6194 = vmatpush1.bf16.msra.mxu0 %v5160
    %6195 = vmatprep.subr.bf16.mxu0 %v5136
    %6196 = vmatpush1.bf16.msra.mxu0 %v5135
    %6197 = vmatprep.subr.bf16.mxu0 %v5111
    %6198 = vmatpush1.bf16.msra.mxu0 %v5110
    %6199 = vmatprep.subr.bf16.mxu0 %v5486
    %6200 = vmatpush2.bf16.msra.mxu0 %v5485
    %6201 = vmatprep.subr.bf16.mxu0 %v5461
    %6202 = vmatpush2.bf16.msra.mxu0 %v5460
    %6203 = vmatprep.subr.bf16.mxu0 %v5436
    %6204 = vmatpush2.bf16.msra.mxu0 %v5435
    %6205 = vmatprep.subr.bf16.mxu0 %v5411
    %6206 = vmatpush2.bf16.msra.mxu0 %v5410
    %6207 = vmatprep.subr.bf16.mxu0 %v5386
    %6208 = vmatpush2.bf16.msra.mxu0 %v5385
    %6209 = vmatprep.subr.bf16.mxu0 %v5361
    %6210 = vmatpush2.bf16.msra.mxu0 %v5360
    %6211 = vmatprep.subr.bf16.mxu0 %v5336
    %6212 = vmatpush2.bf16.msra.mxu0 %v5335
    %6213 = vmatprep.subr.bf16.mxu0 %v5311
    %6214 = vmatpush2.bf16.msra.mxu0 %v5310
    %6215 = vmatprep.mubr.bf16.mxu0 %v3330
    %6216 = vmatmul.mubr.bf16.gmra.mxu0 %v3329
    %v6217 = vpop.f32.mrf.mxu0
    %v6218 = vadd.f32 %v3814, %v6217
    %v6219 = vpop.f32.mrf.mxu0
    %v6220 = vadd.f32 %v3818, %v6219
    %v6221 = vpop.f32.mrf.mxu0
    %v6222 = vpop.f32.mrf.mxu0
    %6223 = vdwg.mxu0
    %6224 = vmatprep.subr.bf16.mxu0 %v5288
    %6225 = vmatpush1.bf16.msra.mxu0 %v5287
    %6226 = vmatprep.subr.bf16.mxu0 %v5263
    %6227 = vmatpush1.bf16.msra.mxu0 %v5262
    %6228 = vmatprep.subr.bf16.mxu0 %v5238
    %6229 = vmatpush1.bf16.msra.mxu0 %v5237
    %6230 = vmatprep.subr.bf16.mxu0 %v5213
    %6231 = vmatpush1.bf16.msra.mxu0 %v5212
    %6232 = vmatprep.subr.bf16.mxu0 %v5188
    %6233 = vmatpush1.bf16.msra.mxu0 %v5187
    %6234 = vmatprep.subr.bf16.mxu0 %v5163
    %6235 = vmatpush1.bf16.msra.mxu0 %v5162
    %6236 = vmatprep.subr.bf16.mxu0 %v5138
    %6237 = vmatpush1.bf16.msra.mxu0 %v5137
    %6238 = vmatprep.subr.bf16.mxu0 %v5113
    %6239 = vmatpush1.bf16.msra.mxu0 %v5112
    %6240 = vmatprep.subr.bf16.mxu0 %v5488
    %6241 = vmatpush2.bf16.msra.mxu0 %v5487
    %6242 = vmatprep.subr.bf16.mxu0 %v5463
    %6243 = vmatpush2.bf16.msra.mxu0 %v5462
    %6244 = vmatprep.subr.bf16.mxu0 %v5438
    %6245 = vmatpush2.bf16.msra.mxu0 %v5437
    %6246 = vmatprep.subr.bf16.mxu0 %v5413
    %6247 = vmatpush2.bf16.msra.mxu0 %v5412
    %6248 = vmatprep.subr.bf16.mxu0 %v5388
    %6249 = vmatpush2.bf16.msra.mxu0 %v5387
    %6250 = vmatprep.subr.bf16.mxu0 %v5363
    %6251 = vmatpush2.bf16.msra.mxu0 %v5362
    %6252 = vmatprep.subr.bf16.mxu0 %v5338
    %6253 = vmatpush2.bf16.msra.mxu0 %v5337
    %6254 = vmatprep.subr.bf16.mxu0 %v5313
    %6255 = vmatpush2.bf16.msra.mxu0 %v5312
    %6256 = vmatprep.mubr.bf16.mxu0 %v3330
    %6257 = vmatmul.mubr.bf16.gmra.mxu0 %v3329
    %v6258 = vpop.f32.mrf.mxu0
    %v6259 = vadd.f32 %v3822, %v6258
    %v6260 = vpop.f32.mrf.mxu0
    %v6261 = vadd.f32 %v3826, %v6260
    %v6262 = vpop.f32.mrf.mxu0
    %v6263 = vpop.f32.mrf.mxu0
    %6264 = vdwg.mxu0
    %6265 = vmatprep.subr.bf16.mxu0 %v5290
    %6266 = vmatpush1.bf16.msra.mxu0 %v5289
    %6267 = vmatprep.subr.bf16.mxu0 %v5265
    %6268 = vmatpush1.bf16.msra.mxu0 %v5264
    %6269 = vmatprep.subr.bf16.mxu0 %v5240
    %6270 = vmatpush1.bf16.msra.mxu0 %v5239
    %6271 = vmatprep.subr.bf16.mxu0 %v5215
    %6272 = vmatpush1.bf16.msra.mxu0 %v5214
    %6273 = vmatprep.subr.bf16.mxu0 %v5190
    %6274 = vmatpush1.bf16.msra.mxu0 %v5189
    %6275 = vmatprep.subr.bf16.mxu0 %v5165
    %6276 = vmatpush1.bf16.msra.mxu0 %v5164
    %6277 = vmatprep.subr.bf16.mxu0 %v5140
    %6278 = vmatpush1.bf16.msra.mxu0 %v5139
    %6279 = vmatprep.subr.bf16.mxu0 %v5115
    %6280 = vmatpush1.bf16.msra.mxu0 %v5114
    %6281 = vmatprep.subr.bf16.mxu0 %v5490
    %6282 = vmatpush2.bf16.msra.mxu0 %v5489
    %6283 = vmatprep.subr.bf16.mxu0 %v5465
    %6284 = vmatpush2.bf16.msra.mxu0 %v5464
    %6285 = vmatprep.subr.bf16.mxu0 %v5440
    %6286 = vmatpush2.bf16.msra.mxu0 %v5439
    %6287 = vmatprep.subr.bf16.mxu0 %v5415
    %6288 = vmatpush2.bf16.msra.mxu0 %v5414
    %6289 = vmatprep.subr.bf16.mxu0 %v5390
    %6290 = vmatpush2.bf16.msra.mxu0 %v5389
    %6291 = vmatprep.subr.bf16.mxu0 %v5365
    %6292 = vmatpush2.bf16.msra.mxu0 %v5364
    %6293 = vmatprep.subr.bf16.mxu0 %v5340
    %6294 = vmatpush2.bf16.msra.mxu0 %v5339
    %6295 = vmatprep.subr.bf16.mxu0 %v5315
    %6296 = vmatpush2.bf16.msra.mxu0 %v5314
    %6297 = vmatprep.mubr.bf16.mxu0 %v3330
    %6298 = vmatmul.mubr.bf16.gmra.mxu0 %v3329
    %v6299 = vpop.f32.mrf.mxu0
    %v6300 = vadd.f32 %v3830, %v6299
    %v6301 = vpop.f32.mrf.mxu0
    %v6302 = vadd.f32 %v3834, %v6301
    %v6303 = vpop.f32.mrf.mxu0
    %v6304 = vpop.f32.mrf.mxu0
    %6305 = vdwg.mxu0
    %6306 = vmatprep.subr.bf16.mxu0 %v5292
    %6307 = vmatpush1.bf16.msra.mxu0 %v5291
    %6308 = vmatprep.subr.bf16.mxu0 %v5267
    %6309 = vmatpush1.bf16.msra.mxu0 %v5266
    %6310 = vmatprep.subr.bf16.mxu0 %v5242
    %6311 = vmatpush1.bf16.msra.mxu0 %v5241
    %6312 = vmatprep.subr.bf16.mxu0 %v5217
    %6313 = vmatpush1.bf16.msra.mxu0 %v5216
    %6314 = vmatprep.subr.bf16.mxu0 %v5192
    %6315 = vmatpush1.bf16.msra.mxu0 %v5191
    %6316 = vmatprep.subr.bf16.mxu0 %v5167
    %6317 = vmatpush1.bf16.msra.mxu0 %v5166
    %6318 = vmatprep.subr.bf16.mxu0 %v5142
    %6319 = vmatpush1.bf16.msra.mxu0 %v5141
    %6320 = vmatprep.subr.bf16.mxu0 %v5117
    %6321 = vmatpush1.bf16.msra.mxu0 %v5116
    %6322 = vmatprep.subr.bf16.mxu0 %v5492
    %6323 = vmatpush2.bf16.msra.mxu0 %v5491
    %6324 = vmatprep.subr.bf16.mxu0 %v5467
    %6325 = vmatpush2.bf16.msra.mxu0 %v5466
    %6326 = vmatprep.subr.bf16.mxu0 %v5442
    %6327 = vmatpush2.bf16.msra.mxu0 %v5441
    %6328 = vmatprep.subr.bf16.mxu0 %v5417
    %6329 = vmatpush2.bf16.msra.mxu0 %v5416
    %6330 = vmatprep.subr.bf16.mxu0 %v5392
    %6331 = vmatpush2.bf16.msra.mxu0 %v5391
    %6332 = vmatprep.subr.bf16.mxu0 %v5367
    %6333 = vmatpush2.bf16.msra.mxu0 %v5366
    %6334 = vmatprep.subr.bf16.mxu0 %v5342
    %6335 = vmatpush2.bf16.msra.mxu0 %v5341
    %6336 = vmatprep.subr.bf16.mxu0 %v5317
    %6337 = vmatpush2.bf16.msra.mxu0 %v5316
    %6338 = vmatprep.mubr.bf16.mxu0 %v3330
    %6339 = vmatmul.mubr.bf16.gmra.mxu0 %v3329
    %v6340 = vpop.f32.mrf.mxu0
    %v6341 = vadd.f32 %v3838, %v6340
    %v6342 = vpop.f32.mrf.mxu0
    %v6343 = vadd.f32 %v3842, %v6342
    %v6344 = vpop.f32.mrf.mxu0
    %v6345 = vpop.f32.mrf.mxu0
    %6346 = vdwg.mxu0
    %6347 = vmatprep.subr.bf16.mxu0 %v5294
    %6348 = vmatpush1.bf16.msra.mxu0 %v5293
    %6349 = vmatprep.subr.bf16.mxu0 %v5269
    %6350 = vmatpush1.bf16.msra.mxu0 %v5268
    %6351 = vmatprep.subr.bf16.mxu0 %v5244
    %6352 = vmatpush1.bf16.msra.mxu0 %v5243
    %6353 = vmatprep.subr.bf16.mxu0 %v5219
    %6354 = vmatpush1.bf16.msra.mxu0 %v5218
    %6355 = vmatprep.subr.bf16.mxu0 %v5194
    %6356 = vmatpush1.bf16.msra.mxu0 %v5193
    %6357 = vmatprep.subr.bf16.mxu0 %v5169
    %6358 = vmatpush1.bf16.msra.mxu0 %v5168
    %6359 = vmatprep.subr.bf16.mxu0 %v5144
    %6360 = vmatpush1.bf16.msra.mxu0 %v5143
    %6361 = vmatprep.subr.bf16.mxu0 %v5119
    %6362 = vmatpush1.bf16.msra.mxu0 %v5118
    %6363 = vmatprep.subr.bf16.mxu0 %v5494
    %6364 = vmatpush2.bf16.msra.mxu0 %v5493
    %6365 = vmatprep.subr.bf16.mxu0 %v5469
    %6366 = vmatpush2.bf16.msra.mxu0 %v5468
    %6367 = vmatprep.subr.bf16.mxu0 %v5444
    %6368 = vmatpush2.bf16.msra.mxu0 %v5443
    %6369 = vmatprep.subr.bf16.mxu0 %v5419
    %6370 = vmatpush2.bf16.msra.mxu0 %v5418
    %6371 = vmatprep.subr.bf16.mxu0 %v5394
    %6372 = vmatpush2.bf16.msra.mxu0 %v5393
    %6373 = vmatprep.subr.bf16.mxu0 %v5369
    %6374 = vmatpush2.bf16.msra.mxu0 %v5368
    %6375 = vmatprep.subr.bf16.mxu0 %v5344
    %6376 = vmatpush2.bf16.msra.mxu0 %v5343
    %6377 = vmatprep.subr.bf16.mxu0 %v5319
    %6378 = vmatpush2.bf16.msra.mxu0 %v5318
    %6379 = vmatprep.mubr.bf16.mxu0 %v3330
    %6380 = vmatmul.mubr.bf16.gmra.mxu0 %v3329
    %v6381 = vpop.f32.mrf.mxu0
    %v6382 = vadd.f32 %v3846, %v6381
    %v6383 = vpop.f32.mrf.mxu0
    %v6384 = vadd.f32 %v3850, %v6383
    %v6385 = vpop.f32.mrf.mxu0
    %v6386 = vpop.f32.mrf.mxu0
    %6387 = vdwg.mxu0
    %6388 = vmatprep.subr.bf16.mxu0 0
    %6389 = vmatpush1.bf16.msra.mxu0 %v5295
    %6390 = vmatprep.subr.bf16.mxu0 0
    %6391 = vmatpush1.bf16.msra.mxu0 %v5270
    %6392 = vmatprep.subr.bf16.mxu0 0
    %6393 = vmatpush1.bf16.msra.mxu0 %v5245
    %6394 = vmatprep.subr.bf16.mxu0 0
    %6395 = vmatpush1.bf16.msra.mxu0 %v5220
    %6396 = vmatprep.subr.bf16.mxu0 0
    %6397 = vmatpush1.bf16.msra.mxu0 %v5195
    %6398 = vmatprep.subr.bf16.mxu0 0
    %6399 = vmatpush1.bf16.msra.mxu0 %v5170
    %6400 = vmatprep.subr.bf16.mxu0 0
    %6401 = vmatpush1.bf16.msra.mxu0 %v5145
    %6402 = vmatprep.subr.bf16.mxu0 0
    %6403 = vmatpush1.bf16.msra.mxu0 %v5120
    %6404 = vmatprep.subr.bf16.mxu0 0
    %6405 = vmatpush2.bf16.msra.mxu0 %v5495
    %6406 = vmatprep.subr.bf16.mxu0 0
    %6407 = vmatpush2.bf16.msra.mxu0 %v5470
    %6408 = vmatprep.subr.bf16.mxu0 0
    %6409 = vmatpush2.bf16.msra.mxu0 %v5445
    %6410 = vmatprep.subr.bf16.mxu0 0
    %6411 = vmatpush2.bf16.msra.mxu0 %v5420
    %6412 = vmatprep.subr.bf16.mxu0 0
    %6413 = vmatpush2.bf16.msra.mxu0 %v5395
    %6414 = vmatprep.subr.bf16.mxu0 0
    %6415 = vmatpush2.bf16.msra.mxu0 %v5370
    %6416 = vmatprep.subr.bf16.mxu0 0
    %6417 = vmatpush2.bf16.msra.mxu0 %v5345
    %6418 = vmatprep.subr.bf16.mxu0 0
    %6419 = vmatpush2.bf16.msra.mxu0 %v5320
    %6420 = vmatprep.mubr.bf16.mxu0 %v3330
    %6421 = vmatmul.mubr.bf16.gmra.mxu0 %v3329
    %v6422 = vpop.f32.mrf.mxu0
    %v6423 = vadd.f32 %v3854, %v6422
    %v6424 = vpop.f32.mrf.mxu0
    %v6425 = vpop.f32.mrf.mxu0
    %v6426 = vpop.f32.mrf.mxu0
    %6427 = vdwg.mxu0
    %v6428 = vmax.f32 %v5931, 0.0
    %v6429 = vmax.f32 %v5933, 0.0
    %v6430 = vmax.f32 %v5972, 0.0
    %v6431 = vmax.f32 %v5974, 0.0
    %v6432 = vmax.f32 %v6013, 0.0
    %v6433 = vmax.f32 %v6015, 0.0
    %v6434 = vmax.f32 %v6054, 0.0
    %v6435 = vmax.f32 %v6056, 0.0
    %v6436 = vmax.f32 %v6095, 0.0
    %v6437 = vmax.f32 %v6097, 0.0
    %v6438 = vmax.f32 %v6136, 0.0
    %v6439 = vmax.f32 %v6138, 0.0
    %v6440 = vmax.f32 %v6177, 0.0
    %v6441 = vmax.f32 %v6179, 0.0
    %v6442 = vmax.f32 %v6218, 0.0
    %v6443 = vmax.f32 %v6220, 0.0
    %v6444 = vmax.f32 %v6259, 0.0
    %v6445 = vmax.f32 %v6261, 0.0
    %v6446 = vmax.f32 %v6300, 0.0
    %v6447 = vmax.f32 %v6302, 0.0
    %v6448 = vmax.f32 %v6341, 0.0
    %v6449 = vmax.f32 %v6343, 0.0
    %v6450 = vmax.f32 %v6382, 0.0
    %v6451 = vmax.f32 %v6384, 0.0
    %v6452 = vmax.f32 %v6423, 0.0
    %vm6453 = vcmask 123904
    %6454 = vst.msk [vmem:[#allocation2] sm:$0x3] %vm6453, %v3223
    %6456 = vrot.lane.b32.xlu0 %v3223, 112
    %v6457 = vpop.permute.xlu0 %6456
    %6459 = vst.msk [vmem:[#allocation4] sm:$0x3] %vm6453, %v6457
    %v6485 = vcombine.low %v6428, %v6429
    %v6486 = vcombine.low %v6430, %v6431
    %v6488 = vunpack.c.l.s4 1983009808
    %v6489 = vunpack.c.0.s8 %v6488
    %v6490 = vlaneseq
    %v6491 = vshrl.u32 %v6490, 7
    %v6492 = vsub.s32 %v6489, %v6491
    %v6493 = vrot.slane %v6485, %v6492
    %v6495 = vunpack.c.l.s4 1983009808
    %v6496 = vunpack.c.0.s8 %v6495
    %v6497 = vlaneseq
    %v6498 = vshrl.u32 %v6497, 7
    %v6499 = vsub.s32 %v6496, %v6498
    %v6500 = vrot.slane %v6486, %v6499
    %v6501 = vcombine.low %v6493, %v6500
    %v6502 = vcombine.low %v6432, %v6433
    %v6503 = vcombine.low %v6434, %v6435
    %v6505 = vunpack.c.l.s4 1983009808
    %v6506 = vunpack.c.0.s8 %v6505
    %v6507 = vlaneseq
    %v6508 = vshrl.u32 %v6507, 7
    %v6509 = vsub.s32 %v6506, %v6508
    %v6510 = vrot.slane %v6502, %v6509
    %v6512 = vunpack.c.l.s4 1983009808
    %v6513 = vunpack.c.0.s8 %v6512
    %v6514 = vlaneseq
    %v6515 = vshrl.u32 %v6514, 7
    %v6516 = vsub.s32 %v6513, %v6515
    %v6517 = vrot.slane %v6503, %v6516
    %v6518 = vcombine.low %v6510, %v6517
    %v6519 = vcombine.low %v6436, %v6437
    %v6520 = vcombine.low %v6438, %v6439
    %v6522 = vunpack.c.l.s4 1983009808
    %v6523 = vunpack.c.0.s8 %v6522
    %v6524 = vlaneseq
    %v6525 = vshrl.u32 %v6524, 7
    %v6526 = vsub.s32 %v6523, %v6525
    %v6527 = vrot.slane %v6519, %v6526
    %v6529 = vunpack.c.l.s4 1983009808
    %v6530 = vunpack.c.0.s8 %v6529
    %v6531 = vlaneseq
    %v6532 = vshrl.u32 %v6531, 7
    %v6533 = vsub.s32 %v6530, %v6532
    %v6534 = vrot.slane %v6520, %v6533
    %v6535 = vcombine.low %v6527, %v6534
    %v6536 = vcombine.low %v6440, %v6441
    %v6537 = vcombine.low %v6442, %v6443
    %v6539 = vunpack.c.l.s4 1983009808
    %v6540 = vunpack.c.0.s8 %v6539
    %v6541 = vlaneseq
    %v6542 = vshrl.u32 %v6541, 7
    %v6543 = vsub.s32 %v6540, %v6542
    %v6544 = vrot.slane %v6536, %v6543
    %v6546 = vunpack.c.l.s4 1983009808
    %v6547 = vunpack.c.0.s8 %v6546
    %v6548 = vlaneseq
    %v6549 = vshrl.u32 %v6548, 7
    %v6550 = vsub.s32 %v6547, %v6549
    %v6551 = vrot.slane %v6537, %v6550
    %v6552 = vcombine.low %v6544, %v6551
    %v6553 = vcombine.low %v6444, %v6445
    %v6554 = vcombine.low %v6446, %v6447
    %v6556 = vunpack.c.l.s4 1983009808
    %v6557 = vunpack.c.0.s8 %v6556
    %v6558 = vlaneseq
    %v6559 = vshrl.u32 %v6558, 7
    %v6560 = vsub.s32 %v6557, %v6559
    %v6561 = vrot.slane %v6553, %v6560
    %v6563 = vunpack.c.l.s4 1983009808
    %v6564 = vunpack.c.0.s8 %v6563
    %v6565 = vlaneseq
    %v6566 = vshrl.u32 %v6565, 7
    %v6567 = vsub.s32 %v6564, %v6566
    %v6568 = vrot.slane %v6554, %v6567
    %v6569 = vcombine.low %v6561, %v6568
    %v6570 = vcombine.low %v6448, %v6449
    %v6571 = vcombine.low %v6450, %v6451
    %v6573 = vunpack.c.l.s4 1983009808
    %v6574 = vunpack.c.0.s8 %v6573
    %v6575 = vlaneseq
    %v6576 = vshrl.u32 %v6575, 7
    %v6577 = vsub.s32 %v6574, %v6576
    %v6578 = vrot.slane %v6570, %v6577
    %v6580 = vunpack.c.l.s4 1983009808
    %v6581 = vunpack.c.0.s8 %v6580
    %v6582 = vlaneseq
    %v6583 = vshrl.u32 %v6582, 7
    %v6584 = vsub.s32 %v6581, %v6583
    %v6585 = vrot.slane %v6571, %v6584
    %v6586 = vcombine.low %v6578, %v6585
    %v6588 = vunpack.c.l.s4 1983009808
    %v6589 = vunpack.c.0.s8 %v6588
    %v6590 = vlaneseq
    %v6591 = vshrl.u32 %v6590, 7
    %v6592 = vsub.s32 %v6589, %v6591
    %v6593 = vrot.slane %v6452, %v6592
    %6601 = vst [vmem:[%s12] sm:$0xff] %v6501
    %6602 = vst [vmem:[%s12 + $0x8] sm:$0xff] %v6518
    %6603 = vst [vmem:[%s12 + $0x10] sm:$0xff] %v6535
    %6604 = vst [vmem:[%s12 + $0x18] sm:$0xff] %v6552
    %6605 = vst [vmem:[%s12 + $0x20] sm:$0xff] %v6569
    %6606 = vst [vmem:[%s12 + $0x28] sm:$0xff] %v6586
    %vm6607 = vcmask 517120
    %6608 = vst.msk [vmem:[%s12 + $0x30] sm:$0x3] %vm6607, %v6593
    // Predicated region
    $region42: #{vae_forward.7} parent=1 // pred_check
      _
    $region43: #{vae_forward.7} parent=1 // pred_check_branch
      %6610 = sbr.rel (0) target = $region45
    $region44: #{vae_forward.7} parent=1 // pred_region
      %s6612 = ssub.s32 32, 32
      %6613 = vsyncadd [#allocation3], %s6612
      %s6615 = sshll.u32 [#allocation2], 4
      %s6616 = int_to_ptr.vmem [resolvable:$true] %s6615
      %6618 = dma.vmem_to_hbm [thread:$0]  %s6616, 32, %s10, [#allocation3]
    $region45: #{vae_forward.7} parent=1 // pred_fallthru
      _
    // Predicated region
    $region46: #{vae_forward.7} parent=1 // pred_check
      _
    $region47: #{vae_forward.7} parent=1 // pred_check_branch
      %6620 = sbr.rel (0) target = $region49
    $region48: #{vae_forward.7} parent=1 // pred_region
      %s6622 = ssub.s32 32, 32
      %6623 = vsyncadd [#allocation5], %s6622
      %s6625 = sshll.u32 [#allocation4], 4
      %s6626 = int_to_ptr.vmem [resolvable:$true] %s6625
      %6628 = dma.vmem_to_hbm [thread:$0]  %s6626, 32, %s11, [#allocation5]
    $region49: #{vae_forward.7} parent=1 // pred_fallthru
      _
    // Predicated region
    $region50: #{vae_forward.7} parent=1 // pred_check
      _
    $region51: #{vae_forward.7} parent=1 // pred_check_branch
      %6630 = sbr.rel (0) target = $region53
    $region52: #{vae_forward.7} parent=1 // pred_region
      _
    $region53: #{vae_forward.7} parent=1 // pred_fallthru
      _
    // Predicated region
    $region54: #{vae_forward.7} parent=1 // pred_check
      _
    $region55: #{vae_forward.7} parent=1 // pred_check_branch
      %6632 = sbr.rel (0) target = $region57
    $region56: #{vae_forward.7} parent=1 // pred_region
      %6633 = dma.done [#allocation3], 32
    $region57: #{vae_forward.7} parent=1 // pred_fallthru
      _
    // Predicated region
    $region58: #{vae_forward.7} parent=1 // pred_check
      _
    $region59: #{vae_forward.7} parent=1 // pred_check_branch
      %6635 = sbr.rel (0) target = $region61
    $region60: #{vae_forward.7} parent=1 // pred_region
      %6636 = dma.done [#allocation5], 32
    $region61: #{vae_forward.7} parent=1 // pred_fallthru
      _
    // Predicated region
    $region62: #{vae_forward.7} parent=1 // pred_check
      _
    $region63: #{vae_forward.7} parent=1 // pred_check_branch
      %6638 = sbr.rel (0) target = $region65
    $region64: #{vae_forward.7} parent=1 // pred_region
      _
    $region65: #{vae_forward.7} parent=1 // pred_fallthru
      _
    %6639 = vsyncpa [#allocation3], 1
    %6640 = vsyncpa [#allocation5], 1

// kernel: vae_forward.9
$region0: #{vae_forward.9}
  #allocation0 [shape = 'u32[]', space=smem, size = 0x4, offset = 0x4, fixed_abs, tag = 'smem constant byte address 0x4 - core index']
  #allocation1 [shape = 'u32[144,128]{1,0:T(1,128)}', space=vmem, size = 0x12000, scoped, tag = 'internal scratch']
  %s0 = inlined_call_operand.vmem [shape: bf16[4,128], index: 0, kind: input, shape index: {}]
  %s1 = inlined_call_operand.vmem [shape: f32[128,450], index: 1, kind: input, shape index: {}]
  %s2 = inlined_call_operand.vmem [shape: f32[4,1], index: 2, kind: input, shape index: {}]
  %s3 = inlined_call_operand.vmem [shape: f32[4,450], index: 3, kind: output, shape index: {}]
  %s4 = sld [smem:[#allocation0]]
  $region22: #{vae_forward.9} parent=0
    _
  %s6 = ssub.s32 1, %s4
  %s7 = scalar_select 0, %s6, %s4
  // Predicated region
  $region2: #{vae_forward.9} parent=0 // pred_check
    _
  $region3: #{vae_forward.9} parent=0 // pred_check_branch
    %9 = sbr.rel (0) target = $region5
  $region4: #{vae_forward.9} parent=0 // pred_region
    _
  $region5: #{vae_forward.9} parent=0 // pred_fallthru
    _
  // Predicated region
  $region6: #{vae_forward.9} parent=0 // pred_check
    _
  $region7: #{vae_forward.9} parent=0 // pred_check_branch
    %11 = sbr.rel (0) target = $region9
  $region8: #{vae_forward.9} parent=0 // pred_region
    _
  $region9: #{vae_forward.9} parent=0 // pred_fallthru
    _
  // Predicated region
  $region10: #{vae_forward.9} parent=0 // pred_check
    _
  $region11: #{vae_forward.9} parent=0 // pred_check_branch
    %13 = sbr.rel (0) target = $region13
  $region12: #{vae_forward.9} parent=0 // pred_region
    _
  $region13: #{vae_forward.9} parent=0 // pred_fallthru
    _
  %v15 = vld [vmem:[%s0] sm:$0x3]
  %v16 = vld [vmem:[%s1] sm:$0xff]
  %v17 = vld [vmem:[%s1 + $0x8] sm:$0xff]
  %v18 = vld [vmem:[%s1 + $0x10] sm:$0xff]
  %v19 = vld [vmem:[%s1 + $0x18] sm:$0xff]
  %v20 = vld [vmem:[%s1 + $0x20] sm:$0xff]
  %v21 = vld [vmem:[%s1 + $0x28] sm:$0xff]
  %v22 = vld [vmem:[%s1 + $0x30] sm:$0xff]
  %v23 = vld [vmem:[%s1 + $0x38] sm:$0xff]
  %v24 = vld [vmem:[%s1 + $0x40] sm:$0xff]
  %v25 = vld [vmem:[%s1 + $0x48] sm:$0xff]
  %v26 = vld [vmem:[%s1 + $0x50] sm:$0xff]
  %v27 = vld [vmem:[%s1 + $0x58] sm:$0xff]
  %v28 = vld [vmem:[%s1 + $0x60] sm:$0xff]
  %v29 = vld [vmem:[%s1 + $0x68] sm:$0xff]
  %v30 = vld [vmem:[%s1 + $0x70] sm:$0xff]
  %v31 = vld [vmem:[%s1 + $0x78] sm:$0xff]
  %v32 = vld [vmem:[%s1 + $0x80] sm:$0xff]
  %v33 = vld [vmem:[%s1 + $0x88] sm:$0xff]
  %v34 = vld [vmem:[%s1 + $0x90] sm:$0xff]
  %v35 = vld [vmem:[%s1 + $0x98] sm:$0xff]
  %v36 = vld [vmem:[%s1 + $0xa0] sm:$0xff]
  %v37 = vld [vmem:[%s1 + $0xa8] sm:$0xff]
  %v38 = vld [vmem:[%s1 + $0xb0] sm:$0xff]
  %v39 = vld [vmem:[%s1 + $0xb8] sm:$0xff]
  %v40 = vld [vmem:[%s1 + $0xc0] sm:$0xff]
  %v41 = vld [vmem:[%s1 + $0xc8] sm:$0xff]
  %v42 = vld [vmem:[%s1 + $0xd0] sm:$0xff]
  %v43 = vld [vmem:[%s1 + $0xd8] sm:$0xff]
  %v44 = vld [vmem:[%s1 + $0xe0] sm:$0xff]
  %v45 = vld [vmem:[%s1 + $0xe8] sm:$0xff]
  %v46 = vld [vmem:[%s1 + $0xf0] sm:$0xff]
  %v47 = vld [vmem:[%s1 + $0xf8] sm:$0xff]
  %v48 = vld [vmem:[%s1 + $0x100] sm:$0xff]
  %v49 = vld [vmem:[%s1 + $0x108] sm:$0xff]
  %v50 = vld [vmem:[%s1 + $0x110] sm:$0xff]
  %v51 = vld [vmem:[%s1 + $0x118] sm:$0xff]
  %v52 = vld [vmem:[%s1 + $0x120] sm:$0xff]
  %v53 = vld [vmem:[%s1 + $0x128] sm:$0xff]
  %v54 = vld [vmem:[%s1 + $0x130] sm:$0xff]
  %v55 = vld [vmem:[%s1 + $0x138] sm:$0xff]
  %v56 = vld [vmem:[%s1 + $0x140] sm:$0xff]
  %v57 = vld [vmem:[%s1 + $0x148] sm:$0xff]
  %v58 = vld [vmem:[%s1 + $0x150] sm:$0xff]
  %v59 = vld [vmem:[%s1 + $0x158] sm:$0xff]
  %v60 = vld [vmem:[%s1 + $0x160] sm:$0xff]
  %v61 = vld [vmem:[%s1 + $0x168] sm:$0xff]
  %v62 = vld [vmem:[%s1 + $0x170] sm:$0xff]
  %v63 = vld [vmem:[%s1 + $0x178] sm:$0xff]
  %v64 = vld [vmem:[%s1 + $0x180] sm:$0xff]
  %v65 = vld [vmem:[%s1 + $0x188] sm:$0xff]
  %v66 = vld [vmem:[%s1 + $0x190] sm:$0xff]
  %v67 = vld [vmem:[%s1 + $0x198] sm:$0xff]
  %v68 = vld [vmem:[%s1 + $0x1a0] sm:$0xff]
  %v69 = vld [vmem:[%s1 + $0x1a8] sm:$0xff]
  %v70 = vld [vmem:[%s1 + $0x1b0] sm:$0xff]
  %v71 = vld [vmem:[%s1 + $0x1b8] sm:$0xff]
  %v72 = vld [vmem:[%s1 + $0x1c0] sm:$0xff]
  %v73 = vld [vmem:[%s1 + $0x1c8] sm:$0xff]
  %v74 = vld [vmem:[%s1 + $0x1d0] sm:$0xff]
  %v75 = vld [vmem:[%s1 + $0x1d8] sm:$0xff]
  %v76 = vld [vmem:[%s1 + $0x1e0] sm:$0xff]
  %v77 = vld [vmem:[%s1 + $0x1e8] sm:$0xff]
  %v78 = vld [vmem:[%s1 + $0x1f0] sm:$0xff]
  %v79 = vld [vmem:[%s1 + $0x1f8] sm:$0xff]
  %v80 = vpack.c.bf16 %v20, %v16
  %v81 = vpack.c.bf16 %v21, %v17
  %v82 = vpack.c.bf16 %v22, %v18
  %v83 = vpack.c.bf16 %v23, %v19
  %v84 = vpack.c.bf16 %v28, %v24
  %v85 = vpack.c.bf16 %v29, %v25
  %v86 = vpack.c.bf16 %v30, %v26
  %v87 = vpack.c.bf16 %v31, %v27
  %v88 = vpack.c.bf16 %v36, %v32
  %v89 = vpack.c.bf16 %v37, %v33
  %v90 = vpack.c.bf16 %v38, %v34
  %v91 = vpack.c.bf16 %v39, %v35
  %v92 = vpack.c.bf16 %v44, %v40
  %v93 = vpack.c.bf16 %v45, %v41
  %v94 = vpack.c.bf16 %v46, %v42
  %v95 = vpack.c.bf16 %v47, %v43
  %v96 = vpack.c.bf16 %v52, %v48
  %v97 = vpack.c.bf16 %v53, %v49
  %v98 = vpack.c.bf16 %v54, %v50
  %v99 = vpack.c.bf16 %v55, %v51
  %v100 = vpack.c.bf16 %v60, %v56
  %v101 = vpack.c.bf16 %v61, %v57
  %v102 = vpack.c.bf16 %v62, %v58
  %v103 = vpack.c.bf16 %v63, %v59
  %v104 = vpack.c.bf16 %v68, %v64
  %v105 = vpack.c.bf16 %v69, %v65
  %v106 = vpack.c.bf16 %v70, %v66
  %v107 = vpack.c.bf16 %v71, %v67
  %v108 = vpack.c.bf16 %v76, %v72
  %v109 = vpack.c.bf16 %v77, %v73
  %v110 = vpack.c.bf16 %v78, %v74
  %v111 = vpack.c.bf16 %v79, %v75
  %v112 = vld [vmem:[%s2] sm:$0xf]
  %114 = vset.pattern.permute.xlu0 0
  %115 = vperm.xlu0 %114, %v112
  %v116 = vpop.permute.xlu0 %115
  %118 = vmatprep.subr.bf16.mxu0 %v109
  %119 = vmatpush1.bf16.msra.mxu0 %v108
  %120 = vmatprep.subr.bf16.mxu0 %v105
  %121 = vmatpush1.bf16.msra.mxu0 %v104
  %122 = vmatprep.subr.bf16.mxu0 %v101
  %123 = vmatpush1.bf16.msra.mxu0 %v100
  %124 = vmatprep.subr.bf16.mxu0 %v97
  %125 = vmatpush1.bf16.msra.mxu0 %v96
  %126 = vmatprep.subr.bf16.mxu0 %v93
  %127 = vmatpush1.bf16.msra.mxu0 %v92
  %128 = vmatprep.subr.bf16.mxu0 %v89
  %129 = vmatpush1.bf16.msra.mxu0 %v88
  %130 = vmatprep.subr.bf16.mxu0 %v85
  %131 = vmatpush1.bf16.msra.mxu0 %v84
  %132 = vmatprep.subr.bf16.mxu0 %v81
  %133 = vmatpush1.bf16.msra.mxu0 %v80
  %134 = vmatprep.subr.bf16.mxu0 0
  %135 = vmatpush2.bf16.msra.mxu0 0
  %136 = vmatprep.subr.bf16.mxu0 0
  %137 = vmatpush2.bf16.msra.mxu0 0
  %138 = vmatprep.subr.bf16.mxu0 0
  %139 = vmatpush2.bf16.msra.mxu0 0
  %140 = vmatprep.subr.bf16.mxu0 0
  %141 = vmatpush2.bf16.msra.mxu0 0
  %142 = vmatprep.subr.bf16.mxu0 0
  %143 = vmatpush2.bf16.msra.mxu0 0
  %144 = vmatprep.subr.bf16.mxu0 0
  %145 = vmatpush2.bf16.msra.mxu0 0
  %146 = vmatprep.subr.bf16.mxu0 0
  %147 = vmatpush2.bf16.msra.mxu0 0
  %148 = vmatprep.subr.bf16.mxu0 0
  %149 = vmatpush2.bf16.msra.mxu0 0
  %150 = vmatprep.mubr.bf16.mxu0 0
  %151 = vmatmul.mubr.bf16.gmra.mxu0 %v15
  %v152 = vpop.f32.mrf.mxu0
  %v153 = vadd.f32 %v116, %v152
  %v154 = vpop.f32.mrf.mxu0
  %v155 = vadd.f32 %v116, %v154
  %v156 = vpop.f32.mrf.mxu0
  %v157 = vpop.f32.mrf.mxu0
  %158 = vdwg.mxu0
  %159 = vmatprep.subr.bf16.mxu0 %v111
  %160 = vmatpush1.bf16.msra.mxu0 %v110
  %161 = vmatprep.subr.bf16.mxu0 %v107
  %162 = vmatpush1.bf16.msra.mxu0 %v106
  %163 = vmatprep.subr.bf16.mxu0 %v103
  %164 = vmatpush1.bf16.msra.mxu0 %v102
  %165 = vmatprep.subr.bf16.mxu0 %v99
  %166 = vmatpush1.bf16.msra.mxu0 %v98
  %167 = vmatprep.subr.bf16.mxu0 %v95
  %168 = vmatpush1.bf16.msra.mxu0 %v94
  %169 = vmatprep.subr.bf16.mxu0 %v91
  %170 = vmatpush1.bf16.msra.mxu0 %v90
  %171 = vmatprep.subr.bf16.mxu0 %v87
  %172 = vmatpush1.bf16.msra.mxu0 %v86
  %173 = vmatprep.subr.bf16.mxu0 %v83
  %174 = vmatpush1.bf16.msra.mxu0 %v82
  %175 = vmatprep.subr.bf16.mxu0 0
  %176 = vmatpush2.bf16.msra.mxu0 0
  %177 = vmatprep.subr.bf16.mxu0 0
  %178 = vmatpush2.bf16.msra.mxu0 0
  %179 = vmatprep.subr.bf16.mxu0 0
  %180 = vmatpush2.bf16.msra.mxu0 0
  %181 = vmatprep.subr.bf16.mxu0 0
  %182 = vmatpush2.bf16.msra.mxu0 0
  %183 = vmatprep.subr.bf16.mxu0 0
  %184 = vmatpush2.bf16.msra.mxu0 0
  %185 = vmatprep.subr.bf16.mxu0 0
  %186 = vmatpush2.bf16.msra.mxu0 0
  %187 = vmatprep.subr.bf16.mxu0 0
  %188 = vmatpush2.bf16.msra.mxu0 0
  %189 = vmatprep.subr.bf16.mxu0 0
  %190 = vmatpush2.bf16.msra.mxu0 0
  %191 = vmatprep.mubr.bf16.mxu0 0
  %192 = vmatmul.mubr.bf16.gmra.mxu0 %v15
  %v193 = vpop.f32.mrf.mxu0
  %v194 = vadd.f32 %v116, %v193
  %v195 = vpop.f32.mrf.mxu0
  %v196 = vadd.f32 %v116, %v195
  %v197 = vpop.f32.mrf.mxu0
  %v198 = vpop.f32.mrf.mxu0
  %199 = vdwg.mxu0
  %v200 = vxor.u32 %v153, 2147483648
  %v201 = vxor.u32 %v155, 2147483648
  %v202 = vxor.u32 %v194, 2147483648
  %v203 = vxor.u32 %v196, 2147483648
  %v204 = vmul.f32 %v200, 1.442695
  %v205 = vpow.pop %v204
  %v206 = vmul.f32 %v201, 1.442695
  %v207 = vpow.pop %v206
  %v208 = vmul.f32 %v202, 1.442695
  %v209 = vpow.pop %v208
  %v210 = vmul.f32 %v203, 1.442695
  %v211 = vpow.pop %v210
  %v212 = vadd.f32 %v205, 1.0
  %v213 = vadd.f32 %v207, 1.0
  %v214 = vadd.f32 %v209, 1.0
  %v215 = vadd.f32 %v211, 1.0
  %v216 = vrcp.pop %v212
  %v217 = vmul.f32 1.0, %v216
  %v218 = vrcp.pop %v213
  %v219 = vmul.f32 1.0, %v218
  %v220 = vrcp.pop %v214
  %v221 = vmul.f32 1.0, %v220
  %v222 = vrcp.pop %v215
  %v223 = vmul.f32 1.0, %v222
  %v228 = vcombine.low %v217, %v219
  %v229 = vcombine.low %v221, %v223
  %232 = vst [vmem:[%s3] sm:$0xff] %v228
  %vm233 = vcmask 1043456
  %vm234 = vcmask 539652
  %vm235 = vmor %vm234, %vm233
  %236 = vst.msk [vmem:[%s3 + $0x8] sm:$0xff] %vm235, %v229
  // Predicated region
  $region14: #{vae_forward.9} parent=0 // pred_check
    _
  $region15: #{vae_forward.9} parent=0 // pred_check_branch
    %238 = sbr.rel (0) target = $region17
  $region16: #{vae_forward.9} parent=0 // pred_region
    _
  $region17: #{vae_forward.9} parent=0 // pred_fallthru
    _
  // Predicated region
  $region18: #{vae_forward.9} parent=0 // pred_check
    _
  $region19: #{vae_forward.9} parent=0 // pred_check_branch
    %240 = sbr.rel (0) target = $region21
  $region20: #{vae_forward.9} parent=0 // pred_region
    _
  $region21: #{vae_forward.9} parent=0 // pred_fallthru
    _

</llo_original>
